<compile_context>
chip_gen: v7x
topology: tpu7x:2x2x1
jax: 0.10.0
libtpu: 0.0.40
codegen_flags: <defaults>
</compile_context>

<pallas_src>
import jax
import jax.numpy as jnp
from jax import lax
from jax.experimental import pallas as pl
from jax.experimental.pallas import tpu as pltpu

# --- scaled-down hyper-parameters (original values in comments) --------------
B              = 2      # batch
N_EVENTS       = 4      # 64
ENC_CHANNELS   = 256    # 4096  (UNet output channels)
TIME_FRAMES    = 8      # 128
MODEL_DIM      = 64     # 256
CONTEXT_DIM    = 16     # 16
IMPULSE_SIZE   = 256    # 4096
RESONANCE_SIZE = 1024   # 32768
N_SAMPLES      = 2048   # 2**15   (N_SAMPLES // 256 == TIME_FRAMES)
RES_CHANNELS   = 64     # 512     (window size of conservation-of-energy model)
RES_STEP       = RES_CHANNELS // 2
RES_FRAMES     = RESONANCE_SIZE // RES_STEP     # 32
UP_STRIDE      = N_SAMPLES // TIME_FRAMES       # 256


def _round_up(n, m):
    return ((n + m - 1) // m) * m


def _default_vmem_limit():
    # generation-dependent scoped VMEM limit; conservative fallback works on
    # every chip (v5e/v6e/v7x).
    try:
        info = pltpu.get_tpu_info()
        cap = getattr(info, "vmem_capacity_bytes", None)
    except Exception:
        cap = None
    if cap is None:
        return 32 * 1024 * 1024
    if cap <= 64 * 1024 * 1024:        # v7x: 64 MiB physical -> leave headroom
        return 40 * 1024 * 1024
    return 64 * 1024 * 1024            # v5e / v6e: 128 MiB physical


VMEM_LIMIT = _default_vmem_limit()


def _pick_tile_m(M, cap=512):
    """Row tile: multiple of 8 (or full), >=2 blocks when cheap (v7x megacore)."""
    if M < 16:
        return M
    if M <= cap:
        if M % 16 == 0:
            return M // 2
        return M
    return cap


def _pick_row_tile(R, cap=128):
    if R <= 8:
        return R
    if R % 16 == 0:
        return min(cap, R // 2)
    return R


# =============================================================================
# Kernel 1: fused Linear (x @ w + b) on the MXU, bf16 operands, f32 accumulate
# =============================================================================
def _linear_kernel(x_ref, w_ref, b_ref, o_ref):
    o_ref[...] = (jnp.dot(x_ref[...], w_ref[...],
                          preferred_element_type=jnp.float32) + b_ref[...])


def pallas_linear(x, w_bf16, b, tile_m=512, tile_n=2048):
    """y = x @ w + b.   x: (M, K) any float, w: (K, N) bf16, b: (N,) -> (M, N) f32.

    Narrow-N weights (N <= tile_n) keep a constant weight block index so the
    weight is DMA'd once; wide-N weights are streamed in tile_n-wide tiles.
    """
    M, K = x.shape
    N = w_bf16.shape[1]
    tm = _pick_tile_m(M, tile_m)
    tn = N if N <= tile_n else tile_n
    return pl.pallas_call(
        _linear_kernel,
        out_shape=jax.ShapeDtypeStruct((M, N), jnp.float32),
        grid=(pl.cdiv(M, tm), pl.cdiv(N, tn)),
        in_specs=[
            pl.BlockSpec((tm, K), lambda i, j: (i, 0)),
            pl.BlockSpec((K, tn), lambda i, j: (0, j)),
            pl.BlockSpec((1, tn), lambda i, j: (0, j)),
        ],
        out_specs=pl.BlockSpec((tm, tn), lambda i, j: (i, j)),
        compiler_params=pltpu.CompilerParams(
            dimension_semantics=("parallel", "parallel"),
            vmem_limit_bytes=VMEM_LIMIT),
    )(x.astype(jnp.bfloat16), w_bf16, b.reshape(1, N).astype(jnp.float32))


# =============================================================================
# Shared in-kernel math
# =============================================================================
def _k_unit_norm(x, eps=1e-8):
    n = jnp.sqrt(jnp.sum(x * x, axis=-1, keepdims=True))
    return x / (n + eps)


def _k_layer_norm(x, g, b, eps=1e-5):
    mu = jnp.mean(x, axis=-1, keepdims=True)
    var = jnp.mean((x - mu) ** 2, axis=-1, keepdims=True)
    return (x - mu) * lax.rsqrt(var + eps) * g + b


def _apply_stack_refs(h, w_ref, b_ref, g_ref, beta_ref):
    # LinearOutputStack approx: 3 x [Linear, LeakyReLU(0.2), LayerNorm] + Linear
    # Weights stay as refs; each (C, C) bf16 slice feeds the MXU directly.
    # TODO(synk): exact LinearOutputStack layer ordering not in provided source.
    for j in range(3):
        h = jnp.dot(h.astype(jnp.bfloat16), w_ref[j],
                    preferred_element_type=jnp.float32) + b_ref[j]
        h = jnp.where(h > 0, h, 0.2 * h)
        h = _k_layer_norm(h, g_ref[j], beta_ref[j])
    return jnp.dot(h.astype(jnp.bfloat16), w_ref[3],
                   preferred_element_type=jnp.float32) + b_ref[3]


# =============================================================================
# Kernel 2: fused LinearOutputStack (4 matmuls + norms in one launch)
# =============================================================================
def _stack_kernel(x_ref, w_ref, b_ref, g_ref, bt_ref, o_ref):
    o_ref[...] = _apply_stack_refs(x_ref[...], w_ref, b_ref, g_ref, bt_ref)


def pallas_stack(x, p, tile_m=512):
    M, C = x.shape
    tm = _pick_tile_m(M, tile_m)
    return pl.pallas_call(
        _stack_kernel,
        out_shape=jax.ShapeDtypeStruct((M, C), jnp.float32),
        grid=(pl.cdiv(M, tm),),
        in_specs=[
            pl.BlockSpec((tm, C), lambda i: (i, 0)),
            pl.BlockSpec((4, C, C), lambda i: (0, 0, 0)),
            pl.BlockSpec((4, 1, C), lambda i: (0, 0, 0)),
            pl.BlockSpec((3, 1, C), lambda i: (0, 0, 0)),
            pl.BlockSpec((3, 1, C), lambda i: (0, 0, 0)),
        ],
        out_specs=pl.BlockSpec((tm, C), lambda i: (i, 0)),
        compiler_params=pltpu.CompilerParams(
            dimension_semantics=("parallel",),
            vmem_limit_bytes=VMEM_LIMIT),
    )(x.astype(jnp.bfloat16), p['w'], p['b'], p['g'], p['beta'])


# =============================================================================
# Kernel 3: fused [to_weight | to_bias] + to_leakage projection
#   lane-dense (M, 2C) main output, separate narrow leakage output with the
#   0.1 + sigmoid(.)*0.98 activation fused in-kernel.
# =============================================================================
def _wbl_kernel(x_ref, wwb_ref, bwb_ref, wlk_ref, blk_ref, owb_ref, olk_ref):
    x = x_ref[...]
    owb_ref[...] = (jnp.dot(x, wwb_ref[...],
                            preferred_element_type=jnp.float32) + bwb_ref[...])
    lk = (jnp.dot(x, wlk_ref[...],
                  preferred_element_type=jnp.float32) + blk_ref[...])
    olk_ref[...] = 0.1 + jax.nn.sigmoid(lk) * 0.98


def pallas_wbl(x, wwb, bwb, wlk, blk, tile_m=512):
    M, C = x.shape
    Nwb = wwb.shape[1]
    Nlk = wlk.shape[1]
    tm = _pick_tile_m(M, tile_m)
    return pl.pallas_call(
        _wbl_kernel,
        out_shape=(jax.ShapeDtypeStruct((M, Nwb), jnp.float32),
                   jax.ShapeDtypeStruct((M, Nlk), jnp.float32)),
        grid=(pl.cdiv(M, tm),),
        in_specs=[
            pl.BlockSpec((tm, C), lambda i: (i, 0)),
            pl.BlockSpec((C, Nwb), lambda i: (0, 0)),
            pl.BlockSpec((1, Nwb), lambda i: (0, 0)),
            pl.BlockSpec((C, Nlk), lambda i: (0, 0)),
            pl.BlockSpec((1, Nlk), lambda i: (0, 0)),
        ],
        out_specs=(pl.BlockSpec((tm, Nwb), lambda i: (i, 0)),
                   pl.BlockSpec((tm, Nlk), lambda i: (i, 0))),
        compiler_params=pltpu.CompilerParams(
            dimension_semantics=("parallel",),
            vmem_limit_bytes=VMEM_LIMIT),
    )(x.astype(jnp.bfloat16), wwb, bwb.reshape(1, Nwb), wlk, blk.reshape(1, Nlk))


# =============================================================================
# Kernel 4: RecurrentConservationOfEnergyModel recurrence, frame axis streamed
#   grid = (row_tiles, n_frames); hidden state lives in persistent VMEM scratch.
#   Only the recurrence + to_output_latent stack run here; the to_output stack
#   (which does not feed the recurrence) is batched afterwards (kernel 5).
# =============================================================================
def _coe_kernel(emb_ref, w_ref, b_ref, leak_ref,
                wol_ref, bol_ref, gol_ref, btol_ref,
                ol_out_ref, on_out_ref, hidden_ref):
    f = pl.program_id(1)
    n_imp = emb_ref.shape[0]

    @pl.when(f == 0)
    def _():
        hidden_ref[...] = jnp.zeros_like(hidden_ref)

    @pl.when(f < n_imp)
    def _():
        hidden_ref[...] = hidden_ref[...] + emb_ref[f]

    hidden = hidden_ref[...]
    w = w_ref[0]
    b = b_ref[0]
    leak = leak_ref[0]

    current_norm = jnp.sqrt(jnp.sum(hidden * hidden, axis=-1, keepdims=True))
    hidden = hidden * w + b
    hidden = _k_unit_norm(hidden) * current_norm

    out_latent = _apply_stack_refs(hidden, wol_ref, bol_ref, gol_ref, btol_ref)
    out_latent = _k_unit_norm(out_latent)
    out_latent = out_latent * (current_norm * leak)
    out_norm = jnp.sqrt(jnp.sum(out_latent * out_latent, axis=-1, keepdims=True))

    hidden = hidden - out_latent
    hidden = _k_unit_norm(hidden) * (current_norm - out_norm)

    hidden_ref[...] = hidden
    ol_out_ref[0] = out_latent
    on_out_ref[0] = out_norm


def run_coe(emb_k, w_k, b_k, leak_k, ol):
    """emb_k: (Fi, R, C), w_k/b_k: (Fn, R, C), leak_k: (Fn, R, 1).
    Returns (out_latent (Fn, R, C), out_norm (Fn, R, 1))."""
    n_imp, R, C = emb_k.shape
    Fn = w_k.shape[0]
    tile_r = _pick_row_tile(R)
    return pl.pallas_call(
        _coe_kernel,
        out_shape=(jax.ShapeDtypeStruct((Fn, R, C), jnp.float32),
                   jax.ShapeDtypeStruct((Fn, R, 1), jnp.float32)),
        grid=(pl.cdiv(R, tile_r), Fn),
        in_specs=[
            # impulse embedding stays VMEM resident (small); per-frame blocks
            # of w / b / leak are streamed (double-buffered by Pallas).
            pl.BlockSpec((n_imp, tile_r, C), lambda i, f: (0, i, 0)),
            pl.BlockSpec((1, tile_r, C), lambda i, f: (f, i, 0)),
            pl.BlockSpec((1, tile_r, C), lambda i, f: (f, i, 0)),
            pl.BlockSpec((1, tile_r, 1), lambda i, f: (f, i, 0)),
            pl.BlockSpec((4, C, C), lambda i, f: (0, 0, 0)),
            pl.BlockSpec((4, 1, C), lambda i, f: (0, 0, 0)),
            pl.BlockSpec((3, 1, C), lambda i, f: (0, 0, 0)),
            pl.BlockSpec((3, 1, C), lambda i, f: (0, 0, 0)),
        ],
        out_specs=(pl.BlockSpec((1, tile_r, C), lambda i, f: (f, i, 0)),
                   pl.BlockSpec((1, tile_r, 1), lambda i, f: (f, i, 0))),
        scratch_shapes=[pltpu.VMEM((tile_r, C), jnp.float32)],
        compiler_params=pltpu.CompilerParams(
            dimension_semantics=("parallel", "arbitrary"),
            vmem_limit_bytes=VMEM_LIMIT),
    )(emb_k, w_k, b_k, leak_k, ol['w'], ol['b'], ol['g'], ol['beta'])


# =============================================================================
# Kernel 5: batched frame synthesis (to_output stack + window + unit-norm)
#   pulled off the serial frame loop -> large MXU-friendly tiles.
# =============================================================================
def _frame_synth_kernel(x_ref, n_ref, w_ref, b_ref, g_ref, bt_ref, win_ref, o_ref):
    h = _apply_stack_refs(x_ref[...], w_ref, b_ref, g_ref, bt_ref)
    h = h * win_ref[...]
    h = _k_unit_norm(h)
    o_ref[...] = h * n_ref[...]


def pallas_frame_synth(x, norms, p, win, tile_m=512):
    M, C = x.shape
    tm = _pick_tile_m(M, tile_m)
    return pl.pallas_call(
        _frame_synth_kernel,
        out_shape=jax.ShapeDtypeStruct((M, C), jnp.float32),
        grid=(pl.cdiv(M, tm),),
        in_specs=[
            pl.BlockSpec((tm, C), lambda i: (i, 0)),
            pl.BlockSpec((tm, 1), lambda i: (i, 0)),
            pl.BlockSpec((4, C, C), lambda i: (0, 0, 0)),
            pl.BlockSpec((4, 1, C), lambda i: (0, 0, 0)),
            pl.BlockSpec((3, 1, C), lambda i: (0, 0, 0)),
            pl.BlockSpec((3, 1, C), lambda i: (0, 0, 0)),
            pl.BlockSpec((1, C), lambda i: (0, 0)),
        ],
        out_specs=pl.BlockSpec((tm, C), lambda i: (i, 0)),
        compiler_params=pltpu.CompilerParams(
            dimension_semantics=("parallel",),
            vmem_limit_bytes=VMEM_LIMIT),
    )(x.astype(jnp.bfloat16), norms, p['w'], p['b'], p['g'], p['beta'], win)


# =============================================================================
# Plain-JAX glue (dense framing / OLA, FFT, parameter setup)
# =============================================================================
def unit_norm(x, axis=-1, eps=1e-8):
    n = jnp.linalg.norm(x, axis=axis, keepdims=True)
    return x / (n + eps)


def hamming_window(n):
    # torch.hamming_window(periodic=True)
    return (0.54 - 0.46 * jnp.cos(2.0 * jnp.pi * jnp.arange(n) / n)).astype(jnp.float32)


def windowed_audio(x, window, step):
    # x: (B, E, S) -> (B, E, S // step, window).  window == 2*step, so each
    # frame is two adjacent step-sized halves (dense reshape, no gather).
    # TODO(synk): `windowed_audio` source not provided; assuming pad-by-step,
    # unfold, hamming analysis window.
    Bb, E, S = x.shape
    n_fr = S // step
    halves = x.reshape(Bb, E, n_fr, step)
    nxt = jnp.concatenate(
        [halves[:, :, 1:], jnp.zeros((Bb, E, 1, step), x.dtype)], axis=2)
    frames = jnp.concatenate([halves, nxt], axis=-1)
    return frames * hamming_window(window)


def overlap_add(frames, step):
    # frames: (B, E, F, W) with W == 2*step -> (B, E, (F+1)*step).
    # 50% overlap -> two shifted dense adds instead of a scatter.
    Bb, E, Fn, W = frames.shape
    first = frames[..., :step]
    second = frames[..., step:]
    first = jnp.concatenate(
        [first, jnp.zeros((Bb, E, 1, step), frames.dtype)], axis=2)
    second = jnp.concatenate(
        [jnp.zeros((Bb, E, 1, step), frames.dtype), second], axis=2)
    return (first + second).reshape(Bb, E, (Fn + 1) * step)


def fft_convolve(a, b):
    # TODO(synk): no FFT primitive in Pallas/Mosaic; done with jnp.fft (XLA op).
    n = a.shape[-1]
    a = jnp.pad(a, [(0, 0)] * (a.ndim - 1) + [(0, n)])
    b = jnp.pad(b, [(0, 0)] * (b.ndim - 1) + [(0, n)])
    spec = jnp.fft.rfft(a, axis=-1) * jnp.fft.rfft(b, axis=-1)
    return jnp.fft.irfft(spec, n=2 * n, axis=-1)


# --- GenerateImpulse (stand-in) ----------------------------------------------
def generate_impulse(p, embeddings):
    # TODO(synk): ConvUpsample / NoiseModel sources not provided; stand-in is a
    # 2-layer MLP producing a sigmoid^2 envelope that gates a fixed noise vector.
    Bb, E, L = embeddings.shape
    x = embeddings.reshape(Bb * E, L)
    h = pallas_linear(x, p['w1'], p['b1'])
    h = jnp.where(h > 0, h, 0.2 * h)
    env = jax.nn.sigmoid(pallas_linear(h, p['w2'], p['b2'])) ** 2
    imp = env * p['noise']
    return imp.reshape(Bb, E, IMPULSE_SIZE)


# --- RecurrentConservationOfEnergyModel --------------------------------------
def rcoe_forward(p, embedding, impulse):
    Bb, E, L = embedding.shape
    C, Fn, step = RES_CHANNELS, RES_FRAMES, RES_STEP

    # to_shape_deformations (ConvUpsample 'learned') approximated by a single
    # learned linear latent -> channels * n_frames.
    # TODO(synk): ConvUpsample source not provided.
    x = embedding.reshape(Bb * E, L)
    defo = pallas_linear(x, p['def_w'], p['def_b']).reshape(Bb, E, C, Fn)
    defo = unit_norm(defo, axis=2)
    defo = jnp.transpose(defo, (0, 1, 3, 2))                      # (B, E, F, C)

    # fused [to_weight | to_bias] (lane-dense 2C) + separate narrow leakage
    d2 = defo.reshape(Bb * E * Fn, C)
    wb, leak_full = pallas_wbl(d2, p['wb_w'], p['wb_b'], p['lk_w'], p['lk_b'])
    weights = wb[:, :C].reshape(Bb, E, Fn, C)
    biases = wb[:, C:2 * C].reshape(Bb, E, Fn, C)
    leak = leak_full[:, :1].reshape(Bb, E, Fn, 1)                 # already 0.1+sig*0.98

    windowed = windowed_audio(impulse, C, step)                   # (B, E, Fi, C)
    norms = jnp.linalg.norm(windowed, axis=-1, keepdims=True)
    emb = pallas_stack(windowed.reshape(-1, C), p['embed_impulse'])
    emb = emb.reshape(Bb, E, -1, C)
    emb = unit_norm(emb, axis=-1) * norms

    R = Bb * E
    to_fr = lambda t: jnp.transpose(t, (2, 0, 1, 3)).reshape(t.shape[2], R, t.shape[3])
    emb_k = to_fr(emb)                                            # (Fi, R, C)
    w_k = to_fr(weights)                                          # (Fn, R, C)
    b_k = to_fr(biases)
    leak_k = to_fr(leak)                                          # (Fn, R, 1)

    # serial recurrence (frame axis streamed), then batched frame synthesis
    out_latent, out_norm = run_coe(emb_k, w_k, b_k, leak_k, p['to_output_latent'])
    frames = pallas_frame_synth(out_latent.reshape(Fn * R, C),
                                out_norm.reshape(Fn * R, 1),
                                p['to_output'],
                                hamming_window(C).reshape(1, C))

    frames = jnp.transpose(frames.reshape(Fn, Bb, E, C), (1, 2, 0, 3))
    out = overlap_add(frames, step)[..., :RESONANCE_SIZE]
    return out.reshape(Bb, N_EVENTS, RESONANCE_SIZE)


# --- Model.generate / Model.forward -------------------------------------------
def model_generate(params, encoded, one_hot, packed):
    Bb = encoded.shape[0]
    ctxt = jnp.sum(encoded, axis=-1)                               # (B, ENC_CHANNELS)
    oh_rows = one_hot.reshape(Bb * N_EVENTS, ENC_CHANNELS)

    # fused [embed_memory_context | embed_context | embed_one_hot] projection,
    # one lane-dense launch instead of three tiny-M masked-store launches.
    stacked = jnp.concatenate([ctxt, oh_rows], axis=0)             # (B + B*E, ENC)
    proj = pallas_linear(stacked, params['ctx_fused_w'], params['ctx_fused_b'])
    dense = proj[:Bb, :CONTEXT_DIM]                                # (B, CONTEXT_DIM)
    ce = proj[:Bb, CONTEXT_DIM:CONTEXT_DIM + MODEL_DIM]            # (B, MODEL_DIM)
    oh = proj[Bb:, CONTEXT_DIM + MODEL_DIM:CONTEXT_DIM + 2 * MODEL_DIM]
    oh = oh.reshape(Bb, N_EVENTS, MODEL_DIM)
    embeddings = ce[:, None, :] + oh

    imp = generate_impulse(params['imp'], embeddings)              # (B, E, IMPULSE_SIZE)
    mixed = rcoe_forward(params['res'], embeddings, imp)           # (B, E, RESONANCE_SIZE)

    padded = jnp.pad(imp, ((0, 0), (0, 0), (0, RESONANCE_SIZE - IMPULSE_SIZE)))
    mixed = mixed + padded

    final = jnp.pad(mixed, ((0, 0), (0, 0), (0, N_SAMPLES - RESONANCE_SIZE)))
    # dense upsample of packed (no scatter): zeros between samples via pad+reshape
    up = jnp.pad(packed[..., None], ((0, 0), (0, 0), (0, 0), (0, UP_STRIDE - 1)))
    up = up.reshape(Bb, N_EVENTS, N_SAMPLES)
    final = fft_convolve(final, up)[..., :N_SAMPLES]

    # TODO(synk): ReverbGenerator source not provided; verb is identity here
    # (`dense` is computed but unused, matching the stubbed reverb path).
    del dense
    return final, imp


def model_forward(params, encoded, one_hot, packed):
    # TODO(synk): UNet encoder / stft / sparsify2 sources not provided; this
    # forward starts from the sparse encoding (encoded, packed, one_hot).
    encoded = jax.nn.relu(encoded)
    final, imp = model_generate(params, encoded, one_hot, packed)
    return final, encoded, imp


# =============================================================================
# Deterministic parameter init (weight_init = 0.1 -> uniform(-0.1, 0.1))
# Matmul weights are stored in bf16 ONCE here (no per-forward astype).
# =============================================================================
def _uniform(key, shape, scale=0.1):
    return jax.random.uniform(key, shape, jnp.float32, -scale, scale)


def init_stack_params(key, c):
    k = jax.random.split(key, 4)
    return {
        'w': jnp.stack([_uniform(k[j], (c, c)) for j in range(4)]).astype(jnp.bfloat16),
        'b': jnp.zeros((4, 1, c), jnp.float32),
        'g': jnp.ones((3, 1, c), jnp.float32),
        'beta': jnp.zeros((3, 1, c), jnp.float32),
    }


def init_params(key):
    keys = jax.random.split(key, 13)
    C = RES_CHANNELS

    # fused [mem (16) | ctx (64) | oh (64)] weight, padded to a 128-lane multiple
    mem_w = _uniform(keys[0], (ENC_CHANNELS, CONTEXT_DIM))
    ctx_w = _uniform(keys[1], (ENC_CHANNELS, MODEL_DIM))
    oh_w = _uniform(keys[2], (ENC_CHANNELS, MODEL_DIM))
    ctx_width = _round_up(CONTEXT_DIM + 2 * MODEL_DIM, 128)
    ctx_fused_w = jnp.zeros((ENC_CHANNELS, ctx_width), jnp.float32)
    ctx_fused_w = ctx_fused_w.at[:, :CONTEXT_DIM].set(mem_w)
    ctx_fused_w = ctx_fused_w.at[:, CONTEXT_DIM:CONTEXT_DIM + MODEL_DIM].set(ctx_w)
    ctx_fused_w = ctx_fused_w.at[:, CONTEXT_DIM + MODEL_DIM:
                                 CONTEXT_DIM + 2 * MODEL_DIM].set(oh_w)
    ctx_fused_b = jnp.zeros((ctx_width,), jnp.float32)

    # fused [to_weight (C) | to_bias (C)] weight (lane-dense 2C), leakage separate
    tw_w = _uniform(keys[7], (C, C))
    tb_w = _uniform(keys[8], (C, C))
    tl_w = _uniform(keys[9], (C, 1))
    wb_w = jnp.concatenate([tw_w, tb_w], axis=1)                   # (C, 2C)
    wb_b = jnp.zeros((2 * C,), jnp.float32)
    lk_width = 128
    lk_w = jnp.zeros((C, lk_width), jnp.float32).at[:, :1].set(tl_w)
    lk_b = jnp.zeros((lk_width,), jnp.float32)

    return {
        'ctx_fused_w': ctx_fused_w.astype(jnp.bfloat16),
        'ctx_fused_b': ctx_fused_b,
        'imp': {
            'w1': _uniform(keys[3], (MODEL_DIM, MODEL_DIM)).astype(jnp.bfloat16),
            'b1': jnp.zeros((MODEL_DIM,), jnp.float32),
            'w2': _uniform(keys[4], (MODEL_DIM, IMPULSE_SIZE)).astype(jnp.bfloat16),
            'b2': jnp.zeros((IMPULSE_SIZE,), jnp.float32),
            'noise': jax.random.uniform(keys[5], (1, IMPULSE_SIZE), jnp.float32, -1.0, 1.0),
        },
        'res': {
            'def_w': _uniform(keys[6], (MODEL_DIM, C * RES_FRAMES)).astype(jnp.bfloat16),
            'def_b': jnp.zeros((C * RES_FRAMES,), jnp.float32),
            'wb_w': wb_w.astype(jnp.bfloat16),
            'wb_b': wb_b,
            'lk_w': lk_w.astype(jnp.bfloat16),
            'lk_b': lk_b,
            'embed_impulse': init_stack_params(keys[10], C),
            'to_output_latent': init_stack_params(keys[11], C),
            'to_output': init_stack_params(keys[12], C),
        },
    }


if __name__ == "__main__":
    key = jax.random.PRNGKey(0)
    k_p, k_enc, k_oh, k_t, k_amp = jax.random.split(key, 5)
    params = init_params(k_p)

    encoded = jax.random.normal(k_enc, (B, ENC_CHANNELS, TIME_FRAMES), jnp.float32)
    oh_idx = jax.random.randint(k_oh, (B, N_EVENTS), 0, ENC_CHANNELS)
    one_hot = jax.nn.one_hot(oh_idx, ENC_CHANNELS, dtype=jnp.float32)
    t_idx = jax.random.randint(k_t, (B, N_EVENTS), 0, TIME_FRAMES)
    amps = jax.random.uniform(k_amp, (B, N_EVENTS), jnp.float32, 0.1, 1.0)
    packed = jax.nn.one_hot(t_idx, TIME_FRAMES, dtype=jnp.float32) * amps[..., None]

    fwd = jax.jit(model_forward)
    final, enc_out, imp = fwd(params, encoded, one_hot, packed)
    jax.block_until_ready((final, enc_out, imp))

    assert final.shape == (B, N_EVENTS, N_SAMPLES)
    assert enc_out.shape == (B, ENC_CHANNELS, TIME_FRAMES)
    assert imp.shape == (B, N_EVENTS, IMPULSE_SIZE)
    assert bool(jnp.all(jnp.isfinite(final)))
    print("KERNEL_OK")
</pallas_src>

<mosaic_0001>
module attributes {stable_mosaic.version = 11 : i64} {
  func.func @_linear_kernel(%arg0: i32, %arg1: i32, %arg2: memref<8x64xbf16, #tpu.memory_space<vmem>>, %arg3: memref<64x256xbf16, #tpu.memory_space<vmem>>, %arg4: memref<1x256xf32, #tpu.memory_space<vmem>>, %arg5: memref<8x256xf32, #tpu.memory_space<vmem>>) attributes {dimension_semantics = [#tpu.dimension_semantics<parallel>, #tpu.dimension_semantics<parallel>], iteration_bounds = array<i64: 1, 1>, scalar_prefetch = 0 : i64, scratch_operands = 0 : i64, tpu.core_type = #tpu.core_type<tc>, window_params = [{transform_indices = @transform_0, window_bounds = array<i64: 8, 64>}, {transform_indices = @transform_1, window_bounds = array<i64: 64, 256>}, {transform_indices = @transform_2, window_bounds = array<i64: 1, 256>}, {transform_indices = @transform_3, window_bounds = array<i64: 8, 256>}]} {
    %c0 = arith.constant 0 : index
    %c0_0 = arith.constant 0 : index
    %0 = vector.load %arg2[%c0, %c0_0] : memref<8x64xbf16, #tpu.memory_space<vmem>>, vector<8x64xbf16>
    %c0_1 = arith.constant 0 : index
    %c0_2 = arith.constant 0 : index
    %1 = vector.load %arg3[%c0_1, %c0_2] : memref<64x256xbf16, #tpu.memory_space<vmem>>, vector<64x256xbf16>
    %cst = arith.constant dense<0.000000e+00> : vector<8x256xf32>
    %2 = tpu.matmul %0, %1, %cst {dimension_numbers = #tpu.dot_dimension_numbers<[1], [0], [0], [1], [0, 0, 1, 1], [], []>} : vector<8x64xbf16>, vector<64x256xbf16>, vector<8x256xf32> -> vector<8x256xf32>
    %c0_3 = arith.constant 0 : index
    %c0_4 = arith.constant 0 : index
    %3 = vector.load %arg4[%c0_3, %c0_4] : memref<1x256xf32, #tpu.memory_space<vmem>>, vector<1x256xf32>
    %4 = vector.broadcast %3 : vector<1x256xf32> to vector<8x256xf32>
    %5 = arith.addf %2, %4 : vector<8x256xf32>
    %c0_5 = arith.constant 0 : index
    %c0_6 = arith.constant 0 : index
    %6 = vector.load %arg5[%c0_5, %c0_6] : memref<8x256xf32, #tpu.memory_space<vmem>>, vector<8x256xf32>
    tpu.vector_store %arg5[%c0_5, %c0_6], %5 {strides = array<i32>} : memref<8x256xf32, #tpu.memory_space<vmem>>, vector<8x256xf32>,
    return
  }
  func.func @transform_0(%arg0: i32, %arg1: i32) -> (i32, i32) {
    %c0_i32 = arith.constant 0 : i32
    %c0_i32_0 = arith.constant 0 : i32
    return %arg0, %c0_i32 : i32, i32
  }
  func.func @transform_1(%arg0: i32, %arg1: i32) -> (i32, i32) {
    %c0_i32 = arith.constant 0 : i32
    %c0_i32_0 = arith.constant 0 : i32
    return %c0_i32, %arg1 : i32, i32
  }
  func.func @transform_2(%arg0: i32, %arg1: i32) -> (i32, i32) {
    %c0_i32 = arith.constant 0 : i32
    %c0_i32_0 = arith.constant 0 : i32
    return %c0_i32, %arg1 : i32, i32
  }
  func.func @transform_3(%arg0: i32, %arg1: i32) -> (i32, i32) {
    %c0_i32 = arith.constant 0 : i32
    return %arg0, %arg1 : i32, i32
  }
}

module attributes {stable_mosaic.version = 11 : i64} {
  func.func @_linear_kernel(%arg0: i32, %arg1: i32, %arg2: memref<8x64xbf16, #tpu.memory_space<vmem>>, %arg3: memref<64x64xbf16, #tpu.memory_space<vmem>>, %arg4: memref<1x64xf32, #tpu.memory_space<vmem>>, %arg5: memref<8x64xf32, #tpu.memory_space<vmem>>) attributes {dimension_semantics = [#tpu.dimension_semantics<parallel>, #tpu.dimension_semantics<parallel>], iteration_bounds = array<i64: 1, 1>, scalar_prefetch = 0 : i64, scratch_operands = 0 : i64, tpu.core_type = #tpu.core_type<tc>, window_params = [{transform_indices = @transform_0, window_bounds = array<i64: 8, 64>}, {transform_indices = @transform_1, window_bounds = array<i64: 64, 64>}, {transform_indices = @transform_2, window_bounds = array<i64: 1, 64>}, {transform_indices = @transform_3, window_bounds = array<i64: 8, 64>}]} {
    %c0 = arith.constant 0 : index
    %c0_0 = arith.constant 0 : index
    %0 = vector.load %arg2[%c0, %c0_0] : memref<8x64xbf16, #tpu.memory_space<vmem>>, vector<8x64xbf16>
    %c0_1 = arith.constant 0 : index
    %c0_2 = arith.constant 0 : index
    %1 = vector.load %arg3[%c0_1, %c0_2] : memref<64x64xbf16, #tpu.memory_space<vmem>>, vector<64x64xbf16>
    %cst = arith.constant dense<0.000000e+00> : vector<8x64xf32>
    %2 = tpu.matmul %0, %1, %cst {dimension_numbers = #tpu.dot_dimension_numbers<[1], [0], [0], [1], [0, 0, 1, 1], [], []>} : vector<8x64xbf16>, vector<64x64xbf16>, vector<8x64xf32> -> vector<8x64xf32>
    %c0_3 = arith.constant 0 : index
    %c0_4 = arith.constant 0 : index
    %3 = vector.load %arg4[%c0_3, %c0_4] : memref<1x64xf32, #tpu.memory_space<vmem>>, vector<1x64xf32>
    %4 = vector.broadcast %3 : vector<1x64xf32> to vector<8x64xf32>
    %5 = arith.addf %2, %4 : vector<8x64xf32>
    %c0_5 = arith.constant 0 : index
    %c0_6 = arith.constant 0 : index
    %6 = vector.load %arg5[%c0_5, %c0_6] : memref<8x64xf32, #tpu.memory_space<vmem>>, vector<8x64xf32>
    tpu.vector_store %arg5[%c0_5, %c0_6], %5 {strides = array<i32>} : memref<8x64xf32, #tpu.memory_space<vmem>>, vector<8x64xf32>,
    return
  }
  func.func @transform_0(%arg0: i32, %arg1: i32) -> (i32, i32) {
    %c0_i32 = arith.constant 0 : i32
    %c0_i32_0 = arith.constant 0 : i32
    return %arg0, %c0_i32 : i32, i32
  }
  func.func @transform_1(%arg0: i32, %arg1: i32) -> (i32, i32) {
    %c0_i32 = arith.constant 0 : i32
    %c0_i32_0 = arith.constant 0 : i32
    return %c0_i32, %arg1 : i32, i32
  }
  func.func @transform_2(%arg0: i32, %arg1: i32) -> (i32, i32) {
    %c0_i32 = arith.constant 0 : i32
    %c0_i32_0 = arith.constant 0 : i32
    return %c0_i32, %arg1 : i32, i32
  }
  func.func @transform_3(%arg0: i32, %arg1: i32) -> (i32, i32) {
    %c0_i32 = arith.constant 0 : i32
    return %arg0, %arg1 : i32, i32
  }
}

module attributes {stable_mosaic.version = 11 : i64} {
  func.func @_linear_kernel(%arg0: i32, %arg1: i32, %arg2: memref<10x256xbf16, #tpu.memory_space<vmem>>, %arg3: memref<256x256xbf16, #tpu.memory_space<vmem>>, %arg4: memref<1x256xf32, #tpu.memory_space<vmem>>, %arg5: memref<10x256xf32, #tpu.memory_space<vmem>>) attributes {dimension_semantics = [#tpu.dimension_semantics<parallel>, #tpu.dimension_semantics<parallel>], iteration_bounds = array<i64: 1, 1>, scalar_prefetch = 0 : i64, scratch_operands = 0 : i64, tpu.core_type = #tpu.core_type<tc>, window_params = [{transform_indices = @transform_0, window_bounds = array<i64: 10, 256>}, {transform_indices = @transform_1, window_bounds = array<i64: 256, 256>}, {transform_indices = @transform_2, window_bounds = array<i64: 1, 256>}, {transform_indices = @transform_3, window_bounds = array<i64: 10, 256>}]} {
    %c0 = arith.constant 0 : index
    %c0_0 = arith.constant 0 : index
    %0 = vector.load %arg2[%c0, %c0_0] : memref<10x256xbf16, #tpu.memory_space<vmem>>, vector<10x256xbf16>
    %c0_1 = arith.constant 0 : index
    %c0_2 = arith.constant 0 : index
    %1 = vector.load %arg3[%c0_1, %c0_2] : memref<256x256xbf16, #tpu.memory_space<vmem>>, vector<256x256xbf16>
    %cst = arith.constant dense<0.000000e+00> : vector<10x256xf32>
    %2 = tpu.matmul %0, %1, %cst {dimension_numbers = #tpu.dot_dimension_numbers<[1], [0], [0], [1], [0, 0, 1, 1], [], []>} : vector<10x256xbf16>, vector<256x256xbf16>, vector<10x256xf32> -> vector<10x256xf32>
    %c0_3 = arith.constant 0 : index
    %c0_4 = arith.constant 0 : index
    %3 = vector.load %arg4[%c0_3, %c0_4] : memref<1x256xf32, #tpu.memory_space<vmem>>, vector<1x256xf32>
    %4 = vector.broadcast %3 : vector<1x256xf32> to vector<10x256xf32>
    %5 = arith.addf %2, %4 : vector<10x256xf32>
    %c0_5 = arith.constant 0 : index
    %c0_6 = arith.constant 0 : index
    %6 = vector.load %arg5[%c0_5, %c0_6] : memref<10x256xf32, #tpu.memory_space<vmem>>, vector<10x256xf32>
    tpu.vector_store %arg5[%c0_5, %c0_6], %5 {strides = array<i32>} : memref<10x256xf32, #tpu.memory_space<vmem>>, vector<10x256xf32>,
    return
  }
  func.func @transform_0(%arg0: i32, %arg1: i32) -> (i32, i32) {
    %c0_i32 = arith.constant 0 : i32
    %c0_i32_0 = arith.constant 0 : i32
    return %arg0, %c0_i32 : i32, i32
  }
  func.func @transform_1(%arg0: i32, %arg1: i32) -> (i32, i32) {
    %c0_i32 = arith.constant 0 : i32
    %c0_i32_0 = arith.constant 0 : i32
    return %c0_i32, %arg1 : i32, i32
  }
  func.func @transform_2(%arg0: i32, %arg1: i32) -> (i32, i32) {
    %c0_i32 = arith.constant 0 : i32
    %c0_i32_0 = arith.constant 0 : i32
    return %c0_i32, %arg1 : i32, i32
  }
  func.func @transform_3(%arg0: i32, %arg1: i32) -> (i32, i32) {
    %c0_i32 = arith.constant 0 : i32
    return %arg0, %arg1 : i32, i32
  }
}

module attributes {stable_mosaic.version = 11 : i64} {
  func.func @_stack_kernel(%arg0: i32, %arg1: memref<32x64xbf16, #tpu.memory_space<vmem>>, %arg2: memref<4x64x64xbf16, #tpu.memory_space<vmem>>, %arg3: memref<4x1x64xf32, #tpu.memory_space<vmem>>, %arg4: memref<3x1x64xf32, #tpu.memory_space<vmem>>, %arg5: memref<3x1x64xf32, #tpu.memory_space<vmem>>, %arg6: memref<32x64xf32, #tpu.memory_space<vmem>>) attributes {dimension_semantics = [#tpu.dimension_semantics<parallel>], iteration_bounds = array<i64: 2>, scalar_prefetch = 0 : i64, scratch_operands = 0 : i64, tpu.core_type = #tpu.core_type<tc>, window_params = [{transform_indices = @transform_0, window_bounds = array<i64: 32, 64>}, {pipeline_mode = #tpu.pipeline_mode<synchronous>, transform_indices = @transform_1, window_bounds = array<i64: 4, 64, 64>}, {pipeline_mode = #tpu.pipeline_mode<synchronous>, transform_indices = @transform_2, window_bounds = array<i64: 4, 1, 64>}, {pipeline_mode = #tpu.pipeline_mode<synchronous>, transform_indices = @transform_3, window_bounds = array<i64: 3, 1, 64>}, {pipeline_mode = #tpu.pipeline_mode<synchronous>, transform_indices = @transform_4, window_bounds = array<i64: 3, 1, 64>}, {transform_indices = @transform_5, window_bounds = array<i64: 32, 64>}]} {
    %c0 = arith.constant 0 : index
    %c0_0 = arith.constant 0 : index
    %0 = vector.load %arg1[%c0, %c0_0] : memref<32x64xbf16, #tpu.memory_space<vmem>>, vector<32x64xbf16>
    %c0_1 = arith.constant 0 : index
    %c0_2 = arith.constant 0 : index
    %c0_3 = arith.constant 0 : index
    %1 = vector.load %arg2[%c0_1, %c0_2, %c0_3] : memref<4x64x64xbf16, #tpu.memory_space<vmem>>, vector<1x64x64xbf16>
    %2 = vector.shape_cast %1 : vector<1x64x64xbf16> to vector<64x64xbf16>
    %cst = arith.constant dense<0.000000e+00> : vector<32x64xf32>
    %3 = tpu.matmul %0, %2, %cst {dimension_numbers = #tpu.dot_dimension_numbers<[1], [0], [0], [1], [0, 0, 1, 1], [], []>} : vector<32x64xbf16>, vector<64x64xbf16>, vector<32x64xf32> -> vector<32x64xf32>
    %c0_4 = arith.constant 0 : index
    %c0_5 = arith.constant 0 : index
    %c0_6 = arith.constant 0 : index
    %4 = vector.load %arg3[%c0_4, %c0_5, %c0_6] : memref<4x1x64xf32, #tpu.memory_space<vmem>>, vector<1x1x64xf32>
    %5 = vector.shape_cast %4 : vector<1x1x64xf32> to vector<1x64xf32>
    %6 = vector.broadcast %5 : vector<1x64xf32> to vector<32x64xf32>
    %7 = arith.addf %3, %6 : vector<32x64xf32>
    %cst_7 = arith.constant 0.000000e+00 : f32
    %8 = vector.broadcast %cst_7 : f32 to vector<32x64xf32>
    %9 = arith.cmpf ogt, %7, %8 : vector<32x64xf32>
    %cst_8 = arith.constant 2.000000e-01 : f32
    %10 = vector.broadcast %cst_8 : f32 to vector<32x64xf32>
    %11 = arith.mulf %10, %7 : vector<32x64xf32>
    %12 = arith.select %9, %7, %11 : vector<32x64xi1>, vector<32x64xf32>
    %c0_9 = arith.constant 0 : index
    %c0_10 = arith.constant 0 : index
    %c0_11 = arith.constant 0 : index
    %13 = vector.load %arg4[%c0_9, %c0_10, %c0_11] : memref<3x1x64xf32, #tpu.memory_space<vmem>>, vector<1x1x64xf32>
    %14 = vector.shape_cast %13 : vector<1x1x64xf32> to vector<1x64xf32>
    %c0_12 = arith.constant 0 : index
    %c0_13 = arith.constant 0 : index
    %c0_14 = arith.constant 0 : index
    %15 = vector.load %arg5[%c0_12, %c0_13, %c0_14] : memref<3x1x64xf32, #tpu.memory_space<vmem>>, vector<1x1x64xf32>
    %16 = vector.shape_cast %15 : vector<1x1x64xf32> to vector<1x64xf32>
    %cst_15 = arith.constant dense<0.000000e+00> : vector<32xf32>
    %17 = vector.multi_reduction <add>, %12, %cst_15 [1] : vector<32x64xf32> to vector<32xf32>
    %18 = vector.shape_cast %17 : vector<32xf32> to vector<32x1xf32>
    %cst_16 = arith.constant 6.400000e+01 : f32
    %19 = vector.broadcast %cst_16 : f32 to vector<32x1xf32>
    %20 = arith.divf %18, %19 : vector<32x1xf32>
    %21 = vector.broadcast %20 : vector<32x1xf32> to vector<32x64xf32>
    %22 = arith.subf %12, %21 : vector<32x64xf32>
    %23 = arith.mulf %22, %22 : vector<32x64xf32>
    %cst_17 = arith.constant dense<0.000000e+00> : vector<32xf32>
    %24 = vector.multi_reduction <add>, %23, %cst_17 [1] : vector<32x64xf32> to vector<32xf32>
    %25 = vector.shape_cast %24 : vector<32xf32> to vector<32x1xf32>
    %cst_18 = arith.constant 6.400000e+01 : f32
    %26 = vector.broadcast %cst_18 : f32 to vector<32x1xf32>
    %27 = arith.divf %25, %26 : vector<32x1xf32>
    %28 = vector.broadcast %20 : vector<32x1xf32> to vector<32x64xf32>
    %29 = arith.subf %12, %28 : vector<32x64xf32>
    %cst_19 = arith.constant 9.99999974E-6 : f32
    %30 = vector.broadcast %cst_19 : f32 to vector<32x1xf32>
    %31 = arith.addf %27, %30 : vector<32x1xf32>
    %32 = math.rsqrt %31 : vector<32x1xf32>
    %33 = vector.broadcast %32 : vector<32x1xf32> to vector<32x64xf32>
    %34 = arith.mulf %29, %33 : vector<32x64xf32>
    %35 = vector.broadcast %14 : vector<1x64xf32> to vector<32x64xf32>
    %36 = arith.mulf %34, %35 : vector<32x64xf32>
    %37 = vector.broadcast %16 : vector<1x64xf32> to vector<32x64xf32>
    %38 = arith.addf %36, %37 : vector<32x64xf32>
    %39 = arith.truncf %38 : vector<32x64xf32> to vector<32x64xbf16>
    %c1 = arith.constant 1 : index
    %c0_20 = arith.constant 0 : index
    %c0_21 = arith.constant 0 : index
    %40 = vector.load %arg2[%c1, %c0_20, %c0_21] : memref<4x64x64xbf16, #tpu.memory_space<vmem>>, vector<1x64x64xbf16>
    %41 = vector.shape_cast %40 : vector<1x64x64xbf16> to vector<64x64xbf16>
    %cst_22 = arith.constant dense<0.000000e+00> : vector<32x64xf32>
    %42 = tpu.matmul %39, %41, %cst_22 {dimension_numbers = #tpu.dot_dimension_numbers<[1], [0], [0], [1], [0, 0, 1, 1], [], []>} : vector<32x64xbf16>, vector<64x64xbf16>, vector<32x64xf32> -> vector<32x64xf32>
    %c1_23 = arith.constant 1 : index
    %c0_24 = arith.constant 0 : index
    %c0_25 = arith.constant 0 : index
    %43 = vector.load %arg3[%c1_23, %c0_24, %c0_25] : memref<4x1x64xf32, #tpu.memory_space<vmem>>, vector<1x1x64xf32>
    %44 = vector.shape_cast %43 : vector<1x1x64xf32> to vector<1x64xf32>
    %45 = vector.broadcast %44 : vector<1x64xf32> to vector<32x64xf32>
    %46 = arith.addf %42, %45 : vector<32x64xf32>
    %cst_26 = arith.constant 0.000000e+00 : f32
    %47 = vector.broadcast %cst_26 : f32 to vector<32x64xf32>
    %48 = arith.cmpf ogt, %46, %47 : vector<32x64xf32>
    %cst_27 = arith.constant 2.000000e-01 : f32
    %49 = vector.broadcast %cst_27 : f32 to vector<32x64xf32>
    %50 = arith.mulf %49, %46 : vector<32x64xf32>
    %51 = arith.select %48, %46, %50 : vector<32x64xi1>, vector<32x64xf32>
    %c1_28 = arith.constant 1 : index
    %c0_29 = arith.constant 0 : index
    %c0_30 = arith.constant 0 : index
    %52 = vector.load %arg4[%c1_28, %c0_29, %c0_30] : memref<3x1x64xf32, #tpu.memory_space<vmem>>, vector<1x1x64xf32>
    %53 = vector.shape_cast %52 : vector<1x1x64xf32> to vector<1x64xf32>
    %c1_31 = arith.constant 1 : index
    %c0_32 = arith.constant 0 : index
    %c0_33 = arith.constant 0 : index
    %54 = vector.load %arg5[%c1_31, %c0_32, %c0_33] : memref<3x1x64xf32, #tpu.memory_space<vmem>>, vector<1x1x64xf32>
    %55 = vector.shape_cast %54 : vector<1x1x64xf32> to vector<1x64xf32>
    %cst_34 = arith.constant dense<0.000000e+00> : vector<32xf32>
    %56 = vector.multi_reduction <add>, %51, %cst_34 [1] : vector<32x64xf32> to vector<32xf32>
    %57 = vector.shape_cast %56 : vector<32xf32> to vector<32x1xf32>
    %cst_35 = arith.constant 6.400000e+01 : f32
    %58 = vector.broadcast %cst_35 : f32 to vector<32x1xf32>
    %59 = arith.divf %57, %58 : vector<32x1xf32>
    %60 = vector.broadcast %59 : vector<32x1xf32> to vector<32x64xf32>
    %61 = arith.subf %51, %60 : vector<32x64xf32>
    %62 = arith.mulf %61, %61 : vector<32x64xf32>
    %cst_36 = arith.constant dense<0.000000e+00> : vector<32xf32>
    %63 = vector.multi_reduction <add>, %62, %cst_36 [1] : vector<32x64xf32> to vector<32xf32>
    %64 = vector.shape_cast %63 : vector<32xf32> to vector<32x1xf32>
    %cst_37 = arith.constant 6.400000e+01 : f32
    %65 = vector.broadcast %cst_37 : f32 to vector<32x1xf32>
    %66 = arith.divf %64, %65 : vector<32x1xf32>
    %67 = vector.broadcast %59 : vector<32x1xf32> to vector<32x64xf32>
    %68 = arith.subf %51, %67 : vector<32x64xf32>
    %cst_38 = arith.constant 9.99999974E-6 : f32
    %69 = vector.broadcast %cst_38 : f32 to vector<32x1xf32>
    %70 = arith.addf %66, %69 : vector<32x1xf32>
    %71 = math.rsqrt %70 : vector<32x1xf32>
    %72 = vector.broadcast %71 : vector<32x1xf32> to vector<32x64xf32>
    %73 = arith.mulf %68, %72 : vector<32x64xf32>
    %74 = vector.broadcast %53 : vector<1x64xf32> to vector<32x64xf32>
    %75 = arith.mulf %73, %74 : vector<32x64xf32>
    %76 = vector.broadcast %55 : vector<1x64xf32> to vector<32x64xf32>
    %77 = arith.addf %75, %76 : vector<32x64xf32>
    %78 = arith.truncf %77 : vector<32x64xf32> to vector<32x64xbf16>
    %c2 = arith.constant 2 : index
    %c0_39 = arith.constant 0 : index
    %c0_40 = arith.constant 0 : index
    %79 = vector.load %arg2[%c2, %c0_39, %c0_40] : memref<4x64x64xbf16, #tpu.memory_space<vmem>>, vector<1x64x64xbf16>
    %80 = vector.shape_cast %79 : vector<1x64x64xbf16> to vector<64x64xbf16>
    %cst_41 = arith.constant dense<0.000000e+00> : vector<32x64xf32>
    %81 = tpu.matmul %78, %80, %cst_41 {dimension_numbers = #tpu.dot_dimension_numbers<[1], [0], [0], [1], [0, 0, 1, 1], [], []>} : vector<32x64xbf16>, vector<64x64xbf16>, vector<32x64xf32> -> vector<32x64xf32>
    %c2_42 = arith.constant 2 : index
    %c0_43 = arith.constant 0 : index
    %c0_44 = arith.constant 0 : index
    %82 = vector.load %arg3[%c2_42, %c0_43, %c0_44] : memref<4x1x64xf32, #tpu.memory_space<vmem>>, vector<1x1x64xf32>
    %83 = vector.shape_cast %82 : vector<1x1x64xf32> to vector<1x64xf32>
    %84 = vector.broadcast %83 : vector<1x64xf32> to vector<32x64xf32>
    %85 = arith.addf %81, %84 : vector<32x64xf32>
    %cst_45 = arith.constant 0.000000e+00 : f32
    %86 = vector.broadcast %cst_45 : f32 to vector<32x64xf32>
    %87 = arith.cmpf ogt, %85, %86 : vector<32x64xf32>
    %cst_46 = arith.constant 2.000000e-01 : f32
    %88 = vector.broadcast %cst_46 : f32 to vector<32x64xf32>
    %89 = arith.mulf %88, %85 : vector<32x64xf32>
    %90 = arith.select %87, %85, %89 : vector<32x64xi1>, vector<32x64xf32>
    %c2_47 = arith.constant 2 : index
    %c0_48 = arith.constant 0 : index
    %c0_49 = arith.constant 0 : index
    %91 = vector.load %arg4[%c2_47, %c0_48, %c0_49] : memref<3x1x64xf32, #tpu.memory_space<vmem>>, vector<1x1x64xf32>
    %92 = vector.shape_cast %91 : vector<1x1x64xf32> to vector<1x64xf32>
    %c2_50 = arith.constant 2 : index
    %c0_51 = arith.constant 0 : index
    %c0_52 = arith.constant 0 : index
    %93 = vector.load %arg5[%c2_50, %c0_51, %c0_52] : memref<3x1x64xf32, #tpu.memory_space<vmem>>, vector<1x1x64xf32>
    %94 = vector.shape_cast %93 : vector<1x1x64xf32> to vector<1x64xf32>
    %cst_53 = arith.constant dense<0.000000e+00> : vector<32xf32>
    %95 = vector.multi_reduction <add>, %90, %cst_53 [1] : vector<32x64xf32> to vector<32xf32>
    %96 = vector.shape_cast %95 : vector<32xf32> to vector<32x1xf32>
    %cst_54 = arith.constant 6.400000e+01 : f32
    %97 = vector.broadcast %cst_54 : f32 to vector<32x1xf32>
    %98 = arith.divf %96, %97 : vector<32x1xf32>
    %99 = vector.broadcast %98 : vector<32x1xf32> to vector<32x64xf32>
    %100 = arith.subf %90, %99 : vector<32x64xf32>
    %101 = arith.mulf %100, %100 : vector<32x64xf32>
    %cst_55 = arith.constant dense<0.000000e+00> : vector<32xf32>
    %102 = vector.multi_reduction <add>, %101, %cst_55 [1] : vector<32x64xf32> to vector<32xf32>
    %103 = vector.shape_cast %102 : vector<32xf32> to vector<32x1xf32>
    %cst_56 = arith.constant 6.400000e+01 : f32
    %104 = vector.broadcast %cst_56 : f32 to vector<32x1xf32>
    %105 = arith.divf %103, %104 : vector<32x1xf32>
    %106 = vector.broadcast %98 : vector<32x1xf32> to vector<32x64xf32>
    %107 = arith.subf %90, %106 : vector<32x64xf32>
    %cst_57 = arith.constant 9.99999974E-6 : f32
    %108 = vector.broadcast %cst_57 : f32 to vector<32x1xf32>
    %109 = arith.addf %105, %108 : vector<32x1xf32>
    %110 = math.rsqrt %109 : vector<32x1xf32>
    %111 = vector.broadcast %110 : vector<32x1xf32> to vector<32x64xf32>
    %112 = arith.mulf %107, %111 : vector<32x64xf32>
    %113 = vector.broadcast %92 : vector<1x64xf32> to vector<32x64xf32>
    %114 = arith.mulf %112, %113 : vector<32x64xf32>
    %115 = vector.broadcast %94 : vector<1x64xf32> to vector<32x64xf32>
    %116 = arith.addf %114, %115 : vector<32x64xf32>
    %117 = arith.truncf %116 : vector<32x64xf32> to vector<32x64xbf16>
    %c3 = arith.constant 3 : index
    %c0_58 = arith.constant 0 : index
    %c0_59 = arith.constant 0 : index
    %118 = vector.load %arg2[%c3, %c0_58, %c0_59] : memref<4x64x64xbf16, #tpu.memory_space<vmem>>, vector<1x64x64xbf16>
    %119 = vector.shape_cast %118 : vector<1x64x64xbf16> to vector<64x64xbf16>
    %cst_60 = arith.constant dense<0.000000e+00> : vector<32x64xf32>
    %120 = tpu.matmul %117, %119, %cst_60 {dimension_numbers = #tpu.dot_dimension_numbers<[1], [0], [0], [1], [0, 0, 1, 1], [], []>} : vector<32x64xbf16>, vector<64x64xbf16>, vector<32x64xf32> -> vector<32x64xf32>
    %c3_61 = arith.constant 3 : index
    %c0_62 = arith.constant 0 : index
    %c0_63 = arith.constant 0 : index
    %121 = vector.load %arg3[%c3_61, %c0_62, %c0_63] : memref<4x1x64xf32, #tpu.memory_space<vmem>>, vector<1x1x64xf32>
    %122 = vector.shape_cast %121 : vector<1x1x64xf32> to vector<1x64xf32>
    %123 = vector.broadcast %122 : vector<1x64xf32> to vector<32x64xf32>
    %124 = arith.addf %120, %123 : vector<32x64xf32>
    %c0_64 = arith.constant 0 : index
    %c0_65 = arith.constant 0 : index
    %125 = vector.load %arg6[%c0_64, %c0_65] : memref<32x64xf32, #tpu.memory_space<vmem>>, vector<32x64xf32>
    tpu.vector_store %arg6[%c0_64, %c0_65], %124 {strides = array<i32>} : memref<32x64xf32, #tpu.memory_space<vmem>>, vector<32x64xf32>,
    return
  }
  func.func @transform_0(%arg0: i32) -> (i32, i32) {
    %c0_i32 = arith.constant 0 : i32
    %c0_i32_0 = arith.constant 0 : i32
    return %arg0, %c0_i32 : i32, i32
  }
  func.func @transform_1(%arg0: i32) -> (i32, i32, i32) {
    %c0_i32 = arith.constant 0 : i32
    %c0_i32_0 = arith.constant 0 : i32
    %c0_i32_1 = arith.constant 0 : i32
    %c0_i32_2 = arith.constant 0 : i32
    return %c0_i32, %c0_i32_0, %c0_i32_1 : i32, i32, i32
  }
  func.func @transform_2(%arg0: i32) -> (i32, i32, i32) {
    %c0_i32 = arith.constant 0 : i32
    %c0_i32_0 = arith.constant 0 : i32
    %c0_i32_1 = arith.constant 0 : i32
    %c0_i32_2 = arith.constant 0 : i32
    return %c0_i32, %c0_i32_0, %c0_i32_1 : i32, i32, i32
  }
  func.func @transform_3(%arg0: i32) -> (i32, i32, i32) {
    %c0_i32 = arith.constant 0 : i32
    %c0_i32_0 = arith.constant 0 : i32
    %c0_i32_1 = arith.constant 0 : i32
    %c0_i32_2 = arith.constant 0 : i32
    return %c0_i32, %c0_i32_0, %c0_i32_1 : i32, i32, i32
  }
  func.func @transform_4(%arg0: i32) -> (i32, i32, i32) {
    %c0_i32 = arith.constant 0 : i32
    %c0_i32_0 = arith.constant 0 : i32
    %c0_i32_1 = arith.constant 0 : i32
    %c0_i32_2 = arith.constant 0 : i32
    return %c0_i32, %c0_i32_0, %c0_i32_1 : i32, i32, i32
  }
  func.func @transform_5(%arg0: i32) -> (i32, i32) {
    %c0_i32 = arith.constant 0 : i32
    %c0_i32_0 = arith.constant 0 : i32
    return %arg0, %c0_i32 : i32, i32
  }
}

module attributes {stable_mosaic.version = 11 : i64} {
  func.func @_linear_kernel(%arg0: i32, %arg1: i32, %arg2: memref<8x64xbf16, #tpu.memory_space<vmem>>, %arg3: memref<64x2048xbf16, #tpu.memory_space<vmem>>, %arg4: memref<1x2048xf32, #tpu.memory_space<vmem>>, %arg5: memref<8x2048xf32, #tpu.memory_space<vmem>>) attributes {dimension_semantics = [#tpu.dimension_semantics<parallel>, #tpu.dimension_semantics<parallel>], iteration_bounds = array<i64: 1, 1>, scalar_prefetch = 0 : i64, scratch_operands = 0 : i64, tpu.core_type = #tpu.core_type<tc>, window_params = [{transform_indices = @transform_0, window_bounds = array<i64: 8, 64>}, {transform_indices = @transform_1, window_bounds = array<i64: 64, 2048>}, {transform_indices = @transform_2, window_bounds = array<i64: 1, 2048>}, {transform_indices = @transform_3, window_bounds = array<i64: 8, 2048>}]} {
    %c0 = arith.constant 0 : index
    %c0_0 = arith.constant 0 : index
    %0 = vector.load %arg2[%c0, %c0_0] : memref<8x64xbf16, #tpu.memory_space<vmem>>, vector<8x64xbf16>
    %c0_1 = arith.constant 0 : index
    %c0_2 = arith.constant 0 : index
    %1 = vector.load %arg3[%c0_1, %c0_2] : memref<64x2048xbf16, #tpu.memory_space<vmem>>, vector<64x2048xbf16>
    %cst = arith.constant dense<0.000000e+00> : vector<8x2048xf32>
    %2 = tpu.matmul %0, %1, %cst {dimension_numbers = #tpu.dot_dimension_numbers<[1], [0], [0], [1], [0, 0, 1, 1], [], []>} : vector<8x64xbf16>, vector<64x2048xbf16>, vector<8x2048xf32> -> vector<8x2048xf32>
    %c0_3 = arith.constant 0 : index
    %c0_4 = arith.constant 0 : index
    %3 = vector.load %arg4[%c0_3, %c0_4] : memref<1x2048xf32, #tpu.memory_space<vmem>>, vector<1x2048xf32>
    %4 = vector.broadcast %3 : vector<1x2048xf32> to vector<8x2048xf32>
    %5 = arith.addf %2, %4 : vector<8x2048xf32>
    %c0_5 = arith.constant 0 : index
    %c0_6 = arith.constant 0 : index
    %6 = vector.load %arg5[%c0_5, %c0_6] : memref<8x2048xf32, #tpu.memory_space<vmem>>, vector<8x2048xf32>
    tpu.vector_store %arg5[%c0_5, %c0_6], %5 {strides = array<i32>} : memref<8x2048xf32, #tpu.memory_space<vmem>>, vector<8x2048xf32>,
    return
  }
  func.func @transform_0(%arg0: i32, %arg1: i32) -> (i32, i32) {
    %c0_i32 = arith.constant 0 : i32
    %c0_i32_0 = arith.constant 0 : i32
    return %arg0, %c0_i32 : i32, i32
  }
  func.func @transform_1(%arg0: i32, %arg1: i32) -> (i32, i32) {
    %c0_i32 = arith.constant 0 : i32
    %c0_i32_0 = arith.constant 0 : i32
    return %c0_i32, %arg1 : i32, i32
  }
  func.func @transform_2(%arg0: i32, %arg1: i32) -> (i32, i32) {
    %c0_i32 = arith.constant 0 : i32
    %c0_i32_0 = arith.constant 0 : i32
    return %c0_i32, %arg1 : i32, i32
  }
  func.func @transform_3(%arg0: i32, %arg1: i32) -> (i32, i32) {
    %c0_i32 = arith.constant 0 : i32
    return %arg0, %arg1 : i32, i32
  }
}

module attributes {stable_mosaic.version = 11 : i64} {
  func.func @_wbl_kernel(%arg0: i32, %arg1: memref<128x64xbf16, #tpu.memory_space<vmem>>, %arg2: memref<64x128xbf16, #tpu.memory_space<vmem>>, %arg3: memref<1x128xf32, #tpu.memory_space<vmem>>, %arg4: memref<64x128xbf16, #tpu.memory_space<vmem>>, %arg5: memref<1x128xf32, #tpu.memory_space<vmem>>, %arg6: memref<128x128xf32, #tpu.memory_space<vmem>>, %arg7: memref<128x128xf32, #tpu.memory_space<vmem>>) attributes {dimension_semantics = [#tpu.dimension_semantics<parallel>], iteration_bounds = array<i64: 2>, scalar_prefetch = 0 : i64, scratch_operands = 0 : i64, tpu.core_type = #tpu.core_type<tc>, window_params = [{transform_indices = @transform_0, window_bounds = array<i64: 128, 64>}, {pipeline_mode = #tpu.pipeline_mode<synchronous>, transform_indices = @transform_1, window_bounds = array<i64: 64, 128>}, {pipeline_mode = #tpu.pipeline_mode<synchronous>, transform_indices = @transform_2, window_bounds = array<i64: 1, 128>}, {pipeline_mode = #tpu.pipeline_mode<synchronous>, transform_indices = @transform_3, window_bounds = array<i64: 64, 128>}, {pipeline_mode = #tpu.pipeline_mode<synchronous>, transform_indices = @transform_4, window_bounds = array<i64: 1, 128>}, {transform_indices = @transform_5, window_bounds = array<i64: 128, 128>}, {transform_indices = @transform_6, window_bounds = array<i64: 128, 128>}]} {
    %c0 = arith.constant 0 : index
    %c0_0 = arith.constant 0 : index
    %0 = vector.load %arg1[%c0, %c0_0] : memref<128x64xbf16, #tpu.memory_space<vmem>>, vector<128x64xbf16>
    %c0_1 = arith.constant 0 : index
    %c0_2 = arith.constant 0 : index
    %1 = vector.load %arg2[%c0_1, %c0_2] : memref<64x128xbf16, #tpu.memory_space<vmem>>, vector<64x128xbf16>
    %cst = arith.constant dense<0.000000e+00> : vector<128x128xf32>
    %2 = tpu.matmul %0, %1, %cst {dimension_numbers = #tpu.dot_dimension_numbers<[1], [0], [0], [1], [0, 0, 1, 1], [], []>} : vector<128x64xbf16>, vector<64x128xbf16>, vector<128x128xf32> -> vector<128x128xf32>
    %c0_3 = arith.constant 0 : index
    %c0_4 = arith.constant 0 : index
    %3 = vector.load %arg3[%c0_3, %c0_4] : memref<1x128xf32, #tpu.memory_space<vmem>>, vector<1x128xf32>
    %4 = vector.broadcast %3 : vector<1x128xf32> to vector<128x128xf32>
    %5 = arith.addf %2, %4 : vector<128x128xf32>
    %c0_5 = arith.constant 0 : index
    %c0_6 = arith.constant 0 : index
    %6 = vector.load %arg6[%c0_5, %c0_6] : memref<128x128xf32, #tpu.memory_space<vmem>>, vector<128x128xf32>
    tpu.vector_store %arg6[%c0_5, %c0_6], %5 {strides = array<i32>} : memref<128x128xf32, #tpu.memory_space<vmem>>, vector<128x128xf32>,
    %c0_7 = arith.constant 0 : index
    %c0_8 = arith.constant 0 : index
    %7 = vector.load %arg4[%c0_7, %c0_8] : memref<64x128xbf16, #tpu.memory_space<vmem>>, vector<64x128xbf16>
    %cst_9 = arith.constant dense<0.000000e+00> : vector<128x128xf32>
    %8 = tpu.matmul %0, %7, %cst_9 {dimension_numbers = #tpu.dot_dimension_numbers<[1], [0], [0], [1], [0, 0, 1, 1], [], []>} : vector<128x64xbf16>, vector<64x128xbf16>, vector<128x128xf32> -> vector<128x128xf32>
    %c0_10 = arith.constant 0 : index
    %c0_11 = arith.constant 0 : index
    %9 = vector.load %arg5[%c0_10, %c0_11] : memref<1x128xf32, #tpu.memory_space<vmem>>, vector<1x128xf32>
    %10 = vector.broadcast %9 : vector<1x128xf32> to vector<128x128xf32>
    %11 = arith.addf %8, %10 : vector<128x128xf32>
    %12 = arith.negf %11 : vector<128x128xf32>
    %13 = math.exp %12 : vector<128x128xf32>
    %cst_12 = arith.constant 1.000000e+00 : f32
    %14 = vector.broadcast %cst_12 : f32 to vector<128x128xf32>
    %15 = arith.addf %14, %13 : vector<128x128xf32>
    %16 = arith.divf %14, %15 : vector<128x128xf32>
    %cst_13 = arith.constant 9.800000e-01 : f32
    %17 = vector.broadcast %cst_13 : f32 to vector<128x128xf32>
    %18 = arith.mulf %16, %17 : vector<128x128xf32>
    %cst_14 = arith.constant 1.000000e-01 : f32
    %19 = vector.broadcast %cst_14 : f32 to vector<128x128xf32>
    %20 = arith.addf %19, %18 : vector<128x128xf32>
    %c0_15 = arith.constant 0 : index
    %c0_16 = arith.constant 0 : index
    %21 = vector.load %arg7[%c0_15, %c0_16] : memref<128x128xf32, #tpu.memory_space<vmem>>, vector<128x128xf32>
    tpu.vector_store %arg7[%c0_15, %c0_16], %20 {strides = array<i32>} : memref<128x128xf32, #tpu.memory_space<vmem>>, vector<128x128xf32>,
    return
  }
  func.func @transform_0(%arg0: i32) -> (i32, i32) {
    %c0_i32 = arith.constant 0 : i32
    %c0_i32_0 = arith.constant 0 : i32
    return %arg0, %c0_i32 : i32, i32
  }
  func.func @transform_1(%arg0: i32) -> (i32, i32) {
    %c0_i32 = arith.constant 0 : i32
    %c0_i32_0 = arith.constant 0 : i32
    %c0_i32_1 = arith.constant 0 : i32
    return %c0_i32, %c0_i32_0 : i32, i32
  }
  func.func @transform_2(%arg0: i32) -> (i32, i32) {
    %c0_i32 = arith.constant 0 : i32
    %c0_i32_0 = arith.constant 0 : i32
    %c0_i32_1 = arith.constant 0 : i32
    return %c0_i32, %c0_i32_0 : i32, i32
  }
  func.func @transform_3(%arg0: i32) -> (i32, i32) {
    %c0_i32 = arith.constant 0 : i32
    %c0_i32_0 = arith.constant 0 : i32
    %c0_i32_1 = arith.constant 0 : i32
    return %c0_i32, %c0_i32_0 : i32, i32
  }
  func.func @transform_4(%arg0: i32) -> (i32, i32) {
    %c0_i32 = arith.constant 0 : i32
    %c0_i32_0 = arith.constant 0 : i32
    %c0_i32_1 = arith.constant 0 : i32
    return %c0_i32, %c0_i32_0 : i32, i32
  }
  func.func @transform_5(%arg0: i32) -> (i32, i32) {
    %c0_i32 = arith.constant 0 : i32
    %c0_i32_0 = arith.constant 0 : i32
    return %arg0, %c0_i32 : i32, i32
  }
  func.func @transform_6(%arg0: i32) -> (i32, i32) {
    %c0_i32 = arith.constant 0 : i32
    %c0_i32_0 = arith.constant 0 : i32
    return %arg0, %c0_i32 : i32, i32
  }
}

module attributes {stable_mosaic.version = 11 : i64} {
  func.func @_frame_synth_kernel(%arg0: i32, %arg1: memref<128x64xbf16, #tpu.memory_space<vmem>>, %arg2: memref<128x1xf32, #tpu.memory_space<vmem>>, %arg3: memref<4x64x64xbf16, #tpu.memory_space<vmem>>, %arg4: memref<4x1x64xf32, #tpu.memory_space<vmem>>, %arg5: memref<3x1x64xf32, #tpu.memory_space<vmem>>, %arg6: memref<3x1x64xf32, #tpu.memory_space<vmem>>, %arg7: memref<1x64xf32, #tpu.memory_space<vmem>>, %arg8: memref<128x64xf32, #tpu.memory_space<vmem>>) attributes {dimension_semantics = [#tpu.dimension_semantics<parallel>], iteration_bounds = array<i64: 2>, scalar_prefetch = 0 : i64, scratch_operands = 0 : i64, tpu.core_type = #tpu.core_type<tc>, window_params = [{transform_indices = @transform_0, window_bounds = array<i64: 128, 64>}, {transform_indices = @transform_1, window_bounds = array<i64: 128, 1>}, {pipeline_mode = #tpu.pipeline_mode<synchronous>, transform_indices = @transform_2, window_bounds = array<i64: 4, 64, 64>}, {pipeline_mode = #tpu.pipeline_mode<synchronous>, transform_indices = @transform_3, window_bounds = array<i64: 4, 1, 64>}, {pipeline_mode = #tpu.pipeline_mode<synchronous>, transform_indices = @transform_4, window_bounds = array<i64: 3, 1, 64>}, {pipeline_mode = #tpu.pipeline_mode<synchronous>, transform_indices = @transform_5, window_bounds = array<i64: 3, 1, 64>}, {pipeline_mode = #tpu.pipeline_mode<synchronous>, transform_indices = @transform_6, window_bounds = array<i64: 1, 64>}, {transform_indices = @transform_7, window_bounds = array<i64: 128, 64>}]} {
    %c0 = arith.constant 0 : index
    %c0_0 = arith.constant 0 : index
    %0 = vector.load %arg1[%c0, %c0_0] : memref<128x64xbf16, #tpu.memory_space<vmem>>, vector<128x64xbf16>
    %c0_1 = arith.constant 0 : index
    %c0_2 = arith.constant 0 : index
    %c0_3 = arith.constant 0 : index
    %1 = vector.load %arg3[%c0_1, %c0_2, %c0_3] : memref<4x64x64xbf16, #tpu.memory_space<vmem>>, vector<1x64x64xbf16>
    %2 = vector.shape_cast %1 : vector<1x64x64xbf16> to vector<64x64xbf16>
    %cst = arith.constant dense<0.000000e+00> : vector<128x64xf32>
    %3 = tpu.matmul %0, %2, %cst {dimension_numbers = #tpu.dot_dimension_numbers<[1], [0], [0], [1], [0, 0, 1, 1], [], []>} : vector<128x64xbf16>, vector<64x64xbf16>, vector<128x64xf32> -> vector<128x64xf32>
    %c0_4 = arith.constant 0 : index
    %c0_5 = arith.constant 0 : index
    %c0_6 = arith.constant 0 : index
    %4 = vector.load %arg4[%c0_4, %c0_5, %c0_6] : memref<4x1x64xf32, #tpu.memory_space<vmem>>, vector<1x1x64xf32>
    %5 = vector.shape_cast %4 : vector<1x1x64xf32> to vector<1x64xf32>
    %6 = vector.broadcast %5 : vector<1x64xf32> to vector<128x64xf32>
    %7 = arith.addf %3, %6 : vector<128x64xf32>
    %cst_7 = arith.constant 0.000000e+00 : f32
    %8 = vector.broadcast %cst_7 : f32 to vector<128x64xf32>
    %9 = arith.cmpf ogt, %7, %8 : vector<128x64xf32>
    %cst_8 = arith.constant 2.000000e-01 : f32
    %10 = vector.broadcast %cst_8 : f32 to vector<128x64xf32>
    %11 = arith.mulf %10, %7 : vector<128x64xf32>
    %12 = arith.select %9, %7, %11 : vector<128x64xi1>, vector<128x64xf32>
    %c0_9 = arith.constant 0 : index
    %c0_10 = arith.constant 0 : index
    %c0_11 = arith.constant 0 : index
    %13 = vector.load %arg5[%c0_9, %c0_10, %c0_11] : memref<3x1x64xf32, #tpu.memory_space<vmem>>, vector<1x1x64xf32>
    %14 = vector.shape_cast %13 : vector<1x1x64xf32> to vector<1x64xf32>
    %c0_12 = arith.constant 0 : index
    %c0_13 = arith.constant 0 : index
    %c0_14 = arith.constant 0 : index
    %15 = vector.load %arg6[%c0_12, %c0_13, %c0_14] : memref<3x1x64xf32, #tpu.memory_space<vmem>>, vector<1x1x64xf32>
    %16 = vector.shape_cast %15 : vector<1x1x64xf32> to vector<1x64xf32>
    %cst_15 = arith.constant dense<0.000000e+00> : vector<128xf32>
    %17 = vector.multi_reduction <add>, %12, %cst_15 [1] : vector<128x64xf32> to vector<128xf32>
    %18 = vector.shape_cast %17 : vector<128xf32> to vector<128x1xf32>
    %cst_16 = arith.constant 6.400000e+01 : f32
    %19 = vector.broadcast %cst_16 : f32 to vector<128x1xf32>
    %20 = arith.divf %18, %19 : vector<128x1xf32>
    %21 = vector.broadcast %20 : vector<128x1xf32> to vector<128x64xf32>
    %22 = arith.subf %12, %21 : vector<128x64xf32>
    %23 = arith.mulf %22, %22 : vector<128x64xf32>
    %cst_17 = arith.constant dense<0.000000e+00> : vector<128xf32>
    %24 = vector.multi_reduction <add>, %23, %cst_17 [1] : vector<128x64xf32> to vector<128xf32>
    %25 = vector.shape_cast %24 : vector<128xf32> to vector<128x1xf32>
    %cst_18 = arith.constant 6.400000e+01 : f32
    %26 = vector.broadcast %cst_18 : f32 to vector<128x1xf32>
    %27 = arith.divf %25, %26 : vector<128x1xf32>
    %28 = vector.broadcast %20 : vector<128x1xf32> to vector<128x64xf32>
    %29 = arith.subf %12, %28 : vector<128x64xf32>
    %cst_19 = arith.constant 9.99999974E-6 : f32
    %30 = vector.broadcast %cst_19 : f32 to vector<128x1xf32>
    %31 = arith.addf %27, %30 : vector<128x1xf32>
    %32 = math.rsqrt %31 : vector<128x1xf32>
    %33 = vector.broadcast %32 : vector<128x1xf32> to vector<128x64xf32>
    %34 = arith.mulf %29, %33 : vector<128x64xf32>
    %35 = vector.broadcast %14 : vector<1x64xf32> to vector<128x64xf32>
    %36 = arith.mulf %34, %35 : vector<128x64xf32>
    %37 = vector.broadcast %16 : vector<1x64xf32> to vector<128x64xf32>
    %38 = arith.addf %36, %37 : vector<128x64xf32>
    %39 = arith.truncf %38 : vector<128x64xf32> to vector<128x64xbf16>
    %c1 = arith.constant 1 : index
    %c0_20 = arith.constant 0 : index
    %c0_21 = arith.constant 0 : index
    %40 = vector.load %arg3[%c1, %c0_20, %c0_21] : memref<4x64x64xbf16, #tpu.memory_space<vmem>>, vector<1x64x64xbf16>
    %41 = vector.shape_cast %40 : vector<1x64x64xbf16> to vector<64x64xbf16>
    %cst_22 = arith.constant dense<0.000000e+00> : vector<128x64xf32>
    %42 = tpu.matmul %39, %41, %cst_22 {dimension_numbers = #tpu.dot_dimension_numbers<[1], [0], [0], [1], [0, 0, 1, 1], [], []>} : vector<128x64xbf16>, vector<64x64xbf16>, vector<128x64xf32> -> vector<128x64xf32>
    %c1_23 = arith.constant 1 : index
    %c0_24 = arith.constant 0 : index
    %c0_25 = arith.constant 0 : index
    %43 = vector.load %arg4[%c1_23, %c0_24, %c0_25] : memref<4x1x64xf32, #tpu.memory_space<vmem>>, vector<1x1x64xf32>
    %44 = vector.shape_cast %43 : vector<1x1x64xf32> to vector<1x64xf32>
    %45 = vector.broadcast %44 : vector<1x64xf32> to vector<128x64xf32>
    %46 = arith.addf %42, %45 : vector<128x64xf32>
    %cst_26 = arith.constant 0.000000e+00 : f32
    %47 = vector.broadcast %cst_26 : f32 to vector<128x64xf32>
    %48 = arith.cmpf ogt, %46, %47 : vector<128x64xf32>
    %cst_27 = arith.constant 2.000000e-01 : f32
    %49 = vector.broadcast %cst_27 : f32 to vector<128x64xf32>
    %50 = arith.mulf %49, %46 : vector<128x64xf32>
    %51 = arith.select %48, %46, %50 : vector<128x64xi1>, vector<128x64xf32>
    %c1_28 = arith.constant 1 : index
    %c0_29 = arith.constant 0 : index
    %c0_30 = arith.constant 0 : index
    %52 = vector.load %arg5[%c1_28, %c0_29, %c0_30] : memref<3x1x64xf32, #tpu.memory_space<vmem>>, vector<1x1x64xf32>
    %53 = vector.shape_cast %52 : vector<1x1x64xf32> to vector<1x64xf32>
    %c1_31 = arith.constant 1 : index
    %c0_32 = arith.constant 0 : index
    %c0_33 = arith.constant 0 : index
    %54 = vector.load %arg6[%c1_31, %c0_32, %c0_33] : memref<3x1x64xf32, #tpu.memory_space<vmem>>, vector<1x1x64xf32>
    %55 = vector.shape_cast %54 : vector<1x1x64xf32> to vector<1x64xf32>
    %cst_34 = arith.constant dense<0.000000e+00> : vector<128xf32>
    %56 = vector.multi_reduction <add>, %51, %cst_34 [1] : vector<128x64xf32> to vector<128xf32>
    %57 = vector.shape_cast %56 : vector<128xf32> to vector<128x1xf32>
    %cst_35 = arith.constant 6.400000e+01 : f32
    %58 = vector.broadcast %cst_35 : f32 to vector<128x1xf32>
    %59 = arith.divf %57, %58 : vector<128x1xf32>
    %60 = vector.broadcast %59 : vector<128x1xf32> to vector<128x64xf32>
    %61 = arith.subf %51, %60 : vector<128x64xf32>
    %62 = arith.mulf %61, %61 : vector<128x64xf32>
    %cst_36 = arith.constant dense<0.000000e+00> : vector<128xf32>
    %63 = vector.multi_reduction <add>, %62, %cst_36 [1] : vector<128x64xf32> to vector<128xf32>
    %64 = vector.shape_cast %63 : vector<128xf32> to vector<128x1xf32>
    %cst_37 = arith.constant 6.400000e+01 : f32
    %65 = vector.broadcast %cst_37 : f32 to vector<128x1xf32>
    %66 = arith.divf %64, %65 : vector<128x1xf32>
    %67 = vector.broadcast %59 : vector<128x1xf32> to vector<128x64xf32>
    %68 = arith.subf %51, %67 : vector<128x64xf32>
    %cst_38 = arith.constant 9.99999974E-6 : f32
    %69 = vector.broadcast %cst_38 : f32 to vector<128x1xf32>
    %70 = arith.addf %66, %69 : vector<128x1xf32>
    %71 = math.rsqrt %70 : vector<128x1xf32>
    %72 = vector.broadcast %71 : vector<128x1xf32> to vector<128x64xf32>
    %73 = arith.mulf %68, %72 : vector<128x64xf32>
    %74 = vector.broadcast %53 : vector<1x64xf32> to vector<128x64xf32>
    %75 = arith.mulf %73, %74 : vector<128x64xf32>
    %76 = vector.broadcast %55 : vector<1x64xf32> to vector<128x64xf32>
    %77 = arith.addf %75, %76 : vector<128x64xf32>
    %78 = arith.truncf %77 : vector<128x64xf32> to vector<128x64xbf16>
    %c2 = arith.constant 2 : index
    %c0_39 = arith.constant 0 : index
    %c0_40 = arith.constant 0 : index
    %79 = vector.load %arg3[%c2, %c0_39, %c0_40] : memref<4x64x64xbf16, #tpu.memory_space<vmem>>, vector<1x64x64xbf16>
    %80 = vector.shape_cast %79 : vector<1x64x64xbf16> to vector<64x64xbf16>
    %cst_41 = arith.constant dense<0.000000e+00> : vector<128x64xf32>
    %81 = tpu.matmul %78, %80, %cst_41 {dimension_numbers = #tpu.dot_dimension_numbers<[1], [0], [0], [1], [0, 0, 1, 1], [], []>} : vector<128x64xbf16>, vector<64x64xbf16>, vector<128x64xf32> -> vector<128x64xf32>
    %c2_42 = arith.constant 2 : index
    %c0_43 = arith.constant 0 : index
    %c0_44 = arith.constant 0 : index
    %82 = vector.load %arg4[%c2_42, %c0_43, %c0_44] : memref<4x1x64xf32, #tpu.memory_space<vmem>>, vector<1x1x64xf32>
    %83 = vector.shape_cast %82 : vector<1x1x64xf32> to vector<1x64xf32>
    %84 = vector.broadcast %83 : vector<1x64xf32> to vector<128x64xf32>
    %85 = arith.addf %81, %84 : vector<128x64xf32>
    %cst_45 = arith.constant 0.000000e+00 : f32
    %86 = vector.broadcast %cst_45 : f32 to vector<128x64xf32>
    %87 = arith.cmpf ogt, %85, %86 : vector<128x64xf32>
    %cst_46 = arith.constant 2.000000e-01 : f32
    %88 = vector.broadcast %cst_46 : f32 to vector<128x64xf32>
    %89 = arith.mulf %88, %85 : vector<128x64xf32>
    %90 = arith.select %87, %85, %89 : vector<128x64xi1>, vector<128x64xf32>
    %c2_47 = arith.constant 2 : index
    %c0_48 = arith.constant 0 : index
    %c0_49 = arith.constant 0 : index
    %91 = vector.load %arg5[%c2_47, %c0_48, %c0_49] : memref<3x1x64xf32, #tpu.memory_space<vmem>>, vector<1x1x64xf32>
    %92 = vector.shape_cast %91 : vector<1x1x64xf32> to vector<1x64xf32>
    %c2_50 = arith.constant 2 : index
    %c0_51 = arith.constant 0 : index
    %c0_52 = arith.constant 0 : index
    %93 = vector.load %arg6[%c2_50, %c0_51, %c0_52] : memref<3x1x64xf32, #tpu.memory_space<vmem>>, vector<1x1x64xf32>
    %94 = vector.shape_cast %93 : vector<1x1x64xf32> to vector<1x64xf32>
    %cst_53 = arith.constant dense<0.000000e+00> : vector<128xf32>
    %95 = vector.multi_reduction <add>, %90, %cst_53 [1] : vector<128x64xf32> to vector<128xf32>
    %96 = vector.shape_cast %95 : vector<128xf32> to vector<128x1xf32>
    %cst_54 = arith.constant 6.400000e+01 : f32
    %97 = vector.broadcast %cst_54 : f32 to vector<128x1xf32>
    %98 = arith.divf %96, %97 : vector<128x1xf32>
    %99 = vector.broadcast %98 : vector<128x1xf32> to vector<128x64xf32>
    %100 = arith.subf %90, %99 : vector<128x64xf32>
    %101 = arith.mulf %100, %100 : vector<128x64xf32>
    %cst_55 = arith.constant dense<0.000000e+00> : vector<128xf32>
    %102 = vector.multi_reduction <add>, %101, %cst_55 [1] : vector<128x64xf32> to vector<128xf32>
    %103 = vector.shape_cast %102 : vector<128xf32> to vector<128x1xf32>
    %cst_56 = arith.constant 6.400000e+01 : f32
    %104 = vector.broadcast %cst_56 : f32 to vector<128x1xf32>
    %105 = arith.divf %103, %104 : vector<128x1xf32>
    %106 = vector.broadcast %98 : vector<128x1xf32> to vector<128x64xf32>
    %107 = arith.subf %90, %106 : vector<128x64xf32>
    %cst_57 = arith.constant 9.99999974E-6 : f32
    %108 = vector.broadcast %cst_57 : f32 to vector<128x1xf32>
    %109 = arith.addf %105, %108 : vector<128x1xf32>
    %110 = math.rsqrt %109 : vector<128x1xf32>
    %111 = vector.broadcast %110 : vector<128x1xf32> to vector<128x64xf32>
    %112 = arith.mulf %107, %111 : vector<128x64xf32>
    %113 = vector.broadcast %92 : vector<1x64xf32> to vector<128x64xf32>
    %114 = arith.mulf %112, %113 : vector<128x64xf32>
    %115 = vector.broadcast %94 : vector<1x64xf32> to vector<128x64xf32>
    %116 = arith.addf %114, %115 : vector<128x64xf32>
    %117 = arith.truncf %116 : vector<128x64xf32> to vector<128x64xbf16>
    %c3 = arith.constant 3 : index
    %c0_58 = arith.constant 0 : index
    %c0_59 = arith.constant 0 : index
    %118 = vector.load %arg3[%c3, %c0_58, %c0_59] : memref<4x64x64xbf16, #tpu.memory_space<vmem>>, vector<1x64x64xbf16>
    %119 = vector.shape_cast %118 : vector<1x64x64xbf16> to vector<64x64xbf16>
    %cst_60 = arith.constant dense<0.000000e+00> : vector<128x64xf32>
    %120 = tpu.matmul %117, %119, %cst_60 {dimension_numbers = #tpu.dot_dimension_numbers<[1], [0], [0], [1], [0, 0, 1, 1], [], []>} : vector<128x64xbf16>, vector<64x64xbf16>, vector<128x64xf32> -> vector<128x64xf32>
    %c3_61 = arith.constant 3 : index
    %c0_62 = arith.constant 0 : index
    %c0_63 = arith.constant 0 : index
    %121 = vector.load %arg4[%c3_61, %c0_62, %c0_63] : memref<4x1x64xf32, #tpu.memory_space<vmem>>, vector<1x1x64xf32>
    %122 = vector.shape_cast %121 : vector<1x1x64xf32> to vector<1x64xf32>
    %123 = vector.broadcast %122 : vector<1x64xf32> to vector<128x64xf32>
    %124 = arith.addf %120, %123 : vector<128x64xf32>
    %c0_64 = arith.constant 0 : index
    %c0_65 = arith.constant 0 : index
    %125 = vector.load %arg7[%c0_64, %c0_65] : memref<1x64xf32, #tpu.memory_space<vmem>>, vector<1x64xf32>
    %126 = vector.broadcast %125 : vector<1x64xf32> to vector<128x64xf32>
    %127 = arith.mulf %124, %126 : vector<128x64xf32>
    %128 = arith.mulf %127, %127 : vector<128x64xf32>
    %cst_66 = arith.constant dense<0.000000e+00> : vector<128xf32>
    %129 = vector.multi_reduction <add>, %128, %cst_66 [1] : vector<128x64xf32> to vector<128xf32>
    %130 = vector.shape_cast %129 : vector<128xf32> to vector<128x1xf32>
    %131 = math.sqrt %130 : vector<128x1xf32>
    %cst_67 = arith.constant 9.99999993E-9 : f32
    %132 = vector.broadcast %cst_67 : f32 to vector<128x1xf32>
    %133 = arith.addf %131, %132 : vector<128x1xf32>
    %134 = vector.broadcast %133 : vector<128x1xf32> to vector<128x64xf32>
    %135 = arith.divf %127, %134 : vector<128x64xf32>
    %c0_68 = arith.constant 0 : index
    %c0_69 = arith.constant 0 : index
    %136 = vector.load %arg2[%c0_68, %c0_69] : memref<128x1xf32, #tpu.memory_space<vmem>>, vector<128x1xf32>
    %137 = vector.broadcast %136 : vector<128x1xf32> to vector<128x64xf32>
    %138 = arith.mulf %135, %137 : vector<128x64xf32>
    %c0_70 = arith.constant 0 : index
    %c0_71 = arith.constant 0 : index
    %139 = vector.load %arg8[%c0_70, %c0_71] : memref<128x64xf32, #tpu.memory_space<vmem>>, vector<128x64xf32>
    tpu.vector_store %arg8[%c0_70, %c0_71], %138 {strides = array<i32>} : memref<128x64xf32, #tpu.memory_space<vmem>>, vector<128x64xf32>,
    return
  }
  func.func @transform_0(%arg0: i32) -> (i32, i32) {
    %c0_i32 = arith.constant 0 : i32
    %c0_i32_0 = arith.constant 0 : i32
    return %arg0, %c0_i32 : i32, i32
  }
  func.func @transform_1(%arg0: i32) -> (i32, i32) {
    %c0_i32 = arith.constant 0 : i32
    %c0_i32_0 = arith.constant 0 : i32
    return %arg0, %c0_i32 : i32, i32
  }
  func.func @transform_2(%arg0: i32) -> (i32, i32, i32) {
    %c0_i32 = arith.constant 0 : i32
    %c0_i32_0 = arith.constant 0 : i32
    %c0_i32_1 = arith.constant 0 : i32
    %c0_i32_2 = arith.constant 0 : i32
    return %c0_i32, %c0_i32_0, %c0_i32_1 : i32, i32, i32
  }
  func.func @transform_3(%arg0: i32) -> (i32, i32, i32) {
    %c0_i32 = arith.constant 0 : i32
    %c0_i32_0 = arith.constant 0 : i32
    %c0_i32_1 = arith.constant 0 : i32
    %c0_i32_2 = arith.constant 0 : i32
    return %c0_i32, %c0_i32_0, %c0_i32_1 : i32, i32, i32
  }
  func.func @transform_4(%arg0: i32) -> (i32, i32, i32) {
    %c0_i32 = arith.constant 0 : i32
    %c0_i32_0 = arith.constant 0 : i32
    %c0_i32_1 = arith.constant 0 : i32
    %c0_i32_2 = arith.constant 0 : i32
    return %c0_i32, %c0_i32_0, %c0_i32_1 : i32, i32, i32
  }
  func.func @transform_5(%arg0: i32) -> (i32, i32, i32) {
    %c0_i32 = arith.constant 0 : i32
    %c0_i32_0 = arith.constant 0 : i32
    %c0_i32_1 = arith.constant 0 : i32
    %c0_i32_2 = arith.constant 0 : i32
    return %c0_i32, %c0_i32_0, %c0_i32_1 : i32, i32, i32
  }
  func.func @transform_6(%arg0: i32) -> (i32, i32) {
    %c0_i32 = arith.constant 0 : i32
    %c0_i32_0 = arith.constant 0 : i32
    %c0_i32_1 = arith.constant 0 : i32
    return %c0_i32, %c0_i32_0 : i32, i32
  }
  func.func @transform_7(%arg0: i32) -> (i32, i32) {
    %c0_i32 = arith.constant 0 : i32
    %c0_i32_0 = arith.constant 0 : i32
    return %arg0, %c0_i32 : i32, i32
  }
}

module attributes {stable_mosaic.version = 11 : i64} {
  func.func @_coe_kernel(%arg0: i32, %arg1: i32, %arg2: memref<8x8x64xf32, #tpu.memory_space<vmem>>, %arg3: memref<1x8x64xf32, #tpu.memory_space<vmem>>, %arg4: memref<1x8x64xf32, #tpu.memory_space<vmem>>, %arg5: memref<1x8x1xf32, #tpu.memory_space<vmem>>, %arg6: memref<4x64x64xbf16, #tpu.memory_space<vmem>>, %arg7: memref<4x1x64xf32, #tpu.memory_space<vmem>>, %arg8: memref<3x1x64xf32, #tpu.memory_space<vmem>>, %arg9: memref<3x1x64xf32, #tpu.memory_space<vmem>>, %arg10: memref<1x8x64xf32, #tpu.memory_space<vmem>>, %arg11: memref<1x8x1xf32, #tpu.memory_space<vmem>>, %arg12: memref<8x64xf32, #tpu.memory_space<vmem>>) attributes {dimension_semantics = [#tpu.dimension_semantics<parallel>, #tpu.dimension_semantics<arbitrary>], iteration_bounds = array<i64: 1, 32>, scalar_prefetch = 0 : i64, scratch_operands = 1 : i64, tpu.core_type = #tpu.core_type<tc>, window_params = [{transform_indices = @transform_0, window_bounds = array<i64: 8, 8, 64>}, {transform_indices = @transform_1, window_bounds = array<i64: 1, 8, 64>}, {transform_indices = @transform_2, window_bounds = array<i64: 1, 8, 64>}, {transform_indices = @transform_3, window_bounds = array<i64: 1, 8, 1>}, {pipeline_mode = #tpu.pipeline_mode<synchronous>, transform_indices = @transform_4, window_bounds = array<i64: 4, 64, 64>}, {pipeline_mode = #tpu.pipeline_mode<synchronous>, transform_indices = @transform_5, window_bounds = array<i64: 4, 1, 64>}, {pipeline_mode = #tpu.pipeline_mode<synchronous>, transform_indices = @transform_6, window_bounds = array<i64: 3, 1, 64>}, {pipeline_mode = #tpu.pipeline_mode<synchronous>, transform_indices = @transform_7, window_bounds = array<i64: 3, 1, 64>}, {transform_indices = @transform_8, window_bounds = array<i64: 1, 8, 64>}, {transform_indices = @transform_9, window_bounds = array<i64: 1, 8, 1>}]} {
    %c0_i32 = arith.constant 0 : i32
    %0 = arith.cmpi eq, %arg1, %c0_i32 : i32
    %1 = arith.extui %0 : i1 to i32
    %c0_i32_0 = arith.constant 0 : i32
    %2 = arith.cmpi ne, %1, %c0_i32_0 : i32
    scf.if %2 {
      %cst_91 = arith.constant 0.000000e+00 : f32
      %188 = vector.broadcast %cst_91 : f32 to vector<8x64xf32>
      %c0_92 = arith.constant 0 : index
      %c0_93 = arith.constant 0 : index
      %189 = vector.load %arg12[%c0_92, %c0_93] : memref<8x64xf32, #tpu.memory_space<vmem>>, vector<8x64xf32>
      tpu.vector_store %arg12[%c0_92, %c0_93], %188 {strides = array<i32>} : memref<8x64xf32, #tpu.memory_space<vmem>>, vector<8x64xf32>,
    } else {
    }
    %c8_i32 = arith.constant 8 : i32
    %3 = arith.cmpi slt, %arg1, %c8_i32 : i32
    %4 = arith.extui %3 : i1 to i32
    %c0_i32_1 = arith.constant 0 : i32
    %5 = arith.cmpi ne, %4, %c0_i32_1 : i32
    scf.if %5 {
      %c0_91 = arith.constant 0 : index
      %c0_92 = arith.constant 0 : index
      %188 = vector.load %arg12[%c0_91, %c0_92] : memref<8x64xf32, #tpu.memory_space<vmem>>, vector<8x64xf32>
      %189 = arith.index_cast %arg1 : i32 to index
      %c0_93 = arith.constant 0 : index
      %c0_94 = arith.constant 0 : index
      %190 = vector.load %arg2[%189, %c0_93, %c0_94] : memref<8x8x64xf32, #tpu.memory_space<vmem>>, vector<1x8x64xf32>
      %191 = vector.shape_cast %190 : vector<1x8x64xf32> to vector<8x64xf32>
      %192 = arith.addf %188, %191 : vector<8x64xf32>
      %c0_95 = arith.constant 0 : index
      %c0_96 = arith.constant 0 : index
      %193 = vector.load %arg12[%c0_95, %c0_96] : memref<8x64xf32, #tpu.memory_space<vmem>>, vector<8x64xf32>
      tpu.vector_store %arg12[%c0_95, %c0_96], %192 {strides = array<i32>} : memref<8x64xf32, #tpu.memory_space<vmem>>, vector<8x64xf32>,
    } else {
    }
    %c0 = arith.constant 0 : index
    %c0_2 = arith.constant 0 : index
    %6 = vector.load %arg12[%c0, %c0_2] : memref<8x64xf32, #tpu.memory_space<vmem>>, vector<8x64xf32>
    %c0_3 = arith.constant 0 : index
    %c0_4 = arith.constant 0 : index
    %c0_5 = arith.constant 0 : index
    %7 = vector.load %arg3[%c0_3, %c0_4, %c0_5] : memref<1x8x64xf32, #tpu.memory_space<vmem>>, vector<1x8x64xf32>
    %8 = vector.shape_cast %7 : vector<1x8x64xf32> to vector<8x64xf32>
    %c0_6 = arith.constant 0 : index
    %c0_7 = arith.constant 0 : index
    %c0_8 = arith.constant 0 : index
    %9 = vector.load %arg4[%c0_6, %c0_7, %c0_8] : memref<1x8x64xf32, #tpu.memory_space<vmem>>, vector<1x8x64xf32>
    %10 = vector.shape_cast %9 : vector<1x8x64xf32> to vector<8x64xf32>
    %c0_9 = arith.constant 0 : index
    %c0_10 = arith.constant 0 : index
    %c0_11 = arith.constant 0 : index
    %11 = vector.load %arg5[%c0_9, %c0_10, %c0_11] : memref<1x8x1xf32, #tpu.memory_space<vmem>>, vector<1x8x1xf32>
    %12 = vector.shape_cast %11 : vector<1x8x1xf32> to vector<8x1xf32>
    %13 = arith.mulf %6, %6 : vector<8x64xf32>
    %cst = arith.constant dense<0.000000e+00> : vector<8xf32>
    %14 = vector.multi_reduction <add>, %13, %cst [1] : vector<8x64xf32> to vector<8xf32>
    %15 = vector.shape_cast %14 : vector<8xf32> to vector<8x1xf32>
    %16 = math.sqrt %15 : vector<8x1xf32>
    %17 = arith.mulf %6, %8 : vector<8x64xf32>
    %18 = arith.addf %17, %10 : vector<8x64xf32>
    %19 = arith.mulf %18, %18 : vector<8x64xf32>
    %cst_12 = arith.constant dense<0.000000e+00> : vector<8xf32>
    %20 = vector.multi_reduction <add>, %19, %cst_12 [1] : vector<8x64xf32> to vector<8xf32>
    %21 = vector.shape_cast %20 : vector<8xf32> to vector<8x1xf32>
    %22 = math.sqrt %21 : vector<8x1xf32>
    %cst_13 = arith.constant 9.99999993E-9 : f32
    %23 = vector.broadcast %cst_13 : f32 to vector<8x1xf32>
    %24 = arith.addf %22, %23 : vector<8x1xf32>
    %25 = vector.broadcast %24 : vector<8x1xf32> to vector<8x64xf32>
    %26 = arith.divf %18, %25 : vector<8x64xf32>
    %27 = vector.broadcast %16 : vector<8x1xf32> to vector<8x64xf32>
    %28 = arith.mulf %26, %27 : vector<8x64xf32>
    %29 = arith.truncf %28 : vector<8x64xf32> to vector<8x64xbf16>
    %c0_14 = arith.constant 0 : index
    %c0_15 = arith.constant 0 : index
    %c0_16 = arith.constant 0 : index
    %30 = vector.load %arg6[%c0_14, %c0_15, %c0_16] : memref<4x64x64xbf16, #tpu.memory_space<vmem>>, vector<1x64x64xbf16>
    %31 = vector.shape_cast %30 : vector<1x64x64xbf16> to vector<64x64xbf16>
    %cst_17 = arith.constant dense<0.000000e+00> : vector<8x64xf32>
    %32 = tpu.matmul %29, %31, %cst_17 {dimension_numbers = #tpu.dot_dimension_numbers<[1], [0], [0], [1], [0, 0, 1, 1], [], []>} : vector<8x64xbf16>, vector<64x64xbf16>, vector<8x64xf32> -> vector<8x64xf32>
    %c0_18 = arith.constant 0 : index
    %c0_19 = arith.constant 0 : index
    %c0_20 = arith.constant 0 : index
    %33 = vector.load %arg7[%c0_18, %c0_19, %c0_20] : memref<4x1x64xf32, #tpu.memory_space<vmem>>, vector<1x1x64xf32>
    %34 = vector.shape_cast %33 : vector<1x1x64xf32> to vector<1x64xf32>
    %35 = vector.broadcast %34 : vector<1x64xf32> to vector<8x64xf32>
    %36 = arith.addf %32, %35 : vector<8x64xf32>
    %cst_21 = arith.constant 0.000000e+00 : f32
    %37 = vector.broadcast %cst_21 : f32 to vector<8x64xf32>
    %38 = arith.cmpf ogt, %36, %37 : vector<8x64xf32>
    %cst_22 = arith.constant 2.000000e-01 : f32
    %39 = vector.broadcast %cst_22 : f32 to vector<8x64xf32>
    %40 = arith.mulf %39, %36 : vector<8x64xf32>
    %41 = arith.select %38, %36, %40 : vector<8x64xi1>, vector<8x64xf32>
    %c0_23 = arith.constant 0 : index
    %c0_24 = arith.constant 0 : index
    %c0_25 = arith.constant 0 : index
    %42 = vector.load %arg8[%c0_23, %c0_24, %c0_25] : memref<3x1x64xf32, #tpu.memory_space<vmem>>, vector<1x1x64xf32>
    %43 = vector.shape_cast %42 : vector<1x1x64xf32> to vector<1x64xf32>
    %c0_26 = arith.constant 0 : index
    %c0_27 = arith.constant 0 : index
    %c0_28 = arith.constant 0 : index
    %44 = vector.load %arg9[%c0_26, %c0_27, %c0_28] : memref<3x1x64xf32, #tpu.memory_space<vmem>>, vector<1x1x64xf32>
    %45 = vector.shape_cast %44 : vector<1x1x64xf32> to vector<1x64xf32>
    %cst_29 = arith.constant dense<0.000000e+00> : vector<8xf32>
    %46 = vector.multi_reduction <add>, %41, %cst_29 [1] : vector<8x64xf32> to vector<8xf32>
    %47 = vector.shape_cast %46 : vector<8xf32> to vector<8x1xf32>
    %cst_30 = arith.constant 6.400000e+01 : f32
    %48 = vector.broadcast %cst_30 : f32 to vector<8x1xf32>
    %49 = arith.divf %47, %48 : vector<8x1xf32>
    %50 = vector.broadcast %49 : vector<8x1xf32> to vector<8x64xf32>
    %51 = arith.subf %41, %50 : vector<8x64xf32>
    %52 = arith.mulf %51, %51 : vector<8x64xf32>
    %cst_31 = arith.constant dense<0.000000e+00> : vector<8xf32>
    %53 = vector.multi_reduction <add>, %52, %cst_31 [1] : vector<8x64xf32> to vector<8xf32>
    %54 = vector.shape_cast %53 : vector<8xf32> to vector<8x1xf32>
    %cst_32 = arith.constant 6.400000e+01 : f32
    %55 = vector.broadcast %cst_32 : f32 to vector<8x1xf32>
    %56 = arith.divf %54, %55 : vector<8x1xf32>
    %57 = vector.broadcast %49 : vector<8x1xf32> to vector<8x64xf32>
    %58 = arith.subf %41, %57 : vector<8x64xf32>
    %cst_33 = arith.constant 9.99999974E-6 : f32
    %59 = vector.broadcast %cst_33 : f32 to vector<8x1xf32>
    %60 = arith.addf %56, %59 : vector<8x1xf32>
    %61 = math.rsqrt %60 : vector<8x1xf32>
    %62 = vector.broadcast %61 : vector<8x1xf32> to vector<8x64xf32>
    %63 = arith.mulf %58, %62 : vector<8x64xf32>
    %64 = vector.broadcast %43 : vector<1x64xf32> to vector<8x64xf32>
    %65 = arith.mulf %63, %64 : vector<8x64xf32>
    %66 = vector.broadcast %45 : vector<1x64xf32> to vector<8x64xf32>
    %67 = arith.addf %65, %66 : vector<8x64xf32>
    %68 = arith.truncf %67 : vector<8x64xf32> to vector<8x64xbf16>
    %c1 = arith.constant 1 : index
    %c0_34 = arith.constant 0 : index
    %c0_35 = arith.constant 0 : index
    %69 = vector.load %arg6[%c1, %c0_34, %c0_35] : memref<4x64x64xbf16, #tpu.memory_space<vmem>>, vector<1x64x64xbf16>
    %70 = vector.shape_cast %69 : vector<1x64x64xbf16> to vector<64x64xbf16>
    %cst_36 = arith.constant dense<0.000000e+00> : vector<8x64xf32>
    %71 = tpu.matmul %68, %70, %cst_36 {dimension_numbers = #tpu.dot_dimension_numbers<[1], [0], [0], [1], [0, 0, 1, 1], [], []>} : vector<8x64xbf16>, vector<64x64xbf16>, vector<8x64xf32> -> vector<8x64xf32>
    %c1_37 = arith.constant 1 : index
    %c0_38 = arith.constant 0 : index
    %c0_39 = arith.constant 0 : index
    %72 = vector.load %arg7[%c1_37, %c0_38, %c0_39] : memref<4x1x64xf32, #tpu.memory_space<vmem>>, vector<1x1x64xf32>
    %73 = vector.shape_cast %72 : vector<1x1x64xf32> to vector<1x64xf32>
    %74 = vector.broadcast %73 : vector<1x64xf32> to vector<8x64xf32>
    %75 = arith.addf %71, %74 : vector<8x64xf32>
    %cst_40 = arith.constant 0.000000e+00 : f32
    %76 = vector.broadcast %cst_40 : f32 to vector<8x64xf32>
    %77 = arith.cmpf ogt, %75, %76 : vector<8x64xf32>
    %cst_41 = arith.constant 2.000000e-01 : f32
    %78 = vector.broadcast %cst_41 : f32 to vector<8x64xf32>
    %79 = arith.mulf %78, %75 : vector<8x64xf32>
    %80 = arith.select %77, %75, %79 : vector<8x64xi1>, vector<8x64xf32>
    %c1_42 = arith.constant 1 : index
    %c0_43 = arith.constant 0 : index
    %c0_44 = arith.constant 0 : index
    %81 = vector.load %arg8[%c1_42, %c0_43, %c0_44] : memref<3x1x64xf32, #tpu.memory_space<vmem>>, vector<1x1x64xf32>
    %82 = vector.shape_cast %81 : vector<1x1x64xf32> to vector<1x64xf32>
    %c1_45 = arith.constant 1 : index
    %c0_46 = arith.constant 0 : index
    %c0_47 = arith.constant 0 : index
    %83 = vector.load %arg9[%c1_45, %c0_46, %c0_47] : memref<3x1x64xf32, #tpu.memory_space<vmem>>, vector<1x1x64xf32>
    %84 = vector.shape_cast %83 : vector<1x1x64xf32> to vector<1x64xf32>
    %cst_48 = arith.constant dense<0.000000e+00> : vector<8xf32>
    %85 = vector.multi_reduction <add>, %80, %cst_48 [1] : vector<8x64xf32> to vector<8xf32>
    %86 = vector.shape_cast %85 : vector<8xf32> to vector<8x1xf32>
    %cst_49 = arith.constant 6.400000e+01 : f32
    %87 = vector.broadcast %cst_49 : f32 to vector<8x1xf32>
    %88 = arith.divf %86, %87 : vector<8x1xf32>
    %89 = vector.broadcast %88 : vector<8x1xf32> to vector<8x64xf32>
    %90 = arith.subf %80, %89 : vector<8x64xf32>
    %91 = arith.mulf %90, %90 : vector<8x64xf32>
    %cst_50 = arith.constant dense<0.000000e+00> : vector<8xf32>
    %92 = vector.multi_reduction <add>, %91, %cst_50 [1] : vector<8x64xf32> to vector<8xf32>
    %93 = vector.shape_cast %92 : vector<8xf32> to vector<8x1xf32>
    %cst_51 = arith.constant 6.400000e+01 : f32
    %94 = vector.broadcast %cst_51 : f32 to vector<8x1xf32>
    %95 = arith.divf %93, %94 : vector<8x1xf32>
    %96 = vector.broadcast %88 : vector<8x1xf32> to vector<8x64xf32>
    %97 = arith.subf %80, %96 : vector<8x64xf32>
    %cst_52 = arith.constant 9.99999974E-6 : f32
    %98 = vector.broadcast %cst_52 : f32 to vector<8x1xf32>
    %99 = arith.addf %95, %98 : vector<8x1xf32>
    %100 = math.rsqrt %99 : vector<8x1xf32>
    %101 = vector.broadcast %100 : vector<8x1xf32> to vector<8x64xf32>
    %102 = arith.mulf %97, %101 : vector<8x64xf32>
    %103 = vector.broadcast %82 : vector<1x64xf32> to vector<8x64xf32>
    %104 = arith.mulf %102, %103 : vector<8x64xf32>
    %105 = vector.broadcast %84 : vector<1x64xf32> to vector<8x64xf32>
    %106 = arith.addf %104, %105 : vector<8x64xf32>
    %107 = arith.truncf %106 : vector<8x64xf32> to vector<8x64xbf16>
    %c2 = arith.constant 2 : index
    %c0_53 = arith.constant 0 : index
    %c0_54 = arith.constant 0 : index
    %108 = vector.load %arg6[%c2, %c0_53, %c0_54] : memref<4x64x64xbf16, #tpu.memory_space<vmem>>, vector<1x64x64xbf16>
    %109 = vector.shape_cast %108 : vector<1x64x64xbf16> to vector<64x64xbf16>
    %cst_55 = arith.constant dense<0.000000e+00> : vector<8x64xf32>
    %110 = tpu.matmul %107, %109, %cst_55 {dimension_numbers = #tpu.dot_dimension_numbers<[1], [0], [0], [1], [0, 0, 1, 1], [], []>} : vector<8x64xbf16>, vector<64x64xbf16>, vector<8x64xf32> -> vector<8x64xf32>
    %c2_56 = arith.constant 2 : index
    %c0_57 = arith.constant 0 : index
    %c0_58 = arith.constant 0 : index
    %111 = vector.load %arg7[%c2_56, %c0_57, %c0_58] : memref<4x1x64xf32, #tpu.memory_space<vmem>>, vector<1x1x64xf32>
    %112 = vector.shape_cast %111 : vector<1x1x64xf32> to vector<1x64xf32>
    %113 = vector.broadcast %112 : vector<1x64xf32> to vector<8x64xf32>
    %114 = arith.addf %110, %113 : vector<8x64xf32>
    %cst_59 = arith.constant 0.000000e+00 : f32
    %115 = vector.broadcast %cst_59 : f32 to vector<8x64xf32>
    %116 = arith.cmpf ogt, %114, %115 : vector<8x64xf32>
    %cst_60 = arith.constant 2.000000e-01 : f32
    %117 = vector.broadcast %cst_60 : f32 to vector<8x64xf32>
    %118 = arith.mulf %117, %114 : vector<8x64xf32>
    %119 = arith.select %116, %114, %118 : vector<8x64xi1>, vector<8x64xf32>
    %c2_61 = arith.constant 2 : index
    %c0_62 = arith.constant 0 : index
    %c0_63 = arith.constant 0 : index
    %120 = vector.load %arg8[%c2_61, %c0_62, %c0_63] : memref<3x1x64xf32, #tpu.memory_space<vmem>>, vector<1x1x64xf32>
    %121 = vector.shape_cast %120 : vector<1x1x64xf32> to vector<1x64xf32>
    %c2_64 = arith.constant 2 : index
    %c0_65 = arith.constant 0 : index
    %c0_66 = arith.constant 0 : index
    %122 = vector.load %arg9[%c2_64, %c0_65, %c0_66] : memref<3x1x64xf32, #tpu.memory_space<vmem>>, vector<1x1x64xf32>
    %123 = vector.shape_cast %122 : vector<1x1x64xf32> to vector<1x64xf32>
    %cst_67 = arith.constant dense<0.000000e+00> : vector<8xf32>
    %124 = vector.multi_reduction <add>, %119, %cst_67 [1] : vector<8x64xf32> to vector<8xf32>
    %125 = vector.shape_cast %124 : vector<8xf32> to vector<8x1xf32>
    %cst_68 = arith.constant 6.400000e+01 : f32
    %126 = vector.broadcast %cst_68 : f32 to vector<8x1xf32>
    %127 = arith.divf %125, %126 : vector<8x1xf32>
    %128 = vector.broadcast %127 : vector<8x1xf32> to vector<8x64xf32>
    %129 = arith.subf %119, %128 : vector<8x64xf32>
    %130 = arith.mulf %129, %129 : vector<8x64xf32>
    %cst_69 = arith.constant dense<0.000000e+00> : vector<8xf32>
    %131 = vector.multi_reduction <add>, %130, %cst_69 [1] : vector<8x64xf32> to vector<8xf32>
    %132 = vector.shape_cast %131 : vector<8xf32> to vector<8x1xf32>
    %cst_70 = arith.constant 6.400000e+01 : f32
    %133 = vector.broadcast %cst_70 : f32 to vector<8x1xf32>
    %134 = arith.divf %132, %133 : vector<8x1xf32>
    %135 = vector.broadcast %127 : vector<8x1xf32> to vector<8x64xf32>
    %136 = arith.subf %119, %135 : vector<8x64xf32>
    %cst_71 = arith.constant 9.99999974E-6 : f32
    %137 = vector.broadcast %cst_71 : f32 to vector<8x1xf32>
    %138 = arith.addf %134, %137 : vector<8x1xf32>
    %139 = math.rsqrt %138 : vector<8x1xf32>
    %140 = vector.broadcast %139 : vector<8x1xf32> to vector<8x64xf32>
    %141 = arith.mulf %136, %140 : vector<8x64xf32>
    %142 = vector.broadcast %121 : vector<1x64xf32> to vector<8x64xf32>
    %143 = arith.mulf %141, %142 : vector<8x64xf32>
    %144 = vector.broadcast %123 : vector<1x64xf32> to vector<8x64xf32>
    %145 = arith.addf %143, %144 : vector<8x64xf32>
    %146 = arith.truncf %145 : vector<8x64xf32> to vector<8x64xbf16>
    %c3 = arith.constant 3 : index
    %c0_72 = arith.constant 0 : index
    %c0_73 = arith.constant 0 : index
    %147 = vector.load %arg6[%c3, %c0_72, %c0_73] : memref<4x64x64xbf16, #tpu.memory_space<vmem>>, vector<1x64x64xbf16>
    %148 = vector.shape_cast %147 : vector<1x64x64xbf16> to vector<64x64xbf16>
    %cst_74 = arith.constant dense<0.000000e+00> : vector<8x64xf32>
    %149 = tpu.matmul %146, %148, %cst_74 {dimension_numbers = #tpu.dot_dimension_numbers<[1], [0], [0], [1], [0, 0, 1, 1], [], []>} : vector<8x64xbf16>, vector<64x64xbf16>, vector<8x64xf32> -> vector<8x64xf32>
    %c3_75 = arith.constant 3 : index
    %c0_76 = arith.constant 0 : index
    %c0_77 = arith.constant 0 : index
    %150 = vector.load %arg7[%c3_75, %c0_76, %c0_77] : memref<4x1x64xf32, #tpu.memory_space<vmem>>, vector<1x1x64xf32>
    %151 = vector.shape_cast %150 : vector<1x1x64xf32> to vector<1x64xf32>
    %152 = vector.broadcast %151 : vector<1x64xf32> to vector<8x64xf32>
    %153 = arith.addf %149, %152 : vector<8x64xf32>
    %154 = arith.mulf %153, %153 : vector<8x64xf32>
    %cst_78 = arith.constant dense<0.000000e+00> : vector<8xf32>
    %155 = vector.multi_reduction <add>, %154, %cst_78 [1] : vector<8x64xf32> to vector<8xf32>
    %156 = vector.shape_cast %155 : vector<8xf32> to vector<8x1xf32>
    %157 = math.sqrt %156 : vector<8x1xf32>
    %cst_79 = arith.constant 9.99999993E-9 : f32
    %158 = vector.broadcast %cst_79 : f32 to vector<8x1xf32>
    %159 = arith.addf %157, %158 : vector<8x1xf32>
    %160 = vector.broadcast %159 : vector<8x1xf32> to vector<8x64xf32>
    %161 = arith.divf %153, %160 : vector<8x64xf32>
    %162 = arith.mulf %16, %12 : vector<8x1xf32>
    %163 = vector.broadcast %162 : vector<8x1xf32> to vector<8x64xf32>
    %164 = arith.mulf %161, %163 : vector<8x64xf32>
    %165 = arith.mulf %164, %164 : vector<8x64xf32>
    %cst_80 = arith.constant dense<0.000000e+00> : vector<8xf32>
    %166 = vector.multi_reduction <add>, %165, %cst_80 [1] : vector<8x64xf32> to vector<8xf32>
    %167 = vector.shape_cast %166 : vector<8xf32> to vector<8x1xf32>
    %168 = math.sqrt %167 : vector<8x1xf32>
    %169 = arith.subf %28, %164 : vector<8x64xf32>
    %170 = arith.mulf %169, %169 : vector<8x64xf32>
    %cst_81 = arith.constant dense<0.000000e+00> : vector<8xf32>
    %171 = vector.multi_reduction <add>, %170, %cst_81 [1] : vector<8x64xf32> to vector<8xf32>
    %172 = vector.shape_cast %171 : vector<8xf32> to vector<8x1xf32>
    %173 = math.sqrt %172 : vector<8x1xf32>
    %cst_82 = arith.constant 9.99999993E-9 : f32
    %174 = vector.broadcast %cst_82 : f32 to vector<8x1xf32>
    %175 = arith.addf %173, %174 : vector<8x1xf32>
    %176 = vector.broadcast %175 : vector<8x1xf32> to vector<8x64xf32>
    %177 = arith.divf %169, %176 : vector<8x64xf32>
    %178 = arith.subf %16, %168 : vector<8x1xf32>
    %179 = vector.broadcast %178 : vector<8x1xf32> to vector<8x64xf32>
    %180 = arith.mulf %177, %179 : vector<8x64xf32>
    %c0_83 = arith.constant 0 : index
    %c0_84 = arith.constant 0 : index
    %181 = vector.load %arg12[%c0_83, %c0_84] : memref<8x64xf32, #tpu.memory_space<vmem>>, vector<8x64xf32>
    tpu.vector_store %arg12[%c0_83, %c0_84], %180 {strides = array<i32>} : memref<8x64xf32, #tpu.memory_space<vmem>>, vector<8x64xf32>,
    %c0_85 = arith.constant 0 : index
    %c0_86 = arith.constant 0 : index
    %c0_87 = arith.constant 0 : index
    %182 = vector.load %arg10[%c0_85, %c0_86, %c0_87] : memref<1x8x64xf32, #tpu.memory_space<vmem>>, vector<1x8x64xf32>
    %183 = vector.shape_cast %182 : vector<1x8x64xf32> to vector<8x64xf32>
    %184 = vector.shape_cast %164 : vector<8x64xf32> to vector<1x8x64xf32>
    tpu.vector_store %arg10[%c0_85, %c0_86, %c0_87], %184 {strides = array<i32>} : memref<1x8x64xf32, #tpu.memory_space<vmem>>, vector<1x8x64xf32>,
    %c0_88 = arith.constant 0 : index
    %c0_89 = arith.constant 0 : index
    %c0_90 = arith.constant 0 : index
    %185 = vector.load %arg11[%c0_88, %c0_89, %c0_90] : memref<1x8x1xf32, #tpu.memory_space<vmem>>, vector<1x8x1xf32>
    %186 = vector.shape_cast %185 : vector<1x8x1xf32> to vector<8x1xf32>
    %187 = vector.shape_cast %168 : vector<8x1xf32> to vector<1x8x1xf32>
    tpu.vector_store %arg11[%c0_88, %c0_89, %c0_90], %187 {strides = array<i32>} : memref<1x8x1xf32, #tpu.memory_space<vmem>>, vector<1x8x1xf32>,
    return
  }
  func.func @transform_0(%arg0: i32, %arg1: i32) -> (i32, i32, i32) {
    %c0_i32 = arith.constant 0 : i32
    %c0_i32_0 = arith.constant 0 : i32
    %c0_i32_1 = arith.constant 0 : i32
    return %c0_i32, %arg0, %c0_i32_0 : i32, i32, i32
  }
  func.func @transform_1(%arg0: i32, %arg1: i32) -> (i32, i32, i32) {
    %c0_i32 = arith.constant 0 : i32
    %c0_i32_0 = arith.constant 0 : i32
    return %arg1, %arg0, %c0_i32 : i32, i32, i32
  }
  func.func @transform_2(%arg0: i32, %arg1: i32) -> (i32, i32, i32) {
    %c0_i32 = arith.constant 0 : i32
    %c0_i32_0 = arith.constant 0 : i32
    return %arg1, %arg0, %c0_i32 : i32, i32, i32
  }
  func.func @transform_3(%arg0: i32, %arg1: i32) -> (i32, i32, i32) {
    %c0_i32 = arith.constant 0 : i32
    %c0_i32_0 = arith.constant 0 : i32
    return %arg1, %arg0, %c0_i32 : i32, i32, i32
  }
  func.func @transform_4(%arg0: i32, %arg1: i32) -> (i32, i32, i32) {
    %c0_i32 = arith.constant 0 : i32
    %c0_i32_0 = arith.constant 0 : i32
    %c0_i32_1 = arith.constant 0 : i32
    %c0_i32_2 = arith.constant 0 : i32
    return %c0_i32, %c0_i32_0, %c0_i32_1 : i32, i32, i32
  }
  func.func @transform_5(%arg0: i32, %arg1: i32) -> (i32, i32, i32) {
    %c0_i32 = arith.constant 0 : i32
    %c0_i32_0 = arith.constant 0 : i32
    %c0_i32_1 = arith.constant 0 : i32
    %c0_i32_2 = arith.constant 0 : i32
    return %c0_i32, %c0_i32_0, %c0_i32_1 : i32, i32, i32
  }
  func.func @transform_6(%arg0: i32, %arg1: i32) -> (i32, i32, i32) {
    %c0_i32 = arith.constant 0 : i32
    %c0_i32_0 = arith.constant 0 : i32
    %c0_i32_1 = arith.constant 0 : i32
    %c0_i32_2 = arith.constant 0 : i32
    return %c0_i32, %c0_i32_0, %c0_i32_1 : i32, i32, i32
  }
  func.func @transform_7(%arg0: i32, %arg1: i32) -> (i32, i32, i32) {
    %c0_i32 = arith.constant 0 : i32
    %c0_i32_0 = arith.constant 0 : i32
    %c0_i32_1 = arith.constant 0 : i32
    %c0_i32_2 = arith.constant 0 : i32
    return %c0_i32, %c0_i32_0, %c0_i32_1 : i32, i32, i32
  }
  func.func @transform_8(%arg0: i32, %arg1: i32) -> (i32, i32, i32) {
    %c0_i32 = arith.constant 0 : i32
    %c0_i32_0 = arith.constant 0 : i32
    return %arg1, %arg0, %c0_i32 : i32, i32, i32
  }
  func.func @transform_9(%arg0: i32, %arg1: i32) -> (i32, i32, i32) {
    %c0_i32 = arith.constant 0 : i32
    %c0_i32_0 = arith.constant 0 : i32
    return %arg1, %arg0, %c0_i32 : i32, i32, i32
  }
}

</mosaic_0001>

<llo_original>
// kernel: model_forward.10
$region0: #{model_forward.10}
  #allocation0 [shape = 'u32[]', space=smem, size = 0x4, offset = 0x4, fixed_abs, tag = 'smem constant byte address 0x4 - core index']
  #allocation1 [shape = 'u32[144,128]{1,0:T(1,128)}', space=vmem, size = 0x12000, scoped, tag = 'internal scratch']
  %s0 = inlined_call_operand.vmem [shape: bf16[8,64], index: 0, kind: input, shape index: {}]
  %s1 = inlined_call_operand.vmem [shape: bf16[64,256], index: 1, kind: input, shape index: {}]
  %s2 = inlined_call_operand.vmem [shape: f32[1,256], index: 2, kind: input, shape index: {}]
  %s3 = inlined_call_operand.vmem [shape: f32[8,256], index: 3, kind: output, shape index: {}]
  %s4 = sld [smem:[#allocation0]]
  $region22: #{model_forward.10} parent=0
    _
  %s6 = ssub.s32 1, %s4
  %s7 = scalar_select 0, %s6, %s4
  // Predicated region
  $region2: #{model_forward.10} parent=0 // pred_check
    _
  $region3: #{model_forward.10} parent=0 // pred_check_branch
    %9 = sbr.rel (0) target = $region5
  $region4: #{model_forward.10} parent=0 // pred_region
    _
  $region5: #{model_forward.10} parent=0 // pred_fallthru
    _
  // Predicated region
  $region6: #{model_forward.10} parent=0 // pred_check
    _
  $region7: #{model_forward.10} parent=0 // pred_check_branch
    %11 = sbr.rel (0) target = $region9
  $region8: #{model_forward.10} parent=0 // pred_region
    _
  $region9: #{model_forward.10} parent=0 // pred_fallthru
    _
  // Predicated region
  $region10: #{model_forward.10} parent=0 // pred_check
    _
  $region11: #{model_forward.10} parent=0 // pred_check_branch
    %13 = sbr.rel (0) target = $region13
  $region12: #{model_forward.10} parent=0 // pred_region
    _
  $region13: #{model_forward.10} parent=0 // pred_fallthru
    _
  %v15 = vld [vmem:[%s0] sm:$0xf]
  %v16 = vld [vmem:[%s1] sm:$0xff]
  %v17 = vld [vmem:[%s1 + $0x8] sm:$0xff]
  %v18 = vld [vmem:[%s1 + $0x10] sm:$0xff]
  %v19 = vld [vmem:[%s1 + $0x18] sm:$0xff]
  %v20 = vld [vmem:[%s1 + $0x20] sm:$0xff]
  %v21 = vld [vmem:[%s1 + $0x28] sm:$0xff]
  %v22 = vld [vmem:[%s1 + $0x30] sm:$0xff]
  %v23 = vld [vmem:[%s1 + $0x38] sm:$0xff]
  %v24 = vld [vmem:[%s2] sm:$0x3]
  %v26 = vlaneseq
  %v27 = vshrl.u32 %v26, 7
  %v28 = vsub.s32 0, %v27
  %v29 = vrot.slane %v24, %v28
  %v30 = vlaneseq
  %v31 = vshrl.u32 %v30, 7
  %v32 = vsub.s32 1, %v31
  %v33 = vrot.slane %v24, %v32
  %v44 = vunpack.c.l.b16 %v16
  %v45 = vunpack.c.h.b16 %v16
  %v46 = vunpack.c.l.b16 %v17
  %v47 = vunpack.c.h.b16 %v17
  %v48 = vunpack.c.l.b16 %v18
  %v49 = vunpack.c.h.b16 %v18
  %v50 = vunpack.c.l.b16 %v19
  %v51 = vunpack.c.h.b16 %v19
  %v52 = vunpack.c.l.b16 %v20
  %v53 = vunpack.c.h.b16 %v20
  %v54 = vunpack.c.l.b16 %v21
  %v55 = vunpack.c.h.b16 %v21
  %v56 = vunpack.c.l.b16 %v22
  %v57 = vunpack.c.h.b16 %v22
  %v58 = vunpack.c.l.b16 %v23
  %v59 = vunpack.c.h.b16 %v23
  %v60 = vpack.c.b16 %v46, %v44
  %v61 = vpack.c.b16 %v47, %v45
  %v62 = vpack.c.b16 %v50, %v48
  %v63 = vpack.c.b16 %v51, %v49
  %v64 = vpack.c.b16 %v54, %v52
  %v65 = vpack.c.b16 %v55, %v53
  %v66 = vpack.c.b16 %v58, %v56
  %v67 = vpack.c.b16 %v59, %v57
  %vm76 = vcmask 523264
  %v78 = vsel %vm76, %v15, 0
  %80 = vmatprep.subr.bf16.mxu0 %v61
  %81 = vmatpush1.bf16.msra.mxu0 %v60
  %82 = vmatprep.subr.bf16.mxu0 %v63
  %83 = vmatpush1.bf16.msra.mxu0 %v62
  %84 = vmatprep.subr.bf16.mxu0 %v65
  %85 = vmatpush1.bf16.msra.mxu0 %v64
  %86 = vmatprep.subr.bf16.mxu0 %v67
  %87 = vmatpush1.bf16.msra.mxu0 %v66
  %88 = vmatprep.subr.bf16.mxu0 0
  %89 = vmatpush1.bf16.msra.mxu0 0
  %90 = vmatprep.subr.bf16.mxu0 0
  %91 = vmatpush1.bf16.msra.mxu0 0
  %92 = vmatprep.subr.bf16.mxu0 0
  %93 = vmatpush1.bf16.msra.mxu0 0
  %94 = vmatprep.subr.bf16.mxu0 0
  %95 = vmatpush1.bf16.msra.mxu0 0
  %96 = vmatprep.subr.bf16.mxu0 0
  %97 = vmatpush1.bf16.msra.mxu0 0
  %98 = vmatprep.subr.bf16.mxu0 0
  %99 = vmatpush1.bf16.msra.mxu0 0
  %100 = vmatprep.subr.bf16.mxu0 0
  %101 = vmatpush1.bf16.msra.mxu0 0
  %102 = vmatprep.subr.bf16.mxu0 0
  %103 = vmatpush1.bf16.msra.mxu0 0
  %104 = vmatprep.subr.bf16.mxu0 0
  %105 = vmatpush1.bf16.msra.mxu0 0
  %106 = vmatprep.subr.bf16.mxu0 0
  %107 = vmatpush1.bf16.msra.mxu0 0
  %108 = vmatprep.subr.bf16.mxu0 0
  %109 = vmatpush1.bf16.msra.mxu0 0
  %110 = vmatprep.subr.bf16.mxu0 0
  %111 = vmatpush1.bf16.msra.mxu0 0
  %112 = vmatprep.mubr.bf16.mxu0 0
  %113 = vmatmul.mubr.bf16.gmra.mrb[0].mxu0 %v78
  %v114 = vpop.f32.mrb[0].mxu0
  %v115 = vadd.f32 %v29, %v114
  %v116 = vpop.f32.mrb[0].mxu0
  %v117 = vadd.f32 %v33, %v116
  %v118 = vpop.f32.mrb[0].mxu0
  %v119 = vpop.f32.mrb[0].mxu0
  %120 = vdwg.mxu0
  %121 = vst [vmem:[%s3] sm:$0xff] %v115
  %122 = vst [vmem:[%s3 + $0x8] sm:$0xff] %v117
  // Predicated region
  $region14: #{model_forward.10} parent=0 // pred_check
    _
  $region15: #{model_forward.10} parent=0 // pred_check_branch
    %124 = sbr.rel (0) target = $region17
  $region16: #{model_forward.10} parent=0 // pred_region
    _
  $region17: #{model_forward.10} parent=0 // pred_fallthru
    _
  // Predicated region
  $region18: #{model_forward.10} parent=0 // pred_check
    _
  $region19: #{model_forward.10} parent=0 // pred_check_branch
    %126 = sbr.rel (0) target = $region21
  $region20: #{model_forward.10} parent=0 // pred_region
    _
  $region21: #{model_forward.10} parent=0 // pred_fallthru
    _

// kernel: model_forward.9
$region0: #{model_forward.9}
  #allocation0 [shape = 'u32[]', space=smem, size = 0x4, offset = 0x4, fixed_abs, tag = 'smem constant byte address 0x4 - core index']
  #allocation1 [shape = 'u32[144,128]{1,0:T(1,128)}', space=vmem, size = 0x12000, scoped, tag = 'internal scratch']
  %s0 = inlined_call_operand.vmem [shape: bf16[8,64], index: 0, kind: input, shape index: {}]
  %s1 = inlined_call_operand.vmem [shape: bf16[64,64], index: 1, kind: input, shape index: {}]
  %s2 = inlined_call_operand.vmem [shape: f32[1,64], index: 2, kind: input, shape index: {}]
  %s3 = inlined_call_operand.vmem [shape: f32[8,64], index: 3, kind: output, shape index: {}]
  %s4 = sld [smem:[#allocation0]]
  $region22: #{model_forward.9} parent=0
    _
  %s6 = ssub.s32 1, %s4
  %s7 = scalar_select 0, %s6, %s4
  // Predicated region
  $region2: #{model_forward.9} parent=0 // pred_check
    _
  $region3: #{model_forward.9} parent=0 // pred_check_branch
    %9 = sbr.rel (0) target = $region5
  $region4: #{model_forward.9} parent=0 // pred_region
    _
  $region5: #{model_forward.9} parent=0 // pred_fallthru
    _
  // Predicated region
  $region6: #{model_forward.9} parent=0 // pred_check
    _
  $region7: #{model_forward.9} parent=0 // pred_check_branch
    %11 = sbr.rel (0) target = $region9
  $region8: #{model_forward.9} parent=0 // pred_region
    _
  $region9: #{model_forward.9} parent=0 // pred_fallthru
    _
  // Predicated region
  $region10: #{model_forward.9} parent=0 // pred_check
    _
  $region11: #{model_forward.9} parent=0 // pred_check_branch
    %13 = sbr.rel (0) target = $region13
  $region12: #{model_forward.9} parent=0 // pred_region
    _
  $region13: #{model_forward.9} parent=0 // pred_fallthru
    _
  %v15 = vld [vmem:[%s0] sm:$0xf]
  %v16 = vld [vmem:[%s1] sm:$0xf]
  %v17 = vld [vmem:[%s1 + $0x4] sm:$0xf]
  %v18 = vld [vmem:[%s1 + $0x8] sm:$0xf]
  %v19 = vld [vmem:[%s1 + $0xc] sm:$0xf]
  %v20 = vld [vmem:[%s1 + $0x10] sm:$0xf]
  %v21 = vld [vmem:[%s1 + $0x14] sm:$0xf]
  %v22 = vld [vmem:[%s1 + $0x18] sm:$0xf]
  %v23 = vld [vmem:[%s1 + $0x1c] sm:$0xf]
  %v24 = vld [vmem:[%s2] sm:$0x1]
  %v26 = vlaneseq
  %v27 = vshrl.u32 %v26, 7
  %v28 = vsub.s32 0, %v27
  %v29 = vrot.slane %v24, %v28
  %v39 = vunpack.c.l.b16 %v16
  %v40 = vunpack.c.l.b16 %v17
  %v41 = vunpack.c.l.b16 %v18
  %v42 = vunpack.c.l.b16 %v19
  %v43 = vunpack.c.l.b16 %v20
  %v44 = vunpack.c.l.b16 %v21
  %v45 = vunpack.c.l.b16 %v22
  %v46 = vunpack.c.l.b16 %v23
  %v47 = vpack.c.b16 %v40, %v39
  %v48 = vpack.c.b16 %v42, %v41
  %v49 = vpack.c.b16 %v44, %v43
  %v50 = vpack.c.b16 %v46, %v45
  %vm55 = vcmask 523264
  %v57 = vsel %vm55, %v15, 0
  %59 = vmatprep.subr.bf16.mxu0 0
  %60 = vmatpush1.bf16.msra.mxu0 %v47
  %61 = vmatprep.subr.bf16.mxu0 0
  %62 = vmatpush1.bf16.msra.mxu0 %v48
  %63 = vmatprep.subr.bf16.mxu0 0
  %64 = vmatpush1.bf16.msra.mxu0 %v49
  %65 = vmatprep.subr.bf16.mxu0 0
  %66 = vmatpush1.bf16.msra.mxu0 %v50
  %67 = vmatprep.subr.bf16.mxu0 0
  %68 = vmatpush1.bf16.msra.mxu0 0
  %69 = vmatprep.subr.bf16.mxu0 0
  %70 = vmatpush1.bf16.msra.mxu0 0
  %71 = vmatprep.subr.bf16.mxu0 0
  %72 = vmatpush1.bf16.msra.mxu0 0
  %73 = vmatprep.subr.bf16.mxu0 0
  %74 = vmatpush1.bf16.msra.mxu0 0
  %75 = vmatprep.subr.bf16.mxu0 0
  %76 = vmatpush1.bf16.msra.mxu0 0
  %77 = vmatprep.subr.bf16.mxu0 0
  %78 = vmatpush1.bf16.msra.mxu0 0
  %79 = vmatprep.subr.bf16.mxu0 0
  %80 = vmatpush1.bf16.msra.mxu0 0
  %81 = vmatprep.subr.bf16.mxu0 0
  %82 = vmatpush1.bf16.msra.mxu0 0
  %83 = vmatprep.subr.bf16.mxu0 0
  %84 = vmatpush1.bf16.msra.mxu0 0
  %85 = vmatprep.subr.bf16.mxu0 0
  %86 = vmatpush1.bf16.msra.mxu0 0
  %87 = vmatprep.subr.bf16.mxu0 0
  %88 = vmatpush1.bf16.msra.mxu0 0
  %89 = vmatprep.subr.bf16.mxu0 0
  %90 = vmatpush1.bf16.msra.mxu0 0
  %91 = vmatprep.mubr.bf16.mxu0 0
  %92 = vmatmul.mubr.bf16.gmra.mrb[0].mxu0 %v57
  %v93 = vpop.f32.mrb[0].mxu0
  %v94 = vadd.f32 %v29, %v93
  %v95 = vpop.f32.mrb[0].mxu0
  %v96 = vpop.f32.mrb[0].mxu0
  %v97 = vpop.f32.mrb[0].mxu0
  %98 = vdwg.mxu0
  %99 = vst.msk [vmem:[%s3] sm:$0xff] %vm55, %v94
  // Predicated region
  $region14: #{model_forward.9} parent=0 // pred_check
    _
  $region15: #{model_forward.9} parent=0 // pred_check_branch
    %101 = sbr.rel (0) target = $region17
  $region16: #{model_forward.9} parent=0 // pred_region
    _
  $region17: #{model_forward.9} parent=0 // pred_fallthru
    _
  // Predicated region
  $region18: #{model_forward.9} parent=0 // pred_check
    _
  $region19: #{model_forward.9} parent=0 // pred_check_branch
    %103 = sbr.rel (0) target = $region21
  $region20: #{model_forward.9} parent=0 // pred_region
    _
  $region21: #{model_forward.9} parent=0 // pred_fallthru
    _

// kernel: model_forward.8
$region0: #{model_forward.8}
  #allocation0 [shape = 'u32[]', space=smem, size = 0x4, offset = 0x4, fixed_abs, tag = 'smem constant byte address 0x4 - core index']
  #allocation1 [shape = 'u32[144,128]{1,0:T(1,128)}', space=vmem, size = 0x12000, scoped, tag = 'internal scratch']
  %s0 = inlined_call_operand.vmem [shape: bf16[10,256], index: 0, kind: input, shape index: {}]
  %s1 = inlined_call_operand.hbm [shape: bf16[256,256], index: 1, kind: input, shape index: {}]
  %s2 = inlined_call_operand.vmem [shape: f32[1,256], index: 2, kind: input, shape index: {}]
  %s3 = inlined_call_operand.vmem [shape: f32[10,256], index: 3, kind: output, shape index: {}]
  %s4 = sld [smem:[#allocation0]]
  $region26: #{model_forward.8} parent=0
    _
  %s6 = ssub.s32 1, %s4
  %s7 = scalar_select 0, %s6, %s4
  $region1: #{model_forward.8} parent=0
    #allocation2 [shape = 'u8[131072]{0}', space=vmem, size = 0x20000, scoped, tag = 'input window, operand 1, single buffered']
    #allocation3 [shape = 's32[1]{0}', space=sflag, size = 0x4, scoped, tag = 'scoped memory for model_forward.8']
    %8 = vsyncpa [#allocation3], 0
    // Predicated region
    $region2: #{model_forward.8} parent=1 // pred_check
      _
    $region3: #{model_forward.8} parent=1 // pred_check_branch
      %10 = sbr.rel (0) target = $region5
    $region4: #{model_forward.8} parent=1 // pred_region
      _
    $region5: #{model_forward.8} parent=1 // pred_fallthru
      _
    // Predicated region
    $region6: #{model_forward.8} parent=1 // pred_check
      _
    $region7: #{model_forward.8} parent=1 // pred_check_branch
      %12 = sbr.rel (0) target = $region9
    $region8: #{model_forward.8} parent=1 // pred_region
      %s14 = ssub.s32 4096, 4096
      %15 = vsyncadd [#allocation3], %s14
      %s16 = sshll.u32 [#allocation2], 4
      %s17 = int_to_ptr.vmem [resolvable:$true] %s16
      %22 = dma.hbm_to_vmem [thread:$0]  %s1, 4096, %s17, [#allocation3], 128, 128, 8
    $region9: #{model_forward.8} parent=1 // pred_fallthru
      _
    // Predicated region
    $region10: #{model_forward.8} parent=1 // pred_check
      _
    $region11: #{model_forward.8} parent=1 // pred_check_branch
      %24 = sbr.rel (0) target = $region13
    $region12: #{model_forward.8} parent=1 // pred_region
      _
    $region13: #{model_forward.8} parent=1 // pred_fallthru
      _
    // Predicated region
    $region14: #{model_forward.8} parent=1 // pred_check
      _
    $region15: #{model_forward.8} parent=1 // pred_check_branch
      %26 = sbr.rel (0) target = $region17
    $region16: #{model_forward.8} parent=1 // pred_region
      %27 = dma.done [#allocation3], 4096
    $region17: #{model_forward.8} parent=1 // pred_fallthru
      _
    %v28 = vld [vmem:[%s0] sm:$0xff]
    %v29 = vld [vmem:[%s0 + $0x8] sm:$0x11]
    %v30 = vld [vmem:[#allocation2] sm:$0xff]
    %v31 = vld [vmem:[#allocation2 + $0x8] sm:$0xff]
    %v32 = vld [vmem:[#allocation2 + $0x10] sm:$0xff]
    %v33 = vld [vmem:[#allocation2 + $0x18] sm:$0xff]
    %v34 = vld [vmem:[#allocation2 + $0x20] sm:$0xff]
    %v35 = vld [vmem:[#allocation2 + $0x28] sm:$0xff]
    %v36 = vld [vmem:[#allocation2 + $0x30] sm:$0xff]
    %v37 = vld [vmem:[#allocation2 + $0x38] sm:$0xff]
    %v38 = vld [vmem:[#allocation2 + $0x40] sm:$0xff]
    %v39 = vld [vmem:[#allocation2 + $0x48] sm:$0xff]
    %v40 = vld [vmem:[#allocation2 + $0x50] sm:$0xff]
    %v41 = vld [vmem:[#allocation2 + $0x58] sm:$0xff]
    %v42 = vld [vmem:[#allocation2 + $0x60] sm:$0xff]
    %v43 = vld [vmem:[#allocation2 + $0x68] sm:$0xff]
    %v44 = vld [vmem:[#allocation2 + $0x70] sm:$0xff]
    %v45 = vld [vmem:[#allocation2 + $0x78] sm:$0xff]
    %v46 = vld [vmem:[#allocation2 + $0x80] sm:$0xff]
    %v47 = vld [vmem:[#allocation2 + $0x88] sm:$0xff]
    %v48 = vld [vmem:[#allocation2 + $0x90] sm:$0xff]
    %v49 = vld [vmem:[#allocation2 + $0x98] sm:$0xff]
    %v50 = vld [vmem:[#allocation2 + $0xa0] sm:$0xff]
    %v51 = vld [vmem:[#allocation2 + $0xa8] sm:$0xff]
    %v52 = vld [vmem:[#allocation2 + $0xb0] sm:$0xff]
    %v53 = vld [vmem:[#allocation2 + $0xb8] sm:$0xff]
    %v54 = vld [vmem:[#allocation2 + $0xc0] sm:$0xff]
    %v55 = vld [vmem:[#allocation2 + $0xc8] sm:$0xff]
    %v56 = vld [vmem:[#allocation2 + $0xd0] sm:$0xff]
    %v57 = vld [vmem:[#allocation2 + $0xd8] sm:$0xff]
    %v58 = vld [vmem:[#allocation2 + $0xe0] sm:$0xff]
    %v59 = vld [vmem:[#allocation2 + $0xe8] sm:$0xff]
    %v60 = vld [vmem:[#allocation2 + $0xf0] sm:$0xff]
    %v61 = vld [vmem:[#allocation2 + $0xf8] sm:$0xff]
    %v62 = vld [vmem:[%s2] sm:$0x3]
    %v64 = vlaneseq
    %v65 = vshrl.u32 %v64, 7
    %v66 = vsub.s32 0, %v65
    %v67 = vrot.slane %v62, %v66
    %v68 = vlaneseq
    %v69 = vshrl.u32 %v68, 7
    %v70 = vsub.s32 1, %v69
    %v71 = vrot.slane %v62, %v70
    %v76 = vunpack.c.l.b16 %v28
    %v77 = vunpack.c.h.b16 %v28
    %v78 = vunpack.c.l.b16 %v29
    %v79 = vunpack.c.h.b16 %v29
    %v80 = vpack.c.b16 %v78, %v76
    %v81 = vpack.c.b16 %v79, %v77
    %v116 = vunpack.c.l.b16 %v30
    %v117 = vunpack.c.h.b16 %v30
    %v118 = vunpack.c.l.b16 %v31
    %v119 = vunpack.c.h.b16 %v31
    %v120 = vunpack.c.l.b16 %v32
    %v121 = vunpack.c.h.b16 %v32
    %v122 = vunpack.c.l.b16 %v33
    %v123 = vunpack.c.h.b16 %v33
    %v124 = vunpack.c.l.b16 %v34
    %v125 = vunpack.c.h.b16 %v34
    %v126 = vunpack.c.l.b16 %v35
    %v127 = vunpack.c.h.b16 %v35
    %v128 = vunpack.c.l.b16 %v36
    %v129 = vunpack.c.h.b16 %v36
    %v130 = vunpack.c.l.b16 %v37
    %v131 = vunpack.c.h.b16 %v37
    %v132 = vunpack.c.l.b16 %v38
    %v133 = vunpack.c.h.b16 %v38
    %v134 = vunpack.c.l.b16 %v39
    %v135 = vunpack.c.h.b16 %v39
    %v136 = vunpack.c.l.b16 %v40
    %v137 = vunpack.c.h.b16 %v40
    %v138 = vunpack.c.l.b16 %v41
    %v139 = vunpack.c.h.b16 %v41
    %v140 = vunpack.c.l.b16 %v42
    %v141 = vunpack.c.h.b16 %v42
    %v142 = vunpack.c.l.b16 %v43
    %v143 = vunpack.c.h.b16 %v43
    %v144 = vunpack.c.l.b16 %v44
    %v145 = vunpack.c.h.b16 %v44
    %v146 = vunpack.c.l.b16 %v45
    %v147 = vunpack.c.h.b16 %v45
    %v148 = vunpack.c.l.b16 %v46
    %v149 = vunpack.c.h.b16 %v46
    %v150 = vunpack.c.l.b16 %v47
    %v151 = vunpack.c.h.b16 %v47
    %v152 = vunpack.c.l.b16 %v48
    %v153 = vunpack.c.h.b16 %v48
    %v154 = vunpack.c.l.b16 %v49
    %v155 = vunpack.c.h.b16 %v49
    %v156 = vunpack.c.l.b16 %v50
    %v157 = vunpack.c.h.b16 %v50
    %v158 = vunpack.c.l.b16 %v51
    %v159 = vunpack.c.h.b16 %v51
    %v160 = vunpack.c.l.b16 %v52
    %v161 = vunpack.c.h.b16 %v52
    %v162 = vunpack.c.l.b16 %v53
    %v163 = vunpack.c.h.b16 %v53
    %v164 = vunpack.c.l.b16 %v54
    %v165 = vunpack.c.h.b16 %v54
    %v166 = vunpack.c.l.b16 %v55
    %v167 = vunpack.c.h.b16 %v55
    %v168 = vunpack.c.l.b16 %v56
    %v169 = vunpack.c.h.b16 %v56
    %v170 = vunpack.c.l.b16 %v57
    %v171 = vunpack.c.h.b16 %v57
    %v172 = vunpack.c.l.b16 %v58
    %v173 = vunpack.c.h.b16 %v58
    %v174 = vunpack.c.l.b16 %v59
    %v175 = vunpack.c.h.b16 %v59
    %v176 = vunpack.c.l.b16 %v60
    %v177 = vunpack.c.h.b16 %v60
    %v178 = vunpack.c.l.b16 %v61
    %v179 = vunpack.c.h.b16 %v61
    %v180 = vpack.c.b16 %v118, %v116
    %v181 = vpack.c.b16 %v119, %v117
    %v182 = vpack.c.b16 %v122, %v120
    %v183 = vpack.c.b16 %v123, %v121
    %v184 = vpack.c.b16 %v126, %v124
    %v185 = vpack.c.b16 %v127, %v125
    %v186 = vpack.c.b16 %v130, %v128
    %v187 = vpack.c.b16 %v131, %v129
    %v188 = vpack.c.b16 %v134, %v132
    %v189 = vpack.c.b16 %v135, %v133
    %v190 = vpack.c.b16 %v138, %v136
    %v191 = vpack.c.b16 %v139, %v137
    %v192 = vpack.c.b16 %v142, %v140
    %v193 = vpack.c.b16 %v143, %v141
    %v194 = vpack.c.b16 %v146, %v144
    %v195 = vpack.c.b16 %v147, %v145
    %v196 = vpack.c.b16 %v150, %v148
    %v197 = vpack.c.b16 %v151, %v149
    %v198 = vpack.c.b16 %v154, %v152
    %v199 = vpack.c.b16 %v155, %v153
    %v200 = vpack.c.b16 %v158, %v156
    %v201 = vpack.c.b16 %v159, %v157
    %v202 = vpack.c.b16 %v162, %v160
    %v203 = vpack.c.b16 %v163, %v161
    %v204 = vpack.c.b16 %v166, %v164
    %v205 = vpack.c.b16 %v167, %v165
    %v206 = vpack.c.b16 %v170, %v168
    %v207 = vpack.c.b16 %v171, %v169
    %v208 = vpack.c.b16 %v174, %v172
    %v209 = vpack.c.b16 %v175, %v173
    %v210 = vpack.c.b16 %v178, %v176
    %v211 = vpack.c.b16 %v179, %v177
    %244 = vmatprep.subr.bf16.mxu0 %v181
    %245 = vmatpush1.bf16.msra.mxu0 %v180
    %246 = vmatprep.subr.bf16.mxu0 %v183
    %247 = vmatpush1.bf16.msra.mxu0 %v182
    %248 = vmatprep.subr.bf16.mxu0 %v185
    %249 = vmatpush1.bf16.msra.mxu0 %v184
    %250 = vmatprep.subr.bf16.mxu0 %v187
    %251 = vmatpush1.bf16.msra.mxu0 %v186
    %252 = vmatprep.subr.bf16.mxu0 %v189
    %253 = vmatpush1.bf16.msra.mxu0 %v188
    %254 = vmatprep.subr.bf16.mxu0 %v191
    %255 = vmatpush1.bf16.msra.mxu0 %v190
    %256 = vmatprep.subr.bf16.mxu0 %v193
    %257 = vmatpush1.bf16.msra.mxu0 %v192
    %258 = vmatprep.subr.bf16.mxu0 %v195
    %259 = vmatpush1.bf16.msra.mxu0 %v194
    %260 = vmatprep.subr.bf16.mxu0 %v197
    %261 = vmatpush1.bf16.msra.mxu0 %v196
    %262 = vmatprep.subr.bf16.mxu0 %v199
    %263 = vmatpush1.bf16.msra.mxu0 %v198
    %264 = vmatprep.subr.bf16.mxu0 %v201
    %265 = vmatpush1.bf16.msra.mxu0 %v200
    %266 = vmatprep.subr.bf16.mxu0 %v203
    %267 = vmatpush1.bf16.msra.mxu0 %v202
    %268 = vmatprep.subr.bf16.mxu0 %v205
    %269 = vmatpush1.bf16.msra.mxu0 %v204
    %270 = vmatprep.subr.bf16.mxu0 %v207
    %271 = vmatpush1.bf16.msra.mxu0 %v206
    %272 = vmatprep.subr.bf16.mxu0 %v209
    %273 = vmatpush1.bf16.msra.mxu0 %v208
    %274 = vmatprep.subr.bf16.mxu0 %v211
    %275 = vmatpush1.bf16.msra.mxu0 %v210
    %276 = vmatprep.mubr.bf16.mxu0 %v81
    %277 = vmatmul.mubr.bf16.gmra.mrb[0].mxu0 %v80
    %v278 = vpop.f32.mrb[0].mxu0
    %v279 = vadd.f32 %v67, %v278
    %v280 = vpop.f32.mrb[0].mxu0
    %v281 = vadd.f32 %v71, %v280
    %v282 = vpop.f32.mrb[0].mxu0
    %v283 = vadd.f32 %v67, %v282
    %v284 = vpop.f32.mrb[0].mxu0
    %v285 = vadd.f32 %v71, %v284
    %286 = vdwg.mxu0
    %287 = vst [vmem:[%s3] sm:$0xff] %v279
    %288 = vst [vmem:[%s3 + $0x8] sm:$0xff] %v281
    %289 = vst [vmem:[%s3 + $0x10] sm:$0x3] %v283
    %290 = vst [vmem:[%s3 + $0x18] sm:$0x3] %v285
    // Predicated region
    $region18: #{model_forward.8} parent=1 // pred_check
      _
    $region19: #{model_forward.8} parent=1 // pred_check_branch
      %292 = sbr.rel (0) target = $region21
    $region20: #{model_forward.8} parent=1 // pred_region
      _
    $region21: #{model_forward.8} parent=1 // pred_fallthru
      _
    // Predicated region
    $region22: #{model_forward.8} parent=1 // pred_check
      _
    $region23: #{model_forward.8} parent=1 // pred_check_branch
      %294 = sbr.rel (0) target = $region25
    $region24: #{model_forward.8} parent=1 // pred_region
      _
    $region25: #{model_forward.8} parent=1 // pred_fallthru
      _
    %295 = vsyncpa [#allocation3], 1

// kernel: model_forward.11
$region0: #{model_forward.11}
  #allocation0 [shape = 'u32[]', space=smem, size = 0x4, offset = 0x4, fixed_abs, tag = 'smem constant byte address 0x4 - core index']
  #allocation1 [shape = 'u32[144,128]{1,0:T(1,128)}', space=vmem, size = 0x12000, scoped, tag = 'internal scratch']
  %s0 = inlined_call_operand.vmem [shape: bf16[64,64], index: 0, kind: input, shape index: {}]
  %s1 = inlined_call_operand.vmem [shape: bf16[4,64,64], index: 1, kind: input, shape index: {}]
  %s2 = inlined_call_operand.vmem [shape: f32[4,1,64], index: 2, kind: input, shape index: {}]
  %s3 = inlined_call_operand.vmem [shape: f32[3,1,64], index: 3, kind: input, shape index: {}]
  %s4 = inlined_call_operand.vmem [shape: f32[3,1,64], index: 4, kind: input, shape index: {}]
  %s5 = inlined_call_operand.vmem [shape: f32[64,64], index: 5, kind: output, shape index: {}]
  %s6 = sld [smem:[#allocation0]]
  $region53: #{model_forward.11} parent=0
    _
  %s8 = ssub.s32 1, %s6
  %s9 = scalar_select 0, %s8, %s6
  loop: start=0, step=1, limit=4
  $region2: #{model_forward.11} parent=0 // loop_pre_header
    _
  $region3: #{model_forward.11} parent=0 // loop_header
    %s11 = sphi 0, %s15
    %p12 = scmp.ge.s32.totalorder %s11, 4
    %s21 = sphi 0, %s23
    %s24 = sphi 0, %s21
    %s25 = sphi 0, %s24
    %s41 = sphi 0, %s25
    %s45 = sphi 0, %s45
    %s47 = sphi 0, %s45
    %s48 = sphi 0, %s47
    %s62 = sphi 0, %s48
    %s66 = sphi 0, %s66
    %s68 = sphi 0, %s66
    %s69 = sphi 0, %s68
    %s83 = sphi 0, %s69
    %s87 = sphi 0, %s87
    %s89 = sphi 0, %s87
    %s90 = sphi 0, %s89
    %s104 = sphi 0, %s90
    %s108 = sphi 0, %s108
    %s110 = sphi 0, %s108
    %s111 = sphi 0, %s110
    %s125 = sphi 0, %s111
    %s131 = sphi 0, %s133
    %s134 = sphi 0, %s131
    %s135 = sphi 0, %s134
    %s151 = sphi 0, %s135
  $region4: #{model_forward.11} parent=0 // loop_header_branch
    %14 = sbr.rel (%p12) target = $region8
  $region5: #{model_forward.11} parent=0 // loop_body
    %s16 = ssub.s32 %s11, 1
    %s17 = ssub.s32 %s11, 2
    %s18 = sadd.s32 %s11, 1
    %s19 = ssub.s32 %s11, %s18
    %p20 = scmp.eq.s32.totalorder %s19, 0
    %s22 = sadd.s32 %s21, 1
    %s23 = scalar_select %p20, %s21, %s22
    %p26 = pneg %p20
    %p27 = scmp.eq.s32.totalorder %s11, 1
    %p28 = por %p26, %p27
    %p29 = scmp.ne.s32.totalorder %s21, %s24
    %p30 = scmp.eq.s32.totalorder %s11, 0
    %p31 = por %p29, %p30
    %p32 = scmp.ne.s32.totalorder %s21, %s24
    %p33 = scmp.eq.s32.totalorder %s16, 1
    %p34 = por %p32, %p33
    %p35 = scmp.ne.s32.totalorder %s24, %s25
    %p36 = scmp.eq.s32.totalorder %s16, 0
    %p37 = por %p35, %p36
    %p38 = scmp.ne.s32.totalorder %s24, %s25
    %p39 = scmp.eq.s32.totalorder %s17, 1
    %p40 = por %p38, %p39
    %p42 = scmp.ne.s32.totalorder %s25, %s41
    %p43 = scmp.eq.s32.totalorder %s17, 0
    %p44 = por %p42, %p43
    %s46 = sadd.s32 %s45, 1
    %p49 = scmp.eq.s32.totalorder %s11, 1
    %p50 = scmp.ne.s32.totalorder %s45, %s47
    %p51 = scmp.eq.s32.totalorder %s11, 0
    %p52 = por %p50, %p51
    %p53 = scmp.ne.s32.totalorder %s45, %s47
    %p54 = scmp.eq.s32.totalorder %s16, 1
    %p55 = por %p53, %p54
    %p56 = scmp.ne.s32.totalorder %s47, %s48
    %p57 = scmp.eq.s32.totalorder %s16, 0
    %p58 = por %p56, %p57
    %p59 = scmp.ne.s32.totalorder %s47, %s48
    %p60 = scmp.eq.s32.totalorder %s17, 1
    %p61 = por %p59, %p60
    %p63 = scmp.ne.s32.totalorder %s48, %s62
    %p64 = scmp.eq.s32.totalorder %s17, 0
    %p65 = por %p63, %p64
    %s67 = sadd.s32 %s66, 1
    %p70 = scmp.eq.s32.totalorder %s11, 1
    %p71 = scmp.ne.s32.totalorder %s66, %s68
    %p72 = scmp.eq.s32.totalorder %s11, 0
    %p73 = por %p71, %p72
    %p74 = scmp.ne.s32.totalorder %s66, %s68
    %p75 = scmp.eq.s32.totalorder %s16, 1
    %p76 = por %p74, %p75
    %p77 = scmp.ne.s32.totalorder %s68, %s69
    %p78 = scmp.eq.s32.totalorder %s16, 0
    %p79 = por %p77, %p78
    %p80 = scmp.ne.s32.totalorder %s68, %s69
    %p81 = scmp.eq.s32.totalorder %s17, 1
    %p82 = por %p80, %p81
    %p84 = scmp.ne.s32.totalorder %s69, %s83
    %p85 = scmp.eq.s32.totalorder %s17, 0
    %p86 = por %p84, %p85
    %s88 = sadd.s32 %s87, 1
    %p91 = scmp.eq.s32.totalorder %s11, 1
    %p92 = scmp.ne.s32.totalorder %s87, %s89
    %p93 = scmp.eq.s32.totalorder %s11, 0
    %p94 = por %p92, %p93
    %p95 = scmp.ne.s32.totalorder %s87, %s89
    %p96 = scmp.eq.s32.totalorder %s16, 1
    %p97 = por %p95, %p96
    %p98 = scmp.ne.s32.totalorder %s89, %s90
    %p99 = scmp.eq.s32.totalorder %s16, 0
    %p100 = por %p98, %p99
    %p101 = scmp.ne.s32.totalorder %s89, %s90
    %p102 = scmp.eq.s32.totalorder %s17, 1
    %p103 = por %p101, %p102
    %p105 = scmp.ne.s32.totalorder %s90, %s104
    %p106 = scmp.eq.s32.totalorder %s17, 0
    %p107 = por %p105, %p106
    %s109 = sadd.s32 %s108, 1
    %p112 = scmp.eq.s32.totalorder %s11, 1
    %p113 = scmp.ne.s32.totalorder %s108, %s110
    %p114 = scmp.eq.s32.totalorder %s11, 0
    %p115 = por %p113, %p114
    %p116 = scmp.ne.s32.totalorder %s108, %s110
    %p117 = scmp.eq.s32.totalorder %s16, 1
    %p118 = por %p116, %p117
    %p119 = scmp.ne.s32.totalorder %s110, %s111
    %p120 = scmp.eq.s32.totalorder %s16, 0
    %p121 = por %p119, %p120
    %p122 = scmp.ne.s32.totalorder %s110, %s111
    %p123 = scmp.eq.s32.totalorder %s17, 1
    %p124 = por %p122, %p123
    %p126 = scmp.ne.s32.totalorder %s111, %s125
    %p127 = scmp.eq.s32.totalorder %s17, 0
    %p128 = por %p126, %p127
    %s129 = ssub.s32 %s11, %s18
    %p130 = scmp.eq.s32.totalorder %s129, 0
    %s132 = sadd.s32 %s131, 1
    %s133 = scalar_select %p130, %s131, %s132
    %p136 = pneg %p130
    %p137 = scmp.eq.s32.totalorder %s11, 1
    %p138 = por %p136, %p137
    %p139 = scmp.ne.s32.totalorder %s131, %s134
    %p140 = scmp.eq.s32.totalorder %s11, 0
    %p141 = por %p139, %p140
    %p142 = scmp.ne.s32.totalorder %s131, %s134
    %p143 = scmp.eq.s32.totalorder %s16, 1
    %p144 = por %p142, %p143
    %p145 = scmp.ne.s32.totalorder %s134, %s135
    %p146 = scmp.eq.s32.totalorder %s16, 0
    %p147 = por %p145, %p146
    %p148 = scmp.ne.s32.totalorder %s134, %s135
    %p149 = scmp.eq.s32.totalorder %s17, 1
    %p150 = por %p148, %p149
    %p152 = scmp.ne.s32.totalorder %s135, %s151
    %p153 = scmp.eq.s32.totalorder %s17, 0
    %p154 = por %p152, %p153
    %p155 = scmp.le.s32.totalorder 1, %s11
    %p156 = scmp.lt.s32.totalorder %s11, 3
    %p157 = pnand %p155, %p156
    %p158 = pneg %p157
    // Predicated region
    $region9: #{model_forward.11} parent=5 // pred_check
      _
    $region10: #{model_forward.11} parent=5 // pred_check_branch
      %160 = sbr.rel (%p157) target = $region12
    $region11: #{model_forward.11} parent=5 // pred_region
      %s161 = ssub.s32 %s11, 1
      // Predicated region
      $region13: #{model_forward.11} parent=11 // pred_check
        %p162 = pneg %p58
      $region14: #{model_forward.11} parent=11 // pred_check_branch
        %164 = sbr.rel (%p162) target = $region16
      $region15: #{model_forward.11} parent=11 // pred_region
        _
      $region16: #{model_forward.11} parent=11 // pred_fallthru
        _
      // Predicated region
      $region17: #{model_forward.11} parent=11 // pred_check
        %p165 = pneg %p79
      $region18: #{model_forward.11} parent=11 // pred_check_branch
        %167 = sbr.rel (%p165) target = $region20
      $region19: #{model_forward.11} parent=11 // pred_region
        _
      $region20: #{model_forward.11} parent=11 // pred_fallthru
        _
      // Predicated region
      $region21: #{model_forward.11} parent=11 // pred_check
        %p168 = pneg %p100
      $region22: #{model_forward.11} parent=11 // pred_check_branch
        %170 = sbr.rel (%p168) target = $region24
      $region23: #{model_forward.11} parent=11 // pred_region
        _
      $region24: #{model_forward.11} parent=11 // pred_fallthru
        _
      // Predicated region
      $region25: #{model_forward.11} parent=11 // pred_check
        %p171 = pneg %p121
      $region26: #{model_forward.11} parent=11 // pred_check_branch
        %173 = sbr.rel (%p171) target = $region28
      $region27: #{model_forward.11} parent=11 // pred_region
        _
      $region28: #{model_forward.11} parent=11 // pred_fallthru
        _
    $region12: #{model_forward.11} parent=5 // pred_fallthru
      _
    %p174 = scmp.lt.s32.totalorder %s11, 2
    // Predicated region
    $region29: #{model_forward.11} parent=5 // pred_check
      %p175 = pneg %p174
    $region30: #{model_forward.11} parent=5 // pred_check_branch
      %177 = sbr.rel (%p175) target = $region32
    $region31: #{model_forward.11} parent=5 // pred_region
      // Predicated region
      $region33: #{model_forward.11} parent=31 // pred_check
        %p178 = pneg %p31
      $region34: #{model_forward.11} parent=31 // pred_check_branch
        %180 = sbr.rel (%p178) target = $region36
      $region35: #{model_forward.11} parent=31 // pred_region
        %s181 = smul.u32 4, %s11
        %p182 = scmp.lt.s32.totalorder %s181, 7
        %s183 = scalar_select %p182, %s181, 7
        %s184 = smul.addr %s183, 4
        %s185 = scalar_lea.vmem %s0, %s184
        %s186 = smul.u32 4, %s11
      $region36: #{model_forward.11} parent=31 // pred_fallthru
        _
    $region32: #{model_forward.11} parent=5 // pred_fallthru
      _
    %p187 = scmp.le.s32.totalorder 1, %s11
    %p188 = scmp.lt.s32.totalorder %s11, 3
    %p189 = pnand %p187, %p188
    %p190 = pneg %p189
    // Predicated region
    $region37: #{model_forward.11} parent=5 // pred_check
      _
    $region38: #{model_forward.11} parent=5 // pred_check_branch
      %192 = sbr.rel (%p189) target = $region40
    $region39: #{model_forward.11} parent=5 // pred_region
      %s193 = ssub.s32 %s11, 1
      %s194 = smul.u32 4, %s16
      %p195 = scmp.lt.s32.totalorder %s194, 7
      %s196 = scalar_select %p195, %s194, 7
      %s197 = smul.addr %s196, 4
      %s198 = scalar_lea.vmem %s0, %s197
      %p199 = pneg %p37
      %p200 = pneg %p34
      %p201 = pneg %p58
      %p202 = pneg %p55
      %p203 = pneg %p79
      %p204 = pneg %p76
      %p205 = pneg %p100
      %p206 = pneg %p97
      %p207 = pneg %p121
      %p208 = pneg %p118
      %p209 = pneg %p147
      %p210 = pneg %p144
      %s211 = smul.u32 4, %s16
      %p212 = scmp.lt.s32.totalorder %s211, 7
      %s213 = scalar_select %p212, %s211, 7
      %s214 = smul.addr %s213, 8
      %s215 = scalar_lea.vmem %s5, %s214
      %s216 = smul.u32 4, %s16
      %p217 = scmp.lt.s32.totalorder %s216, 7
      %s218 = scalar_select %p217, %s216, 7
      %s219 = smul.addr %s218, 4
      %s220 = scalar_lea.vmem %s0, %s219
      %s221 = smul.u32 4, %s16
      %s222 = smul.u32 4, %s16
      %p223 = scmp.lt.s32.totalorder %s222, 7
      %s224 = scalar_select %p223, %s222, 7
      %s225 = smul.addr %s224, 8
      %s226 = scalar_lea.vmem %s5, %s225
      %s227 = smul.u32 4, %s16
      %v229 = vld [vmem:[%s220] sm:$0xf]
      %v230 = vld [vmem:[%s220 + $0x4] sm:$0xf]
      %v231 = vld [vmem:[%s220 + $0x8] sm:$0xf]
      %v232 = vld [vmem:[%s220 + $0xc] sm:$0xf]
      %v233 = vld [vmem:[%s1] sm:$0xf]
      %v234 = vld [vmem:[%s1 + $0x4] sm:$0xf]
      %v235 = vld [vmem:[%s1 + $0x8] sm:$0xf]
      %v236 = vld [vmem:[%s1 + $0xc] sm:$0xf]
      %v237 = vld [vmem:[%s1 + $0x10] sm:$0xf]
      %v238 = vld [vmem:[%s1 + $0x14] sm:$0xf]
      %v239 = vld [vmem:[%s1 + $0x18] sm:$0xf]
      %v240 = vld [vmem:[%s1 + $0x1c] sm:$0xf]
      %v241 = vld [vmem:[%s2] sm:$0x1]
      %v243 = vlaneseq
      %v244 = vshrl.u32 %v243, 7
      %v245 = vsub.s32 0, %v244
      %v246 = vrot.slane %v241, %v245
      %v252 = vunpack.c.l.b16 %v229
      %v253 = vunpack.c.l.b16 %v230
      %v254 = vunpack.c.l.b16 %v231
      %v255 = vunpack.c.l.b16 %v232
      %v256 = vpack.c.b16 %v253, %v252
      %v257 = vpack.c.b16 %v255, %v254
      %v266 = vunpack.c.l.b16 %v233
      %v267 = vunpack.c.l.b16 %v234
      %v268 = vunpack.c.l.b16 %v235
      %v269 = vunpack.c.l.b16 %v236
      %v270 = vunpack.c.l.b16 %v237
      %v271 = vunpack.c.l.b16 %v238
      %v272 = vunpack.c.l.b16 %v239
      %v273 = vunpack.c.l.b16 %v240
      %v274 = vpack.c.b16 %v267, %v266
      %v275 = vpack.c.b16 %v269, %v268
      %v276 = vpack.c.b16 %v271, %v270
      %v277 = vpack.c.b16 %v273, %v272
      %vm282 = vcmask 523264
      %v284 = vsel %vm282, %v256, 0
      %v287 = vsel %vm282, %v257, 0
      %289 = vmatprep.subr.bf16.mxu0 0
      %290 = vmatpush1.bf16.msra.mxu0 %v274
      %291 = vmatprep.subr.bf16.mxu0 0
      %292 = vmatpush1.bf16.msra.mxu0 %v275
      %293 = vmatprep.subr.bf16.mxu0 0
      %294 = vmatpush1.bf16.msra.mxu0 %v276
      %295 = vmatprep.subr.bf16.mxu0 0
      %296 = vmatpush1.bf16.msra.mxu0 %v277
      %297 = vmatprep.subr.bf16.mxu0 0
      %298 = vmatpush1.bf16.msra.mxu0 0
      %299 = vmatprep.subr.bf16.mxu0 0
      %300 = vmatpush1.bf16.msra.mxu0 0
      %301 = vmatprep.subr.bf16.mxu0 0
      %302 = vmatpush1.bf16.msra.mxu0 0
      %303 = vmatprep.subr.bf16.mxu0 0
      %304 = vmatpush1.bf16.msra.mxu0 0
      %305 = vmatprep.subr.bf16.mxu0 0
      %306 = vmatpush1.bf16.msra.mxu0 0
      %307 = vmatprep.subr.bf16.mxu0 0
      %308 = vmatpush1.bf16.msra.mxu0 0
      %309 = vmatprep.subr.bf16.mxu0 0
      %310 = vmatpush1.bf16.msra.mxu0 0
      %311 = vmatprep.subr.bf16.mxu0 0
      %312 = vmatpush1.bf16.msra.mxu0 0
      %313 = vmatprep.subr.bf16.mxu0 0
      %314 = vmatpush1.bf16.msra.mxu0 0
      %315 = vmatprep.subr.bf16.mxu0 0
      %316 = vmatpush1.bf16.msra.mxu0 0
      %317 = vmatprep.subr.bf16.mxu0 0
      %318 = vmatpush1.bf16.msra.mxu0 0
      %319 = vmatprep.subr.bf16.mxu0 0
      %320 = vmatpush1.bf16.msra.mxu0 0
      %321 = vmatprep.mubr.bf16.mxu0 0
      %322 = vmatmul.mubr.bf16.gmra.mrb[0].mxu0 %v284
      %v323 = vpop.f32.mrb[0].mxu0
      %v324 = vadd.f32 %v246, %v323
      %v325 = vpop.f32.mrb[0].mxu0
      %v326 = vpop.f32.mrb[0].mxu0
      %v327 = vadd.f32 %v246, %v326
      %v328 = vpop.f32.mrb[0].mxu0
      %329 = vmatprep.mubr.bf16.mxu0 0
      %330 = vmatmul.mubr.bf16.gmra.mrb[0].mxu0 %v287
      %v331 = vpop.f32.mrb[0].mxu0
      %v332 = vadd.f32 %v246, %v331
      %v333 = vpop.f32.mrb[0].mxu0
      %v334 = vpop.f32.mrb[0].mxu0
      %v335 = vadd.f32 %v246, %v334
      %v336 = vpop.f32.mrb[0].mxu0
      %337 = vdwg.mxu0
      %vm338 = vcmp.gt.f32.partialorder %v324, 0.0
      %vm339 = vcmp.gt.f32.partialorder %v327, 0.0
      %vm340 = vcmp.gt.f32.partialorder %v332, 0.0
      %vm341 = vcmp.gt.f32.partialorder %v335, 0.0
      %v342 = vmul.f32 %v324, 0.2
      %v343 = vmul.f32 %v327, 0.2
      %v344 = vmul.f32 %v332, 0.2
      %v345 = vmul.f32 %v335, 0.2
      %v346 = vsel %vm338, %v324, %v342
      %v347 = vsel %vm339, %v327, %v343
      %v348 = vsel %vm340, %v332, %v344
      %v349 = vsel %vm341, %v335, %v345
      %v350 = vld [vmem:[%s3] sm:$0x1]
      %v351 = vld [vmem:[%s4] sm:$0x1]
      %v352 = vsel %vm282, %v346, 0.0
      %353 = vadd.xlane.f32.xlu0 %v352
      %v354 = vpop.xlane.xlu0 %353
      %v355 = vsel %vm282, %v347, 0.0
      %356 = vadd.xlane.f32.xlu0 %v355
      %v357 = vpop.xlane.xlu0 %356
      %v358 = vsel %vm282, %v348, 0.0
      %359 = vadd.xlane.f32.xlu0 %v358
      %v360 = vpop.xlane.xlu0 %359
      %v361 = vsel %vm282, %v349, 0.0
      %362 = vadd.xlane.f32.xlu0 %v361
      %v363 = vpop.xlane.xlu0 %362
      %v364 = vrcp.pop 64.0
      %v365 = vmul.f32 %v354, %v364
      %v366 = vmul.f32 %v357, %v364
      %v367 = vmul.f32 %v360, %v364
      %v368 = vmul.f32 %v363, %v364
      %v369 = vsub.f32 %v346, %v365
      %v370 = vsub.f32 %v347, %v366
      %v371 = vsub.f32 %v348, %v367
      %v372 = vsub.f32 %v349, %v368
      %v373 = vmul.f32 %v369, %v369
      %v374 = vmul.f32 %v370, %v370
      %v375 = vmul.f32 %v371, %v371
      %v376 = vmul.f32 %v372, %v372
      %v377 = vsel %vm282, %v373, 0.0
      %378 = vadd.xlane.f32.xlu0 %v377
      %v379 = vpop.xlane.xlu0 %378
      %v380 = vsel %vm282, %v374, 0.0
      %381 = vadd.xlane.f32.xlu0 %v380
      %v382 = vpop.xlane.xlu0 %381
      %v383 = vsel %vm282, %v375, 0.0
      %384 = vadd.xlane.f32.xlu0 %v383
      %v385 = vpop.xlane.xlu0 %384
      %v386 = vsel %vm282, %v376, 0.0
      %387 = vadd.xlane.f32.xlu0 %v386
      %v388 = vpop.xlane.xlu0 %387
      %v389 = vmul.f32 %v379, %v364
      %v390 = vmul.f32 %v382, %v364
      %v391 = vmul.f32 %v385, %v364
      %v392 = vmul.f32 %v388, %v364
      %v393 = vadd.f32 %v389, 1e-05
      %v394 = vadd.f32 %v390, 1e-05
      %v395 = vadd.f32 %v391, 1e-05
      %v396 = vadd.f32 %v392, 1e-05
      %v397 = vrsqrt.pop %v393
      %v398 = vrsqrt.pop %v394
      %v399 = vrsqrt.pop %v395
      %v400 = vrsqrt.pop %v396
      %v401 = vmul.f32 %v369, %v397
      %v402 = vmul.f32 %v370, %v398
      %v403 = vmul.f32 %v371, %v399
      %v404 = vmul.f32 %v372, %v400
      %v406 = vlaneseq
      %v407 = vshrl.u32 %v406, 7
      %v408 = vsub.s32 0, %v407
      %v409 = vrot.slane %v350, %v408
      %v411 = vmul.f32 %v401, %v409
      %v412 = vmul.f32 %v402, %v409
      %v413 = vmul.f32 %v403, %v409
      %v414 = vmul.f32 %v404, %v409
      %v416 = vlaneseq
      %v417 = vshrl.u32 %v416, 7
      %v418 = vsub.s32 0, %v417
      %v419 = vrot.slane %v351, %v418
      %v421 = vadd.f32 %v411, %v419
      %v422 = vadd.f32 %v412, %v419
      %v423 = vadd.f32 %v413, %v419
      %v424 = vadd.f32 %v414, %v419
      %v425 = vpack.c.bf16 %v422, %v421
      %v426 = vpack.c.bf16 %v424, %v423
      %s427 = scalar_lea.vmem %s1, 32
      %v428 = vld [vmem:[%s427] sm:$0xf]
      %v429 = vld [vmem:[%s427 + $0x4] sm:$0xf]
      %v430 = vld [vmem:[%s427 + $0x8] sm:$0xf]
      %v431 = vld [vmem:[%s427 + $0xc] sm:$0xf]
      %v432 = vld [vmem:[%s427 + $0x10] sm:$0xf]
      %v433 = vld [vmem:[%s427 + $0x14] sm:$0xf]
      %v434 = vld [vmem:[%s427 + $0x18] sm:$0xf]
      %v435 = vld [vmem:[%s427 + $0x1c] sm:$0xf]
      %s436 = scalar_lea.vmem %s2, 1
      %v437 = vld [vmem:[%s436] sm:$0x1]
      %v439 = vlaneseq
      %v440 = vshrl.u32 %v439, 7
      %v441 = vsub.s32 0, %v440
      %v442 = vrot.slane %v437, %v441
      %v452 = vunpack.c.l.b16 %v428
      %v453 = vunpack.c.l.b16 %v429
      %v454 = vunpack.c.l.b16 %v430
      %v455 = vunpack.c.l.b16 %v431
      %v456 = vunpack.c.l.b16 %v432
      %v457 = vunpack.c.l.b16 %v433
      %v458 = vunpack.c.l.b16 %v434
      %v459 = vunpack.c.l.b16 %v435
      %v460 = vpack.c.b16 %v453, %v452
      %v461 = vpack.c.b16 %v455, %v454
      %v462 = vpack.c.b16 %v457, %v456
      %v463 = vpack.c.b16 %v459, %v458
      %v469 = vsel %vm282, %v425, 0
      %v472 = vsel %vm282, %v426, 0
      %474 = vmatprep.subr.bf16.mxu0 0
      %475 = vmatpush1.bf16.msra.mxu0 %v460
      %476 = vmatprep.subr.bf16.mxu0 0
      %477 = vmatpush1.bf16.msra.mxu0 %v461
      %478 = vmatprep.subr.bf16.mxu0 0
      %479 = vmatpush1.bf16.msra.mxu0 %v462
      %480 = vmatprep.subr.bf16.mxu0 0
      %481 = vmatpush1.bf16.msra.mxu0 %v463
      %482 = vmatprep.subr.bf16.mxu0 0
      %483 = vmatpush1.bf16.msra.mxu0 0
      %484 = vmatprep.subr.bf16.mxu0 0
      %485 = vmatpush1.bf16.msra.mxu0 0
      %486 = vmatprep.subr.bf16.mxu0 0
      %487 = vmatpush1.bf16.msra.mxu0 0
      %488 = vmatprep.subr.bf16.mxu0 0
      %489 = vmatpush1.bf16.msra.mxu0 0
      %490 = vmatprep.subr.bf16.mxu0 0
      %491 = vmatpush1.bf16.msra.mxu0 0
      %492 = vmatprep.subr.bf16.mxu0 0
      %493 = vmatpush1.bf16.msra.mxu0 0
      %494 = vmatprep.subr.bf16.mxu0 0
      %495 = vmatpush1.bf16.msra.mxu0 0
      %496 = vmatprep.subr.bf16.mxu0 0
      %497 = vmatpush1.bf16.msra.mxu0 0
      %498 = vmatprep.subr.bf16.mxu0 0
      %499 = vmatpush1.bf16.msra.mxu0 0
      %500 = vmatprep.subr.bf16.mxu0 0
      %501 = vmatpush1.bf16.msra.mxu0 0
      %502 = vmatprep.subr.bf16.mxu0 0
      %503 = vmatpush1.bf16.msra.mxu0 0
      %504 = vmatprep.subr.bf16.mxu0 0
      %505 = vmatpush1.bf16.msra.mxu0 0
      %506 = vmatprep.mubr.bf16.mxu0 0
      %507 = vmatmul.mubr.bf16.gmra.mrb[0].mxu0 %v469
      %v508 = vpop.f32.mrb[0].mxu0
      %v509 = vadd.f32 %v442, %v508
      %v510 = vpop.f32.mrb[0].mxu0
      %v511 = vpop.f32.mrb[0].mxu0
      %v512 = vadd.f32 %v442, %v511
      %v513 = vpop.f32.mrb[0].mxu0
      %514 = vmatprep.mubr.bf16.mxu0 0
      %515 = vmatmul.mubr.bf16.gmra.mrb[0].mxu0 %v472
      %v516 = vpop.f32.mrb[0].mxu0
      %v517 = vadd.f32 %v442, %v516
      %v518 = vpop.f32.mrb[0].mxu0
      %v519 = vpop.f32.mrb[0].mxu0
      %v520 = vadd.f32 %v442, %v519
      %v521 = vpop.f32.mrb[0].mxu0
      %522 = vdwg.mxu0
      %vm523 = vcmp.gt.f32.partialorder %v509, 0.0
      %vm524 = vcmp.gt.f32.partialorder %v512, 0.0
      %vm525 = vcmp.gt.f32.partialorder %v517, 0.0
      %vm526 = vcmp.gt.f32.partialorder %v520, 0.0
      %v527 = vmul.f32 %v509, 0.2
      %v528 = vmul.f32 %v512, 0.2
      %v529 = vmul.f32 %v517, 0.2
      %v530 = vmul.f32 %v520, 0.2
      %v531 = vsel %vm523, %v509, %v527
      %v532 = vsel %vm524, %v512, %v528
      %v533 = vsel %vm525, %v517, %v529
      %v534 = vsel %vm526, %v520, %v530
      %s535 = scalar_lea.vmem %s3, 1
      %v536 = vld [vmem:[%s535] sm:$0x1]
      %s537 = scalar_lea.vmem %s4, 1
      %v538 = vld [vmem:[%s537] sm:$0x1]
      %v539 = vsel %vm282, %v531, 0.0
      %540 = vadd.xlane.f32.xlu0 %v539
      %v541 = vpop.xlane.xlu0 %540
      %v542 = vsel %vm282, %v532, 0.0
      %543 = vadd.xlane.f32.xlu0 %v542
      %v544 = vpop.xlane.xlu0 %543
      %v545 = vsel %vm282, %v533, 0.0
      %546 = vadd.xlane.f32.xlu0 %v545
      %v547 = vpop.xlane.xlu0 %546
      %v548 = vsel %vm282, %v534, 0.0
      %549 = vadd.xlane.f32.xlu0 %v548
      %v550 = vpop.xlane.xlu0 %549
      %v551 = vmul.f32 %v541, %v364
      %v552 = vmul.f32 %v544, %v364
      %v553 = vmul.f32 %v547, %v364
      %v554 = vmul.f32 %v550, %v364
      %v555 = vsub.f32 %v531, %v551
      %v556 = vsub.f32 %v532, %v552
      %v557 = vsub.f32 %v533, %v553
      %v558 = vsub.f32 %v534, %v554
      %v559 = vmul.f32 %v555, %v555
      %v560 = vmul.f32 %v556, %v556
      %v561 = vmul.f32 %v557, %v557
      %v562 = vmul.f32 %v558, %v558
      %v563 = vsel %vm282, %v559, 0.0
      %564 = vadd.xlane.f32.xlu0 %v563
      %v565 = vpop.xlane.xlu0 %564
      %v566 = vsel %vm282, %v560, 0.0
      %567 = vadd.xlane.f32.xlu0 %v566
      %v568 = vpop.xlane.xlu0 %567
      %v569 = vsel %vm282, %v561, 0.0
      %570 = vadd.xlane.f32.xlu0 %v569
      %v571 = vpop.xlane.xlu0 %570
      %v572 = vsel %vm282, %v562, 0.0
      %573 = vadd.xlane.f32.xlu0 %v572
      %v574 = vpop.xlane.xlu0 %573
      %v575 = vmul.f32 %v565, %v364
      %v576 = vmul.f32 %v568, %v364
      %v577 = vmul.f32 %v571, %v364
      %v578 = vmul.f32 %v574, %v364
      %v579 = vadd.f32 %v575, 1e-05
      %v580 = vadd.f32 %v576, 1e-05
      %v581 = vadd.f32 %v577, 1e-05
      %v582 = vadd.f32 %v578, 1e-05
      %v583 = vrsqrt.pop %v579
      %v584 = vrsqrt.pop %v580
      %v585 = vrsqrt.pop %v581
      %v586 = vrsqrt.pop %v582
      %v587 = vmul.f32 %v555, %v583
      %v588 = vmul.f32 %v556, %v584
      %v589 = vmul.f32 %v557, %v585
      %v590 = vmul.f32 %v558, %v586
      %v592 = vlaneseq
      %v593 = vshrl.u32 %v592, 7
      %v594 = vsub.s32 0, %v593
      %v595 = vrot.slane %v536, %v594
      %v597 = vmul.f32 %v587, %v595
      %v598 = vmul.f32 %v588, %v595
      %v599 = vmul.f32 %v589, %v595
      %v600 = vmul.f32 %v590, %v595
      %v602 = vlaneseq
      %v603 = vshrl.u32 %v602, 7
      %v604 = vsub.s32 0, %v603
      %v605 = vrot.slane %v538, %v604
      %v607 = vadd.f32 %v597, %v605
      %v608 = vadd.f32 %v598, %v605
      %v609 = vadd.f32 %v599, %v605
      %v610 = vadd.f32 %v600, %v605
      %v611 = vpack.c.bf16 %v608, %v607
      %v612 = vpack.c.bf16 %v610, %v609
      %s613 = scalar_lea.vmem %s1, 64
      %v614 = vld [vmem:[%s613] sm:$0xf]
      %v615 = vld [vmem:[%s613 + $0x4] sm:$0xf]
      %v616 = vld [vmem:[%s613 + $0x8] sm:$0xf]
      %v617 = vld [vmem:[%s613 + $0xc] sm:$0xf]
      %v618 = vld [vmem:[%s613 + $0x10] sm:$0xf]
      %v619 = vld [vmem:[%s613 + $0x14] sm:$0xf]
      %v620 = vld [vmem:[%s613 + $0x18] sm:$0xf]
      %v621 = vld [vmem:[%s613 + $0x1c] sm:$0xf]
      %s622 = scalar_lea.vmem %s2, 2
      %v623 = vld [vmem:[%s622] sm:$0x1]
      %v625 = vlaneseq
      %v626 = vshrl.u32 %v625, 7
      %v627 = vsub.s32 0, %v626
      %v628 = vrot.slane %v623, %v627
      %v638 = vunpack.c.l.b16 %v614
      %v639 = vunpack.c.l.b16 %v615
      %v640 = vunpack.c.l.b16 %v616
      %v641 = vunpack.c.l.b16 %v617
      %v642 = vunpack.c.l.b16 %v618
      %v643 = vunpack.c.l.b16 %v619
      %v644 = vunpack.c.l.b16 %v620
      %v645 = vunpack.c.l.b16 %v621
      %v646 = vpack.c.b16 %v639, %v638
      %v647 = vpack.c.b16 %v641, %v640
      %v648 = vpack.c.b16 %v643, %v642
      %v649 = vpack.c.b16 %v645, %v644
      %v655 = vsel %vm282, %v611, 0
      %v658 = vsel %vm282, %v612, 0
      %660 = vmatprep.subr.bf16.mxu0 0
      %661 = vmatpush1.bf16.msra.mxu0 %v646
      %662 = vmatprep.subr.bf16.mxu0 0
      %663 = vmatpush1.bf16.msra.mxu0 %v647
      %664 = vmatprep.subr.bf16.mxu0 0
      %665 = vmatpush1.bf16.msra.mxu0 %v648
      %666 = vmatprep.subr.bf16.mxu0 0
      %667 = vmatpush1.bf16.msra.mxu0 %v649
      %668 = vmatprep.subr.bf16.mxu0 0
      %669 = vmatpush1.bf16.msra.mxu0 0
      %670 = vmatprep.subr.bf16.mxu0 0
      %671 = vmatpush1.bf16.msra.mxu0 0
      %672 = vmatprep.subr.bf16.mxu0 0
      %673 = vmatpush1.bf16.msra.mxu0 0
      %674 = vmatprep.subr.bf16.mxu0 0
      %675 = vmatpush1.bf16.msra.mxu0 0
      %676 = vmatprep.subr.bf16.mxu0 0
      %677 = vmatpush1.bf16.msra.mxu0 0
      %678 = vmatprep.subr.bf16.mxu0 0
      %679 = vmatpush1.bf16.msra.mxu0 0
      %680 = vmatprep.subr.bf16.mxu0 0
      %681 = vmatpush1.bf16.msra.mxu0 0
      %682 = vmatprep.subr.bf16.mxu0 0
      %683 = vmatpush1.bf16.msra.mxu0 0
      %684 = vmatprep.subr.bf16.mxu0 0
      %685 = vmatpush1.bf16.msra.mxu0 0
      %686 = vmatprep.subr.bf16.mxu0 0
      %687 = vmatpush1.bf16.msra.mxu0 0
      %688 = vmatprep.subr.bf16.mxu0 0
      %689 = vmatpush1.bf16.msra.mxu0 0
      %690 = vmatprep.subr.bf16.mxu0 0
      %691 = vmatpush1.bf16.msra.mxu0 0
      %692 = vmatprep.mubr.bf16.mxu0 0
      %693 = vmatmul.mubr.bf16.gmra.mrb[0].mxu0 %v655
      %v694 = vpop.f32.mrb[0].mxu0
      %v695 = vadd.f32 %v628, %v694
      %v696 = vpop.f32.mrb[0].mxu0
      %v697 = vpop.f32.mrb[0].mxu0
      %v698 = vadd.f32 %v628, %v697
      %v699 = vpop.f32.mrb[0].mxu0
      %700 = vmatprep.mubr.bf16.mxu0 0
      %701 = vmatmul.mubr.bf16.gmra.mrb[0].mxu0 %v658
      %v702 = vpop.f32.mrb[0].mxu0
      %v703 = vadd.f32 %v628, %v702
      %v704 = vpop.f32.mrb[0].mxu0
      %v705 = vpop.f32.mrb[0].mxu0
      %v706 = vadd.f32 %v628, %v705
      %v707 = vpop.f32.mrb[0].mxu0
      %708 = vdwg.mxu0
      %vm709 = vcmp.gt.f32.partialorder %v695, 0.0
      %vm710 = vcmp.gt.f32.partialorder %v698, 0.0
      %vm711 = vcmp.gt.f32.partialorder %v703, 0.0
      %vm712 = vcmp.gt.f32.partialorder %v706, 0.0
      %v713 = vmul.f32 %v695, 0.2
      %v714 = vmul.f32 %v698, 0.2
      %v715 = vmul.f32 %v703, 0.2
      %v716 = vmul.f32 %v706, 0.2
      %v717 = vsel %vm709, %v695, %v713
      %v718 = vsel %vm710, %v698, %v714
      %v719 = vsel %vm711, %v703, %v715
      %v720 = vsel %vm712, %v706, %v716
      %s721 = scalar_lea.vmem %s3, 2
      %v722 = vld [vmem:[%s721] sm:$0x1]
      %s723 = scalar_lea.vmem %s4, 2
      %v724 = vld [vmem:[%s723] sm:$0x1]
      %v725 = vsel %vm282, %v717, 0.0
      %726 = vadd.xlane.f32.xlu0 %v725
      %v727 = vpop.xlane.xlu0 %726
      %v728 = vsel %vm282, %v718, 0.0
      %729 = vadd.xlane.f32.xlu0 %v728
      %v730 = vpop.xlane.xlu0 %729
      %v731 = vsel %vm282, %v719, 0.0
      %732 = vadd.xlane.f32.xlu0 %v731
      %v733 = vpop.xlane.xlu0 %732
      %v734 = vsel %vm282, %v720, 0.0
      %735 = vadd.xlane.f32.xlu0 %v734
      %v736 = vpop.xlane.xlu0 %735
      %v737 = vmul.f32 %v727, %v364
      %v738 = vmul.f32 %v730, %v364
      %v739 = vmul.f32 %v733, %v364
      %v740 = vmul.f32 %v736, %v364
      %v741 = vsub.f32 %v717, %v737
      %v742 = vsub.f32 %v718, %v738
      %v743 = vsub.f32 %v719, %v739
      %v744 = vsub.f32 %v720, %v740
      %v745 = vmul.f32 %v741, %v741
      %v746 = vmul.f32 %v742, %v742
      %v747 = vmul.f32 %v743, %v743
      %v748 = vmul.f32 %v744, %v744
      %v749 = vsel %vm282, %v745, 0.0
      %750 = vadd.xlane.f32.xlu0 %v749
      %v751 = vpop.xlane.xlu0 %750
      %v752 = vsel %vm282, %v746, 0.0
      %753 = vadd.xlane.f32.xlu0 %v752
      %v754 = vpop.xlane.xlu0 %753
      %v755 = vsel %vm282, %v747, 0.0
      %756 = vadd.xlane.f32.xlu0 %v755
      %v757 = vpop.xlane.xlu0 %756
      %v758 = vsel %vm282, %v748, 0.0
      %759 = vadd.xlane.f32.xlu0 %v758
      %v760 = vpop.xlane.xlu0 %759
      %v761 = vmul.f32 %v751, %v364
      %v762 = vmul.f32 %v754, %v364
      %v763 = vmul.f32 %v757, %v364
      %v764 = vmul.f32 %v760, %v364
      %v765 = vadd.f32 %v761, 1e-05
      %v766 = vadd.f32 %v762, 1e-05
      %v767 = vadd.f32 %v763, 1e-05
      %v768 = vadd.f32 %v764, 1e-05
      %v769 = vrsqrt.pop %v765
      %v770 = vrsqrt.pop %v766
      %v771 = vrsqrt.pop %v767
      %v772 = vrsqrt.pop %v768
      %v773 = vmul.f32 %v741, %v769
      %v774 = vmul.f32 %v742, %v770
      %v775 = vmul.f32 %v743, %v771
      %v776 = vmul.f32 %v744, %v772
      %v778 = vlaneseq
      %v779 = vshrl.u32 %v778, 7
      %v780 = vsub.s32 0, %v779
      %v781 = vrot.slane %v722, %v780
      %v783 = vmul.f32 %v773, %v781
      %v784 = vmul.f32 %v774, %v781
      %v785 = vmul.f32 %v775, %v781
      %v786 = vmul.f32 %v776, %v781
      %v788 = vlaneseq
      %v789 = vshrl.u32 %v788, 7
      %v790 = vsub.s32 0, %v789
      %v791 = vrot.slane %v724, %v790
      %v793 = vadd.f32 %v783, %v791
      %v794 = vadd.f32 %v784, %v791
      %v795 = vadd.f32 %v785, %v791
      %v796 = vadd.f32 %v786, %v791
      %v797 = vpack.c.bf16 %v794, %v793
      %v798 = vpack.c.bf16 %v796, %v795
      %s799 = scalar_lea.vmem %s1, 96
      %v800 = vld [vmem:[%s799] sm:$0xf]
      %v801 = vld [vmem:[%s799 + $0x4] sm:$0xf]
      %v802 = vld [vmem:[%s799 + $0x8] sm:$0xf]
      %v803 = vld [vmem:[%s799 + $0xc] sm:$0xf]
      %v804 = vld [vmem:[%s799 + $0x10] sm:$0xf]
      %v805 = vld [vmem:[%s799 + $0x14] sm:$0xf]
      %v806 = vld [vmem:[%s799 + $0x18] sm:$0xf]
      %v807 = vld [vmem:[%s799 + $0x1c] sm:$0xf]
      %s808 = scalar_lea.vmem %s2, 3
      %v809 = vld [vmem:[%s808] sm:$0x1]
      %v811 = vlaneseq
      %v812 = vshrl.u32 %v811, 7
      %v813 = vsub.s32 0, %v812
      %v814 = vrot.slane %v809, %v813
      %v824 = vunpack.c.l.b16 %v800
      %v825 = vunpack.c.l.b16 %v801
      %v826 = vunpack.c.l.b16 %v802
      %v827 = vunpack.c.l.b16 %v803
      %v828 = vunpack.c.l.b16 %v804
      %v829 = vunpack.c.l.b16 %v805
      %v830 = vunpack.c.l.b16 %v806
      %v831 = vunpack.c.l.b16 %v807
      %v832 = vpack.c.b16 %v825, %v824
      %v833 = vpack.c.b16 %v827, %v826
      %v834 = vpack.c.b16 %v829, %v828
      %v835 = vpack.c.b16 %v831, %v830
      %v841 = vsel %vm282, %v797, 0
      %v844 = vsel %vm282, %v798, 0
      %846 = vmatprep.subr.bf16.mxu0 0
      %847 = vmatpush1.bf16.msra.mxu0 %v832
      %848 = vmatprep.subr.bf16.mxu0 0
      %849 = vmatpush1.bf16.msra.mxu0 %v833
      %850 = vmatprep.subr.bf16.mxu0 0
      %851 = vmatpush1.bf16.msra.mxu0 %v834
      %852 = vmatprep.subr.bf16.mxu0 0
      %853 = vmatpush1.bf16.msra.mxu0 %v835
      %854 = vmatprep.subr.bf16.mxu0 0
      %855 = vmatpush1.bf16.msra.mxu0 0
      %856 = vmatprep.subr.bf16.mxu0 0
      %857 = vmatpush1.bf16.msra.mxu0 0
      %858 = vmatprep.subr.bf16.mxu0 0
      %859 = vmatpush1.bf16.msra.mxu0 0
      %860 = vmatprep.subr.bf16.mxu0 0
      %861 = vmatpush1.bf16.msra.mxu0 0
      %862 = vmatprep.subr.bf16.mxu0 0
      %863 = vmatpush1.bf16.msra.mxu0 0
      %864 = vmatprep.subr.bf16.mxu0 0
      %865 = vmatpush1.bf16.msra.mxu0 0
      %866 = vmatprep.subr.bf16.mxu0 0
      %867 = vmatpush1.bf16.msra.mxu0 0
      %868 = vmatprep.subr.bf16.mxu0 0
      %869 = vmatpush1.bf16.msra.mxu0 0
      %870 = vmatprep.subr.bf16.mxu0 0
      %871 = vmatpush1.bf16.msra.mxu0 0
      %872 = vmatprep.subr.bf16.mxu0 0
      %873 = vmatpush1.bf16.msra.mxu0 0
      %874 = vmatprep.subr.bf16.mxu0 0
      %875 = vmatpush1.bf16.msra.mxu0 0
      %876 = vmatprep.subr.bf16.mxu0 0
      %877 = vmatpush1.bf16.msra.mxu0 0
      %878 = vmatprep.mubr.bf16.mxu0 0
      %879 = vmatmul.mubr.bf16.gmra.mrb[0].mxu0 %v841
      %v880 = vpop.f32.mrb[0].mxu0
      %v881 = vadd.f32 %v814, %v880
      %v882 = vpop.f32.mrb[0].mxu0
      %v883 = vpop.f32.mrb[0].mxu0
      %v884 = vadd.f32 %v814, %v883
      %v885 = vpop.f32.mrb[0].mxu0
      %886 = vmatprep.mubr.bf16.mxu0 0
      %887 = vmatmul.mubr.bf16.gmra.mrb[0].mxu0 %v844
      %v888 = vpop.f32.mrb[0].mxu0
      %v889 = vadd.f32 %v814, %v888
      %v890 = vpop.f32.mrb[0].mxu0
      %v891 = vpop.f32.mrb[0].mxu0
      %v892 = vadd.f32 %v814, %v891
      %v893 = vpop.f32.mrb[0].mxu0
      %894 = vdwg.mxu0
      %895 = vst.msk [vmem:[%s226] sm:$0xff] %vm282, %v881
      %896 = vst.msk [vmem:[%s226 + $0x8] sm:$0xff] %vm282, %v884
      %897 = vst.msk [vmem:[%s226 + $0x10] sm:$0xff] %vm282, %v889
      %898 = vst.msk [vmem:[%s226 + $0x18] sm:$0xff] %vm282, %v892
      %s899 = smul.u32 4, %s16
      %p900 = scmp.lt.s32.totalorder %s899, 7
      %s901 = scalar_select %p900, %s899, 7
      %s902 = smul.addr %s901, 8
      %s903 = scalar_lea.vmem %s5, %s902
      // Predicated region
      $region41: #{model_forward.11} parent=39 // pred_check
        %p904 = pneg %p144
      $region42: #{model_forward.11} parent=39 // pred_check_branch
        %906 = sbr.rel (%p904) target = $region44
      $region43: #{model_forward.11} parent=39 // pred_region
        %s907 = smul.u32 4, %s16
      $region44: #{model_forward.11} parent=39 // pred_fallthru
        _
    $region40: #{model_forward.11} parent=5 // pred_fallthru
      _
    %p908 = scmp.le.s32.totalorder 2, %s11
    // Predicated region
    $region45: #{model_forward.11} parent=5 // pred_check
      %p909 = pneg %p908
    $region46: #{model_forward.11} parent=5 // pred_check_branch
      %911 = sbr.rel (%p909) target = $region48
    $region47: #{model_forward.11} parent=5 // pred_region
      %s912 = ssub.s32 %s11, 2
      // Predicated region
      $region49: #{model_forward.11} parent=47 // pred_check
        %p913 = pneg %p150
      $region50: #{model_forward.11} parent=47 // pred_check_branch
        %915 = sbr.rel (%p913) target = $region52
      $region51: #{model_forward.11} parent=47 // pred_region
        %s916 = smul.u32 4, %s17
        %p917 = scmp.lt.s32.totalorder %s916, 7
        %s918 = scalar_select %p917, %s916, 7
        %s919 = smul.addr %s918, 8
        %s920 = scalar_lea.vmem %s5, %s919
      $region52: #{model_forward.11} parent=47 // pred_fallthru
        _
    $region48: #{model_forward.11} parent=5 // pred_fallthru
      _
  $region6: #{model_forward.11} parent=0 // loop_footer
    %s15 = sadd.s32 1, %s11
  $region7: #{model_forward.11} parent=0 // loop_footer_branch
    %10 = sbr.rel target = $region3
  $region8: #{model_forward.11} parent=0 // loop_exit
    _

// kernel: model_forward.12
$region0: #{model_forward.12}
  #allocation0 [shape = 'u32[]', space=smem, size = 0x4, offset = 0x4, fixed_abs, tag = 'smem constant byte address 0x4 - core index']
  #allocation1 [shape = 'u32[144,128]{1,0:T(1,128)}', space=vmem, size = 0x12000, scoped, tag = 'internal scratch']
  %s0 = inlined_call_operand.vmem [shape: bf16[8,64], index: 0, kind: input, shape index: {}]
  %s1 = inlined_call_operand.vmem [shape: bf16[64,2048], index: 1, kind: input, shape index: {}]
  %s2 = inlined_call_operand.vmem [shape: f32[1,2048], index: 2, kind: input, shape index: {}]
  %s3 = inlined_call_operand.vmem [shape: f32[8,2048], index: 3, kind: output, shape index: {}]
  %s4 = sld [smem:[#allocation0]]
  $region22: #{model_forward.12} parent=0
    _
  %s6 = ssub.s32 1, %s4
  %s7 = scalar_select 0, %s6, %s4
  // Predicated region
  $region2: #{model_forward.12} parent=0 // pred_check
    _
  $region3: #{model_forward.12} parent=0 // pred_check_branch
    %9 = sbr.rel (0) target = $region5
  $region4: #{model_forward.12} parent=0 // pred_region
    _
  $region5: #{model_forward.12} parent=0 // pred_fallthru
    _
  // Predicated region
  $region6: #{model_forward.12} parent=0 // pred_check
    _
  $region7: #{model_forward.12} parent=0 // pred_check_branch
    %11 = sbr.rel (0) target = $region9
  $region8: #{model_forward.12} parent=0 // pred_region
    _
  $region9: #{model_forward.12} parent=0 // pred_fallthru
    _
  // Predicated region
  $region10: #{model_forward.12} parent=0 // pred_check
    _
  $region11: #{model_forward.12} parent=0 // pred_check_branch
    %13 = sbr.rel (0) target = $region13
  $region12: #{model_forward.12} parent=0 // pred_region
    _
  $region13: #{model_forward.12} parent=0 // pred_fallthru
    _
  %v15 = vld [vmem:[%s0] sm:$0xf]
  %v16 = vld [vmem:[%s1] sm:$0xff]
  %v17 = vld [vmem:[%s1 + $0x8] sm:$0xff]
  %v18 = vld [vmem:[%s1 + $0x10] sm:$0xff]
  %v19 = vld [vmem:[%s1 + $0x18] sm:$0xff]
  %v20 = vld [vmem:[%s1 + $0x20] sm:$0xff]
  %v21 = vld [vmem:[%s1 + $0x28] sm:$0xff]
  %v22 = vld [vmem:[%s1 + $0x30] sm:$0xff]
  %v23 = vld [vmem:[%s1 + $0x38] sm:$0xff]
  %v24 = vld [vmem:[%s1 + $0x40] sm:$0xff]
  %v25 = vld [vmem:[%s1 + $0x48] sm:$0xff]
  %v26 = vld [vmem:[%s1 + $0x50] sm:$0xff]
  %v27 = vld [vmem:[%s1 + $0x58] sm:$0xff]
  %v28 = vld [vmem:[%s1 + $0x60] sm:$0xff]
  %v29 = vld [vmem:[%s1 + $0x68] sm:$0xff]
  %v30 = vld [vmem:[%s1 + $0x70] sm:$0xff]
  %v31 = vld [vmem:[%s1 + $0x78] sm:$0xff]
  %v32 = vld [vmem:[%s1 + $0x80] sm:$0xff]
  %v33 = vld [vmem:[%s1 + $0x88] sm:$0xff]
  %v34 = vld [vmem:[%s1 + $0x90] sm:$0xff]
  %v35 = vld [vmem:[%s1 + $0x98] sm:$0xff]
  %v36 = vld [vmem:[%s1 + $0xa0] sm:$0xff]
  %v37 = vld [vmem:[%s1 + $0xa8] sm:$0xff]
  %v38 = vld [vmem:[%s1 + $0xb0] sm:$0xff]
  %v39 = vld [vmem:[%s1 + $0xb8] sm:$0xff]
  %v40 = vld [vmem:[%s1 + $0xc0] sm:$0xff]
  %v41 = vld [vmem:[%s1 + $0xc8] sm:$0xff]
  %v42 = vld [vmem:[%s1 + $0xd0] sm:$0xff]
  %v43 = vld [vmem:[%s1 + $0xd8] sm:$0xff]
  %v44 = vld [vmem:[%s1 + $0xe0] sm:$0xff]
  %v45 = vld [vmem:[%s1 + $0xe8] sm:$0xff]
  %v46 = vld [vmem:[%s1 + $0xf0] sm:$0xff]
  %v47 = vld [vmem:[%s1 + $0xf8] sm:$0xff]
  %v48 = vld [vmem:[%s1 + $0x100] sm:$0xff]
  %v49 = vld [vmem:[%s1 + $0x108] sm:$0xff]
  %v50 = vld [vmem:[%s1 + $0x110] sm:$0xff]
  %v51 = vld [vmem:[%s1 + $0x118] sm:$0xff]
  %v52 = vld [vmem:[%s1 + $0x120] sm:$0xff]
  %v53 = vld [vmem:[%s1 + $0x128] sm:$0xff]
  %v54 = vld [vmem:[%s1 + $0x130] sm:$0xff]
  %v55 = vld [vmem:[%s1 + $0x138] sm:$0xff]
  %v56 = vld [vmem:[%s1 + $0x140] sm:$0xff]
  %v57 = vld [vmem:[%s1 + $0x148] sm:$0xff]
  %v58 = vld [vmem:[%s1 + $0x150] sm:$0xff]
  %v59 = vld [vmem:[%s1 + $0x158] sm:$0xff]
  %v60 = vld [vmem:[%s1 + $0x160] sm:$0xff]
  %v61 = vld [vmem:[%s1 + $0x168] sm:$0xff]
  %v62 = vld [vmem:[%s1 + $0x170] sm:$0xff]
  %v63 = vld [vmem:[%s1 + $0x178] sm:$0xff]
  %v64 = vld [vmem:[%s1 + $0x180] sm:$0xff]
  %v65 = vld [vmem:[%s1 + $0x188] sm:$0xff]
  %v66 = vld [vmem:[%s1 + $0x190] sm:$0xff]
  %v67 = vld [vmem:[%s1 + $0x198] sm:$0xff]
  %v68 = vld [vmem:[%s1 + $0x1a0] sm:$0xff]
  %v69 = vld [vmem:[%s1 + $0x1a8] sm:$0xff]
  %v70 = vld [vmem:[%s1 + $0x1b0] sm:$0xff]
  %v71 = vld [vmem:[%s1 + $0x1b8] sm:$0xff]
  %v72 = vld [vmem:[%s1 + $0x1c0] sm:$0xff]
  %v73 = vld [vmem:[%s1 + $0x1c8] sm:$0xff]
  %v74 = vld [vmem:[%s1 + $0x1d0] sm:$0xff]
  %v75 = vld [vmem:[%s1 + $0x1d8] sm:$0xff]
  %v76 = vld [vmem:[%s1 + $0x1e0] sm:$0xff]
  %v77 = vld [vmem:[%s1 + $0x1e8] sm:$0xff]
  %v78 = vld [vmem:[%s1 + $0x1f0] sm:$0xff]
  %v79 = vld [vmem:[%s1 + $0x1f8] sm:$0xff]
  %v80 = vld [vmem:[%s2] sm:$0xff]
  %v81 = vld [vmem:[%s2 + $0x8] sm:$0xff]
  %v84 = vlaneseq
  %v85 = vshrl.u32 %v84, 7
  %v86 = vsub.s32 0, %v85
  %v87 = vrot.slane %v80, %v86
  %v88 = vlaneseq
  %v89 = vshrl.u32 %v88, 7
  %v90 = vsub.s32 1, %v89
  %v91 = vrot.slane %v80, %v90
  %v92 = vlaneseq
  %v93 = vshrl.u32 %v92, 7
  %v94 = vsub.s32 2, %v93
  %v95 = vrot.slane %v80, %v94
  %v96 = vlaneseq
  %v97 = vshrl.u32 %v96, 7
  %v98 = vsub.s32 3, %v97
  %v99 = vrot.slane %v80, %v98
  %v100 = vlaneseq
  %v101 = vshrl.u32 %v100, 7
  %v102 = vsub.s32 4, %v101
  %v103 = vrot.slane %v80, %v102
  %v104 = vlaneseq
  %v105 = vshrl.u32 %v104, 7
  %v106 = vsub.s32 5, %v105
  %v107 = vrot.slane %v80, %v106
  %v108 = vlaneseq
  %v109 = vshrl.u32 %v108, 7
  %v110 = vsub.s32 6, %v109
  %v111 = vrot.slane %v80, %v110
  %v112 = vlaneseq
  %v113 = vshrl.u32 %v112, 7
  %v114 = vsub.s32 7, %v113
  %v115 = vrot.slane %v80, %v114
  %v116 = vlaneseq
  %v117 = vshrl.u32 %v116, 7
  %v118 = vsub.s32 0, %v117
  %v119 = vrot.slane %v81, %v118
  %v120 = vlaneseq
  %v121 = vshrl.u32 %v120, 7
  %v122 = vsub.s32 1, %v121
  %v123 = vrot.slane %v81, %v122
  %v124 = vlaneseq
  %v125 = vshrl.u32 %v124, 7
  %v126 = vsub.s32 2, %v125
  %v127 = vrot.slane %v81, %v126
  %v128 = vlaneseq
  %v129 = vshrl.u32 %v128, 7
  %v130 = vsub.s32 3, %v129
  %v131 = vrot.slane %v81, %v130
  %v132 = vlaneseq
  %v133 = vshrl.u32 %v132, 7
  %v134 = vsub.s32 4, %v133
  %v135 = vrot.slane %v81, %v134
  %v136 = vlaneseq
  %v137 = vshrl.u32 %v136, 7
  %v138 = vsub.s32 5, %v137
  %v139 = vrot.slane %v81, %v138
  %v140 = vlaneseq
  %v141 = vshrl.u32 %v140, 7
  %v142 = vsub.s32 6, %v141
  %v143 = vrot.slane %v81, %v142
  %v144 = vlaneseq
  %v145 = vshrl.u32 %v144, 7
  %v146 = vsub.s32 7, %v145
  %v147 = vrot.slane %v81, %v146
  %v228 = vunpack.c.l.b16 %v16
  %v229 = vunpack.c.h.b16 %v16
  %v230 = vunpack.c.l.b16 %v17
  %v231 = vunpack.c.h.b16 %v17
  %v232 = vunpack.c.l.b16 %v18
  %v233 = vunpack.c.h.b16 %v18
  %v234 = vunpack.c.l.b16 %v19
  %v235 = vunpack.c.h.b16 %v19
  %v236 = vunpack.c.l.b16 %v20
  %v237 = vunpack.c.h.b16 %v20
  %v238 = vunpack.c.l.b16 %v21
  %v239 = vunpack.c.h.b16 %v21
  %v240 = vunpack.c.l.b16 %v22
  %v241 = vunpack.c.h.b16 %v22
  %v242 = vunpack.c.l.b16 %v23
  %v243 = vunpack.c.h.b16 %v23
  %v244 = vunpack.c.l.b16 %v24
  %v245 = vunpack.c.h.b16 %v24
  %v246 = vunpack.c.l.b16 %v25
  %v247 = vunpack.c.h.b16 %v25
  %v248 = vunpack.c.l.b16 %v26
  %v249 = vunpack.c.h.b16 %v26
  %v250 = vunpack.c.l.b16 %v27
  %v251 = vunpack.c.h.b16 %v27
  %v252 = vunpack.c.l.b16 %v28
  %v253 = vunpack.c.h.b16 %v28
  %v254 = vunpack.c.l.b16 %v29
  %v255 = vunpack.c.h.b16 %v29
  %v256 = vunpack.c.l.b16 %v30
  %v257 = vunpack.c.h.b16 %v30
  %v258 = vunpack.c.l.b16 %v31
  %v259 = vunpack.c.h.b16 %v31
  %v260 = vunpack.c.l.b16 %v32
  %v261 = vunpack.c.h.b16 %v32
  %v262 = vunpack.c.l.b16 %v33
  %v263 = vunpack.c.h.b16 %v33
  %v264 = vunpack.c.l.b16 %v34
  %v265 = vunpack.c.h.b16 %v34
  %v266 = vunpack.c.l.b16 %v35
  %v267 = vunpack.c.h.b16 %v35
  %v268 = vunpack.c.l.b16 %v36
  %v269 = vunpack.c.h.b16 %v36
  %v270 = vunpack.c.l.b16 %v37
  %v271 = vunpack.c.h.b16 %v37
  %v272 = vunpack.c.l.b16 %v38
  %v273 = vunpack.c.h.b16 %v38
  %v274 = vunpack.c.l.b16 %v39
  %v275 = vunpack.c.h.b16 %v39
  %v276 = vunpack.c.l.b16 %v40
  %v277 = vunpack.c.h.b16 %v40
  %v278 = vunpack.c.l.b16 %v41
  %v279 = vunpack.c.h.b16 %v41
  %v280 = vunpack.c.l.b16 %v42
  %v281 = vunpack.c.h.b16 %v42
  %v282 = vunpack.c.l.b16 %v43
  %v283 = vunpack.c.h.b16 %v43
  %v284 = vunpack.c.l.b16 %v44
  %v285 = vunpack.c.h.b16 %v44
  %v286 = vunpack.c.l.b16 %v45
  %v287 = vunpack.c.h.b16 %v45
  %v288 = vunpack.c.l.b16 %v46
  %v289 = vunpack.c.h.b16 %v46
  %v290 = vunpack.c.l.b16 %v47
  %v291 = vunpack.c.h.b16 %v47
  %v292 = vunpack.c.l.b16 %v48
  %v293 = vunpack.c.h.b16 %v48
  %v294 = vunpack.c.l.b16 %v49
  %v295 = vunpack.c.h.b16 %v49
  %v296 = vunpack.c.l.b16 %v50
  %v297 = vunpack.c.h.b16 %v50
  %v298 = vunpack.c.l.b16 %v51
  %v299 = vunpack.c.h.b16 %v51
  %v300 = vunpack.c.l.b16 %v52
  %v301 = vunpack.c.h.b16 %v52
  %v302 = vunpack.c.l.b16 %v53
  %v303 = vunpack.c.h.b16 %v53
  %v304 = vunpack.c.l.b16 %v54
  %v305 = vunpack.c.h.b16 %v54
  %v306 = vunpack.c.l.b16 %v55
  %v307 = vunpack.c.h.b16 %v55
  %v308 = vunpack.c.l.b16 %v56
  %v309 = vunpack.c.h.b16 %v56
  %v310 = vunpack.c.l.b16 %v57
  %v311 = vunpack.c.h.b16 %v57
  %v312 = vunpack.c.l.b16 %v58
  %v313 = vunpack.c.h.b16 %v58
  %v314 = vunpack.c.l.b16 %v59
  %v315 = vunpack.c.h.b16 %v59
  %v316 = vunpack.c.l.b16 %v60
  %v317 = vunpack.c.h.b16 %v60
  %v318 = vunpack.c.l.b16 %v61
  %v319 = vunpack.c.h.b16 %v61
  %v320 = vunpack.c.l.b16 %v62
  %v321 = vunpack.c.h.b16 %v62
  %v322 = vunpack.c.l.b16 %v63
  %v323 = vunpack.c.h.b16 %v63
  %v324 = vunpack.c.l.b16 %v64
  %v325 = vunpack.c.h.b16 %v64
  %v326 = vunpack.c.l.b16 %v65
  %v327 = vunpack.c.h.b16 %v65
  %v328 = vunpack.c.l.b16 %v66
  %v329 = vunpack.c.h.b16 %v66
  %v330 = vunpack.c.l.b16 %v67
  %v331 = vunpack.c.h.b16 %v67
  %v332 = vunpack.c.l.b16 %v68
  %v333 = vunpack.c.h.b16 %v68
  %v334 = vunpack.c.l.b16 %v69
  %v335 = vunpack.c.h.b16 %v69
  %v336 = vunpack.c.l.b16 %v70
  %v337 = vunpack.c.h.b16 %v70
  %v338 = vunpack.c.l.b16 %v71
  %v339 = vunpack.c.h.b16 %v71
  %v340 = vunpack.c.l.b16 %v72
  %v341 = vunpack.c.h.b16 %v72
  %v342 = vunpack.c.l.b16 %v73
  %v343 = vunpack.c.h.b16 %v73
  %v344 = vunpack.c.l.b16 %v74
  %v345 = vunpack.c.h.b16 %v74
  %v346 = vunpack.c.l.b16 %v75
  %v347 = vunpack.c.h.b16 %v75
  %v348 = vunpack.c.l.b16 %v76
  %v349 = vunpack.c.h.b16 %v76
  %v350 = vunpack.c.l.b16 %v77
  %v351 = vunpack.c.h.b16 %v77
  %v352 = vunpack.c.l.b16 %v78
  %v353 = vunpack.c.h.b16 %v78
  %v354 = vunpack.c.l.b16 %v79
  %v355 = vunpack.c.h.b16 %v79
  %v356 = vpack.c.b16 %v244, %v228
  %v357 = vpack.c.b16 %v245, %v229
  %v358 = vpack.c.b16 %v246, %v230
  %v359 = vpack.c.b16 %v247, %v231
  %v360 = vpack.c.b16 %v248, %v232
  %v361 = vpack.c.b16 %v249, %v233
  %v362 = vpack.c.b16 %v250, %v234
  %v363 = vpack.c.b16 %v251, %v235
  %v364 = vpack.c.b16 %v252, %v236
  %v365 = vpack.c.b16 %v253, %v237
  %v366 = vpack.c.b16 %v254, %v238
  %v367 = vpack.c.b16 %v255, %v239
  %v368 = vpack.c.b16 %v256, %v240
  %v369 = vpack.c.b16 %v257, %v241
  %v370 = vpack.c.b16 %v258, %v242
  %v371 = vpack.c.b16 %v259, %v243
  %v372 = vpack.c.b16 %v276, %v260
  %v373 = vpack.c.b16 %v277, %v261
  %v374 = vpack.c.b16 %v278, %v262
  %v375 = vpack.c.b16 %v279, %v263
  %v376 = vpack.c.b16 %v280, %v264
  %v377 = vpack.c.b16 %v281, %v265
  %v378 = vpack.c.b16 %v282, %v266
  %v379 = vpack.c.b16 %v283, %v267
  %v380 = vpack.c.b16 %v284, %v268
  %v381 = vpack.c.b16 %v285, %v269
  %v382 = vpack.c.b16 %v286, %v270
  %v383 = vpack.c.b16 %v287, %v271
  %v384 = vpack.c.b16 %v288, %v272
  %v385 = vpack.c.b16 %v289, %v273
  %v386 = vpack.c.b16 %v290, %v274
  %v387 = vpack.c.b16 %v291, %v275
  %v388 = vpack.c.b16 %v308, %v292
  %v389 = vpack.c.b16 %v309, %v293
  %v390 = vpack.c.b16 %v310, %v294
  %v391 = vpack.c.b16 %v311, %v295
  %v392 = vpack.c.b16 %v312, %v296
  %v393 = vpack.c.b16 %v313, %v297
  %v394 = vpack.c.b16 %v314, %v298
  %v395 = vpack.c.b16 %v315, %v299
  %v396 = vpack.c.b16 %v316, %v300
  %v397 = vpack.c.b16 %v317, %v301
  %v398 = vpack.c.b16 %v318, %v302
  %v399 = vpack.c.b16 %v319, %v303
  %v400 = vpack.c.b16 %v320, %v304
  %v401 = vpack.c.b16 %v321, %v305
  %v402 = vpack.c.b16 %v322, %v306
  %v403 = vpack.c.b16 %v323, %v307
  %v404 = vpack.c.b16 %v340, %v324
  %v405 = vpack.c.b16 %v341, %v325
  %v406 = vpack.c.b16 %v342, %v326
  %v407 = vpack.c.b16 %v343, %v327
  %v408 = vpack.c.b16 %v344, %v328
  %v409 = vpack.c.b16 %v345, %v329
  %v410 = vpack.c.b16 %v346, %v330
  %v411 = vpack.c.b16 %v347, %v331
  %v412 = vpack.c.b16 %v348, %v332
  %v413 = vpack.c.b16 %v349, %v333
  %v414 = vpack.c.b16 %v350, %v334
  %v415 = vpack.c.b16 %v351, %v335
  %v416 = vpack.c.b16 %v352, %v336
  %v417 = vpack.c.b16 %v353, %v337
  %v418 = vpack.c.b16 %v354, %v338
  %v419 = vpack.c.b16 %v355, %v339
  %vm484 = vcmask 523264
  %v486 = vsel %vm484, %v15, 0
  %488 = vmatprep.subr.bf16.mxu0 %v357
  %489 = vmatpush1.bf16.msra.mxu0 %v356
  %490 = vmatprep.subr.bf16.mxu0 %v373
  %491 = vmatpush1.bf16.msra.mxu0 %v372
  %492 = vmatprep.subr.bf16.mxu0 %v389
  %493 = vmatpush1.bf16.msra.mxu0 %v388
  %494 = vmatprep.subr.bf16.mxu0 %v405
  %495 = vmatpush1.bf16.msra.mxu0 %v404
  %496 = vmatprep.subr.bf16.mxu0 0
  %497 = vmatpush1.bf16.msra.mxu0 0
  %498 = vmatprep.subr.bf16.mxu0 0
  %499 = vmatpush1.bf16.msra.mxu0 0
  %500 = vmatprep.subr.bf16.mxu0 0
  %501 = vmatpush1.bf16.msra.mxu0 0
  %502 = vmatprep.subr.bf16.mxu0 0
  %503 = vmatpush1.bf16.msra.mxu0 0
  %504 = vmatprep.subr.bf16.mxu0 0
  %505 = vmatpush1.bf16.msra.mxu0 0
  %506 = vmatprep.subr.bf16.mxu0 0
  %507 = vmatpush1.bf16.msra.mxu0 0
  %508 = vmatprep.subr.bf16.mxu0 0
  %509 = vmatpush1.bf16.msra.mxu0 0
  %510 = vmatprep.subr.bf16.mxu0 0
  %511 = vmatpush1.bf16.msra.mxu0 0
  %512 = vmatprep.subr.bf16.mxu0 0
  %513 = vmatpush1.bf16.msra.mxu0 0
  %514 = vmatprep.subr.bf16.mxu0 0
  %515 = vmatpush1.bf16.msra.mxu0 0
  %516 = vmatprep.subr.bf16.mxu0 0
  %517 = vmatpush1.bf16.msra.mxu0 0
  %518 = vmatprep.subr.bf16.mxu0 0
  %519 = vmatpush1.bf16.msra.mxu0 0
  %520 = vmatprep.mubr.bf16.mxu0 0
  %521 = vmatmul.mubr.bf16.gmra.mrb[0].mxu0 %v486
  %v522 = vpop.f32.mrb[0].mxu0
  %v523 = vadd.f32 %v87, %v522
  %v524 = vpop.f32.mrb[0].mxu0
  %v525 = vadd.f32 %v91, %v524
  %v526 = vpop.f32.mrb[0].mxu0
  %v527 = vpop.f32.mrb[0].mxu0
  %528 = vdwg.mxu0
  %529 = vmatprep.subr.bf16.mxu0 %v359
  %530 = vmatpush1.bf16.msra.mxu0 %v358
  %531 = vmatprep.subr.bf16.mxu0 %v375
  %532 = vmatpush1.bf16.msra.mxu0 %v374
  %533 = vmatprep.subr.bf16.mxu0 %v391
  %534 = vmatpush1.bf16.msra.mxu0 %v390
  %535 = vmatprep.subr.bf16.mxu0 %v407
  %536 = vmatpush1.bf16.msra.mxu0 %v406
  %537 = vmatprep.subr.bf16.mxu0 0
  %538 = vmatpush1.bf16.msra.mxu0 0
  %539 = vmatprep.subr.bf16.mxu0 0
  %540 = vmatpush1.bf16.msra.mxu0 0
  %541 = vmatprep.subr.bf16.mxu0 0
  %542 = vmatpush1.bf16.msra.mxu0 0
  %543 = vmatprep.subr.bf16.mxu0 0
  %544 = vmatpush1.bf16.msra.mxu0 0
  %545 = vmatprep.subr.bf16.mxu0 0
  %546 = vmatpush1.bf16.msra.mxu0 0
  %547 = vmatprep.subr.bf16.mxu0 0
  %548 = vmatpush1.bf16.msra.mxu0 0
  %549 = vmatprep.subr.bf16.mxu0 0
  %550 = vmatpush1.bf16.msra.mxu0 0
  %551 = vmatprep.subr.bf16.mxu0 0
  %552 = vmatpush1.bf16.msra.mxu0 0
  %553 = vmatprep.subr.bf16.mxu0 0
  %554 = vmatpush1.bf16.msra.mxu0 0
  %555 = vmatprep.subr.bf16.mxu0 0
  %556 = vmatpush1.bf16.msra.mxu0 0
  %557 = vmatprep.subr.bf16.mxu0 0
  %558 = vmatpush1.bf16.msra.mxu0 0
  %559 = vmatprep.subr.bf16.mxu0 0
  %560 = vmatpush1.bf16.msra.mxu0 0
  %561 = vmatprep.mubr.bf16.mxu0 0
  %562 = vmatmul.mubr.bf16.gmra.mrb[0].mxu0 %v486
  %v563 = vpop.f32.mrb[0].mxu0
  %v564 = vadd.f32 %v95, %v563
  %v565 = vpop.f32.mrb[0].mxu0
  %v566 = vadd.f32 %v99, %v565
  %v567 = vpop.f32.mrb[0].mxu0
  %v568 = vpop.f32.mrb[0].mxu0
  %569 = vdwg.mxu0
  %570 = vmatprep.subr.bf16.mxu0 %v361
  %571 = vmatpush1.bf16.msra.mxu0 %v360
  %572 = vmatprep.subr.bf16.mxu0 %v377
  %573 = vmatpush1.bf16.msra.mxu0 %v376
  %574 = vmatprep.subr.bf16.mxu0 %v393
  %575 = vmatpush1.bf16.msra.mxu0 %v392
  %576 = vmatprep.subr.bf16.mxu0 %v409
  %577 = vmatpush1.bf16.msra.mxu0 %v408
  %578 = vmatprep.subr.bf16.mxu0 0
  %579 = vmatpush1.bf16.msra.mxu0 0
  %580 = vmatprep.subr.bf16.mxu0 0
  %581 = vmatpush1.bf16.msra.mxu0 0
  %582 = vmatprep.subr.bf16.mxu0 0
  %583 = vmatpush1.bf16.msra.mxu0 0
  %584 = vmatprep.subr.bf16.mxu0 0
  %585 = vmatpush1.bf16.msra.mxu0 0
  %586 = vmatprep.subr.bf16.mxu0 0
  %587 = vmatpush1.bf16.msra.mxu0 0
  %588 = vmatprep.subr.bf16.mxu0 0
  %589 = vmatpush1.bf16.msra.mxu0 0
  %590 = vmatprep.subr.bf16.mxu0 0
  %591 = vmatpush1.bf16.msra.mxu0 0
  %592 = vmatprep.subr.bf16.mxu0 0
  %593 = vmatpush1.bf16.msra.mxu0 0
  %594 = vmatprep.subr.bf16.mxu0 0
  %595 = vmatpush1.bf16.msra.mxu0 0
  %596 = vmatprep.subr.bf16.mxu0 0
  %597 = vmatpush1.bf16.msra.mxu0 0
  %598 = vmatprep.subr.bf16.mxu0 0
  %599 = vmatpush1.bf16.msra.mxu0 0
  %600 = vmatprep.subr.bf16.mxu0 0
  %601 = vmatpush1.bf16.msra.mxu0 0
  %602 = vmatprep.mubr.bf16.mxu0 0
  %603 = vmatmul.mubr.bf16.gmra.mrb[0].mxu0 %v486
  %v604 = vpop.f32.mrb[0].mxu0
  %v605 = vadd.f32 %v103, %v604
  %v606 = vpop.f32.mrb[0].mxu0
  %v607 = vadd.f32 %v107, %v606
  %v608 = vpop.f32.mrb[0].mxu0
  %v609 = vpop.f32.mrb[0].mxu0
  %610 = vdwg.mxu0
  %611 = vmatprep.subr.bf16.mxu0 %v363
  %612 = vmatpush1.bf16.msra.mxu0 %v362
  %613 = vmatprep.subr.bf16.mxu0 %v379
  %614 = vmatpush1.bf16.msra.mxu0 %v378
  %615 = vmatprep.subr.bf16.mxu0 %v395
  %616 = vmatpush1.bf16.msra.mxu0 %v394
  %617 = vmatprep.subr.bf16.mxu0 %v411
  %618 = vmatpush1.bf16.msra.mxu0 %v410
  %619 = vmatprep.subr.bf16.mxu0 0
  %620 = vmatpush1.bf16.msra.mxu0 0
  %621 = vmatprep.subr.bf16.mxu0 0
  %622 = vmatpush1.bf16.msra.mxu0 0
  %623 = vmatprep.subr.bf16.mxu0 0
  %624 = vmatpush1.bf16.msra.mxu0 0
  %625 = vmatprep.subr.bf16.mxu0 0
  %626 = vmatpush1.bf16.msra.mxu0 0
  %627 = vmatprep.subr.bf16.mxu0 0
  %628 = vmatpush1.bf16.msra.mxu0 0
  %629 = vmatprep.subr.bf16.mxu0 0
  %630 = vmatpush1.bf16.msra.mxu0 0
  %631 = vmatprep.subr.bf16.mxu0 0
  %632 = vmatpush1.bf16.msra.mxu0 0
  %633 = vmatprep.subr.bf16.mxu0 0
  %634 = vmatpush1.bf16.msra.mxu0 0
  %635 = vmatprep.subr.bf16.mxu0 0
  %636 = vmatpush1.bf16.msra.mxu0 0
  %637 = vmatprep.subr.bf16.mxu0 0
  %638 = vmatpush1.bf16.msra.mxu0 0
  %639 = vmatprep.subr.bf16.mxu0 0
  %640 = vmatpush1.bf16.msra.mxu0 0
  %641 = vmatprep.subr.bf16.mxu0 0
  %642 = vmatpush1.bf16.msra.mxu0 0
  %643 = vmatprep.mubr.bf16.mxu0 0
  %644 = vmatmul.mubr.bf16.gmra.mrb[0].mxu0 %v486
  %v645 = vpop.f32.mrb[0].mxu0
  %v646 = vadd.f32 %v111, %v645
  %v647 = vpop.f32.mrb[0].mxu0
  %v648 = vadd.f32 %v115, %v647
  %v649 = vpop.f32.mrb[0].mxu0
  %v650 = vpop.f32.mrb[0].mxu0
  %651 = vdwg.mxu0
  %652 = vmatprep.subr.bf16.mxu0 %v365
  %653 = vmatpush1.bf16.msra.mxu0 %v364
  %654 = vmatprep.subr.bf16.mxu0 %v381
  %655 = vmatpush1.bf16.msra.mxu0 %v380
  %656 = vmatprep.subr.bf16.mxu0 %v397
  %657 = vmatpush1.bf16.msra.mxu0 %v396
  %658 = vmatprep.subr.bf16.mxu0 %v413
  %659 = vmatpush1.bf16.msra.mxu0 %v412
  %660 = vmatprep.subr.bf16.mxu0 0
  %661 = vmatpush1.bf16.msra.mxu0 0
  %662 = vmatprep.subr.bf16.mxu0 0
  %663 = vmatpush1.bf16.msra.mxu0 0
  %664 = vmatprep.subr.bf16.mxu0 0
  %665 = vmatpush1.bf16.msra.mxu0 0
  %666 = vmatprep.subr.bf16.mxu0 0
  %667 = vmatpush1.bf16.msra.mxu0 0
  %668 = vmatprep.subr.bf16.mxu0 0
  %669 = vmatpush1.bf16.msra.mxu0 0
  %670 = vmatprep.subr.bf16.mxu0 0
  %671 = vmatpush1.bf16.msra.mxu0 0
  %672 = vmatprep.subr.bf16.mxu0 0
  %673 = vmatpush1.bf16.msra.mxu0 0
  %674 = vmatprep.subr.bf16.mxu0 0
  %675 = vmatpush1.bf16.msra.mxu0 0
  %676 = vmatprep.subr.bf16.mxu0 0
  %677 = vmatpush1.bf16.msra.mxu0 0
  %678 = vmatprep.subr.bf16.mxu0 0
  %679 = vmatpush1.bf16.msra.mxu0 0
  %680 = vmatprep.subr.bf16.mxu0 0
  %681 = vmatpush1.bf16.msra.mxu0 0
  %682 = vmatprep.subr.bf16.mxu0 0
  %683 = vmatpush1.bf16.msra.mxu0 0
  %684 = vmatprep.mubr.bf16.mxu0 0
  %685 = vmatmul.mubr.bf16.gmra.mrb[0].mxu0 %v486
  %v686 = vpop.f32.mrb[0].mxu0
  %v687 = vadd.f32 %v119, %v686
  %v688 = vpop.f32.mrb[0].mxu0
  %v689 = vadd.f32 %v123, %v688
  %v690 = vpop.f32.mrb[0].mxu0
  %v691 = vpop.f32.mrb[0].mxu0
  %692 = vdwg.mxu0
  %693 = vmatprep.subr.bf16.mxu0 %v367
  %694 = vmatpush1.bf16.msra.mxu0 %v366
  %695 = vmatprep.subr.bf16.mxu0 %v383
  %696 = vmatpush1.bf16.msra.mxu0 %v382
  %697 = vmatprep.subr.bf16.mxu0 %v399
  %698 = vmatpush1.bf16.msra.mxu0 %v398
  %699 = vmatprep.subr.bf16.mxu0 %v415
  %700 = vmatpush1.bf16.msra.mxu0 %v414
  %701 = vmatprep.subr.bf16.mxu0 0
  %702 = vmatpush1.bf16.msra.mxu0 0
  %703 = vmatprep.subr.bf16.mxu0 0
  %704 = vmatpush1.bf16.msra.mxu0 0
  %705 = vmatprep.subr.bf16.mxu0 0
  %706 = vmatpush1.bf16.msra.mxu0 0
  %707 = vmatprep.subr.bf16.mxu0 0
  %708 = vmatpush1.bf16.msra.mxu0 0
  %709 = vmatprep.subr.bf16.mxu0 0
  %710 = vmatpush1.bf16.msra.mxu0 0
  %711 = vmatprep.subr.bf16.mxu0 0
  %712 = vmatpush1.bf16.msra.mxu0 0
  %713 = vmatprep.subr.bf16.mxu0 0
  %714 = vmatpush1.bf16.msra.mxu0 0
  %715 = vmatprep.subr.bf16.mxu0 0
  %716 = vmatpush1.bf16.msra.mxu0 0
  %717 = vmatprep.subr.bf16.mxu0 0
  %718 = vmatpush1.bf16.msra.mxu0 0
  %719 = vmatprep.subr.bf16.mxu0 0
  %720 = vmatpush1.bf16.msra.mxu0 0
  %721 = vmatprep.subr.bf16.mxu0 0
  %722 = vmatpush1.bf16.msra.mxu0 0
  %723 = vmatprep.subr.bf16.mxu0 0
  %724 = vmatpush1.bf16.msra.mxu0 0
  %725 = vmatprep.mubr.bf16.mxu0 0
  %726 = vmatmul.mubr.bf16.gmra.mrb[0].mxu0 %v486
  %v727 = vpop.f32.mrb[0].mxu0
  %v728 = vadd.f32 %v127, %v727
  %v729 = vpop.f32.mrb[0].mxu0
  %v730 = vadd.f32 %v131, %v729
  %v731 = vpop.f32.mrb[0].mxu0
  %v732 = vpop.f32.mrb[0].mxu0
  %733 = vdwg.mxu0
  %734 = vmatprep.subr.bf16.mxu0 %v369
  %735 = vmatpush1.bf16.msra.mxu0 %v368
  %736 = vmatprep.subr.bf16.mxu0 %v385
  %737 = vmatpush1.bf16.msra.mxu0 %v384
  %738 = vmatprep.subr.bf16.mxu0 %v401
  %739 = vmatpush1.bf16.msra.mxu0 %v400
  %740 = vmatprep.subr.bf16.mxu0 %v417
  %741 = vmatpush1.bf16.msra.mxu0 %v416
  %742 = vmatprep.subr.bf16.mxu0 0
  %743 = vmatpush1.bf16.msra.mxu0 0
  %744 = vmatprep.subr.bf16.mxu0 0
  %745 = vmatpush1.bf16.msra.mxu0 0
  %746 = vmatprep.subr.bf16.mxu0 0
  %747 = vmatpush1.bf16.msra.mxu0 0
  %748 = vmatprep.subr.bf16.mxu0 0
  %749 = vmatpush1.bf16.msra.mxu0 0
  %750 = vmatprep.subr.bf16.mxu0 0
  %751 = vmatpush1.bf16.msra.mxu0 0
  %752 = vmatprep.subr.bf16.mxu0 0
  %753 = vmatpush1.bf16.msra.mxu0 0
  %754 = vmatprep.subr.bf16.mxu0 0
  %755 = vmatpush1.bf16.msra.mxu0 0
  %756 = vmatprep.subr.bf16.mxu0 0
  %757 = vmatpush1.bf16.msra.mxu0 0
  %758 = vmatprep.subr.bf16.mxu0 0
  %759 = vmatpush1.bf16.msra.mxu0 0
  %760 = vmatprep.subr.bf16.mxu0 0
  %761 = vmatpush1.bf16.msra.mxu0 0
  %762 = vmatprep.subr.bf16.mxu0 0
  %763 = vmatpush1.bf16.msra.mxu0 0
  %764 = vmatprep.subr.bf16.mxu0 0
  %765 = vmatpush1.bf16.msra.mxu0 0
  %766 = vmatprep.mubr.bf16.mxu0 0
  %767 = vmatmul.mubr.bf16.gmra.mrb[0].mxu0 %v486
  %v768 = vpop.f32.mrb[0].mxu0
  %v769 = vadd.f32 %v135, %v768
  %v770 = vpop.f32.mrb[0].mxu0
  %v771 = vadd.f32 %v139, %v770
  %v772 = vpop.f32.mrb[0].mxu0
  %v773 = vpop.f32.mrb[0].mxu0
  %774 = vdwg.mxu0
  %775 = vmatprep.subr.bf16.mxu0 %v371
  %776 = vmatpush1.bf16.msra.mxu0 %v370
  %777 = vmatprep.subr.bf16.mxu0 %v387
  %778 = vmatpush1.bf16.msra.mxu0 %v386
  %779 = vmatprep.subr.bf16.mxu0 %v403
  %780 = vmatpush1.bf16.msra.mxu0 %v402
  %781 = vmatprep.subr.bf16.mxu0 %v419
  %782 = vmatpush1.bf16.msra.mxu0 %v418
  %783 = vmatprep.subr.bf16.mxu0 0
  %784 = vmatpush1.bf16.msra.mxu0 0
  %785 = vmatprep.subr.bf16.mxu0 0
  %786 = vmatpush1.bf16.msra.mxu0 0
  %787 = vmatprep.subr.bf16.mxu0 0
  %788 = vmatpush1.bf16.msra.mxu0 0
  %789 = vmatprep.subr.bf16.mxu0 0
  %790 = vmatpush1.bf16.msra.mxu0 0
  %791 = vmatprep.subr.bf16.mxu0 0
  %792 = vmatpush1.bf16.msra.mxu0 0
  %793 = vmatprep.subr.bf16.mxu0 0
  %794 = vmatpush1.bf16.msra.mxu0 0
  %795 = vmatprep.subr.bf16.mxu0 0
  %796 = vmatpush1.bf16.msra.mxu0 0
  %797 = vmatprep.subr.bf16.mxu0 0
  %798 = vmatpush1.bf16.msra.mxu0 0
  %799 = vmatprep.subr.bf16.mxu0 0
  %800 = vmatpush1.bf16.msra.mxu0 0
  %801 = vmatprep.subr.bf16.mxu0 0
  %802 = vmatpush1.bf16.msra.mxu0 0
  %803 = vmatprep.subr.bf16.mxu0 0
  %804 = vmatpush1.bf16.msra.mxu0 0
  %805 = vmatprep.subr.bf16.mxu0 0
  %806 = vmatpush1.bf16.msra.mxu0 0
  %807 = vmatprep.mubr.bf16.mxu0 0
  %808 = vmatmul.mubr.bf16.gmra.mrb[0].mxu0 %v486
  %v809 = vpop.f32.mrb[0].mxu0
  %v810 = vadd.f32 %v143, %v809
  %v811 = vpop.f32.mrb[0].mxu0
  %v812 = vadd.f32 %v147, %v811
  %v813 = vpop.f32.mrb[0].mxu0
  %v814 = vpop.f32.mrb[0].mxu0
  %815 = vdwg.mxu0
  %816 = vst [vmem:[%s3] sm:$0xff] %v523
  %817 = vst [vmem:[%s3 + $0x8] sm:$0xff] %v525
  %818 = vst [vmem:[%s3 + $0x10] sm:$0xff] %v564
  %819 = vst [vmem:[%s3 + $0x18] sm:$0xff] %v566
  %820 = vst [vmem:[%s3 + $0x20] sm:$0xff] %v605
  %821 = vst [vmem:[%s3 + $0x28] sm:$0xff] %v607
  %822 = vst [vmem:[%s3 + $0x30] sm:$0xff] %v646
  %823 = vst [vmem:[%s3 + $0x38] sm:$0xff] %v648
  %824 = vst [vmem:[%s3 + $0x40] sm:$0xff] %v687
  %825 = vst [vmem:[%s3 + $0x48] sm:$0xff] %v689
  %826 = vst [vmem:[%s3 + $0x50] sm:$0xff] %v728
  %827 = vst [vmem:[%s3 + $0x58] sm:$0xff] %v730
  %828 = vst [vmem:[%s3 + $0x60] sm:$0xff] %v769
  %829 = vst [vmem:[%s3 + $0x68] sm:$0xff] %v771
  %830 = vst [vmem:[%s3 + $0x70] sm:$0xff] %v810
  %831 = vst [vmem:[%s3 + $0x78] sm:$0xff] %v812
  // Predicated region
  $region14: #{model_forward.12} parent=0 // pred_check
    _
  $region15: #{model_forward.12} parent=0 // pred_check_branch
    %833 = sbr.rel (0) target = $region17
  $region16: #{model_forward.12} parent=0 // pred_region
    _
  $region17: #{model_forward.12} parent=0 // pred_fallthru
    _
  // Predicated region
  $region18: #{model_forward.12} parent=0 // pred_check
    _
  $region19: #{model_forward.12} parent=0 // pred_check_branch
    %835 = sbr.rel (0) target = $region21
  $region20: #{model_forward.12} parent=0 // pred_region
    _
  $region21: #{model_forward.12} parent=0 // pred_fallthru
    _

// kernel: model_forward.13
$region0: #{model_forward.13}
  #allocation0 [shape = 'u32[]', space=smem, size = 0x4, offset = 0x4, fixed_abs, tag = 'smem constant byte address 0x4 - core index']
  #allocation1 [shape = 'u32[144,128]{1,0:T(1,128)}', space=vmem, size = 0x12000, scoped, tag = 'internal scratch']
  %s0 = inlined_call_operand.vmem [shape: bf16[256,64], index: 0, kind: input, shape index: {}]
  %s1 = inlined_call_operand.vmem [shape: bf16[64,128], index: 1, kind: input, shape index: {}]
  %s2 = inlined_call_operand.vmem [shape: f32[1,128], index: 2, kind: input, shape index: {}]
  %s3 = inlined_call_operand.vmem [shape: bf16[64,128], index: 3, kind: input, shape index: {}]
  %s4 = inlined_call_operand.vmem [shape: f32[1,128], index: 4, kind: input, shape index: {}]
  %s5 = inlined_call_operand.vmem [shape: f32[256,128], index: 5, kind: output, shape index: {0}]
  %s6 = inlined_call_operand.vmem [shape: f32[256,128], index: 6, kind: output, shape index: {1}]
  %7 = xla_tuple %s5, %s6
  %s8 = sld [smem:[#allocation0]]
  $region61: #{model_forward.13} parent=0
    _
  %s10 = ssub.s32 1, %s8
  %s11 = scalar_select 0, %s10, %s8
  loop: start=0, step=1, limit=4
  $region2: #{model_forward.13} parent=0 // loop_pre_header
    _
  $region3: #{model_forward.13} parent=0 // loop_header
    %s13 = sphi 0, %s17
    %p14 = scmp.ge.s32.totalorder %s13, 4
    %s23 = sphi 0, %s25
    %s26 = sphi 0, %s23
    %s27 = sphi 0, %s26
    %s43 = sphi 0, %s27
    %s47 = sphi 0, %s47
    %s49 = sphi 0, %s47
    %s50 = sphi 0, %s49
    %s64 = sphi 0, %s50
    %s68 = sphi 0, %s68
    %s70 = sphi 0, %s68
    %s71 = sphi 0, %s70
    %s85 = sphi 0, %s71
    %s89 = sphi 0, %s89
    %s91 = sphi 0, %s89
    %s92 = sphi 0, %s91
    %s106 = sphi 0, %s92
    %s110 = sphi 0, %s110
    %s112 = sphi 0, %s110
    %s113 = sphi 0, %s112
    %s127 = sphi 0, %s113
    %s133 = sphi 0, %s135
    %s136 = sphi 0, %s133
    %s137 = sphi 0, %s136
    %s153 = sphi 0, %s137
    %s159 = sphi 0, %s161
    %s162 = sphi 0, %s159
    %s163 = sphi 0, %s162
    %s179 = sphi 0, %s163
  $region4: #{model_forward.13} parent=0 // loop_header_branch
    %16 = sbr.rel (%p14) target = $region8
  $region5: #{model_forward.13} parent=0 // loop_body
    %s18 = ssub.s32 %s13, 1
    %s19 = ssub.s32 %s13, 2
    %s20 = sadd.s32 %s13, 1
    %s21 = ssub.s32 %s13, %s20
    %p22 = scmp.eq.s32.totalorder %s21, 0
    %s24 = sadd.s32 %s23, 1
    %s25 = scalar_select %p22, %s23, %s24
    %p28 = pneg %p22
    %p29 = scmp.eq.s32.totalorder %s13, 1
    %p30 = por %p28, %p29
    %p31 = scmp.ne.s32.totalorder %s23, %s26
    %p32 = scmp.eq.s32.totalorder %s13, 0
    %p33 = por %p31, %p32
    %p34 = scmp.ne.s32.totalorder %s23, %s26
    %p35 = scmp.eq.s32.totalorder %s18, 1
    %p36 = por %p34, %p35
    %p37 = scmp.ne.s32.totalorder %s26, %s27
    %p38 = scmp.eq.s32.totalorder %s18, 0
    %p39 = por %p37, %p38
    %p40 = scmp.ne.s32.totalorder %s26, %s27
    %p41 = scmp.eq.s32.totalorder %s19, 1
    %p42 = por %p40, %p41
    %p44 = scmp.ne.s32.totalorder %s27, %s43
    %p45 = scmp.eq.s32.totalorder %s19, 0
    %p46 = por %p44, %p45
    %s48 = sadd.s32 %s47, 1
    %p51 = scmp.eq.s32.totalorder %s13, 1
    %p52 = scmp.ne.s32.totalorder %s47, %s49
    %p53 = scmp.eq.s32.totalorder %s13, 0
    %p54 = por %p52, %p53
    %p55 = scmp.ne.s32.totalorder %s47, %s49
    %p56 = scmp.eq.s32.totalorder %s18, 1
    %p57 = por %p55, %p56
    %p58 = scmp.ne.s32.totalorder %s49, %s50
    %p59 = scmp.eq.s32.totalorder %s18, 0
    %p60 = por %p58, %p59
    %p61 = scmp.ne.s32.totalorder %s49, %s50
    %p62 = scmp.eq.s32.totalorder %s19, 1
    %p63 = por %p61, %p62
    %p65 = scmp.ne.s32.totalorder %s50, %s64
    %p66 = scmp.eq.s32.totalorder %s19, 0
    %p67 = por %p65, %p66
    %s69 = sadd.s32 %s68, 1
    %p72 = scmp.eq.s32.totalorder %s13, 1
    %p73 = scmp.ne.s32.totalorder %s68, %s70
    %p74 = scmp.eq.s32.totalorder %s13, 0
    %p75 = por %p73, %p74
    %p76 = scmp.ne.s32.totalorder %s68, %s70
    %p77 = scmp.eq.s32.totalorder %s18, 1
    %p78 = por %p76, %p77
    %p79 = scmp.ne.s32.totalorder %s70, %s71
    %p80 = scmp.eq.s32.totalorder %s18, 0
    %p81 = por %p79, %p80
    %p82 = scmp.ne.s32.totalorder %s70, %s71
    %p83 = scmp.eq.s32.totalorder %s19, 1
    %p84 = por %p82, %p83
    %p86 = scmp.ne.s32.totalorder %s71, %s85
    %p87 = scmp.eq.s32.totalorder %s19, 0
    %p88 = por %p86, %p87
    %s90 = sadd.s32 %s89, 1
    %p93 = scmp.eq.s32.totalorder %s13, 1
    %p94 = scmp.ne.s32.totalorder %s89, %s91
    %p95 = scmp.eq.s32.totalorder %s13, 0
    %p96 = por %p94, %p95
    %p97 = scmp.ne.s32.totalorder %s89, %s91
    %p98 = scmp.eq.s32.totalorder %s18, 1
    %p99 = por %p97, %p98
    %p100 = scmp.ne.s32.totalorder %s91, %s92
    %p101 = scmp.eq.s32.totalorder %s18, 0
    %p102 = por %p100, %p101
    %p103 = scmp.ne.s32.totalorder %s91, %s92
    %p104 = scmp.eq.s32.totalorder %s19, 1
    %p105 = por %p103, %p104
    %p107 = scmp.ne.s32.totalorder %s92, %s106
    %p108 = scmp.eq.s32.totalorder %s19, 0
    %p109 = por %p107, %p108
    %s111 = sadd.s32 %s110, 1
    %p114 = scmp.eq.s32.totalorder %s13, 1
    %p115 = scmp.ne.s32.totalorder %s110, %s112
    %p116 = scmp.eq.s32.totalorder %s13, 0
    %p117 = por %p115, %p116
    %p118 = scmp.ne.s32.totalorder %s110, %s112
    %p119 = scmp.eq.s32.totalorder %s18, 1
    %p120 = por %p118, %p119
    %p121 = scmp.ne.s32.totalorder %s112, %s113
    %p122 = scmp.eq.s32.totalorder %s18, 0
    %p123 = por %p121, %p122
    %p124 = scmp.ne.s32.totalorder %s112, %s113
    %p125 = scmp.eq.s32.totalorder %s19, 1
    %p126 = por %p124, %p125
    %p128 = scmp.ne.s32.totalorder %s113, %s127
    %p129 = scmp.eq.s32.totalorder %s19, 0
    %p130 = por %p128, %p129
    %s131 = ssub.s32 %s13, %s20
    %p132 = scmp.eq.s32.totalorder %s131, 0
    %s134 = sadd.s32 %s133, 1
    %s135 = scalar_select %p132, %s133, %s134
    %p138 = pneg %p132
    %p139 = scmp.eq.s32.totalorder %s13, 1
    %p140 = por %p138, %p139
    %p141 = scmp.ne.s32.totalorder %s133, %s136
    %p142 = scmp.eq.s32.totalorder %s13, 0
    %p143 = por %p141, %p142
    %p144 = scmp.ne.s32.totalorder %s133, %s136
    %p145 = scmp.eq.s32.totalorder %s18, 1
    %p146 = por %p144, %p145
    %p147 = scmp.ne.s32.totalorder %s136, %s137
    %p148 = scmp.eq.s32.totalorder %s18, 0
    %p149 = por %p147, %p148
    %p150 = scmp.ne.s32.totalorder %s136, %s137
    %p151 = scmp.eq.s32.totalorder %s19, 1
    %p152 = por %p150, %p151
    %p154 = scmp.ne.s32.totalorder %s137, %s153
    %p155 = scmp.eq.s32.totalorder %s19, 0
    %p156 = por %p154, %p155
    %s157 = ssub.s32 %s13, %s20
    %p158 = scmp.eq.s32.totalorder %s157, 0
    %s160 = sadd.s32 %s159, 1
    %s161 = scalar_select %p158, %s159, %s160
    %p164 = pneg %p158
    %p165 = scmp.eq.s32.totalorder %s13, 1
    %p166 = por %p164, %p165
    %p167 = scmp.ne.s32.totalorder %s159, %s162
    %p168 = scmp.eq.s32.totalorder %s13, 0
    %p169 = por %p167, %p168
    %p170 = scmp.ne.s32.totalorder %s159, %s162
    %p171 = scmp.eq.s32.totalorder %s18, 1
    %p172 = por %p170, %p171
    %p173 = scmp.ne.s32.totalorder %s162, %s163
    %p174 = scmp.eq.s32.totalorder %s18, 0
    %p175 = por %p173, %p174
    %p176 = scmp.ne.s32.totalorder %s162, %s163
    %p177 = scmp.eq.s32.totalorder %s19, 1
    %p178 = por %p176, %p177
    %p180 = scmp.ne.s32.totalorder %s163, %s179
    %p181 = scmp.eq.s32.totalorder %s19, 0
    %p182 = por %p180, %p181
    %p183 = scmp.le.s32.totalorder 1, %s13
    %p184 = scmp.lt.s32.totalorder %s13, 3
    %p185 = pnand %p183, %p184
    %p186 = pneg %p185
    // Predicated region
    $region9: #{model_forward.13} parent=5 // pred_check
      _
    $region10: #{model_forward.13} parent=5 // pred_check_branch
      %188 = sbr.rel (%p185) target = $region12
    $region11: #{model_forward.13} parent=5 // pred_region
      %s189 = ssub.s32 %s13, 1
      // Predicated region
      $region13: #{model_forward.13} parent=11 // pred_check
        %p190 = pneg %p60
      $region14: #{model_forward.13} parent=11 // pred_check_branch
        %192 = sbr.rel (%p190) target = $region16
      $region15: #{model_forward.13} parent=11 // pred_region
        _
      $region16: #{model_forward.13} parent=11 // pred_fallthru
        _
      // Predicated region
      $region17: #{model_forward.13} parent=11 // pred_check
        %p193 = pneg %p81
      $region18: #{model_forward.13} parent=11 // pred_check_branch
        %195 = sbr.rel (%p193) target = $region20
      $region19: #{model_forward.13} parent=11 // pred_region
        _
      $region20: #{model_forward.13} parent=11 // pred_fallthru
        _
      // Predicated region
      $region21: #{model_forward.13} parent=11 // pred_check
        %p196 = pneg %p102
      $region22: #{model_forward.13} parent=11 // pred_check_branch
        %198 = sbr.rel (%p196) target = $region24
      $region23: #{model_forward.13} parent=11 // pred_region
        _
      $region24: #{model_forward.13} parent=11 // pred_fallthru
        _
      // Predicated region
      $region25: #{model_forward.13} parent=11 // pred_check
        %p199 = pneg %p123
      $region26: #{model_forward.13} parent=11 // pred_check_branch
        %201 = sbr.rel (%p199) target = $region28
      $region27: #{model_forward.13} parent=11 // pred_region
        _
      $region28: #{model_forward.13} parent=11 // pred_fallthru
        _
    $region12: #{model_forward.13} parent=5 // pred_fallthru
      _
    %p202 = scmp.lt.s32.totalorder %s13, 2
    // Predicated region
    $region29: #{model_forward.13} parent=5 // pred_check
      %p203 = pneg %p202
    $region30: #{model_forward.13} parent=5 // pred_check_branch
      %205 = sbr.rel (%p203) target = $region32
    $region31: #{model_forward.13} parent=5 // pred_region
      // Predicated region
      $region33: #{model_forward.13} parent=31 // pred_check
        %p206 = pneg %p33
      $region34: #{model_forward.13} parent=31 // pred_check_branch
        %208 = sbr.rel (%p206) target = $region36
      $region35: #{model_forward.13} parent=31 // pred_region
        %s209 = smul.u32 16, %s13
        %p210 = scmp.lt.s32.totalorder %s209, 31
        %s211 = scalar_select %p210, %s209, 31
        %s212 = smul.addr %s211, 4
        %s213 = scalar_lea.vmem %s0, %s212
        %s214 = smul.u32 16, %s13
      $region36: #{model_forward.13} parent=31 // pred_fallthru
        _
    $region32: #{model_forward.13} parent=5 // pred_fallthru
      _
    %p215 = scmp.le.s32.totalorder 1, %s13
    %p216 = scmp.lt.s32.totalorder %s13, 3
    %p217 = pnand %p215, %p216
    %p218 = pneg %p217
    // Predicated region
    $region37: #{model_forward.13} parent=5 // pred_check
      _
    $region38: #{model_forward.13} parent=5 // pred_check_branch
      %220 = sbr.rel (%p217) target = $region40
    $region39: #{model_forward.13} parent=5 // pred_region
      %s221 = ssub.s32 %s13, 1
      %s222 = smul.u32 16, %s18
      %p223 = scmp.lt.s32.totalorder %s222, 31
      %s224 = scalar_select %p223, %s222, 31
      %s225 = smul.addr %s224, 4
      %s226 = scalar_lea.vmem %s0, %s225
      %p227 = pneg %p39
      %p228 = pneg %p36
      %p229 = pneg %p60
      %p230 = pneg %p57
      %p231 = pneg %p81
      %p232 = pneg %p78
      %p233 = pneg %p102
      %p234 = pneg %p99
      %p235 = pneg %p123
      %p236 = pneg %p120
      %p237 = pneg %p149
      %p238 = pneg %p146
      %s239 = smul.u32 16, %s18
      %p240 = scmp.lt.s32.totalorder %s239, 31
      %s241 = scalar_select %p240, %s239, 31
      %s242 = smul.addr %s241, 8
      %s243 = scalar_lea.vmem %s5, %s242
      %p244 = pneg %p175
      %p245 = pneg %p172
      %s246 = smul.u32 16, %s18
      %p247 = scmp.lt.s32.totalorder %s246, 31
      %s248 = scalar_select %p247, %s246, 31
      %s249 = smul.addr %s248, 8
      %s250 = scalar_lea.vmem %s6, %s249
      %s251 = smul.u32 16, %s18
      %p252 = scmp.lt.s32.totalorder %s251, 31
      %s253 = scalar_select %p252, %s251, 31
      %s254 = smul.addr %s253, 4
      %s255 = scalar_lea.vmem %s0, %s254
      %s256 = smul.u32 16, %s18
      %s257 = smul.u32 16, %s18
      %p258 = scmp.lt.s32.totalorder %s257, 31
      %s259 = scalar_select %p258, %s257, 31
      %s260 = smul.addr %s259, 8
      %s261 = scalar_lea.vmem %s5, %s260
      %s262 = smul.u32 16, %s18
      %s263 = smul.u32 16, %s18
      %p264 = scmp.lt.s32.totalorder %s263, 31
      %s265 = scalar_select %p264, %s263, 31
      %s266 = smul.addr %s265, 8
      %s267 = scalar_lea.vmem %s6, %s266
      %s268 = smul.u32 16, %s18
      %v270 = vld [vmem:[%s255] sm:$0xf]
      %v271 = vld [vmem:[%s255 + $0x4] sm:$0xf]
      %v272 = vld [vmem:[%s255 + $0x8] sm:$0xf]
      %v273 = vld [vmem:[%s255 + $0xc] sm:$0xf]
      %v274 = vld [vmem:[%s255 + $0x10] sm:$0xf]
      %v275 = vld [vmem:[%s255 + $0x14] sm:$0xf]
      %v276 = vld [vmem:[%s255 + $0x18] sm:$0xf]
      %v277 = vld [vmem:[%s255 + $0x1c] sm:$0xf]
      %v278 = vld [vmem:[%s255 + $0x20] sm:$0xf]
      %v279 = vld [vmem:[%s255 + $0x24] sm:$0xf]
      %v280 = vld [vmem:[%s255 + $0x28] sm:$0xf]
      %v281 = vld [vmem:[%s255 + $0x2c] sm:$0xf]
      %v282 = vld [vmem:[%s255 + $0x30] sm:$0xf]
      %v283 = vld [vmem:[%s255 + $0x34] sm:$0xf]
      %v284 = vld [vmem:[%s255 + $0x38] sm:$0xf]
      %v285 = vld [vmem:[%s255 + $0x3c] sm:$0xf]
      %v286 = vld [vmem:[%s1] sm:$0xf]
      %v287 = vld [vmem:[%s1 + $0x4] sm:$0xf]
      %v288 = vld [vmem:[%s1 + $0x8] sm:$0xf]
      %v289 = vld [vmem:[%s1 + $0xc] sm:$0xf]
      %v290 = vld [vmem:[%s1 + $0x10] sm:$0xf]
      %v291 = vld [vmem:[%s1 + $0x14] sm:$0xf]
      %v292 = vld [vmem:[%s1 + $0x18] sm:$0xf]
      %v293 = vld [vmem:[%s1 + $0x1c] sm:$0xf]
      %v294 = vld [vmem:[%s2] sm:$0x1]
      %v296 = vlaneseq
      %v297 = vshrl.u32 %v296, 7
      %v298 = vsub.s32 0, %v297
      %v299 = vrot.slane %v294, %v298
      %v317 = vunpack.c.l.b16 %v270
      %v318 = vunpack.c.l.b16 %v271
      %v319 = vunpack.c.l.b16 %v272
      %v320 = vunpack.c.l.b16 %v273
      %v321 = vunpack.c.l.b16 %v274
      %v322 = vunpack.c.l.b16 %v275
      %v323 = vunpack.c.l.b16 %v276
      %v324 = vunpack.c.l.b16 %v277
      %v325 = vunpack.c.l.b16 %v278
      %v326 = vunpack.c.l.b16 %v279
      %v327 = vunpack.c.l.b16 %v280
      %v328 = vunpack.c.l.b16 %v281
      %v329 = vunpack.c.l.b16 %v282
      %v330 = vunpack.c.l.b16 %v283
      %v331 = vunpack.c.l.b16 %v284
      %v332 = vunpack.c.l.b16 %v285
      %v333 = vpack.c.b16 %v318, %v317
      %v334 = vpack.c.b16 %v320, %v319
      %v335 = vpack.c.b16 %v322, %v321
      %v336 = vpack.c.b16 %v324, %v323
      %v337 = vpack.c.b16 %v326, %v325
      %v338 = vpack.c.b16 %v328, %v327
      %v339 = vpack.c.b16 %v330, %v329
      %v340 = vpack.c.b16 %v332, %v331
      %v349 = vunpack.c.l.b16 %v286
      %v350 = vunpack.c.l.b16 %v287
      %v351 = vunpack.c.l.b16 %v288
      %v352 = vunpack.c.l.b16 %v289
      %v353 = vunpack.c.l.b16 %v290
      %v354 = vunpack.c.l.b16 %v291
      %v355 = vunpack.c.l.b16 %v292
      %v356 = vunpack.c.l.b16 %v293
      %v357 = vpack.c.b16 %v350, %v349
      %v358 = vpack.c.b16 %v352, %v351
      %v359 = vpack.c.b16 %v354, %v353
      %v360 = vpack.c.b16 %v356, %v355
      %vm365 = vcmask 523264
      %v367 = vsel %vm365, %v333, 0
      %v370 = vsel %vm365, %v334, 0
      %v373 = vsel %vm365, %v335, 0
      %v376 = vsel %vm365, %v336, 0
      %v379 = vsel %vm365, %v337, 0
      %v382 = vsel %vm365, %v338, 0
      %v385 = vsel %vm365, %v339, 0
      %v388 = vsel %vm365, %v340, 0
      %390 = vmatprep.subr.bf16.mxu0 0
      %391 = vmatpush1.bf16.msra.mxu0 %v357
      %392 = vmatprep.subr.bf16.mxu0 0
      %393 = vmatpush1.bf16.msra.mxu0 %v358
      %394 = vmatprep.subr.bf16.mxu0 0
      %395 = vmatpush1.bf16.msra.mxu0 %v359
      %396 = vmatprep.subr.bf16.mxu0 0
      %397 = vmatpush1.bf16.msra.mxu0 %v360
      %398 = vmatprep.subr.bf16.mxu0 0
      %399 = vmatpush1.bf16.msra.mxu0 0
      %400 = vmatprep.subr.bf16.mxu0 0
      %401 = vmatpush1.bf16.msra.mxu0 0
      %402 = vmatprep.subr.bf16.mxu0 0
      %403 = vmatpush1.bf16.msra.mxu0 0
      %404 = vmatprep.subr.bf16.mxu0 0
      %405 = vmatpush1.bf16.msra.mxu0 0
      %406 = vmatprep.subr.bf16.mxu0 0
      %407 = vmatpush1.bf16.msra.mxu0 0
      %408 = vmatprep.subr.bf16.mxu0 0
      %409 = vmatpush1.bf16.msra.mxu0 0
      %410 = vmatprep.subr.bf16.mxu0 0
      %411 = vmatpush1.bf16.msra.mxu0 0
      %412 = vmatprep.subr.bf16.mxu0 0
      %413 = vmatpush1.bf16.msra.mxu0 0
      %414 = vmatprep.subr.bf16.mxu0 0
      %415 = vmatpush1.bf16.msra.mxu0 0
      %416 = vmatprep.subr.bf16.mxu0 0
      %417 = vmatpush1.bf16.msra.mxu0 0
      %418 = vmatprep.subr.bf16.mxu0 0
      %419 = vmatpush1.bf16.msra.mxu0 0
      %420 = vmatprep.subr.bf16.mxu0 0
      %421 = vmatpush1.bf16.msra.mxu0 0
      %422 = vmatprep.mubr.bf16.mxu0 0
      %423 = vmatmul.mubr.bf16.gmra.mrb[0].mxu0 %v367
      %v424 = vpop.f32.mrb[0].mxu0
      %v425 = vadd.f32 %v299, %v424
      %v426 = vpop.f32.mrb[0].mxu0
      %v427 = vpop.f32.mrb[0].mxu0
      %v428 = vadd.f32 %v299, %v427
      %v429 = vpop.f32.mrb[0].mxu0
      %430 = vmatprep.mubr.bf16.mxu0 0
      %431 = vmatmul.mubr.bf16.gmra.mrb[0].mxu0 %v370
      %v432 = vpop.f32.mrb[0].mxu0
      %v433 = vadd.f32 %v299, %v432
      %v434 = vpop.f32.mrb[0].mxu0
      %v435 = vpop.f32.mrb[0].mxu0
      %v436 = vadd.f32 %v299, %v435
      %v437 = vpop.f32.mrb[0].mxu0
      %438 = vmatprep.mubr.bf16.mxu0 0
      %439 = vmatmul.mubr.bf16.gmra.mrb[0].mxu0 %v373
      %v440 = vpop.f32.mrb[0].mxu0
      %v441 = vadd.f32 %v299, %v440
      %v442 = vpop.f32.mrb[0].mxu0
      %v443 = vpop.f32.mrb[0].mxu0
      %v444 = vadd.f32 %v299, %v443
      %v445 = vpop.f32.mrb[0].mxu0
      %446 = vmatprep.mubr.bf16.mxu0 0
      %447 = vmatmul.mubr.bf16.gmra.mrb[0].mxu0 %v376
      %v448 = vpop.f32.mrb[0].mxu0
      %v449 = vadd.f32 %v299, %v448
      %v450 = vpop.f32.mrb[0].mxu0
      %v451 = vpop.f32.mrb[0].mxu0
      %v452 = vadd.f32 %v299, %v451
      %v453 = vpop.f32.mrb[0].mxu0
      %454 = vmatprep.mubr.bf16.mxu0 0
      %455 = vmatmul.mubr.bf16.gmra.mrb[0].mxu0 %v379
      %v456 = vpop.f32.mrb[0].mxu0
      %v457 = vadd.f32 %v299, %v456
      %v458 = vpop.f32.mrb[0].mxu0
      %v459 = vpop.f32.mrb[0].mxu0
      %v460 = vadd.f32 %v299, %v459
      %v461 = vpop.f32.mrb[0].mxu0
      %462 = vmatprep.mubr.bf16.mxu0 0
      %463 = vmatmul.mubr.bf16.gmra.mrb[0].mxu0 %v382
      %v464 = vpop.f32.mrb[0].mxu0
      %v465 = vadd.f32 %v299, %v464
      %v466 = vpop.f32.mrb[0].mxu0
      %v467 = vpop.f32.mrb[0].mxu0
      %v468 = vadd.f32 %v299, %v467
      %v469 = vpop.f32.mrb[0].mxu0
      %470 = vmatprep.mubr.bf16.mxu0 0
      %471 = vmatmul.mubr.bf16.gmra.mrb[0].mxu0 %v385
      %v472 = vpop.f32.mrb[0].mxu0
      %v473 = vadd.f32 %v299, %v472
      %v474 = vpop.f32.mrb[0].mxu0
      %v475 = vpop.f32.mrb[0].mxu0
      %v476 = vadd.f32 %v299, %v475
      %v477 = vpop.f32.mrb[0].mxu0
      %478 = vmatprep.mubr.bf16.mxu0 0
      %479 = vmatmul.mubr.bf16.gmra.mrb[0].mxu0 %v388
      %v480 = vpop.f32.mrb[0].mxu0
      %v481 = vadd.f32 %v299, %v480
      %v482 = vpop.f32.mrb[0].mxu0
      %v483 = vpop.f32.mrb[0].mxu0
      %v484 = vadd.f32 %v299, %v483
      %v485 = vpop.f32.mrb[0].mxu0
      %486 = vdwg.mxu0
      %487 = vst [vmem:[%s261] sm:$0xff] %v425
      %488 = vst [vmem:[%s261 + $0x8] sm:$0xff] %v428
      %489 = vst [vmem:[%s261 + $0x10] sm:$0xff] %v433
      %490 = vst [vmem:[%s261 + $0x18] sm:$0xff] %v436
      %491 = vst [vmem:[%s261 + $0x20] sm:$0xff] %v441
      %492 = vst [vmem:[%s261 + $0x28] sm:$0xff] %v444
      %493 = vst [vmem:[%s261 + $0x30] sm:$0xff] %v449
      %494 = vst [vmem:[%s261 + $0x38] sm:$0xff] %v452
      %495 = vst [vmem:[%s261 + $0x40] sm:$0xff] %v457
      %496 = vst [vmem:[%s261 + $0x48] sm:$0xff] %v460
      %497 = vst [vmem:[%s261 + $0x50] sm:$0xff] %v465
      %498 = vst [vmem:[%s261 + $0x58] sm:$0xff] %v468
      %499 = vst [vmem:[%s261 + $0x60] sm:$0xff] %v473
      %500 = vst [vmem:[%s261 + $0x68] sm:$0xff] %v476
      %501 = vst [vmem:[%s261 + $0x70] sm:$0xff] %v481
      %502 = vst [vmem:[%s261 + $0x78] sm:$0xff] %v484
      %v503 = vld [vmem:[%s3] sm:$0xf]
      %v504 = vld [vmem:[%s3 + $0x4] sm:$0xf]
      %v505 = vld [vmem:[%s3 + $0x8] sm:$0xf]
      %v506 = vld [vmem:[%s3 + $0xc] sm:$0xf]
      %v507 = vld [vmem:[%s3 + $0x10] sm:$0xf]
      %v508 = vld [vmem:[%s3 + $0x14] sm:$0xf]
      %v509 = vld [vmem:[%s3 + $0x18] sm:$0xf]
      %v510 = vld [vmem:[%s3 + $0x1c] sm:$0xf]
      %v511 = vld [vmem:[%s4] sm:$0x1]
      %v513 = vlaneseq
      %v514 = vshrl.u32 %v513, 7
      %v515 = vsub.s32 0, %v514
      %v516 = vrot.slane %v511, %v515
      %v526 = vunpack.c.l.b16 %v503
      %v527 = vunpack.c.l.b16 %v504
      %v528 = vunpack.c.l.b16 %v505
      %v529 = vunpack.c.l.b16 %v506
      %v530 = vunpack.c.l.b16 %v507
      %v531 = vunpack.c.l.b16 %v508
      %v532 = vunpack.c.l.b16 %v509
      %v533 = vunpack.c.l.b16 %v510
      %v534 = vpack.c.b16 %v527, %v526
      %v535 = vpack.c.b16 %v529, %v528
      %v536 = vpack.c.b16 %v531, %v530
      %v537 = vpack.c.b16 %v533, %v532
      %542 = vmatprep.subr.bf16.mxu0 0
      %543 = vmatpush1.bf16.msra.mxu0 %v534
      %544 = vmatprep.subr.bf16.mxu0 0
      %545 = vmatpush1.bf16.msra.mxu0 %v535
      %546 = vmatprep.subr.bf16.mxu0 0
      %547 = vmatpush1.bf16.msra.mxu0 %v536
      %548 = vmatprep.subr.bf16.mxu0 0
      %549 = vmatpush1.bf16.msra.mxu0 %v537
      %550 = vmatprep.subr.bf16.mxu0 0
      %551 = vmatpush1.bf16.msra.mxu0 0
      %552 = vmatprep.subr.bf16.mxu0 0
      %553 = vmatpush1.bf16.msra.mxu0 0
      %554 = vmatprep.subr.bf16.mxu0 0
      %555 = vmatpush1.bf16.msra.mxu0 0
      %556 = vmatprep.subr.bf16.mxu0 0
      %557 = vmatpush1.bf16.msra.mxu0 0
      %558 = vmatprep.subr.bf16.mxu0 0
      %559 = vmatpush1.bf16.msra.mxu0 0
      %560 = vmatprep.subr.bf16.mxu0 0
      %561 = vmatpush1.bf16.msra.mxu0 0
      %562 = vmatprep.subr.bf16.mxu0 0
      %563 = vmatpush1.bf16.msra.mxu0 0
      %564 = vmatprep.subr.bf16.mxu0 0
      %565 = vmatpush1.bf16.msra.mxu0 0
      %566 = vmatprep.subr.bf16.mxu0 0
      %567 = vmatpush1.bf16.msra.mxu0 0
      %568 = vmatprep.subr.bf16.mxu0 0
      %569 = vmatpush1.bf16.msra.mxu0 0
      %570 = vmatprep.subr.bf16.mxu0 0
      %571 = vmatpush1.bf16.msra.mxu0 0
      %572 = vmatprep.subr.bf16.mxu0 0
      %573 = vmatpush1.bf16.msra.mxu0 0
      %574 = vmatprep.mubr.bf16.mxu0 0
      %575 = vmatmul.mubr.bf16.gmra.mrb[0].mxu0 %v367
      %v576 = vpop.f32.mrb[0].mxu0
      %v577 = vadd.f32 %v516, %v576
      %v578 = vpop.f32.mrb[0].mxu0
      %v579 = vpop.f32.mrb[0].mxu0
      %v580 = vadd.f32 %v516, %v579
      %v581 = vpop.f32.mrb[0].mxu0
      %582 = vmatprep.mubr.bf16.mxu0 0
      %583 = vmatmul.mubr.bf16.gmra.mrb[0].mxu0 %v370
      %v584 = vpop.f32.mrb[0].mxu0
      %v585 = vadd.f32 %v516, %v584
      %v586 = vpop.f32.mrb[0].mxu0
      %v587 = vpop.f32.mrb[0].mxu0
      %v588 = vadd.f32 %v516, %v587
      %v589 = vpop.f32.mrb[0].mxu0
      %590 = vmatprep.mubr.bf16.mxu0 0
      %591 = vmatmul.mubr.bf16.gmra.mrb[0].mxu0 %v373
      %v592 = vpop.f32.mrb[0].mxu0
      %v593 = vadd.f32 %v516, %v592
      %v594 = vpop.f32.mrb[0].mxu0
      %v595 = vpop.f32.mrb[0].mxu0
      %v596 = vadd.f32 %v516, %v595
      %v597 = vpop.f32.mrb[0].mxu0
      %598 = vmatprep.mubr.bf16.mxu0 0
      %599 = vmatmul.mubr.bf16.gmra.mrb[0].mxu0 %v376
      %v600 = vpop.f32.mrb[0].mxu0
      %v601 = vadd.f32 %v516, %v600
      %v602 = vpop.f32.mrb[0].mxu0
      %v603 = vpop.f32.mrb[0].mxu0
      %v604 = vadd.f32 %v516, %v603
      %v605 = vpop.f32.mrb[0].mxu0
      %606 = vmatprep.mubr.bf16.mxu0 0
      %607 = vmatmul.mubr.bf16.gmra.mrb[0].mxu0 %v379
      %v608 = vpop.f32.mrb[0].mxu0
      %v609 = vadd.f32 %v516, %v608
      %v610 = vpop.f32.mrb[0].mxu0
      %v611 = vpop.f32.mrb[0].mxu0
      %v612 = vadd.f32 %v516, %v611
      %v613 = vpop.f32.mrb[0].mxu0
      %614 = vmatprep.mubr.bf16.mxu0 0
      %615 = vmatmul.mubr.bf16.gmra.mrb[0].mxu0 %v382
      %v616 = vpop.f32.mrb[0].mxu0
      %v617 = vadd.f32 %v516, %v616
      %v618 = vpop.f32.mrb[0].mxu0
      %v619 = vpop.f32.mrb[0].mxu0
      %v620 = vadd.f32 %v516, %v619
      %v621 = vpop.f32.mrb[0].mxu0
      %622 = vmatprep.mubr.bf16.mxu0 0
      %623 = vmatmul.mubr.bf16.gmra.mrb[0].mxu0 %v385
      %v624 = vpop.f32.mrb[0].mxu0
      %v625 = vadd.f32 %v516, %v624
      %v626 = vpop.f32.mrb[0].mxu0
      %v627 = vpop.f32.mrb[0].mxu0
      %v628 = vadd.f32 %v516, %v627
      %v629 = vpop.f32.mrb[0].mxu0
      %630 = vmatprep.mubr.bf16.mxu0 0
      %631 = vmatmul.mubr.bf16.gmra.mrb[0].mxu0 %v388
      %v632 = vpop.f32.mrb[0].mxu0
      %v633 = vadd.f32 %v516, %v632
      %v634 = vpop.f32.mrb[0].mxu0
      %v635 = vpop.f32.mrb[0].mxu0
      %v636 = vadd.f32 %v516, %v635
      %v637 = vpop.f32.mrb[0].mxu0
      %638 = vdwg.mxu0
      %v639 = vxor.u32 %v577, 2147483648
      %v640 = vxor.u32 %v580, 2147483648
      %v641 = vxor.u32 %v585, 2147483648
      %v642 = vxor.u32 %v588, 2147483648
      %v643 = vxor.u32 %v593, 2147483648
      %v644 = vxor.u32 %v596, 2147483648
      %v645 = vxor.u32 %v601, 2147483648
      %v646 = vxor.u32 %v604, 2147483648
      %v647 = vxor.u32 %v609, 2147483648
      %v648 = vxor.u32 %v612, 2147483648
      %v649 = vxor.u32 %v617, 2147483648
      %v650 = vxor.u32 %v620, 2147483648
      %v651 = vxor.u32 %v625, 2147483648
      %v652 = vxor.u32 %v628, 2147483648
      %v653 = vxor.u32 %v633, 2147483648
      %v654 = vxor.u32 %v636, 2147483648
      %v655 = vmul.f32 %v639, 1.442695
      %v656 = vpow.pop %v655
      %v657 = vmul.f32 %v640, 1.442695
      %v658 = vpow.pop %v657
      %v659 = vmul.f32 %v641, 1.442695
      %v660 = vpow.pop %v659
      %v661 = vmul.f32 %v642, 1.442695
      %v662 = vpow.pop %v661
      %v663 = vmul.f32 %v643, 1.442695
      %v664 = vpow.pop %v663
      %v665 = vmul.f32 %v644, 1.442695
      %v666 = vpow.pop %v665
      %v667 = vmul.f32 %v645, 1.442695
      %v668 = vpow.pop %v667
      %v669 = vmul.f32 %v646, 1.442695
      %v670 = vpow.pop %v669
      %v671 = vmul.f32 %v647, 1.442695
      %v672 = vpow.pop %v671
      %v673 = vmul.f32 %v648, 1.442695
      %v674 = vpow.pop %v673
      %v675 = vmul.f32 %v649, 1.442695
      %v676 = vpow.pop %v675
      %v677 = vmul.f32 %v650, 1.442695
      %v678 = vpow.pop %v677
      %v679 = vmul.f32 %v651, 1.442695
      %v680 = vpow.pop %v679
      %v681 = vmul.f32 %v652, 1.442695
      %v682 = vpow.pop %v681
      %v683 = vmul.f32 %v653, 1.442695
      %v684 = vpow.pop %v683
      %v685 = vmul.f32 %v654, 1.442695
      %v686 = vpow.pop %v685
      %v687 = vadd.f32 %v656, 1.0
      %v688 = vadd.f32 %v658, 1.0
      %v689 = vadd.f32 %v660, 1.0
      %v690 = vadd.f32 %v662, 1.0
      %v691 = vadd.f32 %v664, 1.0
      %v692 = vadd.f32 %v666, 1.0
      %v693 = vadd.f32 %v668, 1.0
      %v694 = vadd.f32 %v670, 1.0
      %v695 = vadd.f32 %v672, 1.0
      %v696 = vadd.f32 %v674, 1.0
      %v697 = vadd.f32 %v676, 1.0
      %v698 = vadd.f32 %v678, 1.0
      %v699 = vadd.f32 %v680, 1.0
      %v700 = vadd.f32 %v682, 1.0
      %v701 = vadd.f32 %v684, 1.0
      %v702 = vadd.f32 %v686, 1.0
      %v703 = vrcp.pop %v687
      %v704 = vmul.f32 1.0, %v703
      %v705 = vrcp.pop %v688
      %v706 = vmul.f32 1.0, %v705
      %v707 = vrcp.pop %v689
      %v708 = vmul.f32 1.0, %v707
      %v709 = vrcp.pop %v690
      %v710 = vmul.f32 1.0, %v709
      %v711 = vrcp.pop %v691
      %v712 = vmul.f32 1.0, %v711
      %v713 = vrcp.pop %v692
      %v714 = vmul.f32 1.0, %v713
      %v715 = vrcp.pop %v693
      %v716 = vmul.f32 1.0, %v715
      %v717 = vrcp.pop %v694
      %v718 = vmul.f32 1.0, %v717
      %v719 = vrcp.pop %v695
      %v720 = vmul.f32 1.0, %v719
      %v721 = vrcp.pop %v696
      %v722 = vmul.f32 1.0, %v721
      %v723 = vrcp.pop %v697
      %v724 = vmul.f32 1.0, %v723
      %v725 = vrcp.pop %v698
      %v726 = vmul.f32 1.0, %v725
      %v727 = vrcp.pop %v699
      %v728 = vmul.f32 1.0, %v727
      %v729 = vrcp.pop %v700
      %v730 = vmul.f32 1.0, %v729
      %v731 = vrcp.pop %v701
      %v732 = vmul.f32 1.0, %v731
      %v733 = vrcp.pop %v702
      %v734 = vmul.f32 1.0, %v733
      %v735 = vmul.f32 %v704, 0.98
      %v736 = vmul.f32 %v706, 0.98
      %v737 = vmul.f32 %v708, 0.98
      %v738 = vmul.f32 %v710, 0.98
      %v739 = vmul.f32 %v712, 0.98
      %v740 = vmul.f32 %v714, 0.98
      %v741 = vmul.f32 %v716, 0.98
      %v742 = vmul.f32 %v718, 0.98
      %v743 = vmul.f32 %v720, 0.98
      %v744 = vmul.f32 %v722, 0.98
      %v745 = vmul.f32 %v724, 0.98
      %v746 = vmul.f32 %v726, 0.98
      %v747 = vmul.f32 %v728, 0.98
      %v748 = vmul.f32 %v730, 0.98
      %v749 = vmul.f32 %v732, 0.98
      %v750 = vmul.f32 %v734, 0.98
      %v751 = vadd.f32 %v735, 0.1
      %v752 = vadd.f32 %v736, 0.1
      %v753 = vadd.f32 %v737, 0.1
      %v754 = vadd.f32 %v738, 0.1
      %v755 = vadd.f32 %v739, 0.1
      %v756 = vadd.f32 %v740, 0.1
      %v757 = vadd.f32 %v741, 0.1
      %v758 = vadd.f32 %v742, 0.1
      %v759 = vadd.f32 %v743, 0.1
      %v760 = vadd.f32 %v744, 0.1
      %v761 = vadd.f32 %v745, 0.1
      %v762 = vadd.f32 %v746, 0.1
      %v763 = vadd.f32 %v747, 0.1
      %v764 = vadd.f32 %v748, 0.1
      %v765 = vadd.f32 %v749, 0.1
      %v766 = vadd.f32 %v750, 0.1
      %767 = vst [vmem:[%s267] sm:$0xff] %v751
      %768 = vst [vmem:[%s267 + $0x8] sm:$0xff] %v752
      %769 = vst [vmem:[%s267 + $0x10] sm:$0xff] %v753
      %770 = vst [vmem:[%s267 + $0x18] sm:$0xff] %v754
      %771 = vst [vmem:[%s267 + $0x20] sm:$0xff] %v755
      %772 = vst [vmem:[%s267 + $0x28] sm:$0xff] %v756
      %773 = vst [vmem:[%s267 + $0x30] sm:$0xff] %v757
      %774 = vst [vmem:[%s267 + $0x38] sm:$0xff] %v758
      %775 = vst [vmem:[%s267 + $0x40] sm:$0xff] %v759
      %776 = vst [vmem:[%s267 + $0x48] sm:$0xff] %v760
      %777 = vst [vmem:[%s267 + $0x50] sm:$0xff] %v761
      %778 = vst [vmem:[%s267 + $0x58] sm:$0xff] %v762
      %779 = vst [vmem:[%s267 + $0x60] sm:$0xff] %v763
      %780 = vst [vmem:[%s267 + $0x68] sm:$0xff] %v764
      %781 = vst [vmem:[%s267 + $0x70] sm:$0xff] %v765
      %782 = vst [vmem:[%s267 + $0x78] sm:$0xff] %v766
      %s783 = smul.u32 16, %s18
      %p784 = scmp.lt.s32.totalorder %s783, 31
      %s785 = scalar_select %p784, %s783, 31
      %s786 = smul.addr %s785, 8
      %s787 = scalar_lea.vmem %s5, %s786
      %s788 = smul.u32 16, %s18
      %p789 = scmp.lt.s32.totalorder %s788, 31
      %s790 = scalar_select %p789, %s788, 31
      %s791 = smul.addr %s790, 8
      %s792 = scalar_lea.vmem %s6, %s791
      // Predicated region
      $region41: #{model_forward.13} parent=39 // pred_check
        %p793 = pneg %p146
      $region42: #{model_forward.13} parent=39 // pred_check_branch
        %795 = sbr.rel (%p793) target = $region44
      $region43: #{model_forward.13} parent=39 // pred_region
        %s796 = smul.u32 16, %s18
      $region44: #{model_forward.13} parent=39 // pred_fallthru
        _
      // Predicated region
      $region45: #{model_forward.13} parent=39 // pred_check
        %p797 = pneg %p172
      $region46: #{model_forward.13} parent=39 // pred_check_branch
        %799 = sbr.rel (%p797) target = $region48
      $region47: #{model_forward.13} parent=39 // pred_region
        %s800 = smul.u32 16, %s18
      $region48: #{model_forward.13} parent=39 // pred_fallthru
        _
    $region40: #{model_forward.13} parent=5 // pred_fallthru
      _
    %p801 = scmp.le.s32.totalorder 2, %s13
    // Predicated region
    $region49: #{model_forward.13} parent=5 // pred_check
      %p802 = pneg %p801
    $region50: #{model_forward.13} parent=5 // pred_check_branch
      %804 = sbr.rel (%p802) target = $region52
    $region51: #{model_forward.13} parent=5 // pred_region
      %s805 = ssub.s32 %s13, 2
      // Predicated region
      $region53: #{model_forward.13} parent=51 // pred_check
        %p806 = pneg %p152
      $region54: #{model_forward.13} parent=51 // pred_check_branch
        %808 = sbr.rel (%p806) target = $region56
      $region55: #{model_forward.13} parent=51 // pred_region
        %s809 = smul.u32 16, %s19
        %p810 = scmp.lt.s32.totalorder %s809, 31
        %s811 = scalar_select %p810, %s809, 31
        %s812 = smul.addr %s811, 8
        %s813 = scalar_lea.vmem %s5, %s812
      $region56: #{model_forward.13} parent=51 // pred_fallthru
        _
      // Predicated region
      $region57: #{model_forward.13} parent=51 // pred_check
        %p814 = pneg %p178
      $region58: #{model_forward.13} parent=51 // pred_check_branch
        %816 = sbr.rel (%p814) target = $region60
      $region59: #{model_forward.13} parent=51 // pred_region
        %s817 = smul.u32 16, %s19
        %p818 = scmp.lt.s32.totalorder %s817, 31
        %s819 = scalar_select %p818, %s817, 31
        %s820 = smul.addr %s819, 8
        %s821 = scalar_lea.vmem %s6, %s820
      $region60: #{model_forward.13} parent=51 // pred_fallthru
        _
    $region52: #{model_forward.13} parent=5 // pred_fallthru
      _
  $region6: #{model_forward.13} parent=0 // loop_footer
    %s17 = sadd.s32 1, %s13
  $region7: #{model_forward.13} parent=0 // loop_footer_branch
    %12 = sbr.rel target = $region3
  $region8: #{model_forward.13} parent=0 // loop_exit
    _

// kernel: model_forward.14
$region0: #{model_forward.14}
  #allocation0 [shape = 'u32[]', space=smem, size = 0x4, offset = 0x4, fixed_abs, tag = 'smem constant byte address 0x4 - core index']
  #allocation1 [shape = 'u32[144,128]{1,0:T(1,128)}', space=vmem, size = 0x12000, scoped, tag = 'internal scratch']
  #allocation2 [shape = 'f32[8,64]{1,0:T(8,128)}', space=vmem, size = 0x1000, scoped, tag = 'scratch operand']
  %s0 = inlined_call_operand.vmem [shape: f32[8,8,64], index: 0, kind: input, shape index: {}]
  %s1 = inlined_call_operand.vmem [shape: f32[32,8,64], index: 1, kind: input, shape index: {}]
  %s2 = inlined_call_operand.vmem [shape: f32[32,8,64], index: 2, kind: input, shape index: {}]
  %s3 = inlined_call_operand.vmem [shape: f32[32,8,1], index: 3, kind: input, shape index: {}]
  %s4 = inlined_call_operand.vmem [shape: bf16[4,64,64], index: 4, kind: input, shape index: {}]
  %s5 = inlined_call_operand.vmem [shape: f32[4,1,64], index: 5, kind: input, shape index: {}]
  %s6 = inlined_call_operand.vmem [shape: f32[3,1,64], index: 6, kind: input, shape index: {}]
  %s7 = inlined_call_operand.vmem [shape: f32[3,1,64], index: 7, kind: input, shape index: {}]
  %s8 = inlined_call_operand.vmem [shape: f32[32,8,64], index: 8, kind: output, shape index: {0}]
  %s9 = inlined_call_operand.vmem [shape: f32[32,8,1], index: 9, kind: output, shape index: {1}]
  %10 = xla_tuple %s8, %s9
  %s11 = sld [smem:[#allocation0]]
  $region81: #{model_forward.14} parent=0
    _
  %s13 = ssub.s32 1, %s11
  %s14 = scalar_select 0, %s13, %s11
  loop: start=0, step=1, limit=34
  $region2: #{model_forward.14} parent=0 // loop_pre_header
    _
  $region3: #{model_forward.14} parent=0 // loop_header
    %s16 = sphi 0, %s20
    %p17 = scmp.ge.s32.totalorder %s16, 34
    %s23 = sphi 0, %s35
    %s24 = sphi 0, %s31
    %s25 = sphi 0, %s23
    %s26 = sphi 0, %s24
    %s27 = sphi 0, %s25
    %s28 = sphi 0, %s26
    %s38 = sphi 0, %s40
    %s41 = sphi 0, %s38
    %s42 = sphi 0, %s41
    %s58 = sphi 0, %s42
    %s66 = sphi 0, %s68
    %s69 = sphi 0, %s66
    %s70 = sphi 0, %s69
    %s86 = sphi 0, %s70
    %s94 = sphi 0, %s96
    %s97 = sphi 0, %s94
    %s98 = sphi 0, %s97
    %s114 = sphi 0, %s98
    %s122 = sphi 0, %s124
    %s125 = sphi 0, %s122
    %s126 = sphi 0, %s125
    %s142 = sphi 0, %s126
    %s146 = sphi 0, %s146
    %s148 = sphi 0, %s146
    %s149 = sphi 0, %s148
    %s163 = sphi 0, %s149
    %s167 = sphi 0, %s167
    %s169 = sphi 0, %s167
    %s170 = sphi 0, %s169
    %s184 = sphi 0, %s170
    %s188 = sphi 0, %s188
    %s190 = sphi 0, %s188
    %s191 = sphi 0, %s190
    %s205 = sphi 0, %s191
    %s209 = sphi 0, %s209
    %s211 = sphi 0, %s209
    %s212 = sphi 0, %s211
    %s226 = sphi 0, %s212
    %s234 = sphi 0, %s236
    %s237 = sphi 0, %s234
    %s238 = sphi 0, %s237
    %s254 = sphi 0, %s238
    %s262 = sphi 0, %s264
    %s265 = sphi 0, %s262
    %s266 = sphi 0, %s265
    %s282 = sphi 0, %s266
  $region4: #{model_forward.14} parent=0 // loop_header_branch
    %19 = sbr.rel (%p17) target = $region8
  $region5: #{model_forward.14} parent=0 // loop_body
    %s21 = ssub.s32 %s16, 1
    %s22 = ssub.s32 %s16, 2
    %s29 = sadd.s32 1, %s24
    %p30 = scmp.ge.s32.totalorder %s29, 32
    %s31 = scalar_select %p30, 0, %s29
    %s32 = sadd.s32 1, %s23
    %s33 = scalar_select %p30, %s32, %s23
    %p34 = scmp.ge.s32.totalorder %s33, 1
    %s35 = scalar_select %p34, 0, %s33
    %s36 = ssub.s32 %s23, %s35
    %p37 = scmp.eq.s32.totalorder %s36, 0
    %s39 = sadd.s32 %s38, 1
    %s40 = scalar_select %p37, %s38, %s39
    %p43 = pneg %p37
    %p44 = scmp.eq.s32.totalorder %s16, 31
    %p45 = por %p43, %p44
    %p46 = scmp.ne.s32.totalorder %s38, %s41
    %p47 = scmp.eq.s32.totalorder %s16, 0
    %p48 = por %p46, %p47
    %p49 = scmp.ne.s32.totalorder %s38, %s41
    %p50 = scmp.eq.s32.totalorder %s21, 31
    %p51 = por %p49, %p50
    %p52 = scmp.ne.s32.totalorder %s41, %s42
    %p53 = scmp.eq.s32.totalorder %s21, 0
    %p54 = por %p52, %p53
    %p55 = scmp.ne.s32.totalorder %s41, %s42
    %p56 = scmp.eq.s32.totalorder %s22, 31
    %p57 = por %p55, %p56
    %p59 = scmp.ne.s32.totalorder %s42, %s58
    %p60 = scmp.eq.s32.totalorder %s22, 0
    %p61 = por %p59, %p60
    %s62 = ssub.s32 %s24, %s31
    %s63 = ssub.s32 %s23, %s35
    %s64 = sor.u32 %s62, %s63
    %p65 = scmp.eq.s32.totalorder %s64, 0
    %s67 = sadd.s32 %s66, 1
    %s68 = scalar_select %p65, %s66, %s67
    %p71 = pneg %p65
    %p72 = scmp.eq.s32.totalorder %s16, 31
    %p73 = por %p71, %p72
    %p74 = scmp.ne.s32.totalorder %s66, %s69
    %p75 = scmp.eq.s32.totalorder %s16, 0
    %p76 = por %p74, %p75
    %p77 = scmp.ne.s32.totalorder %s66, %s69
    %p78 = scmp.eq.s32.totalorder %s21, 31
    %p79 = por %p77, %p78
    %p80 = scmp.ne.s32.totalorder %s69, %s70
    %p81 = scmp.eq.s32.totalorder %s21, 0
    %p82 = por %p80, %p81
    %p83 = scmp.ne.s32.totalorder %s69, %s70
    %p84 = scmp.eq.s32.totalorder %s22, 31
    %p85 = por %p83, %p84
    %p87 = scmp.ne.s32.totalorder %s70, %s86
    %p88 = scmp.eq.s32.totalorder %s22, 0
    %p89 = por %p87, %p88
    %s90 = ssub.s32 %s24, %s31
    %s91 = ssub.s32 %s23, %s35
    %s92 = sor.u32 %s90, %s91
    %p93 = scmp.eq.s32.totalorder %s92, 0
    %s95 = sadd.s32 %s94, 1
    %s96 = scalar_select %p93, %s94, %s95
    %p99 = pneg %p93
    %p100 = scmp.eq.s32.totalorder %s16, 31
    %p101 = por %p99, %p100
    %p102 = scmp.ne.s32.totalorder %s94, %s97
    %p103 = scmp.eq.s32.totalorder %s16, 0
    %p104 = por %p102, %p103
    %p105 = scmp.ne.s32.totalorder %s94, %s97
    %p106 = scmp.eq.s32.totalorder %s21, 31
    %p107 = por %p105, %p106
    %p108 = scmp.ne.s32.totalorder %s97, %s98
    %p109 = scmp.eq.s32.totalorder %s21, 0
    %p110 = por %p108, %p109
    %p111 = scmp.ne.s32.totalorder %s97, %s98
    %p112 = scmp.eq.s32.totalorder %s22, 31
    %p113 = por %p111, %p112
    %p115 = scmp.ne.s32.totalorder %s98, %s114
    %p116 = scmp.eq.s32.totalorder %s22, 0
    %p117 = por %p115, %p116
    %s118 = ssub.s32 %s24, %s31
    %s119 = ssub.s32 %s23, %s35
    %s120 = sor.u32 %s118, %s119
    %p121 = scmp.eq.s32.totalorder %s120, 0
    %s123 = sadd.s32 %s122, 1
    %s124 = scalar_select %p121, %s122, %s123
    %p127 = pneg %p121
    %p128 = scmp.eq.s32.totalorder %s16, 31
    %p129 = por %p127, %p128
    %p130 = scmp.ne.s32.totalorder %s122, %s125
    %p131 = scmp.eq.s32.totalorder %s16, 0
    %p132 = por %p130, %p131
    %p133 = scmp.ne.s32.totalorder %s122, %s125
    %p134 = scmp.eq.s32.totalorder %s21, 31
    %p135 = por %p133, %p134
    %p136 = scmp.ne.s32.totalorder %s125, %s126
    %p137 = scmp.eq.s32.totalorder %s21, 0
    %p138 = por %p136, %p137
    %p139 = scmp.ne.s32.totalorder %s125, %s126
    %p140 = scmp.eq.s32.totalorder %s22, 31
    %p141 = por %p139, %p140
    %p143 = scmp.ne.s32.totalorder %s126, %s142
    %p144 = scmp.eq.s32.totalorder %s22, 0
    %p145 = por %p143, %p144
    %s147 = sadd.s32 %s146, 1
    %p150 = scmp.eq.s32.totalorder %s16, 31
    %p151 = scmp.ne.s32.totalorder %s146, %s148
    %p152 = scmp.eq.s32.totalorder %s16, 0
    %p153 = por %p151, %p152
    %p154 = scmp.ne.s32.totalorder %s146, %s148
    %p155 = scmp.eq.s32.totalorder %s21, 31
    %p156 = por %p154, %p155
    %p157 = scmp.ne.s32.totalorder %s148, %s149
    %p158 = scmp.eq.s32.totalorder %s21, 0
    %p159 = por %p157, %p158
    %p160 = scmp.ne.s32.totalorder %s148, %s149
    %p161 = scmp.eq.s32.totalorder %s22, 31
    %p162 = por %p160, %p161
    %p164 = scmp.ne.s32.totalorder %s149, %s163
    %p165 = scmp.eq.s32.totalorder %s22, 0
    %p166 = por %p164, %p165
    %s168 = sadd.s32 %s167, 1
    %p171 = scmp.eq.s32.totalorder %s16, 31
    %p172 = scmp.ne.s32.totalorder %s167, %s169
    %p173 = scmp.eq.s32.totalorder %s16, 0
    %p174 = por %p172, %p173
    %p175 = scmp.ne.s32.totalorder %s167, %s169
    %p176 = scmp.eq.s32.totalorder %s21, 31
    %p177 = por %p175, %p176
    %p178 = scmp.ne.s32.totalorder %s169, %s170
    %p179 = scmp.eq.s32.totalorder %s21, 0
    %p180 = por %p178, %p179
    %p181 = scmp.ne.s32.totalorder %s169, %s170
    %p182 = scmp.eq.s32.totalorder %s22, 31
    %p183 = por %p181, %p182
    %p185 = scmp.ne.s32.totalorder %s170, %s184
    %p186 = scmp.eq.s32.totalorder %s22, 0
    %p187 = por %p185, %p186
    %s189 = sadd.s32 %s188, 1
    %p192 = scmp.eq.s32.totalorder %s16, 31
    %p193 = scmp.ne.s32.totalorder %s188, %s190
    %p194 = scmp.eq.s32.totalorder %s16, 0
    %p195 = por %p193, %p194
    %p196 = scmp.ne.s32.totalorder %s188, %s190
    %p197 = scmp.eq.s32.totalorder %s21, 31
    %p198 = por %p196, %p197
    %p199 = scmp.ne.s32.totalorder %s190, %s191
    %p200 = scmp.eq.s32.totalorder %s21, 0
    %p201 = por %p199, %p200
    %p202 = scmp.ne.s32.totalorder %s190, %s191
    %p203 = scmp.eq.s32.totalorder %s22, 31
    %p204 = por %p202, %p203
    %p206 = scmp.ne.s32.totalorder %s191, %s205
    %p207 = scmp.eq.s32.totalorder %s22, 0
    %p208 = por %p206, %p207
    %s210 = sadd.s32 %s209, 1
    %p213 = scmp.eq.s32.totalorder %s16, 31
    %p214 = scmp.ne.s32.totalorder %s209, %s211
    %p215 = scmp.eq.s32.totalorder %s16, 0
    %p216 = por %p214, %p215
    %p217 = scmp.ne.s32.totalorder %s209, %s211
    %p218 = scmp.eq.s32.totalorder %s21, 31
    %p219 = por %p217, %p218
    %p220 = scmp.ne.s32.totalorder %s211, %s212
    %p221 = scmp.eq.s32.totalorder %s21, 0
    %p222 = por %p220, %p221
    %p223 = scmp.ne.s32.totalorder %s211, %s212
    %p224 = scmp.eq.s32.totalorder %s22, 31
    %p225 = por %p223, %p224
    %p227 = scmp.ne.s32.totalorder %s212, %s226
    %p228 = scmp.eq.s32.totalorder %s22, 0
    %p229 = por %p227, %p228
    %s230 = ssub.s32 %s24, %s31
    %s231 = ssub.s32 %s23, %s35
    %s232 = sor.u32 %s230, %s231
    %p233 = scmp.eq.s32.totalorder %s232, 0
    %s235 = sadd.s32 %s234, 1
    %s236 = scalar_select %p233, %s234, %s235
    %p239 = pneg %p233
    %p240 = scmp.eq.s32.totalorder %s16, 31
    %p241 = por %p239, %p240
    %p242 = scmp.ne.s32.totalorder %s234, %s237
    %p243 = scmp.eq.s32.totalorder %s16, 0
    %p244 = por %p242, %p243
    %p245 = scmp.ne.s32.totalorder %s234, %s237
    %p246 = scmp.eq.s32.totalorder %s21, 31
    %p247 = por %p245, %p246
    %p248 = scmp.ne.s32.totalorder %s237, %s238
    %p249 = scmp.eq.s32.totalorder %s21, 0
    %p250 = por %p248, %p249
    %p251 = scmp.ne.s32.totalorder %s237, %s238
    %p252 = scmp.eq.s32.totalorder %s22, 31
    %p253 = por %p251, %p252
    %p255 = scmp.ne.s32.totalorder %s238, %s254
    %p256 = scmp.eq.s32.totalorder %s22, 0
    %p257 = por %p255, %p256
    %s258 = ssub.s32 %s24, %s31
    %s259 = ssub.s32 %s23, %s35
    %s260 = sor.u32 %s258, %s259
    %p261 = scmp.eq.s32.totalorder %s260, 0
    %s263 = sadd.s32 %s262, 1
    %s264 = scalar_select %p261, %s262, %s263
    %p267 = pneg %p261
    %p268 = scmp.eq.s32.totalorder %s16, 31
    %p269 = por %p267, %p268
    %p270 = scmp.ne.s32.totalorder %s262, %s265
    %p271 = scmp.eq.s32.totalorder %s16, 0
    %p272 = por %p270, %p271
    %p273 = scmp.ne.s32.totalorder %s262, %s265
    %p274 = scmp.eq.s32.totalorder %s21, 31
    %p275 = por %p273, %p274
    %p276 = scmp.ne.s32.totalorder %s265, %s266
    %p277 = scmp.eq.s32.totalorder %s21, 0
    %p278 = por %p276, %p277
    %p279 = scmp.ne.s32.totalorder %s265, %s266
    %p280 = scmp.eq.s32.totalorder %s22, 31
    %p281 = por %p279, %p280
    %p283 = scmp.ne.s32.totalorder %s266, %s282
    %p284 = scmp.eq.s32.totalorder %s22, 0
    %p285 = por %p283, %p284
    %p286 = scmp.le.s32.totalorder 1, %s16
    %p287 = scmp.lt.s32.totalorder %s16, 33
    %p288 = pnand %p286, %p287
    %p289 = pneg %p288
    // Predicated region
    $region9: #{model_forward.14} parent=5 // pred_check
      _
    $region10: #{model_forward.14} parent=5 // pred_check_branch
      %291 = sbr.rel (%p288) target = $region12
    $region11: #{model_forward.14} parent=5 // pred_region
      %s292 = ssub.s32 %s16, 1
      // Predicated region
      $region13: #{model_forward.14} parent=11 // pred_check
        %p293 = pneg %p54
      $region14: #{model_forward.14} parent=11 // pred_check_branch
        %295 = sbr.rel (%p293) target = $region16
      $region15: #{model_forward.14} parent=11 // pred_region
        %p296 = scmp.lt.s32.totalorder %s25, 0
        %s297 = scalar_select %p296, %s25, 0
        %s298 = smul.addr %s297, 8
        %s299 = scalar_lea.vmem %s0, %s298
      $region16: #{model_forward.14} parent=11 // pred_fallthru
        _
      // Predicated region
      $region17: #{model_forward.14} parent=11 // pred_check
        %p300 = pneg %p159
      $region18: #{model_forward.14} parent=11 // pred_check_branch
        %302 = sbr.rel (%p300) target = $region20
      $region19: #{model_forward.14} parent=11 // pred_region
        _
      $region20: #{model_forward.14} parent=11 // pred_fallthru
        _
      // Predicated region
      $region21: #{model_forward.14} parent=11 // pred_check
        %p303 = pneg %p180
      $region22: #{model_forward.14} parent=11 // pred_check_branch
        %305 = sbr.rel (%p303) target = $region24
      $region23: #{model_forward.14} parent=11 // pred_region
        _
      $region24: #{model_forward.14} parent=11 // pred_fallthru
        _
      // Predicated region
      $region25: #{model_forward.14} parent=11 // pred_check
        %p306 = pneg %p201
      $region26: #{model_forward.14} parent=11 // pred_check_branch
        %308 = sbr.rel (%p306) target = $region28
      $region27: #{model_forward.14} parent=11 // pred_region
        _
      $region28: #{model_forward.14} parent=11 // pred_fallthru
        _
      // Predicated region
      $region29: #{model_forward.14} parent=11 // pred_check
        %p309 = pneg %p222
      $region30: #{model_forward.14} parent=11 // pred_check_branch
        %311 = sbr.rel (%p309) target = $region32
      $region31: #{model_forward.14} parent=11 // pred_region
        _
      $region32: #{model_forward.14} parent=11 // pred_fallthru
        _
    $region12: #{model_forward.14} parent=5 // pred_fallthru
      _
    %p312 = scmp.lt.s32.totalorder %s16, 32
    // Predicated region
    $region33: #{model_forward.14} parent=5 // pred_check
      %p313 = pneg %p312
    $region34: #{model_forward.14} parent=5 // pred_check_branch
      %315 = sbr.rel (%p313) target = $region36
    $region35: #{model_forward.14} parent=5 // pred_region
      // Predicated region
      $region37: #{model_forward.14} parent=35 // pred_check
        %p316 = pneg %p76
      $region38: #{model_forward.14} parent=35 // pred_check_branch
        %318 = sbr.rel (%p316) target = $region40
      $region39: #{model_forward.14} parent=35 // pred_region
        %p319 = scmp.lt.s32.totalorder %s24, 31
        %s320 = scalar_select %p319, %s24, 31
        %p321 = scmp.lt.s32.totalorder %s23, 0
        %s322 = scalar_select %p321, %s23, 0
        %s323 = sadd.s32 %s322, %s320
        %s324 = smul.addr %s323, 8
        %s325 = scalar_lea.vmem %s1, %s324
      $region40: #{model_forward.14} parent=35 // pred_fallthru
        _
      // Predicated region
      $region41: #{model_forward.14} parent=35 // pred_check
        %p326 = pneg %p104
      $region42: #{model_forward.14} parent=35 // pred_check_branch
        %328 = sbr.rel (%p326) target = $region44
      $region43: #{model_forward.14} parent=35 // pred_region
        %p329 = scmp.lt.s32.totalorder %s24, 31
        %s330 = scalar_select %p329, %s24, 31
        %p331 = scmp.lt.s32.totalorder %s23, 0
        %s332 = scalar_select %p331, %s23, 0
        %s333 = sadd.s32 %s332, %s330
        %s334 = smul.addr %s333, 8
        %s335 = scalar_lea.vmem %s2, %s334
      $region44: #{model_forward.14} parent=35 // pred_fallthru
        _
      // Predicated region
      $region45: #{model_forward.14} parent=35 // pred_check
        %p336 = pneg %p132
      $region46: #{model_forward.14} parent=35 // pred_check_branch
        %338 = sbr.rel (%p336) target = $region48
      $region47: #{model_forward.14} parent=35 // pred_region
        %p339 = scmp.lt.s32.totalorder %s24, 31
        %s340 = scalar_select %p339, %s24, 31
        %p341 = scmp.lt.s32.totalorder %s23, 0
        %s342 = scalar_select %p341, %s23, 0
        %s343 = sadd.s32 %s342, %s340
        %s344 = smul.addr %s343, 8
        %s345 = scalar_lea.vmem %s3, %s344
      $region48: #{model_forward.14} parent=35 // pred_fallthru
        _
    $region36: #{model_forward.14} parent=5 // pred_fallthru
      _
    %p346 = scmp.le.s32.totalorder 1, %s16
    %p347 = scmp.lt.s32.totalorder %s16, 33
    %p348 = pnand %p346, %p347
    %p349 = pneg %p348
    // Predicated region
    $region49: #{model_forward.14} parent=5 // pred_check
      _
    $region50: #{model_forward.14} parent=5 // pred_check_branch
      %351 = sbr.rel (%p348) target = $region52
    $region51: #{model_forward.14} parent=5 // pred_region
      %s352 = ssub.s32 %s16, 1
      %p353 = scmp.lt.s32.totalorder %s25, 0
      %s354 = scalar_select %p353, %s25, 0
      %s355 = smul.addr %s354, 8
      %s356 = scalar_lea.vmem %s0, %s355
      %p357 = pneg %p54
      %p358 = pneg %p51
      %p359 = scmp.lt.s32.totalorder %s26, 31
      %s360 = scalar_select %p359, %s26, 31
      %p361 = scmp.lt.s32.totalorder %s25, 0
      %s362 = scalar_select %p361, %s25, 0
      %s363 = sadd.s32 %s362, %s360
      %s364 = smul.addr %s363, 8
      %s365 = scalar_lea.vmem %s1, %s364
      %p366 = pneg %p82
      %p367 = pneg %p79
      %p368 = scmp.lt.s32.totalorder %s26, 31
      %s369 = scalar_select %p368, %s26, 31
      %p370 = scmp.lt.s32.totalorder %s25, 0
      %s371 = scalar_select %p370, %s25, 0
      %s372 = sadd.s32 %s371, %s369
      %s373 = smul.addr %s372, 8
      %s374 = scalar_lea.vmem %s2, %s373
      %p375 = pneg %p110
      %p376 = pneg %p107
      %p377 = scmp.lt.s32.totalorder %s26, 31
      %s378 = scalar_select %p377, %s26, 31
      %p379 = scmp.lt.s32.totalorder %s25, 0
      %s380 = scalar_select %p379, %s25, 0
      %s381 = sadd.s32 %s380, %s378
      %s382 = smul.addr %s381, 8
      %s383 = scalar_lea.vmem %s3, %s382
      %p384 = pneg %p138
      %p385 = pneg %p135
      %p386 = pneg %p159
      %p387 = pneg %p156
      %p388 = pneg %p180
      %p389 = pneg %p177
      %p390 = pneg %p201
      %p391 = pneg %p198
      %p392 = pneg %p222
      %p393 = pneg %p219
      %p394 = pneg %p250
      %p395 = pneg %p247
      %p396 = scmp.lt.s32.totalorder %s26, 31
      %s397 = scalar_select %p396, %s26, 31
      %p398 = scmp.lt.s32.totalorder %s25, 0
      %s399 = scalar_select %p398, %s25, 0
      %s400 = sadd.s32 %s399, %s397
      %s401 = smul.addr %s400, 8
      %s402 = scalar_lea.vmem %s8, %s401
      %p403 = pneg %p278
      %p404 = pneg %p275
      %p405 = scmp.lt.s32.totalorder %s26, 31
      %s406 = scalar_select %p405, %s26, 31
      %p407 = scmp.lt.s32.totalorder %s25, 0
      %s408 = scalar_select %p407, %s25, 0
      %s409 = sadd.s32 %s408, %s406
      %s410 = smul.addr %s409, 8
      %s411 = scalar_lea.vmem %s9, %s410
      %p412 = scmp.lt.s32.totalorder %s25, 0
      %s413 = scalar_select %p412, %s25, 0
      %s414 = smul.addr %s413, 8
      %s415 = scalar_lea.vmem %s0, %s414
      %p416 = scmp.lt.s32.totalorder %s26, 31
      %s417 = scalar_select %p416, %s26, 31
      %p418 = scmp.lt.s32.totalorder %s25, 0
      %s419 = scalar_select %p418, %s25, 0
      %s420 = sadd.s32 %s419, %s417
      %s421 = smul.addr %s420, 8
      %s422 = scalar_lea.vmem %s1, %s421
      %p423 = scmp.lt.s32.totalorder %s26, 31
      %s424 = scalar_select %p423, %s26, 31
      %p425 = scmp.lt.s32.totalorder %s25, 0
      %s426 = scalar_select %p425, %s25, 0
      %s427 = sadd.s32 %s426, %s424
      %s428 = smul.addr %s427, 8
      %s429 = scalar_lea.vmem %s2, %s428
      %p430 = scmp.lt.s32.totalorder %s26, 31
      %s431 = scalar_select %p430, %s26, 31
      %p432 = scmp.lt.s32.totalorder %s25, 0
      %s433 = scalar_select %p432, %s25, 0
      %s434 = sadd.s32 %s433, %s431
      %s435 = smul.addr %s434, 8
      %s436 = scalar_lea.vmem %s3, %s435
      %p437 = scmp.lt.s32.totalorder %s26, 31
      %s438 = scalar_select %p437, %s26, 31
      %p439 = scmp.lt.s32.totalorder %s25, 0
      %s440 = scalar_select %p439, %s25, 0
      %s441 = sadd.s32 %s440, %s438
      %s442 = smul.addr %s441, 8
      %s443 = scalar_lea.vmem %s8, %s442
      %p444 = scmp.lt.s32.totalorder %s26, 31
      %s445 = scalar_select %p444, %s26, 31
      %p446 = scmp.lt.s32.totalorder %s25, 0
      %s447 = scalar_select %p446, %s25, 0
      %s448 = sadd.s32 %s447, %s445
      %s449 = smul.addr %s448, 8
      %s450 = scalar_lea.vmem %s9, %s449
      %p452 = scmp.eq.s32.totalorder %s26, 0
      // Predicated region
      $region53: #{model_forward.14} parent=51 // pred_check
        %p453 = pneg %p452
      $region54: #{model_forward.14} parent=51 // pred_check_branch
        %455 = sbr.rel (%p453) target = $region56
      $region55: #{model_forward.14} parent=51 // pred_region
        %vm456 = vcmask 523264
        %457 = vst.msk [vmem:[#allocation2] sm:$0xff] %vm456, 0.0
      $region56: #{model_forward.14} parent=51 // pred_fallthru
        _
      %p458 = scmp.lt.s32.totalorder %s26, 8
      // Predicated region
      $region57: #{model_forward.14} parent=51 // pred_check
        %p459 = pneg %p458
      $region58: #{model_forward.14} parent=51 // pred_check_branch
        %461 = sbr.rel (%p459) target = $region60
      $region59: #{model_forward.14} parent=51 // pred_region
        %v462 = vld [vmem:[#allocation2] sm:$0xff]
        %s463 = smul.u32 %s26, 8
        %s464 = scalar_lea.vmem %s415, %s463
        %v465 = vld [vmem:[%s464] sm:$0xff]
        %v466 = vadd.f32 %v462, %v465
        %vm467 = vcmask 523264
        %468 = vst.msk [vmem:[#allocation2] sm:$0xff] %vm467, %v466
      $region60: #{model_forward.14} parent=51 // pred_fallthru
        _
      %v469 = vld [vmem:[#allocation2] sm:$0xff]
      %v470 = vld [vmem:[%s422] sm:$0xff]
      %v471 = vld [vmem:[%s429] sm:$0xff]
      %v472 = vld [vmem:[%s436] sm:$0xff]
      %v473 = vmul.f32 %v469, %v469
      %vm474 = vcmask 523264
      %v475 = vsel %vm474, %v473, 0.0
      %476 = vadd.xlane.f32.xlu0 %v475
      %v477 = vpop.xlane.xlu0 %476
      %v478 = vrsqrt.pop %v477
      %v479 = vmul.f32 %v477, %v478
      %vm480 = vcmp.eq.f32.partialorder %v477, inf
      %v481 = vsel %vm480, %v477, %v479
      %vm482 = vcmp.eq.f32.partialorder %v477, 0.0
      %v483 = vand.u32 %v477, 2147483648
      %v484 = vsel %vm482, %v483, %v481
      %v485 = vmul.f32 %v469, %v470
      %v486 = vadd.f32 %v485, %v471
      %v487 = vmul.f32 %v486, %v486
      %v488 = vsel %vm474, %v487, 0.0
      %489 = vadd.xlane.f32.xlu0 %v488
      %v490 = vpop.xlane.xlu0 %489
      %v491 = vrsqrt.pop %v490
      %v492 = vmul.f32 %v490, %v491
      %vm493 = vcmp.eq.f32.partialorder %v490, inf
      %v494 = vsel %vm493, %v490, %v492
      %vm495 = vcmp.eq.f32.partialorder %v490, 0.0
      %v496 = vand.u32 %v490, 2147483648
      %v497 = vsel %vm495, %v496, %v494
      %v498 = vadd.f32 %v497, 1e-08
      %v499 = vrcp.pop %v498
      %v500 = vmul.f32 %v486, %v499
      %v501 = vmul.f32 %v500, %v484
      %v502 = vpack.c.bf16 %v501, %v501
      %v503 = vld [vmem:[%s4] sm:$0xf]
      %v504 = vld [vmem:[%s4 + $0x4] sm:$0xf]
      %v505 = vld [vmem:[%s4 + $0x8] sm:$0xf]
      %v506 = vld [vmem:[%s4 + $0xc] sm:$0xf]
      %v507 = vld [vmem:[%s4 + $0x10] sm:$0xf]
      %v508 = vld [vmem:[%s4 + $0x14] sm:$0xf]
      %v509 = vld [vmem:[%s4 + $0x18] sm:$0xf]
      %v510 = vld [vmem:[%s4 + $0x1c] sm:$0xf]
      %v511 = vld [vmem:[%s5] sm:$0x1]
      %v513 = vlaneseq
      %v514 = vshrl.u32 %v513, 7
      %v515 = vsub.s32 0, %v514
      %v516 = vrot.slane %v511, %v515
      %v526 = vunpack.c.l.b16 %v503
      %v527 = vunpack.c.l.b16 %v504
      %v528 = vunpack.c.l.b16 %v505
      %v529 = vunpack.c.l.b16 %v506
      %v530 = vunpack.c.l.b16 %v507
      %v531 = vunpack.c.l.b16 %v508
      %v532 = vunpack.c.l.b16 %v509
      %v533 = vunpack.c.l.b16 %v510
      %v534 = vpack.c.b16 %v527, %v526
      %v535 = vpack.c.b16 %v529, %v528
      %v536 = vpack.c.b16 %v531, %v530
      %v537 = vpack.c.b16 %v533, %v532
      %v543 = vsel %vm474, %v502, 0
      %545 = vmatprep.subr.bf16.mxu0 0
      %546 = vmatpush1.bf16.msra.mxu0 %v534
      %547 = vmatprep.subr.bf16.mxu0 0
      %548 = vmatpush1.bf16.msra.mxu0 %v535
      %549 = vmatprep.subr.bf16.mxu0 0
      %550 = vmatpush1.bf16.msra.mxu0 %v536
      %551 = vmatprep.subr.bf16.mxu0 0
      %552 = vmatpush1.bf16.msra.mxu0 %v537
      %553 = vmatprep.subr.bf16.mxu0 0
      %554 = vmatpush1.bf16.msra.mxu0 0
      %555 = vmatprep.subr.bf16.mxu0 0
      %556 = vmatpush1.bf16.msra.mxu0 0
      %557 = vmatprep.subr.bf16.mxu0 0
      %558 = vmatpush1.bf16.msra.mxu0 0
      %559 = vmatprep.subr.bf16.mxu0 0
      %560 = vmatpush1.bf16.msra.mxu0 0
      %561 = vmatprep.subr.bf16.mxu0 0
      %562 = vmatpush1.bf16.msra.mxu0 0
      %563 = vmatprep.subr.bf16.mxu0 0
      %564 = vmatpush1.bf16.msra.mxu0 0
      %565 = vmatprep.subr.bf16.mxu0 0
      %566 = vmatpush1.bf16.msra.mxu0 0
      %567 = vmatprep.subr.bf16.mxu0 0
      %568 = vmatpush1.bf16.msra.mxu0 0
      %569 = vmatprep.subr.bf16.mxu0 0
      %570 = vmatpush1.bf16.msra.mxu0 0
      %571 = vmatprep.subr.bf16.mxu0 0
      %572 = vmatpush1.bf16.msra.mxu0 0
      %573 = vmatprep.subr.bf16.mxu0 0
      %574 = vmatpush1.bf16.msra.mxu0 0
      %575 = vmatprep.subr.bf16.mxu0 0
      %576 = vmatpush1.bf16.msra.mxu0 0
      %577 = vmatprep.mubr.bf16.mxu0 0
      %578 = vmatmul.mubr.bf16.gmra.mrb[0].mxu0 %v543
      %v579 = vpop.f32.mrb[0].mxu0
      %v580 = vadd.f32 %v516, %v579
      %v581 = vpop.f32.mrb[0].mxu0
      %v582 = vpop.f32.mrb[0].mxu0
      %v583 = vpop.f32.mrb[0].mxu0
      %584 = vdwg.mxu0
      %vm585 = vcmp.gt.f32.partialorder %v580, 0.0
      %v586 = vmul.f32 %v580, 0.2
      %v587 = vsel %vm585, %v580, %v586
      %v588 = vld [vmem:[%s6] sm:$0x1]
      %v589 = vld [vmem:[%s7] sm:$0x1]
      %v590 = vsel %vm474, %v587, 0.0
      %591 = vadd.xlane.f32.xlu0 %v590
      %v592 = vpop.xlane.xlu0 %591
      %v593 = vrcp.pop 64.0
      %v594 = vmul.f32 %v592, %v593
      %v595 = vsub.f32 %v587, %v594
      %v596 = vmul.f32 %v595, %v595
      %v597 = vsel %vm474, %v596, 0.0
      %598 = vadd.xlane.f32.xlu0 %v597
      %v599 = vpop.xlane.xlu0 %598
      %v600 = vmul.f32 %v599, %v593
      %v601 = vadd.f32 %v600, 1e-05
      %v602 = vrsqrt.pop %v601
      %v603 = vmul.f32 %v595, %v602
      %v605 = vlaneseq
      %v606 = vshrl.u32 %v605, 7
      %v607 = vsub.s32 0, %v606
      %v608 = vrot.slane %v588, %v607
      %v610 = vmul.f32 %v603, %v608
      %v612 = vlaneseq
      %v613 = vshrl.u32 %v612, 7
      %v614 = vsub.s32 0, %v613
      %v615 = vrot.slane %v589, %v614
      %v617 = vadd.f32 %v610, %v615
      %v618 = vpack.c.bf16 %v617, %v617
      %s619 = scalar_lea.vmem %s4, 32
      %v620 = vld [vmem:[%s619] sm:$0xf]
      %v621 = vld [vmem:[%s619 + $0x4] sm:$0xf]
      %v622 = vld [vmem:[%s619 + $0x8] sm:$0xf]
      %v623 = vld [vmem:[%s619 + $0xc] sm:$0xf]
      %v624 = vld [vmem:[%s619 + $0x10] sm:$0xf]
      %v625 = vld [vmem:[%s619 + $0x14] sm:$0xf]
      %v626 = vld [vmem:[%s619 + $0x18] sm:$0xf]
      %v627 = vld [vmem:[%s619 + $0x1c] sm:$0xf]
      %s628 = scalar_lea.vmem %s5, 1
      %v629 = vld [vmem:[%s628] sm:$0x1]
      %v631 = vlaneseq
      %v632 = vshrl.u32 %v631, 7
      %v633 = vsub.s32 0, %v632
      %v634 = vrot.slane %v629, %v633
      %v644 = vunpack.c.l.b16 %v620
      %v645 = vunpack.c.l.b16 %v621
      %v646 = vunpack.c.l.b16 %v622
      %v647 = vunpack.c.l.b16 %v623
      %v648 = vunpack.c.l.b16 %v624
      %v649 = vunpack.c.l.b16 %v625
      %v650 = vunpack.c.l.b16 %v626
      %v651 = vunpack.c.l.b16 %v627
      %v652 = vpack.c.b16 %v645, %v644
      %v653 = vpack.c.b16 %v647, %v646
      %v654 = vpack.c.b16 %v649, %v648
      %v655 = vpack.c.b16 %v651, %v650
      %v661 = vsel %vm474, %v618, 0
      %663 = vmatprep.subr.bf16.mxu0 0
      %664 = vmatpush1.bf16.msra.mxu0 %v652
      %665 = vmatprep.subr.bf16.mxu0 0
      %666 = vmatpush1.bf16.msra.mxu0 %v653
      %667 = vmatprep.subr.bf16.mxu0 0
      %668 = vmatpush1.bf16.msra.mxu0 %v654
      %669 = vmatprep.subr.bf16.mxu0 0
      %670 = vmatpush1.bf16.msra.mxu0 %v655
      %671 = vmatprep.subr.bf16.mxu0 0
      %672 = vmatpush1.bf16.msra.mxu0 0
      %673 = vmatprep.subr.bf16.mxu0 0
      %674 = vmatpush1.bf16.msra.mxu0 0
      %675 = vmatprep.subr.bf16.mxu0 0
      %676 = vmatpush1.bf16.msra.mxu0 0
      %677 = vmatprep.subr.bf16.mxu0 0
      %678 = vmatpush1.bf16.msra.mxu0 0
      %679 = vmatprep.subr.bf16.mxu0 0
      %680 = vmatpush1.bf16.msra.mxu0 0
      %681 = vmatprep.subr.bf16.mxu0 0
      %682 = vmatpush1.bf16.msra.mxu0 0
      %683 = vmatprep.subr.bf16.mxu0 0
      %684 = vmatpush1.bf16.msra.mxu0 0
      %685 = vmatprep.subr.bf16.mxu0 0
      %686 = vmatpush1.bf16.msra.mxu0 0
      %687 = vmatprep.subr.bf16.mxu0 0
      %688 = vmatpush1.bf16.msra.mxu0 0
      %689 = vmatprep.subr.bf16.mxu0 0
      %690 = vmatpush1.bf16.msra.mxu0 0
      %691 = vmatprep.subr.bf16.mxu0 0
      %692 = vmatpush1.bf16.msra.mxu0 0
      %693 = vmatprep.subr.bf16.mxu0 0
      %694 = vmatpush1.bf16.msra.mxu0 0
      %695 = vmatprep.mubr.bf16.mxu0 0
      %696 = vmatmul.mubr.bf16.gmra.mrb[0].mxu0 %v661
      %v697 = vpop.f32.mrb[0].mxu0
      %v698 = vadd.f32 %v634, %v697
      %v699 = vpop.f32.mrb[0].mxu0
      %v700 = vpop.f32.mrb[0].mxu0
      %v701 = vpop.f32.mrb[0].mxu0
      %702 = vdwg.mxu0
      %vm703 = vcmp.gt.f32.partialorder %v698, 0.0
      %v704 = vmul.f32 %v698, 0.2
      %v705 = vsel %vm703, %v698, %v704
      %s706 = scalar_lea.vmem %s6, 1
      %v707 = vld [vmem:[%s706] sm:$0x1]
      %s708 = scalar_lea.vmem %s7, 1
      %v709 = vld [vmem:[%s708] sm:$0x1]
      %v710 = vsel %vm474, %v705, 0.0
      %711 = vadd.xlane.f32.xlu0 %v710
      %v712 = vpop.xlane.xlu0 %711
      %v713 = vmul.f32 %v712, %v593
      %v714 = vsub.f32 %v705, %v713
      %v715 = vmul.f32 %v714, %v714
      %v716 = vsel %vm474, %v715, 0.0
      %717 = vadd.xlane.f32.xlu0 %v716
      %v718 = vpop.xlane.xlu0 %717
      %v719 = vmul.f32 %v718, %v593
      %v720 = vadd.f32 %v719, 1e-05
      %v721 = vrsqrt.pop %v720
      %v722 = vmul.f32 %v714, %v721
      %v724 = vlaneseq
      %v725 = vshrl.u32 %v724, 7
      %v726 = vsub.s32 0, %v725
      %v727 = vrot.slane %v707, %v726
      %v729 = vmul.f32 %v722, %v727
      %v731 = vlaneseq
      %v732 = vshrl.u32 %v731, 7
      %v733 = vsub.s32 0, %v732
      %v734 = vrot.slane %v709, %v733
      %v736 = vadd.f32 %v729, %v734
      %v737 = vpack.c.bf16 %v736, %v736
      %s738 = scalar_lea.vmem %s4, 64
      %v739 = vld [vmem:[%s738] sm:$0xf]
      %v740 = vld [vmem:[%s738 + $0x4] sm:$0xf]
      %v741 = vld [vmem:[%s738 + $0x8] sm:$0xf]
      %v742 = vld [vmem:[%s738 + $0xc] sm:$0xf]
      %v743 = vld [vmem:[%s738 + $0x10] sm:$0xf]
      %v744 = vld [vmem:[%s738 + $0x14] sm:$0xf]
      %v745 = vld [vmem:[%s738 + $0x18] sm:$0xf]
      %v746 = vld [vmem:[%s738 + $0x1c] sm:$0xf]
      %s747 = scalar_lea.vmem %s5, 2
      %v748 = vld [vmem:[%s747] sm:$0x1]
      %v750 = vlaneseq
      %v751 = vshrl.u32 %v750, 7
      %v752 = vsub.s32 0, %v751
      %v753 = vrot.slane %v748, %v752
      %v763 = vunpack.c.l.b16 %v739
      %v764 = vunpack.c.l.b16 %v740
      %v765 = vunpack.c.l.b16 %v741
      %v766 = vunpack.c.l.b16 %v742
      %v767 = vunpack.c.l.b16 %v743
      %v768 = vunpack.c.l.b16 %v744
      %v769 = vunpack.c.l.b16 %v745
      %v770 = vunpack.c.l.b16 %v746
      %v771 = vpack.c.b16 %v764, %v763
      %v772 = vpack.c.b16 %v766, %v765
      %v773 = vpack.c.b16 %v768, %v767
      %v774 = vpack.c.b16 %v770, %v769
      %v780 = vsel %vm474, %v737, 0
      %782 = vmatprep.subr.bf16.mxu0 0
      %783 = vmatpush1.bf16.msra.mxu0 %v771
      %784 = vmatprep.subr.bf16.mxu0 0
      %785 = vmatpush1.bf16.msra.mxu0 %v772
      %786 = vmatprep.subr.bf16.mxu0 0
      %787 = vmatpush1.bf16.msra.mxu0 %v773
      %788 = vmatprep.subr.bf16.mxu0 0
      %789 = vmatpush1.bf16.msra.mxu0 %v774
      %790 = vmatprep.subr.bf16.mxu0 0
      %791 = vmatpush1.bf16.msra.mxu0 0
      %792 = vmatprep.subr.bf16.mxu0 0
      %793 = vmatpush1.bf16.msra.mxu0 0
      %794 = vmatprep.subr.bf16.mxu0 0
      %795 = vmatpush1.bf16.msra.mxu0 0
      %796 = vmatprep.subr.bf16.mxu0 0
      %797 = vmatpush1.bf16.msra.mxu0 0
      %798 = vmatprep.subr.bf16.mxu0 0
      %799 = vmatpush1.bf16.msra.mxu0 0
      %800 = vmatprep.subr.bf16.mxu0 0
      %801 = vmatpush1.bf16.msra.mxu0 0
      %802 = vmatprep.subr.bf16.mxu0 0
      %803 = vmatpush1.bf16.msra.mxu0 0
      %804 = vmatprep.subr.bf16.mxu0 0
      %805 = vmatpush1.bf16.msra.mxu0 0
      %806 = vmatprep.subr.bf16.mxu0 0
      %807 = vmatpush1.bf16.msra.mxu0 0
      %808 = vmatprep.subr.bf16.mxu0 0
      %809 = vmatpush1.bf16.msra.mxu0 0
      %810 = vmatprep.subr.bf16.mxu0 0
      %811 = vmatpush1.bf16.msra.mxu0 0
      %812 = vmatprep.subr.bf16.mxu0 0
      %813 = vmatpush1.bf16.msra.mxu0 0
      %814 = vmatprep.mubr.bf16.mxu0 0
      %815 = vmatmul.mubr.bf16.gmra.mrb[0].mxu0 %v780
      %v816 = vpop.f32.mrb[0].mxu0
      %v817 = vadd.f32 %v753, %v816
      %v818 = vpop.f32.mrb[0].mxu0
      %v819 = vpop.f32.mrb[0].mxu0
      %v820 = vpop.f32.mrb[0].mxu0
      %821 = vdwg.mxu0
      %vm822 = vcmp.gt.f32.partialorder %v817, 0.0
      %v823 = vmul.f32 %v817, 0.2
      %v824 = vsel %vm822, %v817, %v823
      %s825 = scalar_lea.vmem %s6, 2
      %v826 = vld [vmem:[%s825] sm:$0x1]
      %s827 = scalar_lea.vmem %s7, 2
      %v828 = vld [vmem:[%s827] sm:$0x1]
      %v829 = vsel %vm474, %v824, 0.0
      %830 = vadd.xlane.f32.xlu0 %v829
      %v831 = vpop.xlane.xlu0 %830
      %v832 = vmul.f32 %v831, %v593
      %v833 = vsub.f32 %v824, %v832
      %v834 = vmul.f32 %v833, %v833
      %v835 = vsel %vm474, %v834, 0.0
      %836 = vadd.xlane.f32.xlu0 %v835
      %v837 = vpop.xlane.xlu0 %836
      %v838 = vmul.f32 %v837, %v593
      %v839 = vadd.f32 %v838, 1e-05
      %v840 = vrsqrt.pop %v839
      %v841 = vmul.f32 %v833, %v840
      %v843 = vlaneseq
      %v844 = vshrl.u32 %v843, 7
      %v845 = vsub.s32 0, %v844
      %v846 = vrot.slane %v826, %v845
      %v848 = vmul.f32 %v841, %v846
      %v850 = vlaneseq
      %v851 = vshrl.u32 %v850, 7
      %v852 = vsub.s32 0, %v851
      %v853 = vrot.slane %v828, %v852
      %v855 = vadd.f32 %v848, %v853
      %v856 = vpack.c.bf16 %v855, %v855
      %s857 = scalar_lea.vmem %s4, 96
      %v858 = vld [vmem:[%s857] sm:$0xf]
      %v859 = vld [vmem:[%s857 + $0x4] sm:$0xf]
      %v860 = vld [vmem:[%s857 + $0x8] sm:$0xf]
      %v861 = vld [vmem:[%s857 + $0xc] sm:$0xf]
      %v862 = vld [vmem:[%s857 + $0x10] sm:$0xf]
      %v863 = vld [vmem:[%s857 + $0x14] sm:$0xf]
      %v864 = vld [vmem:[%s857 + $0x18] sm:$0xf]
      %v865 = vld [vmem:[%s857 + $0x1c] sm:$0xf]
      %s866 = scalar_lea.vmem %s5, 3
      %v867 = vld [vmem:[%s866] sm:$0x1]
      %v869 = vlaneseq
      %v870 = vshrl.u32 %v869, 7
      %v871 = vsub.s32 0, %v870
      %v872 = vrot.slane %v867, %v871
      %v882 = vunpack.c.l.b16 %v858
      %v883 = vunpack.c.l.b16 %v859
      %v884 = vunpack.c.l.b16 %v860
      %v885 = vunpack.c.l.b16 %v861
      %v886 = vunpack.c.l.b16 %v862
      %v887 = vunpack.c.l.b16 %v863
      %v888 = vunpack.c.l.b16 %v864
      %v889 = vunpack.c.l.b16 %v865
      %v890 = vpack.c.b16 %v883, %v882
      %v891 = vpack.c.b16 %v885, %v884
      %v892 = vpack.c.b16 %v887, %v886
      %v893 = vpack.c.b16 %v889, %v888
      %v899 = vsel %vm474, %v856, 0
      %901 = vmatprep.subr.bf16.mxu0 0
      %902 = vmatpush1.bf16.msra.mxu0 %v890
      %903 = vmatprep.subr.bf16.mxu0 0
      %904 = vmatpush1.bf16.msra.mxu0 %v891
      %905 = vmatprep.subr.bf16.mxu0 0
      %906 = vmatpush1.bf16.msra.mxu0 %v892
      %907 = vmatprep.subr.bf16.mxu0 0
      %908 = vmatpush1.bf16.msra.mxu0 %v893
      %909 = vmatprep.subr.bf16.mxu0 0
      %910 = vmatpush1.bf16.msra.mxu0 0
      %911 = vmatprep.subr.bf16.mxu0 0
      %912 = vmatpush1.bf16.msra.mxu0 0
      %913 = vmatprep.subr.bf16.mxu0 0
      %914 = vmatpush1.bf16.msra.mxu0 0
      %915 = vmatprep.subr.bf16.mxu0 0
      %916 = vmatpush1.bf16.msra.mxu0 0
      %917 = vmatprep.subr.bf16.mxu0 0
      %918 = vmatpush1.bf16.msra.mxu0 0
      %919 = vmatprep.subr.bf16.mxu0 0
      %920 = vmatpush1.bf16.msra.mxu0 0
      %921 = vmatprep.subr.bf16.mxu0 0
      %922 = vmatpush1.bf16.msra.mxu0 0
      %923 = vmatprep.subr.bf16.mxu0 0
      %924 = vmatpush1.bf16.msra.mxu0 0
      %925 = vmatprep.subr.bf16.mxu0 0
      %926 = vmatpush1.bf16.msra.mxu0 0
      %927 = vmatprep.subr.bf16.mxu0 0
      %928 = vmatpush1.bf16.msra.mxu0 0
      %929 = vmatprep.subr.bf16.mxu0 0
      %930 = vmatpush1.bf16.msra.mxu0 0
      %931 = vmatprep.subr.bf16.mxu0 0
      %932 = vmatpush1.bf16.msra.mxu0 0
      %933 = vmatprep.mubr.bf16.mxu0 0
      %934 = vmatmul.mubr.bf16.gmra.mrb[0].mxu0 %v899
      %v935 = vpop.f32.mrb[0].mxu0
      %v936 = vadd.f32 %v872, %v935
      %v937 = vpop.f32.mrb[0].mxu0
      %v938 = vpop.f32.mrb[0].mxu0
      %v939 = vpop.f32.mrb[0].mxu0
      %940 = vdwg.mxu0
      %v941 = vmul.f32 %v936, %v936
      %v942 = vsel %vm474, %v941, 0.0
      %943 = vadd.xlane.f32.xlu0 %v942
      %v944 = vpop.xlane.xlu0 %943
      %v945 = vrsqrt.pop %v944
      %v946 = vmul.f32 %v944, %v945
      %vm947 = vcmp.eq.f32.partialorder %v944, inf
      %v948 = vsel %vm947, %v944, %v946
      %vm949 = vcmp.eq.f32.partialorder %v944, 0.0
      %v950 = vand.u32 %v944, 2147483648
      %v951 = vsel %vm949, %v950, %v948
      %v952 = vadd.f32 %v951, 1e-08
      %v953 = vrcp.pop %v952
      %v954 = vmul.f32 %v936, %v953
      %v955 = vmul.f32 %v484, %v472
      %957 = vset.pattern.permute.xlu0 0
      %958 = vperm.xlu0 %957, %v955
      %v959 = vpop.permute.xlu0 %958
      %v961 = vmul.f32 %v954, %v959
      %v962 = vmul.f32 %v961, %v961
      %v963 = vsel %vm474, %v962, 0.0
      %964 = vadd.xlane.f32.xlu0 %v963
      %v965 = vpop.xlane.xlu0 %964
      %v966 = vrsqrt.pop %v965
      %v967 = vmul.f32 %v965, %v966
      %vm968 = vcmp.eq.f32.partialorder %v965, inf
      %v969 = vsel %vm968, %v965, %v967
      %vm970 = vcmp.eq.f32.partialorder %v965, 0.0
      %v971 = vand.u32 %v965, 2147483648
      %v972 = vsel %vm970, %v971, %v969
      %v973 = vsub.f32 %v501, %v961
      %v974 = vmul.f32 %v973, %v973
      %v975 = vsel %vm474, %v974, 0.0
      %976 = vadd.xlane.f32.xlu0 %v975
      %v977 = vpop.xlane.xlu0 %976
      %v978 = vrsqrt.pop %v977
      %v979 = vmul.f32 %v977, %v978
      %vm980 = vcmp.eq.f32.partialorder %v977, inf
      %v981 = vsel %vm980, %v977, %v979
      %vm982 = vcmp.eq.f32.partialorder %v977, 0.0
      %v983 = vand.u32 %v977, 2147483648
      %v984 = vsel %vm982, %v983, %v981
      %v985 = vadd.f32 %v984, 1e-08
      %v986 = vrcp.pop %v985
      %v987 = vmul.f32 %v973, %v986
      %v988 = vsub.f32 %v484, %v972
      %v989 = vmul.f32 %v987, %v988
      %990 = vst.msk [vmem:[#allocation2] sm:$0xff] %vm474, %v989
      %991 = vst.msk [vmem:[%s443] sm:$0xff] %vm474, %v961
      %vm992 = vcmask 7168
      %993 = vst.msk [vmem:[%s450] sm:$0xff] %vm992, %v972
      %p994 = scmp.lt.s32.totalorder %s26, 31
      %s995 = scalar_select %p994, %s26, 31
      %p996 = scmp.lt.s32.totalorder %s25, 0
      %s997 = scalar_select %p996, %s25, 0
      %s998 = sadd.s32 %s997, %s995
      %s999 = smul.addr %s998, 8
      %s1000 = scalar_lea.vmem %s8, %s999
      %p1001 = scmp.lt.s32.totalorder %s26, 31
      %s1002 = scalar_select %p1001, %s26, 31
      %p1003 = scmp.lt.s32.totalorder %s25, 0
      %s1004 = scalar_select %p1003, %s25, 0
      %s1005 = sadd.s32 %s1004, %s1002
      %s1006 = smul.addr %s1005, 8
      %s1007 = scalar_lea.vmem %s9, %s1006
      // Predicated region
      $region61: #{model_forward.14} parent=51 // pred_check
        %p1008 = pneg %p247
      $region62: #{model_forward.14} parent=51 // pred_check_branch
        %1010 = sbr.rel (%p1008) target = $region64
      $region63: #{model_forward.14} parent=51 // pred_region
        _
      $region64: #{model_forward.14} parent=51 // pred_fallthru
        _
      // Predicated region
      $region65: #{model_forward.14} parent=51 // pred_check
        %p1011 = pneg %p275
      $region66: #{model_forward.14} parent=51 // pred_check_branch
        %1013 = sbr.rel (%p1011) target = $region68
      $region67: #{model_forward.14} parent=51 // pred_region
        _
      $region68: #{model_forward.14} parent=51 // pred_fallthru
        _
    $region52: #{model_forward.14} parent=5 // pred_fallthru
      _
    %p1014 = scmp.le.s32.totalorder 2, %s16
    // Predicated region
    $region69: #{model_forward.14} parent=5 // pred_check
      %p1015 = pneg %p1014
    $region70: #{model_forward.14} parent=5 // pred_check_branch
      %1017 = sbr.rel (%p1015) target = $region72
    $region71: #{model_forward.14} parent=5 // pred_region
      %s1018 = ssub.s32 %s16, 2
      // Predicated region
      $region73: #{model_forward.14} parent=71 // pred_check
        %p1019 = pneg %p253
      $region74: #{model_forward.14} parent=71 // pred_check_branch
        %1021 = sbr.rel (%p1019) target = $region76
      $region75: #{model_forward.14} parent=71 // pred_region
        %p1022 = scmp.lt.s32.totalorder %s28, 31
        %s1023 = scalar_select %p1022, %s28, 31
        %p1024 = scmp.lt.s32.totalorder %s27, 0
        %s1025 = scalar_select %p1024, %s27, 0
        %s1026 = sadd.s32 %s1025, %s1023
        %s1027 = smul.addr %s1026, 8
        %s1028 = scalar_lea.vmem %s8, %s1027
      $region76: #{model_forward.14} parent=71 // pred_fallthru
        _
      // Predicated region
      $region77: #{model_forward.14} parent=71 // pred_check
        %p1029 = pneg %p281
      $region78: #{model_forward.14} parent=71 // pred_check_branch
        %1031 = sbr.rel (%p1029) target = $region80
      $region79: #{model_forward.14} parent=71 // pred_region
        %p1032 = scmp.lt.s32.totalorder %s28, 31
        %s1033 = scalar_select %p1032, %s28, 31
        %p1034 = scmp.lt.s32.totalorder %s27, 0
        %s1035 = scalar_select %p1034, %s27, 0
        %s1036 = sadd.s32 %s1035, %s1033
        %s1037 = smul.addr %s1036, 8
        %s1038 = scalar_lea.vmem %s9, %s1037
      $region80: #{model_forward.14} parent=71 // pred_fallthru
        _
    $region72: #{model_forward.14} parent=5 // pred_fallthru
      _
  $region6: #{model_forward.14} parent=0 // loop_footer
    %s20 = sadd.s32 1, %s16
  $region7: #{model_forward.14} parent=0 // loop_footer_branch
    %15 = sbr.rel target = $region3
  $region8: #{model_forward.14} parent=0 // loop_exit
    _

// kernel: model_forward.15
$region0: #{model_forward.15}
  #allocation0 [shape = 'u32[]', space=smem, size = 0x4, offset = 0x4, fixed_abs, tag = 'smem constant byte address 0x4 - core index']
  #allocation1 [shape = 'u32[144,128]{1,0:T(1,128)}', space=vmem, size = 0x12000, scoped, tag = 'internal scratch']
  %s0 = inlined_call_operand.vmem [shape: bf16[256,64], index: 0, kind: input, shape index: {}]
  %s1 = inlined_call_operand.vmem [shape: f32[256,1], index: 1, kind: input, shape index: {}]
  %s2 = inlined_call_operand.vmem [shape: bf16[4,64,64], index: 2, kind: input, shape index: {}]
  %s3 = inlined_call_operand.vmem [shape: f32[4,1,64], index: 3, kind: input, shape index: {}]
  %s4 = inlined_call_operand.vmem [shape: f32[3,1,64], index: 4, kind: input, shape index: {}]
  %s5 = inlined_call_operand.vmem [shape: f32[3,1,64], index: 5, kind: input, shape index: {}]
  %s6 = inlined_call_operand.vmem [shape: f32[1,64], index: 6, kind: input, shape index: {}]
  %s7 = inlined_call_operand.vmem [shape: f32[256,64], index: 7, kind: output, shape index: {}]
  %s8 = sld [smem:[#allocation0]]
  $region61: #{model_forward.15} parent=0
    _
  %s10 = ssub.s32 1, %s8
  %s11 = scalar_select 0, %s10, %s8
  loop: start=0, step=1, limit=4
  $region2: #{model_forward.15} parent=0 // loop_pre_header
    _
  $region3: #{model_forward.15} parent=0 // loop_header
    %s13 = sphi 0, %s17
    %p14 = scmp.ge.s32.totalorder %s13, 4
    %s23 = sphi 0, %s25
    %s26 = sphi 0, %s23
    %s27 = sphi 0, %s26
    %s43 = sphi 0, %s27
    %s49 = sphi 0, %s51
    %s52 = sphi 0, %s49
    %s53 = sphi 0, %s52
    %s69 = sphi 0, %s53
    %s73 = sphi 0, %s73
    %s75 = sphi 0, %s73
    %s76 = sphi 0, %s75
    %s90 = sphi 0, %s76
    %s94 = sphi 0, %s94
    %s96 = sphi 0, %s94
    %s97 = sphi 0, %s96
    %s111 = sphi 0, %s97
    %s115 = sphi 0, %s115
    %s117 = sphi 0, %s115
    %s118 = sphi 0, %s117
    %s132 = sphi 0, %s118
    %s136 = sphi 0, %s136
    %s138 = sphi 0, %s136
    %s139 = sphi 0, %s138
    %s153 = sphi 0, %s139
    %s157 = sphi 0, %s157
    %s159 = sphi 0, %s157
    %s160 = sphi 0, %s159
    %s174 = sphi 0, %s160
    %s180 = sphi 0, %s182
    %s183 = sphi 0, %s180
    %s184 = sphi 0, %s183
    %s200 = sphi 0, %s184
  $region4: #{model_forward.15} parent=0 // loop_header_branch
    %16 = sbr.rel (%p14) target = $region8
  $region5: #{model_forward.15} parent=0 // loop_body
    %s18 = ssub.s32 %s13, 1
    %s19 = ssub.s32 %s13, 2
    %s20 = sadd.s32 %s13, 1
    %s21 = ssub.s32 %s13, %s20
    %p22 = scmp.eq.s32.totalorder %s21, 0
    %s24 = sadd.s32 %s23, 1
    %s25 = scalar_select %p22, %s23, %s24
    %p28 = pneg %p22
    %p29 = scmp.eq.s32.totalorder %s13, 1
    %p30 = por %p28, %p29
    %p31 = scmp.ne.s32.totalorder %s23, %s26
    %p32 = scmp.eq.s32.totalorder %s13, 0
    %p33 = por %p31, %p32
    %p34 = scmp.ne.s32.totalorder %s23, %s26
    %p35 = scmp.eq.s32.totalorder %s18, 1
    %p36 = por %p34, %p35
    %p37 = scmp.ne.s32.totalorder %s26, %s27
    %p38 = scmp.eq.s32.totalorder %s18, 0
    %p39 = por %p37, %p38
    %p40 = scmp.ne.s32.totalorder %s26, %s27
    %p41 = scmp.eq.s32.totalorder %s19, 1
    %p42 = por %p40, %p41
    %p44 = scmp.ne.s32.totalorder %s27, %s43
    %p45 = scmp.eq.s32.totalorder %s19, 0
    %p46 = por %p44, %p45
    %s47 = ssub.s32 %s13, %s20
    %p48 = scmp.eq.s32.totalorder %s47, 0
    %s50 = sadd.s32 %s49, 1
    %s51 = scalar_select %p48, %s49, %s50
    %p54 = pneg %p48
    %p55 = scmp.eq.s32.totalorder %s13, 1
    %p56 = por %p54, %p55
    %p57 = scmp.ne.s32.totalorder %s49, %s52
    %p58 = scmp.eq.s32.totalorder %s13, 0
    %p59 = por %p57, %p58
    %p60 = scmp.ne.s32.totalorder %s49, %s52
    %p61 = scmp.eq.s32.totalorder %s18, 1
    %p62 = por %p60, %p61
    %p63 = scmp.ne.s32.totalorder %s52, %s53
    %p64 = scmp.eq.s32.totalorder %s18, 0
    %p65 = por %p63, %p64
    %p66 = scmp.ne.s32.totalorder %s52, %s53
    %p67 = scmp.eq.s32.totalorder %s19, 1
    %p68 = por %p66, %p67
    %p70 = scmp.ne.s32.totalorder %s53, %s69
    %p71 = scmp.eq.s32.totalorder %s19, 0
    %p72 = por %p70, %p71
    %s74 = sadd.s32 %s73, 1
    %p77 = scmp.eq.s32.totalorder %s13, 1
    %p78 = scmp.ne.s32.totalorder %s73, %s75
    %p79 = scmp.eq.s32.totalorder %s13, 0
    %p80 = por %p78, %p79
    %p81 = scmp.ne.s32.totalorder %s73, %s75
    %p82 = scmp.eq.s32.totalorder %s18, 1
    %p83 = por %p81, %p82
    %p84 = scmp.ne.s32.totalorder %s75, %s76
    %p85 = scmp.eq.s32.totalorder %s18, 0
    %p86 = por %p84, %p85
    %p87 = scmp.ne.s32.totalorder %s75, %s76
    %p88 = scmp.eq.s32.totalorder %s19, 1
    %p89 = por %p87, %p88
    %p91 = scmp.ne.s32.totalorder %s76, %s90
    %p92 = scmp.eq.s32.totalorder %s19, 0
    %p93 = por %p91, %p92
    %s95 = sadd.s32 %s94, 1
    %p98 = scmp.eq.s32.totalorder %s13, 1
    %p99 = scmp.ne.s32.totalorder %s94, %s96
    %p100 = scmp.eq.s32.totalorder %s13, 0
    %p101 = por %p99, %p100
    %p102 = scmp.ne.s32.totalorder %s94, %s96
    %p103 = scmp.eq.s32.totalorder %s18, 1
    %p104 = por %p102, %p103
    %p105 = scmp.ne.s32.totalorder %s96, %s97
    %p106 = scmp.eq.s32.totalorder %s18, 0
    %p107 = por %p105, %p106
    %p108 = scmp.ne.s32.totalorder %s96, %s97
    %p109 = scmp.eq.s32.totalorder %s19, 1
    %p110 = por %p108, %p109
    %p112 = scmp.ne.s32.totalorder %s97, %s111
    %p113 = scmp.eq.s32.totalorder %s19, 0
    %p114 = por %p112, %p113
    %s116 = sadd.s32 %s115, 1
    %p119 = scmp.eq.s32.totalorder %s13, 1
    %p120 = scmp.ne.s32.totalorder %s115, %s117
    %p121 = scmp.eq.s32.totalorder %s13, 0
    %p122 = por %p120, %p121
    %p123 = scmp.ne.s32.totalorder %s115, %s117
    %p124 = scmp.eq.s32.totalorder %s18, 1
    %p125 = por %p123, %p124
    %p126 = scmp.ne.s32.totalorder %s117, %s118
    %p127 = scmp.eq.s32.totalorder %s18, 0
    %p128 = por %p126, %p127
    %p129 = scmp.ne.s32.totalorder %s117, %s118
    %p130 = scmp.eq.s32.totalorder %s19, 1
    %p131 = por %p129, %p130
    %p133 = scmp.ne.s32.totalorder %s118, %s132
    %p134 = scmp.eq.s32.totalorder %s19, 0
    %p135 = por %p133, %p134
    %s137 = sadd.s32 %s136, 1
    %p140 = scmp.eq.s32.totalorder %s13, 1
    %p141 = scmp.ne.s32.totalorder %s136, %s138
    %p142 = scmp.eq.s32.totalorder %s13, 0
    %p143 = por %p141, %p142
    %p144 = scmp.ne.s32.totalorder %s136, %s138
    %p145 = scmp.eq.s32.totalorder %s18, 1
    %p146 = por %p144, %p145
    %p147 = scmp.ne.s32.totalorder %s138, %s139
    %p148 = scmp.eq.s32.totalorder %s18, 0
    %p149 = por %p147, %p148
    %p150 = scmp.ne.s32.totalorder %s138, %s139
    %p151 = scmp.eq.s32.totalorder %s19, 1
    %p152 = por %p150, %p151
    %p154 = scmp.ne.s32.totalorder %s139, %s153
    %p155 = scmp.eq.s32.totalorder %s19, 0
    %p156 = por %p154, %p155
    %s158 = sadd.s32 %s157, 1
    %p161 = scmp.eq.s32.totalorder %s13, 1
    %p162 = scmp.ne.s32.totalorder %s157, %s159
    %p163 = scmp.eq.s32.totalorder %s13, 0
    %p164 = por %p162, %p163
    %p165 = scmp.ne.s32.totalorder %s157, %s159
    %p166 = scmp.eq.s32.totalorder %s18, 1
    %p167 = por %p165, %p166
    %p168 = scmp.ne.s32.totalorder %s159, %s160
    %p169 = scmp.eq.s32.totalorder %s18, 0
    %p170 = por %p168, %p169
    %p171 = scmp.ne.s32.totalorder %s159, %s160
    %p172 = scmp.eq.s32.totalorder %s19, 1
    %p173 = por %p171, %p172
    %p175 = scmp.ne.s32.totalorder %s160, %s174
    %p176 = scmp.eq.s32.totalorder %s19, 0
    %p177 = por %p175, %p176
    %s178 = ssub.s32 %s13, %s20
    %p179 = scmp.eq.s32.totalorder %s178, 0
    %s181 = sadd.s32 %s180, 1
    %s182 = scalar_select %p179, %s180, %s181
    %p185 = pneg %p179
    %p186 = scmp.eq.s32.totalorder %s13, 1
    %p187 = por %p185, %p186
    %p188 = scmp.ne.s32.totalorder %s180, %s183
    %p189 = scmp.eq.s32.totalorder %s13, 0
    %p190 = por %p188, %p189
    %p191 = scmp.ne.s32.totalorder %s180, %s183
    %p192 = scmp.eq.s32.totalorder %s18, 1
    %p193 = por %p191, %p192
    %p194 = scmp.ne.s32.totalorder %s183, %s184
    %p195 = scmp.eq.s32.totalorder %s18, 0
    %p196 = por %p194, %p195
    %p197 = scmp.ne.s32.totalorder %s183, %s184
    %p198 = scmp.eq.s32.totalorder %s19, 1
    %p199 = por %p197, %p198
    %p201 = scmp.ne.s32.totalorder %s184, %s200
    %p202 = scmp.eq.s32.totalorder %s19, 0
    %p203 = por %p201, %p202
    %p204 = scmp.le.s32.totalorder 1, %s13
    %p205 = scmp.lt.s32.totalorder %s13, 3
    %p206 = pnand %p204, %p205
    %p207 = pneg %p206
    // Predicated region
    $region9: #{model_forward.15} parent=5 // pred_check
      _
    $region10: #{model_forward.15} parent=5 // pred_check_branch
      %209 = sbr.rel (%p206) target = $region12
    $region11: #{model_forward.15} parent=5 // pred_region
      %s210 = ssub.s32 %s13, 1
      // Predicated region
      $region13: #{model_forward.15} parent=11 // pred_check
        %p211 = pneg %p86
      $region14: #{model_forward.15} parent=11 // pred_check_branch
        %213 = sbr.rel (%p211) target = $region16
      $region15: #{model_forward.15} parent=11 // pred_region
        _
      $region16: #{model_forward.15} parent=11 // pred_fallthru
        _
      // Predicated region
      $region17: #{model_forward.15} parent=11 // pred_check
        %p214 = pneg %p107
      $region18: #{model_forward.15} parent=11 // pred_check_branch
        %216 = sbr.rel (%p214) target = $region20
      $region19: #{model_forward.15} parent=11 // pred_region
        _
      $region20: #{model_forward.15} parent=11 // pred_fallthru
        _
      // Predicated region
      $region21: #{model_forward.15} parent=11 // pred_check
        %p217 = pneg %p128
      $region22: #{model_forward.15} parent=11 // pred_check_branch
        %219 = sbr.rel (%p217) target = $region24
      $region23: #{model_forward.15} parent=11 // pred_region
        _
      $region24: #{model_forward.15} parent=11 // pred_fallthru
        _
      // Predicated region
      $region25: #{model_forward.15} parent=11 // pred_check
        %p220 = pneg %p149
      $region26: #{model_forward.15} parent=11 // pred_check_branch
        %222 = sbr.rel (%p220) target = $region28
      $region27: #{model_forward.15} parent=11 // pred_region
        _
      $region28: #{model_forward.15} parent=11 // pred_fallthru
        _
      // Predicated region
      $region29: #{model_forward.15} parent=11 // pred_check
        %p223 = pneg %p170
      $region30: #{model_forward.15} parent=11 // pred_check_branch
        %225 = sbr.rel (%p223) target = $region32
      $region31: #{model_forward.15} parent=11 // pred_region
        _
      $region32: #{model_forward.15} parent=11 // pred_fallthru
        _
    $region12: #{model_forward.15} parent=5 // pred_fallthru
      _
    %p226 = scmp.lt.s32.totalorder %s13, 2
    // Predicated region
    $region33: #{model_forward.15} parent=5 // pred_check
      %p227 = pneg %p226
    $region34: #{model_forward.15} parent=5 // pred_check_branch
      %229 = sbr.rel (%p227) target = $region36
    $region35: #{model_forward.15} parent=5 // pred_region
      // Predicated region
      $region37: #{model_forward.15} parent=35 // pred_check
        %p230 = pneg %p33
      $region38: #{model_forward.15} parent=35 // pred_check_branch
        %232 = sbr.rel (%p230) target = $region40
      $region39: #{model_forward.15} parent=35 // pred_region
        %s233 = smul.u32 16, %s13
        %p234 = scmp.lt.s32.totalorder %s233, 31
        %s235 = scalar_select %p234, %s233, 31
        %s236 = smul.addr %s235, 4
        %s237 = scalar_lea.vmem %s0, %s236
        %s238 = smul.u32 16, %s13
      $region40: #{model_forward.15} parent=35 // pred_fallthru
        _
      // Predicated region
      $region41: #{model_forward.15} parent=35 // pred_check
        %p239 = pneg %p59
      $region42: #{model_forward.15} parent=35 // pred_check_branch
        %241 = sbr.rel (%p239) target = $region44
      $region43: #{model_forward.15} parent=35 // pred_region
        %s242 = smul.u32 16, %s13
        %p243 = scmp.lt.s32.totalorder %s242, 31
        %s244 = scalar_select %p243, %s242, 31
        %s245 = smul.addr %s244, 8
        %s246 = scalar_lea.vmem %s1, %s245
        %s247 = smul.u32 16, %s13
      $region44: #{model_forward.15} parent=35 // pred_fallthru
        _
    $region36: #{model_forward.15} parent=5 // pred_fallthru
      _
    %p248 = scmp.le.s32.totalorder 1, %s13
    %p249 = scmp.lt.s32.totalorder %s13, 3
    %p250 = pnand %p248, %p249
    %p251 = pneg %p250
    // Predicated region
    $region45: #{model_forward.15} parent=5 // pred_check
      _
    $region46: #{model_forward.15} parent=5 // pred_check_branch
      %253 = sbr.rel (%p250) target = $region48
    $region47: #{model_forward.15} parent=5 // pred_region
      %s254 = ssub.s32 %s13, 1
      %s255 = smul.u32 16, %s18
      %p256 = scmp.lt.s32.totalorder %s255, 31
      %s257 = scalar_select %p256, %s255, 31
      %s258 = smul.addr %s257, 4
      %s259 = scalar_lea.vmem %s0, %s258
      %p260 = pneg %p39
      %p261 = pneg %p36
      %s262 = smul.u32 16, %s18
      %p263 = scmp.lt.s32.totalorder %s262, 31
      %s264 = scalar_select %p263, %s262, 31
      %s265 = smul.addr %s264, 8
      %s266 = scalar_lea.vmem %s1, %s265
      %p267 = pneg %p65
      %p268 = pneg %p62
      %p269 = pneg %p86
      %p270 = pneg %p83
      %p271 = pneg %p107
      %p272 = pneg %p104
      %p273 = pneg %p128
      %p274 = pneg %p125
      %p275 = pneg %p149
      %p276 = pneg %p146
      %p277 = pneg %p170
      %p278 = pneg %p167
      %p279 = pneg %p196
      %p280 = pneg %p193
      %s281 = smul.u32 16, %s18
      %p282 = scmp.lt.s32.totalorder %s281, 31
      %s283 = scalar_select %p282, %s281, 31
      %s284 = smul.addr %s283, 8
      %s285 = scalar_lea.vmem %s7, %s284
      %s286 = smul.u32 16, %s18
      %p287 = scmp.lt.s32.totalorder %s286, 31
      %s288 = scalar_select %p287, %s286, 31
      %s289 = smul.addr %s288, 4
      %s290 = scalar_lea.vmem %s0, %s289
      %s291 = smul.u32 16, %s18
      %s292 = smul.u32 16, %s18
      %p293 = scmp.lt.s32.totalorder %s292, 31
      %s294 = scalar_select %p293, %s292, 31
      %s295 = smul.addr %s294, 8
      %s296 = scalar_lea.vmem %s1, %s295
      %s297 = smul.u32 16, %s18
      %s298 = smul.u32 16, %s18
      %p299 = scmp.lt.s32.totalorder %s298, 31
      %s300 = scalar_select %p299, %s298, 31
      %s301 = smul.addr %s300, 8
      %s302 = scalar_lea.vmem %s7, %s301
      %s303 = smul.u32 16, %s18
      %v305 = vld [vmem:[%s290] sm:$0xf]
      %v306 = vld [vmem:[%s290 + $0x4] sm:$0xf]
      %v307 = vld [vmem:[%s290 + $0x8] sm:$0xf]
      %v308 = vld [vmem:[%s290 + $0xc] sm:$0xf]
      %v309 = vld [vmem:[%s290 + $0x10] sm:$0xf]
      %v310 = vld [vmem:[%s290 + $0x14] sm:$0xf]
      %v311 = vld [vmem:[%s290 + $0x18] sm:$0xf]
      %v312 = vld [vmem:[%s290 + $0x1c] sm:$0xf]
      %v313 = vld [vmem:[%s290 + $0x20] sm:$0xf]
      %v314 = vld [vmem:[%s290 + $0x24] sm:$0xf]
      %v315 = vld [vmem:[%s290 + $0x28] sm:$0xf]
      %v316 = vld [vmem:[%s290 + $0x2c] sm:$0xf]
      %v317 = vld [vmem:[%s290 + $0x30] sm:$0xf]
      %v318 = vld [vmem:[%s290 + $0x34] sm:$0xf]
      %v319 = vld [vmem:[%s290 + $0x38] sm:$0xf]
      %v320 = vld [vmem:[%s290 + $0x3c] sm:$0xf]
      %v321 = vld [vmem:[%s2] sm:$0xf]
      %v322 = vld [vmem:[%s2 + $0x4] sm:$0xf]
      %v323 = vld [vmem:[%s2 + $0x8] sm:$0xf]
      %v324 = vld [vmem:[%s2 + $0xc] sm:$0xf]
      %v325 = vld [vmem:[%s2 + $0x10] sm:$0xf]
      %v326 = vld [vmem:[%s2 + $0x14] sm:$0xf]
      %v327 = vld [vmem:[%s2 + $0x18] sm:$0xf]
      %v328 = vld [vmem:[%s2 + $0x1c] sm:$0xf]
      %v329 = vld [vmem:[%s3] sm:$0x1]
      %v331 = vlaneseq
      %v332 = vshrl.u32 %v331, 7
      %v333 = vsub.s32 0, %v332
      %v334 = vrot.slane %v329, %v333
      %v352 = vunpack.c.l.b16 %v305
      %v353 = vunpack.c.l.b16 %v306
      %v354 = vunpack.c.l.b16 %v307
      %v355 = vunpack.c.l.b16 %v308
      %v356 = vunpack.c.l.b16 %v309
      %v357 = vunpack.c.l.b16 %v310
      %v358 = vunpack.c.l.b16 %v311
      %v359 = vunpack.c.l.b16 %v312
      %v360 = vunpack.c.l.b16 %v313
      %v361 = vunpack.c.l.b16 %v314
      %v362 = vunpack.c.l.b16 %v315
      %v363 = vunpack.c.l.b16 %v316
      %v364 = vunpack.c.l.b16 %v317
      %v365 = vunpack.c.l.b16 %v318
      %v366 = vunpack.c.l.b16 %v319
      %v367 = vunpack.c.l.b16 %v320
      %v368 = vpack.c.b16 %v353, %v352
      %v369 = vpack.c.b16 %v355, %v354
      %v370 = vpack.c.b16 %v357, %v356
      %v371 = vpack.c.b16 %v359, %v358
      %v372 = vpack.c.b16 %v361, %v360
      %v373 = vpack.c.b16 %v363, %v362
      %v374 = vpack.c.b16 %v365, %v364
      %v375 = vpack.c.b16 %v367, %v366
      %v384 = vunpack.c.l.b16 %v321
      %v385 = vunpack.c.l.b16 %v322
      %v386 = vunpack.c.l.b16 %v323
      %v387 = vunpack.c.l.b16 %v324
      %v388 = vunpack.c.l.b16 %v325
      %v389 = vunpack.c.l.b16 %v326
      %v390 = vunpack.c.l.b16 %v327
      %v391 = vunpack.c.l.b16 %v328
      %v392 = vpack.c.b16 %v385, %v384
      %v393 = vpack.c.b16 %v387, %v386
      %v394 = vpack.c.b16 %v389, %v388
      %v395 = vpack.c.b16 %v391, %v390
      %vm400 = vcmask 523264
      %v402 = vsel %vm400, %v368, 0
      %v405 = vsel %vm400, %v369, 0
      %v408 = vsel %vm400, %v370, 0
      %v411 = vsel %vm400, %v371, 0
      %v414 = vsel %vm400, %v372, 0
      %v417 = vsel %vm400, %v373, 0
      %v420 = vsel %vm400, %v374, 0
      %v423 = vsel %vm400, %v375, 0
      %425 = vmatprep.subr.bf16.mxu0 0
      %426 = vmatpush1.bf16.msra.mxu0 %v392
      %427 = vmatprep.subr.bf16.mxu0 0
      %428 = vmatpush1.bf16.msra.mxu0 %v393
      %429 = vmatprep.subr.bf16.mxu0 0
      %430 = vmatpush1.bf16.msra.mxu0 %v394
      %431 = vmatprep.subr.bf16.mxu0 0
      %432 = vmatpush1.bf16.msra.mxu0 %v395
      %433 = vmatprep.subr.bf16.mxu0 0
      %434 = vmatpush1.bf16.msra.mxu0 0
      %435 = vmatprep.subr.bf16.mxu0 0
      %436 = vmatpush1.bf16.msra.mxu0 0
      %437 = vmatprep.subr.bf16.mxu0 0
      %438 = vmatpush1.bf16.msra.mxu0 0
      %439 = vmatprep.subr.bf16.mxu0 0
      %440 = vmatpush1.bf16.msra.mxu0 0
      %441 = vmatprep.subr.bf16.mxu0 0
      %442 = vmatpush1.bf16.msra.mxu0 0
      %443 = vmatprep.subr.bf16.mxu0 0
      %444 = vmatpush1.bf16.msra.mxu0 0
      %445 = vmatprep.subr.bf16.mxu0 0
      %446 = vmatpush1.bf16.msra.mxu0 0
      %447 = vmatprep.subr.bf16.mxu0 0
      %448 = vmatpush1.bf16.msra.mxu0 0
      %449 = vmatprep.subr.bf16.mxu0 0
      %450 = vmatpush1.bf16.msra.mxu0 0
      %451 = vmatprep.subr.bf16.mxu0 0
      %452 = vmatpush1.bf16.msra.mxu0 0
      %453 = vmatprep.subr.bf16.mxu0 0
      %454 = vmatpush1.bf16.msra.mxu0 0
      %455 = vmatprep.subr.bf16.mxu0 0
      %456 = vmatpush1.bf16.msra.mxu0 0
      %457 = vmatprep.mubr.bf16.mxu0 0
      %458 = vmatmul.mubr.bf16.gmra.mrb[0].mxu0 %v402
      %v459 = vpop.f32.mrb[0].mxu0
      %v460 = vadd.f32 %v334, %v459
      %v461 = vpop.f32.mrb[0].mxu0
      %v462 = vpop.f32.mrb[0].mxu0
      %v463 = vadd.f32 %v334, %v462
      %v464 = vpop.f32.mrb[0].mxu0
      %465 = vmatprep.mubr.bf16.mxu0 0
      %466 = vmatmul.mubr.bf16.gmra.mrb[0].mxu0 %v405
      %v467 = vpop.f32.mrb[0].mxu0
      %v468 = vadd.f32 %v334, %v467
      %v469 = vpop.f32.mrb[0].mxu0
      %v470 = vpop.f32.mrb[0].mxu0
      %v471 = vadd.f32 %v334, %v470
      %v472 = vpop.f32.mrb[0].mxu0
      %473 = vmatprep.mubr.bf16.mxu0 0
      %474 = vmatmul.mubr.bf16.gmra.mrb[0].mxu0 %v408
      %v475 = vpop.f32.mrb[0].mxu0
      %v476 = vadd.f32 %v334, %v475
      %v477 = vpop.f32.mrb[0].mxu0
      %v478 = vpop.f32.mrb[0].mxu0
      %v479 = vadd.f32 %v334, %v478
      %v480 = vpop.f32.mrb[0].mxu0
      %481 = vmatprep.mubr.bf16.mxu0 0
      %482 = vmatmul.mubr.bf16.gmra.mrb[0].mxu0 %v411
      %v483 = vpop.f32.mrb[0].mxu0
      %v484 = vadd.f32 %v334, %v483
      %v485 = vpop.f32.mrb[0].mxu0
      %v486 = vpop.f32.mrb[0].mxu0
      %v487 = vadd.f32 %v334, %v486
      %v488 = vpop.f32.mrb[0].mxu0
      %489 = vmatprep.mubr.bf16.mxu0 0
      %490 = vmatmul.mubr.bf16.gmra.mrb[0].mxu0 %v414
      %v491 = vpop.f32.mrb[0].mxu0
      %v492 = vadd.f32 %v334, %v491
      %v493 = vpop.f32.mrb[0].mxu0
      %v494 = vpop.f32.mrb[0].mxu0
      %v495 = vadd.f32 %v334, %v494
      %v496 = vpop.f32.mrb[0].mxu0
      %497 = vmatprep.mubr.bf16.mxu0 0
      %498 = vmatmul.mubr.bf16.gmra.mrb[0].mxu0 %v417
      %v499 = vpop.f32.mrb[0].mxu0
      %v500 = vadd.f32 %v334, %v499
      %v501 = vpop.f32.mrb[0].mxu0
      %v502 = vpop.f32.mrb[0].mxu0
      %v503 = vadd.f32 %v334, %v502
      %v504 = vpop.f32.mrb[0].mxu0
      %505 = vmatprep.mubr.bf16.mxu0 0
      %506 = vmatmul.mubr.bf16.gmra.mrb[0].mxu0 %v420
      %v507 = vpop.f32.mrb[0].mxu0
      %v508 = vadd.f32 %v334, %v507
      %v509 = vpop.f32.mrb[0].mxu0
      %v510 = vpop.f32.mrb[0].mxu0
      %v511 = vadd.f32 %v334, %v510
      %v512 = vpop.f32.mrb[0].mxu0
      %513 = vmatprep.mubr.bf16.mxu0 0
      %514 = vmatmul.mubr.bf16.gmra.mrb[0].mxu0 %v423
      %v515 = vpop.f32.mrb[0].mxu0
      %v516 = vadd.f32 %v334, %v515
      %v517 = vpop.f32.mrb[0].mxu0
      %v518 = vpop.f32.mrb[0].mxu0
      %v519 = vadd.f32 %v334, %v518
      %v520 = vpop.f32.mrb[0].mxu0
      %521 = vdwg.mxu0
      %vm522 = vcmp.gt.f32.partialorder %v460, 0.0
      %vm523 = vcmp.gt.f32.partialorder %v463, 0.0
      %vm524 = vcmp.gt.f32.partialorder %v468, 0.0
      %vm525 = vcmp.gt.f32.partialorder %v471, 0.0
      %vm526 = vcmp.gt.f32.partialorder %v476, 0.0
      %vm527 = vcmp.gt.f32.partialorder %v479, 0.0
      %vm528 = vcmp.gt.f32.partialorder %v484, 0.0
      %vm529 = vcmp.gt.f32.partialorder %v487, 0.0
      %vm530 = vcmp.gt.f32.partialorder %v492, 0.0
      %vm531 = vcmp.gt.f32.partialorder %v495, 0.0
      %vm532 = vcmp.gt.f32.partialorder %v500, 0.0
      %vm533 = vcmp.gt.f32.partialorder %v503, 0.0
      %vm534 = vcmp.gt.f32.partialorder %v508, 0.0
      %vm535 = vcmp.gt.f32.partialorder %v511, 0.0
      %vm536 = vcmp.gt.f32.partialorder %v516, 0.0
      %vm537 = vcmp.gt.f32.partialorder %v519, 0.0
      %v538 = vmul.f32 %v460, 0.2
      %v539 = vmul.f32 %v463, 0.2
      %v540 = vmul.f32 %v468, 0.2
      %v541 = vmul.f32 %v471, 0.2
      %v542 = vmul.f32 %v476, 0.2
      %v543 = vmul.f32 %v479, 0.2
      %v544 = vmul.f32 %v484, 0.2
      %v545 = vmul.f32 %v487, 0.2
      %v546 = vmul.f32 %v492, 0.2
      %v547 = vmul.f32 %v495, 0.2
      %v548 = vmul.f32 %v500, 0.2
      %v549 = vmul.f32 %v503, 0.2
      %v550 = vmul.f32 %v508, 0.2
      %v551 = vmul.f32 %v511, 0.2
      %v552 = vmul.f32 %v516, 0.2
      %v553 = vmul.f32 %v519, 0.2
      %v554 = vsel %vm522, %v460, %v538
      %v555 = vsel %vm523, %v463, %v539
      %v556 = vsel %vm524, %v468, %v540
      %v557 = vsel %vm525, %v471, %v541
      %v558 = vsel %vm526, %v476, %v542
      %v559 = vsel %vm527, %v479, %v543
      %v560 = vsel %vm528, %v484, %v544
      %v561 = vsel %vm529, %v487, %v545
      %v562 = vsel %vm530, %v492, %v546
      %v563 = vsel %vm531, %v495, %v547
      %v564 = vsel %vm532, %v500, %v548
      %v565 = vsel %vm533, %v503, %v549
      %v566 = vsel %vm534, %v508, %v550
      %v567 = vsel %vm535, %v511, %v551
      %v568 = vsel %vm536, %v516, %v552
      %v569 = vsel %vm537, %v519, %v553
      %v570 = vld [vmem:[%s4] sm:$0x1]
      %v571 = vld [vmem:[%s5] sm:$0x1]
      %v572 = vsel %vm400, %v554, 0.0
      %573 = vadd.xlane.f32.xlu0 %v572
      %v574 = vpop.xlane.xlu0 %573
      %v575 = vsel %vm400, %v555, 0.0
      %576 = vadd.xlane.f32.xlu0 %v575
      %v577 = vpop.xlane.xlu0 %576
      %v578 = vsel %vm400, %v556, 0.0
      %579 = vadd.xlane.f32.xlu0 %v578
      %v580 = vpop.xlane.xlu0 %579
      %v581 = vsel %vm400, %v557, 0.0
      %582 = vadd.xlane.f32.xlu0 %v581
      %v583 = vpop.xlane.xlu0 %582
      %v584 = vsel %vm400, %v558, 0.0
      %585 = vadd.xlane.f32.xlu0 %v584
      %v586 = vpop.xlane.xlu0 %585
      %v587 = vsel %vm400, %v559, 0.0
      %588 = vadd.xlane.f32.xlu0 %v587
      %v589 = vpop.xlane.xlu0 %588
      %v590 = vsel %vm400, %v560, 0.0
      %591 = vadd.xlane.f32.xlu0 %v590
      %v592 = vpop.xlane.xlu0 %591
      %v593 = vsel %vm400, %v561, 0.0
      %594 = vadd.xlane.f32.xlu0 %v593
      %v595 = vpop.xlane.xlu0 %594
      %v596 = vsel %vm400, %v562, 0.0
      %597 = vadd.xlane.f32.xlu0 %v596
      %v598 = vpop.xlane.xlu0 %597
      %v599 = vsel %vm400, %v563, 0.0
      %600 = vadd.xlane.f32.xlu0 %v599
      %v601 = vpop.xlane.xlu0 %600
      %v602 = vsel %vm400, %v564, 0.0
      %603 = vadd.xlane.f32.xlu0 %v602
      %v604 = vpop.xlane.xlu0 %603
      %v605 = vsel %vm400, %v565, 0.0
      %606 = vadd.xlane.f32.xlu0 %v605
      %v607 = vpop.xlane.xlu0 %606
      %v608 = vsel %vm400, %v566, 0.0
      %609 = vadd.xlane.f32.xlu0 %v608
      %v610 = vpop.xlane.xlu0 %609
      %v611 = vsel %vm400, %v567, 0.0
      %612 = vadd.xlane.f32.xlu0 %v611
      %v613 = vpop.xlane.xlu0 %612
      %v614 = vsel %vm400, %v568, 0.0
      %615 = vadd.xlane.f32.xlu0 %v614
      %v616 = vpop.xlane.xlu0 %615
      %v617 = vsel %vm400, %v569, 0.0
      %618 = vadd.xlane.f32.xlu0 %v617
      %v619 = vpop.xlane.xlu0 %618
      %v620 = vrcp.pop 64.0
      %v621 = vmul.f32 %v574, %v620
      %v622 = vmul.f32 %v577, %v620
      %v623 = vmul.f32 %v580, %v620
      %v624 = vmul.f32 %v583, %v620
      %v625 = vmul.f32 %v586, %v620
      %v626 = vmul.f32 %v589, %v620
      %v627 = vmul.f32 %v592, %v620
      %v628 = vmul.f32 %v595, %v620
      %v629 = vmul.f32 %v598, %v620
      %v630 = vmul.f32 %v601, %v620
      %v631 = vmul.f32 %v604, %v620
      %v632 = vmul.f32 %v607, %v620
      %v633 = vmul.f32 %v610, %v620
      %v634 = vmul.f32 %v613, %v620
      %v635 = vmul.f32 %v616, %v620
      %v636 = vmul.f32 %v619, %v620
      %v637 = vsub.f32 %v554, %v621
      %v638 = vsub.f32 %v555, %v622
      %v639 = vsub.f32 %v556, %v623
      %v640 = vsub.f32 %v557, %v624
      %v641 = vsub.f32 %v558, %v625
      %v642 = vsub.f32 %v559, %v626
      %v643 = vsub.f32 %v560, %v627
      %v644 = vsub.f32 %v561, %v628
      %v645 = vsub.f32 %v562, %v629
      %v646 = vsub.f32 %v563, %v630
      %v647 = vsub.f32 %v564, %v631
      %v648 = vsub.f32 %v565, %v632
      %v649 = vsub.f32 %v566, %v633
      %v650 = vsub.f32 %v567, %v634
      %v651 = vsub.f32 %v568, %v635
      %v652 = vsub.f32 %v569, %v636
      %v653 = vmul.f32 %v637, %v637
      %v654 = vmul.f32 %v638, %v638
      %v655 = vmul.f32 %v639, %v639
      %v656 = vmul.f32 %v640, %v640
      %v657 = vmul.f32 %v641, %v641
      %v658 = vmul.f32 %v642, %v642
      %v659 = vmul.f32 %v643, %v643
      %v660 = vmul.f32 %v644, %v644
      %v661 = vmul.f32 %v645, %v645
      %v662 = vmul.f32 %v646, %v646
      %v663 = vmul.f32 %v647, %v647
      %v664 = vmul.f32 %v648, %v648
      %v665 = vmul.f32 %v649, %v649
      %v666 = vmul.f32 %v650, %v650
      %v667 = vmul.f32 %v651, %v651
      %v668 = vmul.f32 %v652, %v652
      %v669 = vsel %vm400, %v653, 0.0
      %670 = vadd.xlane.f32.xlu0 %v669
      %v671 = vpop.xlane.xlu0 %670
      %v672 = vsel %vm400, %v654, 0.0
      %673 = vadd.xlane.f32.xlu0 %v672
      %v674 = vpop.xlane.xlu0 %673
      %v675 = vsel %vm400, %v655, 0.0
      %676 = vadd.xlane.f32.xlu0 %v675
      %v677 = vpop.xlane.xlu0 %676
      %v678 = vsel %vm400, %v656, 0.0
      %679 = vadd.xlane.f32.xlu0 %v678
      %v680 = vpop.xlane.xlu0 %679
      %v681 = vsel %vm400, %v657, 0.0
      %682 = vadd.xlane.f32.xlu0 %v681
      %v683 = vpop.xlane.xlu0 %682
      %v684 = vsel %vm400, %v658, 0.0
      %685 = vadd.xlane.f32.xlu0 %v684
      %v686 = vpop.xlane.xlu0 %685
      %v687 = vsel %vm400, %v659, 0.0
      %688 = vadd.xlane.f32.xlu0 %v687
      %v689 = vpop.xlane.xlu0 %688
      %v690 = vsel %vm400, %v660, 0.0
      %691 = vadd.xlane.f32.xlu0 %v690
      %v692 = vpop.xlane.xlu0 %691
      %v693 = vsel %vm400, %v661, 0.0
      %694 = vadd.xlane.f32.xlu0 %v693
      %v695 = vpop.xlane.xlu0 %694
      %v696 = vsel %vm400, %v662, 0.0
      %697 = vadd.xlane.f32.xlu0 %v696
      %v698 = vpop.xlane.xlu0 %697
      %v699 = vsel %vm400, %v663, 0.0
      %700 = vadd.xlane.f32.xlu0 %v699
      %v701 = vpop.xlane.xlu0 %700
      %v702 = vsel %vm400, %v664, 0.0
      %703 = vadd.xlane.f32.xlu0 %v702
      %v704 = vpop.xlane.xlu0 %703
      %v705 = vsel %vm400, %v665, 0.0
      %706 = vadd.xlane.f32.xlu0 %v705
      %v707 = vpop.xlane.xlu0 %706
      %v708 = vsel %vm400, %v666, 0.0
      %709 = vadd.xlane.f32.xlu0 %v708
      %v710 = vpop.xlane.xlu0 %709
      %v711 = vsel %vm400, %v667, 0.0
      %712 = vadd.xlane.f32.xlu0 %v711
      %v713 = vpop.xlane.xlu0 %712
      %v714 = vsel %vm400, %v668, 0.0
      %715 = vadd.xlane.f32.xlu0 %v714
      %v716 = vpop.xlane.xlu0 %715
      %v717 = vmul.f32 %v671, %v620
      %v718 = vmul.f32 %v674, %v620
      %v719 = vmul.f32 %v677, %v620
      %v720 = vmul.f32 %v680, %v620
      %v721 = vmul.f32 %v683, %v620
      %v722 = vmul.f32 %v686, %v620
      %v723 = vmul.f32 %v689, %v620
      %v724 = vmul.f32 %v692, %v620
      %v725 = vmul.f32 %v695, %v620
      %v726 = vmul.f32 %v698, %v620
      %v727 = vmul.f32 %v701, %v620
      %v728 = vmul.f32 %v704, %v620
      %v729 = vmul.f32 %v707, %v620
      %v730 = vmul.f32 %v710, %v620
      %v731 = vmul.f32 %v713, %v620
      %v732 = vmul.f32 %v716, %v620
      %v733 = vadd.f32 %v717, 1e-05
      %v734 = vadd.f32 %v718, 1e-05
      %v735 = vadd.f32 %v719, 1e-05
      %v736 = vadd.f32 %v720, 1e-05
      %v737 = vadd.f32 %v721, 1e-05
      %v738 = vadd.f32 %v722, 1e-05
      %v739 = vadd.f32 %v723, 1e-05
      %v740 = vadd.f32 %v724, 1e-05
      %v741 = vadd.f32 %v725, 1e-05
      %v742 = vadd.f32 %v726, 1e-05
      %v743 = vadd.f32 %v727, 1e-05
      %v744 = vadd.f32 %v728, 1e-05
      %v745 = vadd.f32 %v729, 1e-05
      %v746 = vadd.f32 %v730, 1e-05
      %v747 = vadd.f32 %v731, 1e-05
      %v748 = vadd.f32 %v732, 1e-05
      %v749 = vrsqrt.pop %v733
      %v750 = vrsqrt.pop %v734
      %v751 = vrsqrt.pop %v735
      %v752 = vrsqrt.pop %v736
      %v753 = vrsqrt.pop %v737
      %v754 = vrsqrt.pop %v738
      %v755 = vrsqrt.pop %v739
      %v756 = vrsqrt.pop %v740
      %v757 = vrsqrt.pop %v741
      %v758 = vrsqrt.pop %v742
      %v759 = vrsqrt.pop %v743
      %v760 = vrsqrt.pop %v744
      %v761 = vrsqrt.pop %v745
      %v762 = vrsqrt.pop %v746
      %v763 = vrsqrt.pop %v747
      %v764 = vrsqrt.pop %v748
      %v765 = vmul.f32 %v637, %v749
      %v766 = vmul.f32 %v638, %v750
      %v767 = vmul.f32 %v639, %v751
      %v768 = vmul.f32 %v640, %v752
      %v769 = vmul.f32 %v641, %v753
      %v770 = vmul.f32 %v642, %v754
      %v771 = vmul.f32 %v643, %v755
      %v772 = vmul.f32 %v644, %v756
      %v773 = vmul.f32 %v645, %v757
      %v774 = vmul.f32 %v646, %v758
      %v775 = vmul.f32 %v647, %v759
      %v776 = vmul.f32 %v648, %v760
      %v777 = vmul.f32 %v649, %v761
      %v778 = vmul.f32 %v650, %v762
      %v779 = vmul.f32 %v651, %v763
      %v780 = vmul.f32 %v652, %v764
      %v782 = vlaneseq
      %v783 = vshrl.u32 %v782, 7
      %v784 = vsub.s32 0, %v783
      %v785 = vrot.slane %v570, %v784
      %v787 = vmul.f32 %v765, %v785
      %v788 = vmul.f32 %v766, %v785
      %v789 = vmul.f32 %v767, %v785
      %v790 = vmul.f32 %v768, %v785
      %v791 = vmul.f32 %v769, %v785
      %v792 = vmul.f32 %v770, %v785
      %v793 = vmul.f32 %v771, %v785
      %v794 = vmul.f32 %v772, %v785
      %v795 = vmul.f32 %v773, %v785
      %v796 = vmul.f32 %v774, %v785
      %v797 = vmul.f32 %v775, %v785
      %v798 = vmul.f32 %v776, %v785
      %v799 = vmul.f32 %v777, %v785
      %v800 = vmul.f32 %v778, %v785
      %v801 = vmul.f32 %v779, %v785
      %v802 = vmul.f32 %v780, %v785
      %v804 = vlaneseq
      %v805 = vshrl.u32 %v804, 7
      %v806 = vsub.s32 0, %v805
      %v807 = vrot.slane %v571, %v806
      %v809 = vadd.f32 %v787, %v807
      %v810 = vadd.f32 %v788, %v807
      %v811 = vadd.f32 %v789, %v807
      %v812 = vadd.f32 %v790, %v807
      %v813 = vadd.f32 %v791, %v807
      %v814 = vadd.f32 %v792, %v807
      %v815 = vadd.f32 %v793, %v807
      %v816 = vadd.f32 %v794, %v807
      %v817 = vadd.f32 %v795, %v807
      %v818 = vadd.f32 %v796, %v807
      %v819 = vadd.f32 %v797, %v807
      %v820 = vadd.f32 %v798, %v807
      %v821 = vadd.f32 %v799, %v807
      %v822 = vadd.f32 %v800, %v807
      %v823 = vadd.f32 %v801, %v807
      %v824 = vadd.f32 %v802, %v807
      %v825 = vpack.c.bf16 %v810, %v809
      %v826 = vpack.c.bf16 %v812, %v811
      %v827 = vpack.c.bf16 %v814, %v813
      %v828 = vpack.c.bf16 %v816, %v815
      %v829 = vpack.c.bf16 %v818, %v817
      %v830 = vpack.c.bf16 %v820, %v819
      %v831 = vpack.c.bf16 %v822, %v821
      %v832 = vpack.c.bf16 %v824, %v823
      %s833 = scalar_lea.vmem %s2, 32
      %v834 = vld [vmem:[%s833] sm:$0xf]
      %v835 = vld [vmem:[%s833 + $0x4] sm:$0xf]
      %v836 = vld [vmem:[%s833 + $0x8] sm:$0xf]
      %v837 = vld [vmem:[%s833 + $0xc] sm:$0xf]
      %v838 = vld [vmem:[%s833 + $0x10] sm:$0xf]
      %v839 = vld [vmem:[%s833 + $0x14] sm:$0xf]
      %v840 = vld [vmem:[%s833 + $0x18] sm:$0xf]
      %v841 = vld [vmem:[%s833 + $0x1c] sm:$0xf]
      %s842 = scalar_lea.vmem %s3, 1
      %v843 = vld [vmem:[%s842] sm:$0x1]
      %v845 = vlaneseq
      %v846 = vshrl.u32 %v845, 7
      %v847 = vsub.s32 0, %v846
      %v848 = vrot.slane %v843, %v847
      %v858 = vunpack.c.l.b16 %v834
      %v859 = vunpack.c.l.b16 %v835
      %v860 = vunpack.c.l.b16 %v836
      %v861 = vunpack.c.l.b16 %v837
      %v862 = vunpack.c.l.b16 %v838
      %v863 = vunpack.c.l.b16 %v839
      %v864 = vunpack.c.l.b16 %v840
      %v865 = vunpack.c.l.b16 %v841
      %v866 = vpack.c.b16 %v859, %v858
      %v867 = vpack.c.b16 %v861, %v860
      %v868 = vpack.c.b16 %v863, %v862
      %v869 = vpack.c.b16 %v865, %v864
      %v875 = vsel %vm400, %v825, 0
      %v878 = vsel %vm400, %v826, 0
      %v881 = vsel %vm400, %v827, 0
      %v884 = vsel %vm400, %v828, 0
      %v887 = vsel %vm400, %v829, 0
      %v890 = vsel %vm400, %v830, 0
      %v893 = vsel %vm400, %v831, 0
      %v896 = vsel %vm400, %v832, 0
      %898 = vmatprep.subr.bf16.mxu0 0
      %899 = vmatpush1.bf16.msra.mxu0 %v866
      %900 = vmatprep.subr.bf16.mxu0 0
      %901 = vmatpush1.bf16.msra.mxu0 %v867
      %902 = vmatprep.subr.bf16.mxu0 0
      %903 = vmatpush1.bf16.msra.mxu0 %v868
      %904 = vmatprep.subr.bf16.mxu0 0
      %905 = vmatpush1.bf16.msra.mxu0 %v869
      %906 = vmatprep.subr.bf16.mxu0 0
      %907 = vmatpush1.bf16.msra.mxu0 0
      %908 = vmatprep.subr.bf16.mxu0 0
      %909 = vmatpush1.bf16.msra.mxu0 0
      %910 = vmatprep.subr.bf16.mxu0 0
      %911 = vmatpush1.bf16.msra.mxu0 0
      %912 = vmatprep.subr.bf16.mxu0 0
      %913 = vmatpush1.bf16.msra.mxu0 0
      %914 = vmatprep.subr.bf16.mxu0 0
      %915 = vmatpush1.bf16.msra.mxu0 0
      %916 = vmatprep.subr.bf16.mxu0 0
      %917 = vmatpush1.bf16.msra.mxu0 0
      %918 = vmatprep.subr.bf16.mxu0 0
      %919 = vmatpush1.bf16.msra.mxu0 0
      %920 = vmatprep.subr.bf16.mxu0 0
      %921 = vmatpush1.bf16.msra.mxu0 0
      %922 = vmatprep.subr.bf16.mxu0 0
      %923 = vmatpush1.bf16.msra.mxu0 0
      %924 = vmatprep.subr.bf16.mxu0 0
      %925 = vmatpush1.bf16.msra.mxu0 0
      %926 = vmatprep.subr.bf16.mxu0 0
      %927 = vmatpush1.bf16.msra.mxu0 0
      %928 = vmatprep.subr.bf16.mxu0 0
      %929 = vmatpush1.bf16.msra.mxu0 0
      %930 = vmatprep.mubr.bf16.mxu0 0
      %931 = vmatmul.mubr.bf16.gmra.mrb[0].mxu0 %v875
      %v932 = vpop.f32.mrb[0].mxu0
      %v933 = vadd.f32 %v848, %v932
      %v934 = vpop.f32.mrb[0].mxu0
      %v935 = vpop.f32.mrb[0].mxu0
      %v936 = vadd.f32 %v848, %v935
      %v937 = vpop.f32.mrb[0].mxu0
      %938 = vmatprep.mubr.bf16.mxu0 0
      %939 = vmatmul.mubr.bf16.gmra.mrb[0].mxu0 %v878
      %v940 = vpop.f32.mrb[0].mxu0
      %v941 = vadd.f32 %v848, %v940
      %v942 = vpop.f32.mrb[0].mxu0
      %v943 = vpop.f32.mrb[0].mxu0
      %v944 = vadd.f32 %v848, %v943
      %v945 = vpop.f32.mrb[0].mxu0
      %946 = vmatprep.mubr.bf16.mxu0 0
      %947 = vmatmul.mubr.bf16.gmra.mrb[0].mxu0 %v881
      %v948 = vpop.f32.mrb[0].mxu0
      %v949 = vadd.f32 %v848, %v948
      %v950 = vpop.f32.mrb[0].mxu0
      %v951 = vpop.f32.mrb[0].mxu0
      %v952 = vadd.f32 %v848, %v951
      %v953 = vpop.f32.mrb[0].mxu0
      %954 = vmatprep.mubr.bf16.mxu0 0
      %955 = vmatmul.mubr.bf16.gmra.mrb[0].mxu0 %v884
      %v956 = vpop.f32.mrb[0].mxu0
      %v957 = vadd.f32 %v848, %v956
      %v958 = vpop.f32.mrb[0].mxu0
      %v959 = vpop.f32.mrb[0].mxu0
      %v960 = vadd.f32 %v848, %v959
      %v961 = vpop.f32.mrb[0].mxu0
      %962 = vmatprep.mubr.bf16.mxu0 0
      %963 = vmatmul.mubr.bf16.gmra.mrb[0].mxu0 %v887
      %v964 = vpop.f32.mrb[0].mxu0
      %v965 = vadd.f32 %v848, %v964
      %v966 = vpop.f32.mrb[0].mxu0
      %v967 = vpop.f32.mrb[0].mxu0
      %v968 = vadd.f32 %v848, %v967
      %v969 = vpop.f32.mrb[0].mxu0
      %970 = vmatprep.mubr.bf16.mxu0 0
      %971 = vmatmul.mubr.bf16.gmra.mrb[0].mxu0 %v890
      %v972 = vpop.f32.mrb[0].mxu0
      %v973 = vadd.f32 %v848, %v972
      %v974 = vpop.f32.mrb[0].mxu0
      %v975 = vpop.f32.mrb[0].mxu0
      %v976 = vadd.f32 %v848, %v975
      %v977 = vpop.f32.mrb[0].mxu0
      %978 = vmatprep.mubr.bf16.mxu0 0
      %979 = vmatmul.mubr.bf16.gmra.mrb[0].mxu0 %v893
      %v980 = vpop.f32.mrb[0].mxu0
      %v981 = vadd.f32 %v848, %v980
      %v982 = vpop.f32.mrb[0].mxu0
      %v983 = vpop.f32.mrb[0].mxu0
      %v984 = vadd.f32 %v848, %v983
      %v985 = vpop.f32.mrb[0].mxu0
      %986 = vmatprep.mubr.bf16.mxu0 0
      %987 = vmatmul.mubr.bf16.gmra.mrb[0].mxu0 %v896
      %v988 = vpop.f32.mrb[0].mxu0
      %v989 = vadd.f32 %v848, %v988
      %v990 = vpop.f32.mrb[0].mxu0
      %v991 = vpop.f32.mrb[0].mxu0
      %v992 = vadd.f32 %v848, %v991
      %v993 = vpop.f32.mrb[0].mxu0
      %994 = vdwg.mxu0
      %vm995 = vcmp.gt.f32.partialorder %v933, 0.0
      %vm996 = vcmp.gt.f32.partialorder %v936, 0.0
      %vm997 = vcmp.gt.f32.partialorder %v941, 0.0
      %vm998 = vcmp.gt.f32.partialorder %v944, 0.0
      %vm999 = vcmp.gt.f32.partialorder %v949, 0.0
      %vm1000 = vcmp.gt.f32.partialorder %v952, 0.0
      %vm1001 = vcmp.gt.f32.partialorder %v957, 0.0
      %vm1002 = vcmp.gt.f32.partialorder %v960, 0.0
      %vm1003 = vcmp.gt.f32.partialorder %v965, 0.0
      %vm1004 = vcmp.gt.f32.partialorder %v968, 0.0
      %vm1005 = vcmp.gt.f32.partialorder %v973, 0.0
      %vm1006 = vcmp.gt.f32.partialorder %v976, 0.0
      %vm1007 = vcmp.gt.f32.partialorder %v981, 0.0
      %vm1008 = vcmp.gt.f32.partialorder %v984, 0.0
      %vm1009 = vcmp.gt.f32.partialorder %v989, 0.0
      %vm1010 = vcmp.gt.f32.partialorder %v992, 0.0
      %v1011 = vmul.f32 %v933, 0.2
      %v1012 = vmul.f32 %v936, 0.2
      %v1013 = vmul.f32 %v941, 0.2
      %v1014 = vmul.f32 %v944, 0.2
      %v1015 = vmul.f32 %v949, 0.2
      %v1016 = vmul.f32 %v952, 0.2
      %v1017 = vmul.f32 %v957, 0.2
      %v1018 = vmul.f32 %v960, 0.2
      %v1019 = vmul.f32 %v965, 0.2
      %v1020 = vmul.f32 %v968, 0.2
      %v1021 = vmul.f32 %v973, 0.2
      %v1022 = vmul.f32 %v976, 0.2
      %v1023 = vmul.f32 %v981, 0.2
      %v1024 = vmul.f32 %v984, 0.2
      %v1025 = vmul.f32 %v989, 0.2
      %v1026 = vmul.f32 %v992, 0.2
      %v1027 = vsel %vm995, %v933, %v1011
      %v1028 = vsel %vm996, %v936, %v1012
      %v1029 = vsel %vm997, %v941, %v1013
      %v1030 = vsel %vm998, %v944, %v1014
      %v1031 = vsel %vm999, %v949, %v1015
      %v1032 = vsel %vm1000, %v952, %v1016
      %v1033 = vsel %vm1001, %v957, %v1017
      %v1034 = vsel %vm1002, %v960, %v1018
      %v1035 = vsel %vm1003, %v965, %v1019
      %v1036 = vsel %vm1004, %v968, %v1020
      %v1037 = vsel %vm1005, %v973, %v1021
      %v1038 = vsel %vm1006, %v976, %v1022
      %v1039 = vsel %vm1007, %v981, %v1023
      %v1040 = vsel %vm1008, %v984, %v1024
      %v1041 = vsel %vm1009, %v989, %v1025
      %v1042 = vsel %vm1010, %v992, %v1026
      %s1043 = scalar_lea.vmem %s4, 1
      %v1044 = vld [vmem:[%s1043] sm:$0x1]
      %s1045 = scalar_lea.vmem %s5, 1
      %v1046 = vld [vmem:[%s1045] sm:$0x1]
      %v1047 = vsel %vm400, %v1027, 0.0
      %1048 = vadd.xlane.f32.xlu0 %v1047
      %v1049 = vpop.xlane.xlu0 %1048
      %v1050 = vsel %vm400, %v1028, 0.0
      %1051 = vadd.xlane.f32.xlu0 %v1050
      %v1052 = vpop.xlane.xlu0 %1051
      %v1053 = vsel %vm400, %v1029, 0.0
      %1054 = vadd.xlane.f32.xlu0 %v1053
      %v1055 = vpop.xlane.xlu0 %1054
      %v1056 = vsel %vm400, %v1030, 0.0
      %1057 = vadd.xlane.f32.xlu0 %v1056
      %v1058 = vpop.xlane.xlu0 %1057
      %v1059 = vsel %vm400, %v1031, 0.0
      %1060 = vadd.xlane.f32.xlu0 %v1059
      %v1061 = vpop.xlane.xlu0 %1060
      %v1062 = vsel %vm400, %v1032, 0.0
      %1063 = vadd.xlane.f32.xlu0 %v1062
      %v1064 = vpop.xlane.xlu0 %1063
      %v1065 = vsel %vm400, %v1033, 0.0
      %1066 = vadd.xlane.f32.xlu0 %v1065
      %v1067 = vpop.xlane.xlu0 %1066
      %v1068 = vsel %vm400, %v1034, 0.0
      %1069 = vadd.xlane.f32.xlu0 %v1068
      %v1070 = vpop.xlane.xlu0 %1069
      %v1071 = vsel %vm400, %v1035, 0.0
      %1072 = vadd.xlane.f32.xlu0 %v1071
      %v1073 = vpop.xlane.xlu0 %1072
      %v1074 = vsel %vm400, %v1036, 0.0
      %1075 = vadd.xlane.f32.xlu0 %v1074
      %v1076 = vpop.xlane.xlu0 %1075
      %v1077 = vsel %vm400, %v1037, 0.0
      %1078 = vadd.xlane.f32.xlu0 %v1077
      %v1079 = vpop.xlane.xlu0 %1078
      %v1080 = vsel %vm400, %v1038, 0.0
      %1081 = vadd.xlane.f32.xlu0 %v1080
      %v1082 = vpop.xlane.xlu0 %1081
      %v1083 = vsel %vm400, %v1039, 0.0
      %1084 = vadd.xlane.f32.xlu0 %v1083
      %v1085 = vpop.xlane.xlu0 %1084
      %v1086 = vsel %vm400, %v1040, 0.0
      %1087 = vadd.xlane.f32.xlu0 %v1086
      %v1088 = vpop.xlane.xlu0 %1087
      %v1089 = vsel %vm400, %v1041, 0.0
      %1090 = vadd.xlane.f32.xlu0 %v1089
      %v1091 = vpop.xlane.xlu0 %1090
      %v1092 = vsel %vm400, %v1042, 0.0
      %1093 = vadd.xlane.f32.xlu0 %v1092
      %v1094 = vpop.xlane.xlu0 %1093
      %v1095 = vmul.f32 %v1049, %v620
      %v1096 = vmul.f32 %v1052, %v620
      %v1097 = vmul.f32 %v1055, %v620
      %v1098 = vmul.f32 %v1058, %v620
      %v1099 = vmul.f32 %v1061, %v620
      %v1100 = vmul.f32 %v1064, %v620
      %v1101 = vmul.f32 %v1067, %v620
      %v1102 = vmul.f32 %v1070, %v620
      %v1103 = vmul.f32 %v1073, %v620
      %v1104 = vmul.f32 %v1076, %v620
      %v1105 = vmul.f32 %v1079, %v620
      %v1106 = vmul.f32 %v1082, %v620
      %v1107 = vmul.f32 %v1085, %v620
      %v1108 = vmul.f32 %v1088, %v620
      %v1109 = vmul.f32 %v1091, %v620
      %v1110 = vmul.f32 %v1094, %v620
      %v1111 = vsub.f32 %v1027, %v1095
      %v1112 = vsub.f32 %v1028, %v1096
      %v1113 = vsub.f32 %v1029, %v1097
      %v1114 = vsub.f32 %v1030, %v1098
      %v1115 = vsub.f32 %v1031, %v1099
      %v1116 = vsub.f32 %v1032, %v1100
      %v1117 = vsub.f32 %v1033, %v1101
      %v1118 = vsub.f32 %v1034, %v1102
      %v1119 = vsub.f32 %v1035, %v1103
      %v1120 = vsub.f32 %v1036, %v1104
      %v1121 = vsub.f32 %v1037, %v1105
      %v1122 = vsub.f32 %v1038, %v1106
      %v1123 = vsub.f32 %v1039, %v1107
      %v1124 = vsub.f32 %v1040, %v1108
      %v1125 = vsub.f32 %v1041, %v1109
      %v1126 = vsub.f32 %v1042, %v1110
      %v1127 = vmul.f32 %v1111, %v1111
      %v1128 = vmul.f32 %v1112, %v1112
      %v1129 = vmul.f32 %v1113, %v1113
      %v1130 = vmul.f32 %v1114, %v1114
      %v1131 = vmul.f32 %v1115, %v1115
      %v1132 = vmul.f32 %v1116, %v1116
      %v1133 = vmul.f32 %v1117, %v1117
      %v1134 = vmul.f32 %v1118, %v1118
      %v1135 = vmul.f32 %v1119, %v1119
      %v1136 = vmul.f32 %v1120, %v1120
      %v1137 = vmul.f32 %v1121, %v1121
      %v1138 = vmul.f32 %v1122, %v1122
      %v1139 = vmul.f32 %v1123, %v1123
      %v1140 = vmul.f32 %v1124, %v1124
      %v1141 = vmul.f32 %v1125, %v1125
      %v1142 = vmul.f32 %v1126, %v1126
      %v1143 = vsel %vm400, %v1127, 0.0
      %1144 = vadd.xlane.f32.xlu0 %v1143
      %v1145 = vpop.xlane.xlu0 %1144
      %v1146 = vsel %vm400, %v1128, 0.0
      %1147 = vadd.xlane.f32.xlu0 %v1146
      %v1148 = vpop.xlane.xlu0 %1147
      %v1149 = vsel %vm400, %v1129, 0.0
      %1150 = vadd.xlane.f32.xlu0 %v1149
      %v1151 = vpop.xlane.xlu0 %1150
      %v1152 = vsel %vm400, %v1130, 0.0
      %1153 = vadd.xlane.f32.xlu0 %v1152
      %v1154 = vpop.xlane.xlu0 %1153
      %v1155 = vsel %vm400, %v1131, 0.0
      %1156 = vadd.xlane.f32.xlu0 %v1155
      %v1157 = vpop.xlane.xlu0 %1156
      %v1158 = vsel %vm400, %v1132, 0.0
      %1159 = vadd.xlane.f32.xlu0 %v1158
      %v1160 = vpop.xlane.xlu0 %1159
      %v1161 = vsel %vm400, %v1133, 0.0
      %1162 = vadd.xlane.f32.xlu0 %v1161
      %v1163 = vpop.xlane.xlu0 %1162
      %v1164 = vsel %vm400, %v1134, 0.0
      %1165 = vadd.xlane.f32.xlu0 %v1164
      %v1166 = vpop.xlane.xlu0 %1165
      %v1167 = vsel %vm400, %v1135, 0.0
      %1168 = vadd.xlane.f32.xlu0 %v1167
      %v1169 = vpop.xlane.xlu0 %1168
      %v1170 = vsel %vm400, %v1136, 0.0
      %1171 = vadd.xlane.f32.xlu0 %v1170
      %v1172 = vpop.xlane.xlu0 %1171
      %v1173 = vsel %vm400, %v1137, 0.0
      %1174 = vadd.xlane.f32.xlu0 %v1173
      %v1175 = vpop.xlane.xlu0 %1174
      %v1176 = vsel %vm400, %v1138, 0.0
      %1177 = vadd.xlane.f32.xlu0 %v1176
      %v1178 = vpop.xlane.xlu0 %1177
      %v1179 = vsel %vm400, %v1139, 0.0
      %1180 = vadd.xlane.f32.xlu0 %v1179
      %v1181 = vpop.xlane.xlu0 %1180
      %v1182 = vsel %vm400, %v1140, 0.0
      %1183 = vadd.xlane.f32.xlu0 %v1182
      %v1184 = vpop.xlane.xlu0 %1183
      %v1185 = vsel %vm400, %v1141, 0.0
      %1186 = vadd.xlane.f32.xlu0 %v1185
      %v1187 = vpop.xlane.xlu0 %1186
      %v1188 = vsel %vm400, %v1142, 0.0
      %1189 = vadd.xlane.f32.xlu0 %v1188
      %v1190 = vpop.xlane.xlu0 %1189
      %v1191 = vmul.f32 %v1145, %v620
      %v1192 = vmul.f32 %v1148, %v620
      %v1193 = vmul.f32 %v1151, %v620
      %v1194 = vmul.f32 %v1154, %v620
      %v1195 = vmul.f32 %v1157, %v620
      %v1196 = vmul.f32 %v1160, %v620
      %v1197 = vmul.f32 %v1163, %v620
      %v1198 = vmul.f32 %v1166, %v620
      %v1199 = vmul.f32 %v1169, %v620
      %v1200 = vmul.f32 %v1172, %v620
      %v1201 = vmul.f32 %v1175, %v620
      %v1202 = vmul.f32 %v1178, %v620
      %v1203 = vmul.f32 %v1181, %v620
      %v1204 = vmul.f32 %v1184, %v620
      %v1205 = vmul.f32 %v1187, %v620
      %v1206 = vmul.f32 %v1190, %v620
      %v1207 = vadd.f32 %v1191, 1e-05
      %v1208 = vadd.f32 %v1192, 1e-05
      %v1209 = vadd.f32 %v1193, 1e-05
      %v1210 = vadd.f32 %v1194, 1e-05
      %v1211 = vadd.f32 %v1195, 1e-05
      %v1212 = vadd.f32 %v1196, 1e-05
      %v1213 = vadd.f32 %v1197, 1e-05
      %v1214 = vadd.f32 %v1198, 1e-05
      %v1215 = vadd.f32 %v1199, 1e-05
      %v1216 = vadd.f32 %v1200, 1e-05
      %v1217 = vadd.f32 %v1201, 1e-05
      %v1218 = vadd.f32 %v1202, 1e-05
      %v1219 = vadd.f32 %v1203, 1e-05
      %v1220 = vadd.f32 %v1204, 1e-05
      %v1221 = vadd.f32 %v1205, 1e-05
      %v1222 = vadd.f32 %v1206, 1e-05
      %v1223 = vrsqrt.pop %v1207
      %v1224 = vrsqrt.pop %v1208
      %v1225 = vrsqrt.pop %v1209
      %v1226 = vrsqrt.pop %v1210
      %v1227 = vrsqrt.pop %v1211
      %v1228 = vrsqrt.pop %v1212
      %v1229 = vrsqrt.pop %v1213
      %v1230 = vrsqrt.pop %v1214
      %v1231 = vrsqrt.pop %v1215
      %v1232 = vrsqrt.pop %v1216
      %v1233 = vrsqrt.pop %v1217
      %v1234 = vrsqrt.pop %v1218
      %v1235 = vrsqrt.pop %v1219
      %v1236 = vrsqrt.pop %v1220
      %v1237 = vrsqrt.pop %v1221
      %v1238 = vrsqrt.pop %v1222
      %v1239 = vmul.f32 %v1111, %v1223
      %v1240 = vmul.f32 %v1112, %v1224
      %v1241 = vmul.f32 %v1113, %v1225
      %v1242 = vmul.f32 %v1114, %v1226
      %v1243 = vmul.f32 %v1115, %v1227
      %v1244 = vmul.f32 %v1116, %v1228
      %v1245 = vmul.f32 %v1117, %v1229
      %v1246 = vmul.f32 %v1118, %v1230
      %v1247 = vmul.f32 %v1119, %v1231
      %v1248 = vmul.f32 %v1120, %v1232
      %v1249 = vmul.f32 %v1121, %v1233
      %v1250 = vmul.f32 %v1122, %v1234
      %v1251 = vmul.f32 %v1123, %v1235
      %v1252 = vmul.f32 %v1124, %v1236
      %v1253 = vmul.f32 %v1125, %v1237
      %v1254 = vmul.f32 %v1126, %v1238
      %v1256 = vlaneseq
      %v1257 = vshrl.u32 %v1256, 7
      %v1258 = vsub.s32 0, %v1257
      %v1259 = vrot.slane %v1044, %v1258
      %v1261 = vmul.f32 %v1239, %v1259
      %v1262 = vmul.f32 %v1240, %v1259
      %v1263 = vmul.f32 %v1241, %v1259
      %v1264 = vmul.f32 %v1242, %v1259
      %v1265 = vmul.f32 %v1243, %v1259
      %v1266 = vmul.f32 %v1244, %v1259
      %v1267 = vmul.f32 %v1245, %v1259
      %v1268 = vmul.f32 %v1246, %v1259
      %v1269 = vmul.f32 %v1247, %v1259
      %v1270 = vmul.f32 %v1248, %v1259
      %v1271 = vmul.f32 %v1249, %v1259
      %v1272 = vmul.f32 %v1250, %v1259
      %v1273 = vmul.f32 %v1251, %v1259
      %v1274 = vmul.f32 %v1252, %v1259
      %v1275 = vmul.f32 %v1253, %v1259
      %v1276 = vmul.f32 %v1254, %v1259
      %v1278 = vlaneseq
      %v1279 = vshrl.u32 %v1278, 7
      %v1280 = vsub.s32 0, %v1279
      %v1281 = vrot.slane %v1046, %v1280
      %v1283 = vadd.f32 %v1261, %v1281
      %v1284 = vadd.f32 %v1262, %v1281
      %v1285 = vadd.f32 %v1263, %v1281
      %v1286 = vadd.f32 %v1264, %v1281
      %v1287 = vadd.f32 %v1265, %v1281
      %v1288 = vadd.f32 %v1266, %v1281
      %v1289 = vadd.f32 %v1267, %v1281
      %v1290 = vadd.f32 %v1268, %v1281
      %v1291 = vadd.f32 %v1269, %v1281
      %v1292 = vadd.f32 %v1270, %v1281
      %v1293 = vadd.f32 %v1271, %v1281
      %v1294 = vadd.f32 %v1272, %v1281
      %v1295 = vadd.f32 %v1273, %v1281
      %v1296 = vadd.f32 %v1274, %v1281
      %v1297 = vadd.f32 %v1275, %v1281
      %v1298 = vadd.f32 %v1276, %v1281
      %v1299 = vpack.c.bf16 %v1284, %v1283
      %v1300 = vpack.c.bf16 %v1286, %v1285
      %v1301 = vpack.c.bf16 %v1288, %v1287
      %v1302 = vpack.c.bf16 %v1290, %v1289
      %v1303 = vpack.c.bf16 %v1292, %v1291
      %v1304 = vpack.c.bf16 %v1294, %v1293
      %v1305 = vpack.c.bf16 %v1296, %v1295
      %v1306 = vpack.c.bf16 %v1298, %v1297
      %s1307 = scalar_lea.vmem %s2, 64
      %v1308 = vld [vmem:[%s1307] sm:$0xf]
      %v1309 = vld [vmem:[%s1307 + $0x4] sm:$0xf]
      %v1310 = vld [vmem:[%s1307 + $0x8] sm:$0xf]
      %v1311 = vld [vmem:[%s1307 + $0xc] sm:$0xf]
      %v1312 = vld [vmem:[%s1307 + $0x10] sm:$0xf]
      %v1313 = vld [vmem:[%s1307 + $0x14] sm:$0xf]
      %v1314 = vld [vmem:[%s1307 + $0x18] sm:$0xf]
      %v1315 = vld [vmem:[%s1307 + $0x1c] sm:$0xf]
      %s1316 = scalar_lea.vmem %s3, 2
      %v1317 = vld [vmem:[%s1316] sm:$0x1]
      %v1319 = vlaneseq
      %v1320 = vshrl.u32 %v1319, 7
      %v1321 = vsub.s32 0, %v1320
      %v1322 = vrot.slane %v1317, %v1321
      %v1332 = vunpack.c.l.b16 %v1308
      %v1333 = vunpack.c.l.b16 %v1309
      %v1334 = vunpack.c.l.b16 %v1310
      %v1335 = vunpack.c.l.b16 %v1311
      %v1336 = vunpack.c.l.b16 %v1312
      %v1337 = vunpack.c.l.b16 %v1313
      %v1338 = vunpack.c.l.b16 %v1314
      %v1339 = vunpack.c.l.b16 %v1315
      %v1340 = vpack.c.b16 %v1333, %v1332
      %v1341 = vpack.c.b16 %v1335, %v1334
      %v1342 = vpack.c.b16 %v1337, %v1336
      %v1343 = vpack.c.b16 %v1339, %v1338
      %v1349 = vsel %vm400, %v1299, 0
      %v1352 = vsel %vm400, %v1300, 0
      %v1355 = vsel %vm400, %v1301, 0
      %v1358 = vsel %vm400, %v1302, 0
      %v1361 = vsel %vm400, %v1303, 0
      %v1364 = vsel %vm400, %v1304, 0
      %v1367 = vsel %vm400, %v1305, 0
      %v1370 = vsel %vm400, %v1306, 0
      %1372 = vmatprep.subr.bf16.mxu0 0
      %1373 = vmatpush1.bf16.msra.mxu0 %v1340
      %1374 = vmatprep.subr.bf16.mxu0 0
      %1375 = vmatpush1.bf16.msra.mxu0 %v1341
      %1376 = vmatprep.subr.bf16.mxu0 0
      %1377 = vmatpush1.bf16.msra.mxu0 %v1342
      %1378 = vmatprep.subr.bf16.mxu0 0
      %1379 = vmatpush1.bf16.msra.mxu0 %v1343
      %1380 = vmatprep.subr.bf16.mxu0 0
      %1381 = vmatpush1.bf16.msra.mxu0 0
      %1382 = vmatprep.subr.bf16.mxu0 0
      %1383 = vmatpush1.bf16.msra.mxu0 0
      %1384 = vmatprep.subr.bf16.mxu0 0
      %1385 = vmatpush1.bf16.msra.mxu0 0
      %1386 = vmatprep.subr.bf16.mxu0 0
      %1387 = vmatpush1.bf16.msra.mxu0 0
      %1388 = vmatprep.subr.bf16.mxu0 0
      %1389 = vmatpush1.bf16.msra.mxu0 0
      %1390 = vmatprep.subr.bf16.mxu0 0
      %1391 = vmatpush1.bf16.msra.mxu0 0
      %1392 = vmatprep.subr.bf16.mxu0 0
      %1393 = vmatpush1.bf16.msra.mxu0 0
      %1394 = vmatprep.subr.bf16.mxu0 0
      %1395 = vmatpush1.bf16.msra.mxu0 0
      %1396 = vmatprep.subr.bf16.mxu0 0
      %1397 = vmatpush1.bf16.msra.mxu0 0
      %1398 = vmatprep.subr.bf16.mxu0 0
      %1399 = vmatpush1.bf16.msra.mxu0 0
      %1400 = vmatprep.subr.bf16.mxu0 0
      %1401 = vmatpush1.bf16.msra.mxu0 0
      %1402 = vmatprep.subr.bf16.mxu0 0
      %1403 = vmatpush1.bf16.msra.mxu0 0
      %1404 = vmatprep.mubr.bf16.mxu0 0
      %1405 = vmatmul.mubr.bf16.gmra.mrb[0].mxu0 %v1349
      %v1406 = vpop.f32.mrb[0].mxu0
      %v1407 = vadd.f32 %v1322, %v1406
      %v1408 = vpop.f32.mrb[0].mxu0
      %v1409 = vpop.f32.mrb[0].mxu0
      %v1410 = vadd.f32 %v1322, %v1409
      %v1411 = vpop.f32.mrb[0].mxu0
      %1412 = vmatprep.mubr.bf16.mxu0 0
      %1413 = vmatmul.mubr.bf16.gmra.mrb[0].mxu0 %v1352
      %v1414 = vpop.f32.mrb[0].mxu0
      %v1415 = vadd.f32 %v1322, %v1414
      %v1416 = vpop.f32.mrb[0].mxu0
      %v1417 = vpop.f32.mrb[0].mxu0
      %v1418 = vadd.f32 %v1322, %v1417
      %v1419 = vpop.f32.mrb[0].mxu0
      %1420 = vmatprep.mubr.bf16.mxu0 0
      %1421 = vmatmul.mubr.bf16.gmra.mrb[0].mxu0 %v1355
      %v1422 = vpop.f32.mrb[0].mxu0
      %v1423 = vadd.f32 %v1322, %v1422
      %v1424 = vpop.f32.mrb[0].mxu0
      %v1425 = vpop.f32.mrb[0].mxu0
      %v1426 = vadd.f32 %v1322, %v1425
      %v1427 = vpop.f32.mrb[0].mxu0
      %1428 = vmatprep.mubr.bf16.mxu0 0
      %1429 = vmatmul.mubr.bf16.gmra.mrb[0].mxu0 %v1358
      %v1430 = vpop.f32.mrb[0].mxu0
      %v1431 = vadd.f32 %v1322, %v1430
      %v1432 = vpop.f32.mrb[0].mxu0
      %v1433 = vpop.f32.mrb[0].mxu0
      %v1434 = vadd.f32 %v1322, %v1433
      %v1435 = vpop.f32.mrb[0].mxu0
      %1436 = vmatprep.mubr.bf16.mxu0 0
      %1437 = vmatmul.mubr.bf16.gmra.mrb[0].mxu0 %v1361
      %v1438 = vpop.f32.mrb[0].mxu0
      %v1439 = vadd.f32 %v1322, %v1438
      %v1440 = vpop.f32.mrb[0].mxu0
      %v1441 = vpop.f32.mrb[0].mxu0
      %v1442 = vadd.f32 %v1322, %v1441
      %v1443 = vpop.f32.mrb[0].mxu0
      %1444 = vmatprep.mubr.bf16.mxu0 0
      %1445 = vmatmul.mubr.bf16.gmra.mrb[0].mxu0 %v1364
      %v1446 = vpop.f32.mrb[0].mxu0
      %v1447 = vadd.f32 %v1322, %v1446
      %v1448 = vpop.f32.mrb[0].mxu0
      %v1449 = vpop.f32.mrb[0].mxu0
      %v1450 = vadd.f32 %v1322, %v1449
      %v1451 = vpop.f32.mrb[0].mxu0
      %1452 = vmatprep.mubr.bf16.mxu0 0
      %1453 = vmatmul.mubr.bf16.gmra.mrb[0].mxu0 %v1367
      %v1454 = vpop.f32.mrb[0].mxu0
      %v1455 = vadd.f32 %v1322, %v1454
      %v1456 = vpop.f32.mrb[0].mxu0
      %v1457 = vpop.f32.mrb[0].mxu0
      %v1458 = vadd.f32 %v1322, %v1457
      %v1459 = vpop.f32.mrb[0].mxu0
      %1460 = vmatprep.mubr.bf16.mxu0 0
      %1461 = vmatmul.mubr.bf16.gmra.mrb[0].mxu0 %v1370
      %v1462 = vpop.f32.mrb[0].mxu0
      %v1463 = vadd.f32 %v1322, %v1462
      %v1464 = vpop.f32.mrb[0].mxu0
      %v1465 = vpop.f32.mrb[0].mxu0
      %v1466 = vadd.f32 %v1322, %v1465
      %v1467 = vpop.f32.mrb[0].mxu0
      %1468 = vdwg.mxu0
      %vm1469 = vcmp.gt.f32.partialorder %v1407, 0.0
      %vm1470 = vcmp.gt.f32.partialorder %v1410, 0.0
      %vm1471 = vcmp.gt.f32.partialorder %v1415, 0.0
      %vm1472 = vcmp.gt.f32.partialorder %v1418, 0.0
      %vm1473 = vcmp.gt.f32.partialorder %v1423, 0.0
      %vm1474 = vcmp.gt.f32.partialorder %v1426, 0.0
      %vm1475 = vcmp.gt.f32.partialorder %v1431, 0.0
      %vm1476 = vcmp.gt.f32.partialorder %v1434, 0.0
      %vm1477 = vcmp.gt.f32.partialorder %v1439, 0.0
      %vm1478 = vcmp.gt.f32.partialorder %v1442, 0.0
      %vm1479 = vcmp.gt.f32.partialorder %v1447, 0.0
      %vm1480 = vcmp.gt.f32.partialorder %v1450, 0.0
      %vm1481 = vcmp.gt.f32.partialorder %v1455, 0.0
      %vm1482 = vcmp.gt.f32.partialorder %v1458, 0.0
      %vm1483 = vcmp.gt.f32.partialorder %v1463, 0.0
      %vm1484 = vcmp.gt.f32.partialorder %v1466, 0.0
      %v1485 = vmul.f32 %v1407, 0.2
      %v1486 = vmul.f32 %v1410, 0.2
      %v1487 = vmul.f32 %v1415, 0.2
      %v1488 = vmul.f32 %v1418, 0.2
      %v1489 = vmul.f32 %v1423, 0.2
      %v1490 = vmul.f32 %v1426, 0.2
      %v1491 = vmul.f32 %v1431, 0.2
      %v1492 = vmul.f32 %v1434, 0.2
      %v1493 = vmul.f32 %v1439, 0.2
      %v1494 = vmul.f32 %v1442, 0.2
      %v1495 = vmul.f32 %v1447, 0.2
      %v1496 = vmul.f32 %v1450, 0.2
      %v1497 = vmul.f32 %v1455, 0.2
      %v1498 = vmul.f32 %v1458, 0.2
      %v1499 = vmul.f32 %v1463, 0.2
      %v1500 = vmul.f32 %v1466, 0.2
      %v1501 = vsel %vm1469, %v1407, %v1485
      %v1502 = vsel %vm1470, %v1410, %v1486
      %v1503 = vsel %vm1471, %v1415, %v1487
      %v1504 = vsel %vm1472, %v1418, %v1488
      %v1505 = vsel %vm1473, %v1423, %v1489
      %v1506 = vsel %vm1474, %v1426, %v1490
      %v1507 = vsel %vm1475, %v1431, %v1491
      %v1508 = vsel %vm1476, %v1434, %v1492
      %v1509 = vsel %vm1477, %v1439, %v1493
      %v1510 = vsel %vm1478, %v1442, %v1494
      %v1511 = vsel %vm1479, %v1447, %v1495
      %v1512 = vsel %vm1480, %v1450, %v1496
      %v1513 = vsel %vm1481, %v1455, %v1497
      %v1514 = vsel %vm1482, %v1458, %v1498
      %v1515 = vsel %vm1483, %v1463, %v1499
      %v1516 = vsel %vm1484, %v1466, %v1500
      %s1517 = scalar_lea.vmem %s4, 2
      %v1518 = vld [vmem:[%s1517] sm:$0x1]
      %s1519 = scalar_lea.vmem %s5, 2
      %v1520 = vld [vmem:[%s1519] sm:$0x1]
      %v1521 = vsel %vm400, %v1501, 0.0
      %1522 = vadd.xlane.f32.xlu0 %v1521
      %v1523 = vpop.xlane.xlu0 %1522
      %v1524 = vsel %vm400, %v1502, 0.0
      %1525 = vadd.xlane.f32.xlu0 %v1524
      %v1526 = vpop.xlane.xlu0 %1525
      %v1527 = vsel %vm400, %v1503, 0.0
      %1528 = vadd.xlane.f32.xlu0 %v1527
      %v1529 = vpop.xlane.xlu0 %1528
      %v1530 = vsel %vm400, %v1504, 0.0
      %1531 = vadd.xlane.f32.xlu0 %v1530
      %v1532 = vpop.xlane.xlu0 %1531
      %v1533 = vsel %vm400, %v1505, 0.0
      %1534 = vadd.xlane.f32.xlu0 %v1533
      %v1535 = vpop.xlane.xlu0 %1534
      %v1536 = vsel %vm400, %v1506, 0.0
      %1537 = vadd.xlane.f32.xlu0 %v1536
      %v1538 = vpop.xlane.xlu0 %1537
      %v1539 = vsel %vm400, %v1507, 0.0
      %1540 = vadd.xlane.f32.xlu0 %v1539
      %v1541 = vpop.xlane.xlu0 %1540
      %v1542 = vsel %vm400, %v1508, 0.0
      %1543 = vadd.xlane.f32.xlu0 %v1542
      %v1544 = vpop.xlane.xlu0 %1543
      %v1545 = vsel %vm400, %v1509, 0.0
      %1546 = vadd.xlane.f32.xlu0 %v1545
      %v1547 = vpop.xlane.xlu0 %1546
      %v1548 = vsel %vm400, %v1510, 0.0
      %1549 = vadd.xlane.f32.xlu0 %v1548
      %v1550 = vpop.xlane.xlu0 %1549
      %v1551 = vsel %vm400, %v1511, 0.0
      %1552 = vadd.xlane.f32.xlu0 %v1551
      %v1553 = vpop.xlane.xlu0 %1552
      %v1554 = vsel %vm400, %v1512, 0.0
      %1555 = vadd.xlane.f32.xlu0 %v1554
      %v1556 = vpop.xlane.xlu0 %1555
      %v1557 = vsel %vm400, %v1513, 0.0
      %1558 = vadd.xlane.f32.xlu0 %v1557
      %v1559 = vpop.xlane.xlu0 %1558
      %v1560 = vsel %vm400, %v1514, 0.0
      %1561 = vadd.xlane.f32.xlu0 %v1560
      %v1562 = vpop.xlane.xlu0 %1561
      %v1563 = vsel %vm400, %v1515, 0.0
      %1564 = vadd.xlane.f32.xlu0 %v1563
      %v1565 = vpop.xlane.xlu0 %1564
      %v1566 = vsel %vm400, %v1516, 0.0
      %1567 = vadd.xlane.f32.xlu0 %v1566
      %v1568 = vpop.xlane.xlu0 %1567
      %v1569 = vmul.f32 %v1523, %v620
      %v1570 = vmul.f32 %v1526, %v620
      %v1571 = vmul.f32 %v1529, %v620
      %v1572 = vmul.f32 %v1532, %v620
      %v1573 = vmul.f32 %v1535, %v620
      %v1574 = vmul.f32 %v1538, %v620
      %v1575 = vmul.f32 %v1541, %v620
      %v1576 = vmul.f32 %v1544, %v620
      %v1577 = vmul.f32 %v1547, %v620
      %v1578 = vmul.f32 %v1550, %v620
      %v1579 = vmul.f32 %v1553, %v620
      %v1580 = vmul.f32 %v1556, %v620
      %v1581 = vmul.f32 %v1559, %v620
      %v1582 = vmul.f32 %v1562, %v620
      %v1583 = vmul.f32 %v1565, %v620
      %v1584 = vmul.f32 %v1568, %v620
      %v1585 = vsub.f32 %v1501, %v1569
      %v1586 = vsub.f32 %v1502, %v1570
      %v1587 = vsub.f32 %v1503, %v1571
      %v1588 = vsub.f32 %v1504, %v1572
      %v1589 = vsub.f32 %v1505, %v1573
      %v1590 = vsub.f32 %v1506, %v1574
      %v1591 = vsub.f32 %v1507, %v1575
      %v1592 = vsub.f32 %v1508, %v1576
      %v1593 = vsub.f32 %v1509, %v1577
      %v1594 = vsub.f32 %v1510, %v1578
      %v1595 = vsub.f32 %v1511, %v1579
      %v1596 = vsub.f32 %v1512, %v1580
      %v1597 = vsub.f32 %v1513, %v1581
      %v1598 = vsub.f32 %v1514, %v1582
      %v1599 = vsub.f32 %v1515, %v1583
      %v1600 = vsub.f32 %v1516, %v1584
      %v1601 = vmul.f32 %v1585, %v1585
      %v1602 = vmul.f32 %v1586, %v1586
      %v1603 = vmul.f32 %v1587, %v1587
      %v1604 = vmul.f32 %v1588, %v1588
      %v1605 = vmul.f32 %v1589, %v1589
      %v1606 = vmul.f32 %v1590, %v1590
      %v1607 = vmul.f32 %v1591, %v1591
      %v1608 = vmul.f32 %v1592, %v1592
      %v1609 = vmul.f32 %v1593, %v1593
      %v1610 = vmul.f32 %v1594, %v1594
      %v1611 = vmul.f32 %v1595, %v1595
      %v1612 = vmul.f32 %v1596, %v1596
      %v1613 = vmul.f32 %v1597, %v1597
      %v1614 = vmul.f32 %v1598, %v1598
      %v1615 = vmul.f32 %v1599, %v1599
      %v1616 = vmul.f32 %v1600, %v1600
      %v1617 = vsel %vm400, %v1601, 0.0
      %1618 = vadd.xlane.f32.xlu0 %v1617
      %v1619 = vpop.xlane.xlu0 %1618
      %v1620 = vsel %vm400, %v1602, 0.0
      %1621 = vadd.xlane.f32.xlu0 %v1620
      %v1622 = vpop.xlane.xlu0 %1621
      %v1623 = vsel %vm400, %v1603, 0.0
      %1624 = vadd.xlane.f32.xlu0 %v1623
      %v1625 = vpop.xlane.xlu0 %1624
      %v1626 = vsel %vm400, %v1604, 0.0
      %1627 = vadd.xlane.f32.xlu0 %v1626
      %v1628 = vpop.xlane.xlu0 %1627
      %v1629 = vsel %vm400, %v1605, 0.0
      %1630 = vadd.xlane.f32.xlu0 %v1629
      %v1631 = vpop.xlane.xlu0 %1630
      %v1632 = vsel %vm400, %v1606, 0.0
      %1633 = vadd.xlane.f32.xlu0 %v1632
      %v1634 = vpop.xlane.xlu0 %1633
      %v1635 = vsel %vm400, %v1607, 0.0
      %1636 = vadd.xlane.f32.xlu0 %v1635
      %v1637 = vpop.xlane.xlu0 %1636
      %v1638 = vsel %vm400, %v1608, 0.0
      %1639 = vadd.xlane.f32.xlu0 %v1638
      %v1640 = vpop.xlane.xlu0 %1639
      %v1641 = vsel %vm400, %v1609, 0.0
      %1642 = vadd.xlane.f32.xlu0 %v1641
      %v1643 = vpop.xlane.xlu0 %1642
      %v1644 = vsel %vm400, %v1610, 0.0
      %1645 = vadd.xlane.f32.xlu0 %v1644
      %v1646 = vpop.xlane.xlu0 %1645
      %v1647 = vsel %vm400, %v1611, 0.0
      %1648 = vadd.xlane.f32.xlu0 %v1647
      %v1649 = vpop.xlane.xlu0 %1648
      %v1650 = vsel %vm400, %v1612, 0.0
      %1651 = vadd.xlane.f32.xlu0 %v1650
      %v1652 = vpop.xlane.xlu0 %1651
      %v1653 = vsel %vm400, %v1613, 0.0
      %1654 = vadd.xlane.f32.xlu0 %v1653
      %v1655 = vpop.xlane.xlu0 %1654
      %v1656 = vsel %vm400, %v1614, 0.0
      %1657 = vadd.xlane.f32.xlu0 %v1656
      %v1658 = vpop.xlane.xlu0 %1657
      %v1659 = vsel %vm400, %v1615, 0.0
      %1660 = vadd.xlane.f32.xlu0 %v1659
      %v1661 = vpop.xlane.xlu0 %1660
      %v1662 = vsel %vm400, %v1616, 0.0
      %1663 = vadd.xlane.f32.xlu0 %v1662
      %v1664 = vpop.xlane.xlu0 %1663
      %v1665 = vmul.f32 %v1619, %v620
      %v1666 = vmul.f32 %v1622, %v620
      %v1667 = vmul.f32 %v1625, %v620
      %v1668 = vmul.f32 %v1628, %v620
      %v1669 = vmul.f32 %v1631, %v620
      %v1670 = vmul.f32 %v1634, %v620
      %v1671 = vmul.f32 %v1637, %v620
      %v1672 = vmul.f32 %v1640, %v620
      %v1673 = vmul.f32 %v1643, %v620
      %v1674 = vmul.f32 %v1646, %v620
      %v1675 = vmul.f32 %v1649, %v620
      %v1676 = vmul.f32 %v1652, %v620
      %v1677 = vmul.f32 %v1655, %v620
      %v1678 = vmul.f32 %v1658, %v620
      %v1679 = vmul.f32 %v1661, %v620
      %v1680 = vmul.f32 %v1664, %v620
      %v1681 = vadd.f32 %v1665, 1e-05
      %v1682 = vadd.f32 %v1666, 1e-05
      %v1683 = vadd.f32 %v1667, 1e-05
      %v1684 = vadd.f32 %v1668, 1e-05
      %v1685 = vadd.f32 %v1669, 1e-05
      %v1686 = vadd.f32 %v1670, 1e-05
      %v1687 = vadd.f32 %v1671, 1e-05
      %v1688 = vadd.f32 %v1672, 1e-05
      %v1689 = vadd.f32 %v1673, 1e-05
      %v1690 = vadd.f32 %v1674, 1e-05
      %v1691 = vadd.f32 %v1675, 1e-05
      %v1692 = vadd.f32 %v1676, 1e-05
      %v1693 = vadd.f32 %v1677, 1e-05
      %v1694 = vadd.f32 %v1678, 1e-05
      %v1695 = vadd.f32 %v1679, 1e-05
      %v1696 = vadd.f32 %v1680, 1e-05
      %v1697 = vrsqrt.pop %v1681
      %v1698 = vrsqrt.pop %v1682
      %v1699 = vrsqrt.pop %v1683
      %v1700 = vrsqrt.pop %v1684
      %v1701 = vrsqrt.pop %v1685
      %v1702 = vrsqrt.pop %v1686
      %v1703 = vrsqrt.pop %v1687
      %v1704 = vrsqrt.pop %v1688
      %v1705 = vrsqrt.pop %v1689
      %v1706 = vrsqrt.pop %v1690
      %v1707 = vrsqrt.pop %v1691
      %v1708 = vrsqrt.pop %v1692
      %v1709 = vrsqrt.pop %v1693
      %v1710 = vrsqrt.pop %v1694
      %v1711 = vrsqrt.pop %v1695
      %v1712 = vrsqrt.pop %v1696
      %v1713 = vmul.f32 %v1585, %v1697
      %v1714 = vmul.f32 %v1586, %v1698
      %v1715 = vmul.f32 %v1587, %v1699
      %v1716 = vmul.f32 %v1588, %v1700
      %v1717 = vmul.f32 %v1589, %v1701
      %v1718 = vmul.f32 %v1590, %v1702
      %v1719 = vmul.f32 %v1591, %v1703
      %v1720 = vmul.f32 %v1592, %v1704
      %v1721 = vmul.f32 %v1593, %v1705
      %v1722 = vmul.f32 %v1594, %v1706
      %v1723 = vmul.f32 %v1595, %v1707
      %v1724 = vmul.f32 %v1596, %v1708
      %v1725 = vmul.f32 %v1597, %v1709
      %v1726 = vmul.f32 %v1598, %v1710
      %v1727 = vmul.f32 %v1599, %v1711
      %v1728 = vmul.f32 %v1600, %v1712
      %v1730 = vlaneseq
      %v1731 = vshrl.u32 %v1730, 7
      %v1732 = vsub.s32 0, %v1731
      %v1733 = vrot.slane %v1518, %v1732
      %v1735 = vmul.f32 %v1713, %v1733
      %v1736 = vmul.f32 %v1714, %v1733
      %v1737 = vmul.f32 %v1715, %v1733
      %v1738 = vmul.f32 %v1716, %v1733
      %v1739 = vmul.f32 %v1717, %v1733
      %v1740 = vmul.f32 %v1718, %v1733
      %v1741 = vmul.f32 %v1719, %v1733
      %v1742 = vmul.f32 %v1720, %v1733
      %v1743 = vmul.f32 %v1721, %v1733
      %v1744 = vmul.f32 %v1722, %v1733
      %v1745 = vmul.f32 %v1723, %v1733
      %v1746 = vmul.f32 %v1724, %v1733
      %v1747 = vmul.f32 %v1725, %v1733
      %v1748 = vmul.f32 %v1726, %v1733
      %v1749 = vmul.f32 %v1727, %v1733
      %v1750 = vmul.f32 %v1728, %v1733
      %v1752 = vlaneseq
      %v1753 = vshrl.u32 %v1752, 7
      %v1754 = vsub.s32 0, %v1753
      %v1755 = vrot.slane %v1520, %v1754
      %v1757 = vadd.f32 %v1735, %v1755
      %v1758 = vadd.f32 %v1736, %v1755
      %v1759 = vadd.f32 %v1737, %v1755
      %v1760 = vadd.f32 %v1738, %v1755
      %v1761 = vadd.f32 %v1739, %v1755
      %v1762 = vadd.f32 %v1740, %v1755
      %v1763 = vadd.f32 %v1741, %v1755
      %v1764 = vadd.f32 %v1742, %v1755
      %v1765 = vadd.f32 %v1743, %v1755
      %v1766 = vadd.f32 %v1744, %v1755
      %v1767 = vadd.f32 %v1745, %v1755
      %v1768 = vadd.f32 %v1746, %v1755
      %v1769 = vadd.f32 %v1747, %v1755
      %v1770 = vadd.f32 %v1748, %v1755
      %v1771 = vadd.f32 %v1749, %v1755
      %v1772 = vadd.f32 %v1750, %v1755
      %v1773 = vpack.c.bf16 %v1758, %v1757
      %v1774 = vpack.c.bf16 %v1760, %v1759
      %v1775 = vpack.c.bf16 %v1762, %v1761
      %v1776 = vpack.c.bf16 %v1764, %v1763
      %v1777 = vpack.c.bf16 %v1766, %v1765
      %v1778 = vpack.c.bf16 %v1768, %v1767
      %v1779 = vpack.c.bf16 %v1770, %v1769
      %v1780 = vpack.c.bf16 %v1772, %v1771
      %s1781 = scalar_lea.vmem %s2, 96
      %v1782 = vld [vmem:[%s1781] sm:$0xf]
      %v1783 = vld [vmem:[%s1781 + $0x4] sm:$0xf]
      %v1784 = vld [vmem:[%s1781 + $0x8] sm:$0xf]
      %v1785 = vld [vmem:[%s1781 + $0xc] sm:$0xf]
      %v1786 = vld [vmem:[%s1781 + $0x10] sm:$0xf]
      %v1787 = vld [vmem:[%s1781 + $0x14] sm:$0xf]
      %v1788 = vld [vmem:[%s1781 + $0x18] sm:$0xf]
      %v1789 = vld [vmem:[%s1781 + $0x1c] sm:$0xf]
      %s1790 = scalar_lea.vmem %s3, 3
      %v1791 = vld [vmem:[%s1790] sm:$0x1]
      %v1793 = vlaneseq
      %v1794 = vshrl.u32 %v1793, 7
      %v1795 = vsub.s32 0, %v1794
      %v1796 = vrot.slane %v1791, %v1795
      %v1806 = vunpack.c.l.b16 %v1782
      %v1807 = vunpack.c.l.b16 %v1783
      %v1808 = vunpack.c.l.b16 %v1784
      %v1809 = vunpack.c.l.b16 %v1785
      %v1810 = vunpack.c.l.b16 %v1786
      %v1811 = vunpack.c.l.b16 %v1787
      %v1812 = vunpack.c.l.b16 %v1788
      %v1813 = vunpack.c.l.b16 %v1789
      %v1814 = vpack.c.b16 %v1807, %v1806
      %v1815 = vpack.c.b16 %v1809, %v1808
      %v1816 = vpack.c.b16 %v1811, %v1810
      %v1817 = vpack.c.b16 %v1813, %v1812
      %v1823 = vsel %vm400, %v1773, 0
      %v1826 = vsel %vm400, %v1774, 0
      %v1829 = vsel %vm400, %v1775, 0
      %v1832 = vsel %vm400, %v1776, 0
      %v1835 = vsel %vm400, %v1777, 0
      %v1838 = vsel %vm400, %v1778, 0
      %v1841 = vsel %vm400, %v1779, 0
      %v1844 = vsel %vm400, %v1780, 0
      %1846 = vmatprep.subr.bf16.mxu0 0
      %1847 = vmatpush1.bf16.msra.mxu0 %v1814
      %1848 = vmatprep.subr.bf16.mxu0 0
      %1849 = vmatpush1.bf16.msra.mxu0 %v1815
      %1850 = vmatprep.subr.bf16.mxu0 0
      %1851 = vmatpush1.bf16.msra.mxu0 %v1816
      %1852 = vmatprep.subr.bf16.mxu0 0
      %1853 = vmatpush1.bf16.msra.mxu0 %v1817
      %1854 = vmatprep.subr.bf16.mxu0 0
      %1855 = vmatpush1.bf16.msra.mxu0 0
      %1856 = vmatprep.subr.bf16.mxu0 0
      %1857 = vmatpush1.bf16.msra.mxu0 0
      %1858 = vmatprep.subr.bf16.mxu0 0
      %1859 = vmatpush1.bf16.msra.mxu0 0
      %1860 = vmatprep.subr.bf16.mxu0 0
      %1861 = vmatpush1.bf16.msra.mxu0 0
      %1862 = vmatprep.subr.bf16.mxu0 0
      %1863 = vmatpush1.bf16.msra.mxu0 0
      %1864 = vmatprep.subr.bf16.mxu0 0
      %1865 = vmatpush1.bf16.msra.mxu0 0
      %1866 = vmatprep.subr.bf16.mxu0 0
      %1867 = vmatpush1.bf16.msra.mxu0 0
      %1868 = vmatprep.subr.bf16.mxu0 0
      %1869 = vmatpush1.bf16.msra.mxu0 0
      %1870 = vmatprep.subr.bf16.mxu0 0
      %1871 = vmatpush1.bf16.msra.mxu0 0
      %1872 = vmatprep.subr.bf16.mxu0 0
      %1873 = vmatpush1.bf16.msra.mxu0 0
      %1874 = vmatprep.subr.bf16.mxu0 0
      %1875 = vmatpush1.bf16.msra.mxu0 0
      %1876 = vmatprep.subr.bf16.mxu0 0
      %1877 = vmatpush1.bf16.msra.mxu0 0
      %1878 = vmatprep.mubr.bf16.mxu0 0
      %1879 = vmatmul.mubr.bf16.gmra.mrb[0].mxu0 %v1823
      %v1880 = vpop.f32.mrb[0].mxu0
      %v1881 = vadd.f32 %v1796, %v1880
      %v1882 = vpop.f32.mrb[0].mxu0
      %v1883 = vpop.f32.mrb[0].mxu0
      %v1884 = vadd.f32 %v1796, %v1883
      %v1885 = vpop.f32.mrb[0].mxu0
      %1886 = vmatprep.mubr.bf16.mxu0 0
      %1887 = vmatmul.mubr.bf16.gmra.mrb[0].mxu0 %v1826
      %v1888 = vpop.f32.mrb[0].mxu0
      %v1889 = vadd.f32 %v1796, %v1888
      %v1890 = vpop.f32.mrb[0].mxu0
      %v1891 = vpop.f32.mrb[0].mxu0
      %v1892 = vadd.f32 %v1796, %v1891
      %v1893 = vpop.f32.mrb[0].mxu0
      %1894 = vmatprep.mubr.bf16.mxu0 0
      %1895 = vmatmul.mubr.bf16.gmra.mrb[0].mxu0 %v1829
      %v1896 = vpop.f32.mrb[0].mxu0
      %v1897 = vadd.f32 %v1796, %v1896
      %v1898 = vpop.f32.mrb[0].mxu0
      %v1899 = vpop.f32.mrb[0].mxu0
      %v1900 = vadd.f32 %v1796, %v1899
      %v1901 = vpop.f32.mrb[0].mxu0
      %1902 = vmatprep.mubr.bf16.mxu0 0
      %1903 = vmatmul.mubr.bf16.gmra.mrb[0].mxu0 %v1832
      %v1904 = vpop.f32.mrb[0].mxu0
      %v1905 = vadd.f32 %v1796, %v1904
      %v1906 = vpop.f32.mrb[0].mxu0
      %v1907 = vpop.f32.mrb[0].mxu0
      %v1908 = vadd.f32 %v1796, %v1907
      %v1909 = vpop.f32.mrb[0].mxu0
      %1910 = vmatprep.mubr.bf16.mxu0 0
      %1911 = vmatmul.mubr.bf16.gmra.mrb[0].mxu0 %v1835
      %v1912 = vpop.f32.mrb[0].mxu0
      %v1913 = vadd.f32 %v1796, %v1912
      %v1914 = vpop.f32.mrb[0].mxu0
      %v1915 = vpop.f32.mrb[0].mxu0
      %v1916 = vadd.f32 %v1796, %v1915
      %v1917 = vpop.f32.mrb[0].mxu0
      %1918 = vmatprep.mubr.bf16.mxu0 0
      %1919 = vmatmul.mubr.bf16.gmra.mrb[0].mxu0 %v1838
      %v1920 = vpop.f32.mrb[0].mxu0
      %v1921 = vadd.f32 %v1796, %v1920
      %v1922 = vpop.f32.mrb[0].mxu0
      %v1923 = vpop.f32.mrb[0].mxu0
      %v1924 = vadd.f32 %v1796, %v1923
      %v1925 = vpop.f32.mrb[0].mxu0
      %1926 = vmatprep.mubr.bf16.mxu0 0
      %1927 = vmatmul.mubr.bf16.gmra.mrb[0].mxu0 %v1841
      %v1928 = vpop.f32.mrb[0].mxu0
      %v1929 = vadd.f32 %v1796, %v1928
      %v1930 = vpop.f32.mrb[0].mxu0
      %v1931 = vpop.f32.mrb[0].mxu0
      %v1932 = vadd.f32 %v1796, %v1931
      %v1933 = vpop.f32.mrb[0].mxu0
      %1934 = vmatprep.mubr.bf16.mxu0 0
      %1935 = vmatmul.mubr.bf16.gmra.mrb[0].mxu0 %v1844
      %v1936 = vpop.f32.mrb[0].mxu0
      %v1937 = vadd.f32 %v1796, %v1936
      %v1938 = vpop.f32.mrb[0].mxu0
      %v1939 = vpop.f32.mrb[0].mxu0
      %v1940 = vadd.f32 %v1796, %v1939
      %v1941 = vpop.f32.mrb[0].mxu0
      %1942 = vdwg.mxu0
      %v1943 = vld [vmem:[%s6] sm:$0x1]
      %v1945 = vlaneseq
      %v1946 = vshrl.u32 %v1945, 7
      %v1947 = vsub.s32 0, %v1946
      %v1948 = vrot.slane %v1943, %v1947
      %v1950 = vmul.f32 %v1881, %v1948
      %v1951 = vmul.f32 %v1884, %v1948
      %v1952 = vmul.f32 %v1889, %v1948
      %v1953 = vmul.f32 %v1892, %v1948
      %v1954 = vmul.f32 %v1897, %v1948
      %v1955 = vmul.f32 %v1900, %v1948
      %v1956 = vmul.f32 %v1905, %v1948
      %v1957 = vmul.f32 %v1908, %v1948
      %v1958 = vmul.f32 %v1913, %v1948
      %v1959 = vmul.f32 %v1916, %v1948
      %v1960 = vmul.f32 %v1921, %v1948
      %v1961 = vmul.f32 %v1924, %v1948
      %v1962 = vmul.f32 %v1929, %v1948
      %v1963 = vmul.f32 %v1932, %v1948
      %v1964 = vmul.f32 %v1937, %v1948
      %v1965 = vmul.f32 %v1940, %v1948
      %v1966 = vmul.f32 %v1950, %v1950
      %v1967 = vmul.f32 %v1951, %v1951
      %v1968 = vmul.f32 %v1952, %v1952
      %v1969 = vmul.f32 %v1953, %v1953
      %v1970 = vmul.f32 %v1954, %v1954
      %v1971 = vmul.f32 %v1955, %v1955
      %v1972 = vmul.f32 %v1956, %v1956
      %v1973 = vmul.f32 %v1957, %v1957
      %v1974 = vmul.f32 %v1958, %v1958
      %v1975 = vmul.f32 %v1959, %v1959
      %v1976 = vmul.f32 %v1960, %v1960
      %v1977 = vmul.f32 %v1961, %v1961
      %v1978 = vmul.f32 %v1962, %v1962
      %v1979 = vmul.f32 %v1963, %v1963
      %v1980 = vmul.f32 %v1964, %v1964
      %v1981 = vmul.f32 %v1965, %v1965
      %v1982 = vsel %vm400, %v1966, 0.0
      %1983 = vadd.xlane.f32.xlu0 %v1982
      %v1984 = vpop.xlane.xlu0 %1983
      %v1985 = vsel %vm400, %v1967, 0.0
      %1986 = vadd.xlane.f32.xlu0 %v1985
      %v1987 = vpop.xlane.xlu0 %1986
      %v1988 = vsel %vm400, %v1968, 0.0
      %1989 = vadd.xlane.f32.xlu0 %v1988
      %v1990 = vpop.xlane.xlu0 %1989
      %v1991 = vsel %vm400, %v1969, 0.0
      %1992 = vadd.xlane.f32.xlu0 %v1991
      %v1993 = vpop.xlane.xlu0 %1992
      %v1994 = vsel %vm400, %v1970, 0.0
      %1995 = vadd.xlane.f32.xlu0 %v1994
      %v1996 = vpop.xlane.xlu0 %1995
      %v1997 = vsel %vm400, %v1971, 0.0
      %1998 = vadd.xlane.f32.xlu0 %v1997
      %v1999 = vpop.xlane.xlu0 %1998
      %v2000 = vsel %vm400, %v1972, 0.0
      %2001 = vadd.xlane.f32.xlu0 %v2000
      %v2002 = vpop.xlane.xlu0 %2001
      %v2003 = vsel %vm400, %v1973, 0.0
      %2004 = vadd.xlane.f32.xlu0 %v2003
      %v2005 = vpop.xlane.xlu0 %2004
      %v2006 = vsel %vm400, %v1974, 0.0
      %2007 = vadd.xlane.f32.xlu0 %v2006
      %v2008 = vpop.xlane.xlu0 %2007
      %v2009 = vsel %vm400, %v1975, 0.0
      %2010 = vadd.xlane.f32.xlu0 %v2009
      %v2011 = vpop.xlane.xlu0 %2010
      %v2012 = vsel %vm400, %v1976, 0.0
      %2013 = vadd.xlane.f32.xlu0 %v2012
      %v2014 = vpop.xlane.xlu0 %2013
      %v2015 = vsel %vm400, %v1977, 0.0
      %2016 = vadd.xlane.f32.xlu0 %v2015
      %v2017 = vpop.xlane.xlu0 %2016
      %v2018 = vsel %vm400, %v1978, 0.0
      %2019 = vadd.xlane.f32.xlu0 %v2018
      %v2020 = vpop.xlane.xlu0 %2019
      %v2021 = vsel %vm400, %v1979, 0.0
      %2022 = vadd.xlane.f32.xlu0 %v2021
      %v2023 = vpop.xlane.xlu0 %2022
      %v2024 = vsel %vm400, %v1980, 0.0
      %2025 = vadd.xlane.f32.xlu0 %v2024
      %v2026 = vpop.xlane.xlu0 %2025
      %v2027 = vsel %vm400, %v1981, 0.0
      %2028 = vadd.xlane.f32.xlu0 %v2027
      %v2029 = vpop.xlane.xlu0 %2028
      %v2030 = vrsqrt.pop %v1984
      %v2031 = vmul.f32 %v1984, %v2030
      %vm2032 = vcmp.eq.f32.partialorder %v1984, inf
      %v2033 = vsel %vm2032, %v1984, %v2031
      %vm2034 = vcmp.eq.f32.partialorder %v1984, 0.0
      %v2035 = vand.u32 %v1984, 2147483648
      %v2036 = vsel %vm2034, %v2035, %v2033
      %v2037 = vrsqrt.pop %v1987
      %v2038 = vmul.f32 %v1987, %v2037
      %vm2039 = vcmp.eq.f32.partialorder %v1987, inf
      %v2040 = vsel %vm2039, %v1987, %v2038
      %vm2041 = vcmp.eq.f32.partialorder %v1987, 0.0
      %v2042 = vand.u32 %v1987, 2147483648
      %v2043 = vsel %vm2041, %v2042, %v2040
      %v2044 = vrsqrt.pop %v1990
      %v2045 = vmul.f32 %v1990, %v2044
      %vm2046 = vcmp.eq.f32.partialorder %v1990, inf
      %v2047 = vsel %vm2046, %v1990, %v2045
      %vm2048 = vcmp.eq.f32.partialorder %v1990, 0.0
      %v2049 = vand.u32 %v1990, 2147483648
      %v2050 = vsel %vm2048, %v2049, %v2047
      %v2051 = vrsqrt.pop %v1993
      %v2052 = vmul.f32 %v1993, %v2051
      %vm2053 = vcmp.eq.f32.partialorder %v1993, inf
      %v2054 = vsel %vm2053, %v1993, %v2052
      %vm2055 = vcmp.eq.f32.partialorder %v1993, 0.0
      %v2056 = vand.u32 %v1993, 2147483648
      %v2057 = vsel %vm2055, %v2056, %v2054
      %v2058 = vrsqrt.pop %v1996
      %v2059 = vmul.f32 %v1996, %v2058
      %vm2060 = vcmp.eq.f32.partialorder %v1996, inf
      %v2061 = vsel %vm2060, %v1996, %v2059
      %vm2062 = vcmp.eq.f32.partialorder %v1996, 0.0
      %v2063 = vand.u32 %v1996, 2147483648
      %v2064 = vsel %vm2062, %v2063, %v2061
      %v2065 = vrsqrt.pop %v1999
      %v2066 = vmul.f32 %v1999, %v2065
      %vm2067 = vcmp.eq.f32.partialorder %v1999, inf
      %v2068 = vsel %vm2067, %v1999, %v2066
      %vm2069 = vcmp.eq.f32.partialorder %v1999, 0.0
      %v2070 = vand.u32 %v1999, 2147483648
      %v2071 = vsel %vm2069, %v2070, %v2068
      %v2072 = vrsqrt.pop %v2002
      %v2073 = vmul.f32 %v2002, %v2072
      %vm2074 = vcmp.eq.f32.partialorder %v2002, inf
      %v2075 = vsel %vm2074, %v2002, %v2073
      %vm2076 = vcmp.eq.f32.partialorder %v2002, 0.0
      %v2077 = vand.u32 %v2002, 2147483648
      %v2078 = vsel %vm2076, %v2077, %v2075
      %v2079 = vrsqrt.pop %v2005
      %v2080 = vmul.f32 %v2005, %v2079
      %vm2081 = vcmp.eq.f32.partialorder %v2005, inf
      %v2082 = vsel %vm2081, %v2005, %v2080
      %vm2083 = vcmp.eq.f32.partialorder %v2005, 0.0
      %v2084 = vand.u32 %v2005, 2147483648
      %v2085 = vsel %vm2083, %v2084, %v2082
      %v2086 = vrsqrt.pop %v2008
      %v2087 = vmul.f32 %v2008, %v2086
      %vm2088 = vcmp.eq.f32.partialorder %v2008, inf
      %v2089 = vsel %vm2088, %v2008, %v2087
      %vm2090 = vcmp.eq.f32.partialorder %v2008, 0.0
      %v2091 = vand.u32 %v2008, 2147483648
      %v2092 = vsel %vm2090, %v2091, %v2089
      %v2093 = vrsqrt.pop %v2011
      %v2094 = vmul.f32 %v2011, %v2093
      %vm2095 = vcmp.eq.f32.partialorder %v2011, inf
      %v2096 = vsel %vm2095, %v2011, %v2094
      %vm2097 = vcmp.eq.f32.partialorder %v2011, 0.0
      %v2098 = vand.u32 %v2011, 2147483648
      %v2099 = vsel %vm2097, %v2098, %v2096
      %v2100 = vrsqrt.pop %v2014
      %v2101 = vmul.f32 %v2014, %v2100
      %vm2102 = vcmp.eq.f32.partialorder %v2014, inf
      %v2103 = vsel %vm2102, %v2014, %v2101
      %vm2104 = vcmp.eq.f32.partialorder %v2014, 0.0
      %v2105 = vand.u32 %v2014, 2147483648
      %v2106 = vsel %vm2104, %v2105, %v2103
      %v2107 = vrsqrt.pop %v2017
      %v2108 = vmul.f32 %v2017, %v2107
      %vm2109 = vcmp.eq.f32.partialorder %v2017, inf
      %v2110 = vsel %vm2109, %v2017, %v2108
      %vm2111 = vcmp.eq.f32.partialorder %v2017, 0.0
      %v2112 = vand.u32 %v2017, 2147483648
      %v2113 = vsel %vm2111, %v2112, %v2110
      %v2114 = vrsqrt.pop %v2020
      %v2115 = vmul.f32 %v2020, %v2114
      %vm2116 = vcmp.eq.f32.partialorder %v2020, inf
      %v2117 = vsel %vm2116, %v2020, %v2115
      %vm2118 = vcmp.eq.f32.partialorder %v2020, 0.0
      %v2119 = vand.u32 %v2020, 2147483648
      %v2120 = vsel %vm2118, %v2119, %v2117
      %v2121 = vrsqrt.pop %v2023
      %v2122 = vmul.f32 %v2023, %v2121
      %vm2123 = vcmp.eq.f32.partialorder %v2023, inf
      %v2124 = vsel %vm2123, %v2023, %v2122
      %vm2125 = vcmp.eq.f32.partialorder %v2023, 0.0
      %v2126 = vand.u32 %v2023, 2147483648
      %v2127 = vsel %vm2125, %v2126, %v2124
      %v2128 = vrsqrt.pop %v2026
      %v2129 = vmul.f32 %v2026, %v2128
      %vm2130 = vcmp.eq.f32.partialorder %v2026, inf
      %v2131 = vsel %vm2130, %v2026, %v2129
      %vm2132 = vcmp.eq.f32.partialorder %v2026, 0.0
      %v2133 = vand.u32 %v2026, 2147483648
      %v2134 = vsel %vm2132, %v2133, %v2131
      %v2135 = vrsqrt.pop %v2029
      %v2136 = vmul.f32 %v2029, %v2135
      %vm2137 = vcmp.eq.f32.partialorder %v2029, inf
      %v2138 = vsel %vm2137, %v2029, %v2136
      %vm2139 = vcmp.eq.f32.partialorder %v2029, 0.0
      %v2140 = vand.u32 %v2029, 2147483648
      %v2141 = vsel %vm2139, %v2140, %v2138
      %v2142 = vadd.f32 %v2036, 1e-08
      %v2143 = vadd.f32 %v2043, 1e-08
      %v2144 = vadd.f32 %v2050, 1e-08
      %v2145 = vadd.f32 %v2057, 1e-08
      %v2146 = vadd.f32 %v2064, 1e-08
      %v2147 = vadd.f32 %v2071, 1e-08
      %v2148 = vadd.f32 %v2078, 1e-08
      %v2149 = vadd.f32 %v2085, 1e-08
      %v2150 = vadd.f32 %v2092, 1e-08
      %v2151 = vadd.f32 %v2099, 1e-08
      %v2152 = vadd.f32 %v2106, 1e-08
      %v2153 = vadd.f32 %v2113, 1e-08
      %v2154 = vadd.f32 %v2120, 1e-08
      %v2155 = vadd.f32 %v2127, 1e-08
      %v2156 = vadd.f32 %v2134, 1e-08
      %v2157 = vadd.f32 %v2141, 1e-08
      %v2158 = vrcp.pop %v2142
      %v2159 = vmul.f32 %v1950, %v2158
      %v2160 = vrcp.pop %v2143
      %v2161 = vmul.f32 %v1951, %v2160
      %v2162 = vrcp.pop %v2144
      %v2163 = vmul.f32 %v1952, %v2162
      %v2164 = vrcp.pop %v2145
      %v2165 = vmul.f32 %v1953, %v2164
      %v2166 = vrcp.pop %v2146
      %v2167 = vmul.f32 %v1954, %v2166
      %v2168 = vrcp.pop %v2147
      %v2169 = vmul.f32 %v1955, %v2168
      %v2170 = vrcp.pop %v2148
      %v2171 = vmul.f32 %v1956, %v2170
      %v2172 = vrcp.pop %v2149
      %v2173 = vmul.f32 %v1957, %v2172
      %v2174 = vrcp.pop %v2150
      %v2175 = vmul.f32 %v1958, %v2174
      %v2176 = vrcp.pop %v2151
      %v2177 = vmul.f32 %v1959, %v2176
      %v2178 = vrcp.pop %v2152
      %v2179 = vmul.f32 %v1960, %v2178
      %v2180 = vrcp.pop %v2153
      %v2181 = vmul.f32 %v1961, %v2180
      %v2182 = vrcp.pop %v2154
      %v2183 = vmul.f32 %v1962, %v2182
      %v2184 = vrcp.pop %v2155
      %v2185 = vmul.f32 %v1963, %v2184
      %v2186 = vrcp.pop %v2156
      %v2187 = vmul.f32 %v1964, %v2186
      %v2188 = vrcp.pop %v2157
      %v2189 = vmul.f32 %v1965, %v2188
      %v2190 = vld [vmem:[%s296] sm:$0xff]
      %v2191 = vld [vmem:[%s296 + $0x8] sm:$0xff]
      %v2192 = vld [vmem:[%s296 + $0x10] sm:$0xff]
      %v2193 = vld [vmem:[%s296 + $0x18] sm:$0xff]
      %v2194 = vld [vmem:[%s296 + $0x20] sm:$0xff]
      %v2195 = vld [vmem:[%s296 + $0x28] sm:$0xff]
      %v2196 = vld [vmem:[%s296 + $0x30] sm:$0xff]
      %v2197 = vld [vmem:[%s296 + $0x38] sm:$0xff]
      %v2198 = vld [vmem:[%s296 + $0x40] sm:$0xff]
      %v2199 = vld [vmem:[%s296 + $0x48] sm:$0xff]
      %v2200 = vld [vmem:[%s296 + $0x50] sm:$0xff]
      %v2201 = vld [vmem:[%s296 + $0x58] sm:$0xff]
      %v2202 = vld [vmem:[%s296 + $0x60] sm:$0xff]
      %v2203 = vld [vmem:[%s296 + $0x68] sm:$0xff]
      %v2204 = vld [vmem:[%s296 + $0x70] sm:$0xff]
      %v2205 = vld [vmem:[%s296 + $0x78] sm:$0xff]
      %2207 = vset.pattern.permute.xlu0 0
      %2208 = vperm.xlu0 %2207, %v2190
      %v2209 = vpop.permute.xlu0 %2208
      %2212 = vset.pattern.permute.xlu0 0
      %2213 = vperm.xlu0 %2212, %v2191
      %v2214 = vpop.permute.xlu0 %2213
      %2217 = vset.pattern.permute.xlu0 0
      %2218 = vperm.xlu0 %2217, %v2192
      %v2219 = vpop.permute.xlu0 %2218
      %2222 = vset.pattern.permute.xlu0 0
      %2223 = vperm.xlu0 %2222, %v2193
      %v2224 = vpop.permute.xlu0 %2223
      %2227 = vset.pattern.permute.xlu0 0
      %2228 = vperm.xlu0 %2227, %v2194
      %v2229 = vpop.permute.xlu0 %2228
      %2232 = vset.pattern.permute.xlu0 0
      %2233 = vperm.xlu0 %2232, %v2195
      %v2234 = vpop.permute.xlu0 %2233
      %2237 = vset.pattern.permute.xlu0 0
      %2238 = vperm.xlu0 %2237, %v2196
      %v2239 = vpop.permute.xlu0 %2238
      %2242 = vset.pattern.permute.xlu0 0
      %2243 = vperm.xlu0 %2242, %v2197
      %v2244 = vpop.permute.xlu0 %2243
      %2247 = vset.pattern.permute.xlu0 0
      %2248 = vperm.xlu0 %2247, %v2198
      %v2249 = vpop.permute.xlu0 %2248
      %2252 = vset.pattern.permute.xlu0 0
      %2253 = vperm.xlu0 %2252, %v2199
      %v2254 = vpop.permute.xlu0 %2253
      %2257 = vset.pattern.permute.xlu0 0
      %2258 = vperm.xlu0 %2257, %v2200
      %v2259 = vpop.permute.xlu0 %2258
      %2262 = vset.pattern.permute.xlu0 0
      %2263 = vperm.xlu0 %2262, %v2201
      %v2264 = vpop.permute.xlu0 %2263
      %2267 = vset.pattern.permute.xlu0 0
      %2268 = vperm.xlu0 %2267, %v2202
      %v2269 = vpop.permute.xlu0 %2268
      %2272 = vset.pattern.permute.xlu0 0
      %2273 = vperm.xlu0 %2272, %v2203
      %v2274 = vpop.permute.xlu0 %2273
      %2277 = vset.pattern.permute.xlu0 0
      %2278 = vperm.xlu0 %2277, %v2204
      %v2279 = vpop.permute.xlu0 %2278
      %2282 = vset.pattern.permute.xlu0 0
      %2283 = vperm.xlu0 %2282, %v2205
      %v2284 = vpop.permute.xlu0 %2283
      %v2286 = vmul.f32 %v2159, %v2209
      %v2287 = vmul.f32 %v2161, %v2214
      %v2288 = vmul.f32 %v2163, %v2219
      %v2289 = vmul.f32 %v2165, %v2224
      %v2290 = vmul.f32 %v2167, %v2229
      %v2291 = vmul.f32 %v2169, %v2234
      %v2292 = vmul.f32 %v2171, %v2239
      %v2293 = vmul.f32 %v2173, %v2244
      %v2294 = vmul.f32 %v2175, %v2249
      %v2295 = vmul.f32 %v2177, %v2254
      %v2296 = vmul.f32 %v2179, %v2259
      %v2297 = vmul.f32 %v2181, %v2264
      %v2298 = vmul.f32 %v2183, %v2269
      %v2299 = vmul.f32 %v2185, %v2274
      %v2300 = vmul.f32 %v2187, %v2279
      %v2301 = vmul.f32 %v2189, %v2284
      %2302 = vst.msk [vmem:[%s302] sm:$0xff] %vm400, %v2286
      %2303 = vst.msk [vmem:[%s302 + $0x8] sm:$0xff] %vm400, %v2287
      %2304 = vst.msk [vmem:[%s302 + $0x10] sm:$0xff] %vm400, %v2288
      %2305 = vst.msk [vmem:[%s302 + $0x18] sm:$0xff] %vm400, %v2289
      %2306 = vst.msk [vmem:[%s302 + $0x20] sm:$0xff] %vm400, %v2290
      %2307 = vst.msk [vmem:[%s302 + $0x28] sm:$0xff] %vm400, %v2291
      %2308 = vst.msk [vmem:[%s302 + $0x30] sm:$0xff] %vm400, %v2292
      %2309 = vst.msk [vmem:[%s302 + $0x38] sm:$0xff] %vm400, %v2293
      %2310 = vst.msk [vmem:[%s302 + $0x40] sm:$0xff] %vm400, %v2294
      %2311 = vst.msk [vmem:[%s302 + $0x48] sm:$0xff] %vm400, %v2295
      %2312 = vst.msk [vmem:[%s302 + $0x50] sm:$0xff] %vm400, %v2296
      %2313 = vst.msk [vmem:[%s302 + $0x58] sm:$0xff] %vm400, %v2297
      %2314 = vst.msk [vmem:[%s302 + $0x60] sm:$0xff] %vm400, %v2298
      %2315 = vst.msk [vmem:[%s302 + $0x68] sm:$0xff] %vm400, %v2299
      %2316 = vst.msk [vmem:[%s302 + $0x70] sm:$0xff] %vm400, %v2300
      %2317 = vst.msk [vmem:[%s302 + $0x78] sm:$0xff] %vm400, %v2301
      %s2318 = smul.u32 16, %s18
      %p2319 = scmp.lt.s32.totalorder %s2318, 31
      %s2320 = scalar_select %p2319, %s2318, 31
      %s2321 = smul.addr %s2320, 8
      %s2322 = scalar_lea.vmem %s7, %s2321
      // Predicated region
      $region49: #{model_forward.15} parent=47 // pred_check
        %p2323 = pneg %p193
      $region50: #{model_forward.15} parent=47 // pred_check_branch
        %2325 = sbr.rel (%p2323) target = $region52
      $region51: #{model_forward.15} parent=47 // pred_region
        %s2326 = smul.u32 16, %s18
      $region52: #{model_forward.15} parent=47 // pred_fallthru
        _
    $region48: #{model_forward.15} parent=5 // pred_fallthru
      _
    %p2327 = scmp.le.s32.totalorder 2, %s13
    // Predicated region
    $region53: #{model_forward.15} parent=5 // pred_check
      %p2328 = pneg %p2327
    $region54: #{model_forward.15} parent=5 // pred_check_branch
      %2330 = sbr.rel (%p2328) target = $region56
    $region55: #{model_forward.15} parent=5 // pred_region
      %s2331 = ssub.s32 %s13, 2
      // Predicated region
      $region57: #{model_forward.15} parent=55 // pred_check
        %p2332 = pneg %p199
      $region58: #{model_forward.15} parent=55 // pred_check_branch
        %2334 = sbr.rel (%p2332) target = $region60
      $region59: #{model_forward.15} parent=55 // pred_region
        %s2335 = smul.u32 16, %s19
        %p2336 = scmp.lt.s32.totalorder %s2335, 31
        %s2337 = scalar_select %p2336, %s2335, 31
        %s2338 = smul.addr %s2337, 8
        %s2339 = scalar_lea.vmem %s7, %s2338
      $region60: #{model_forward.15} parent=55 // pred_fallthru
        _
    $region56: #{model_forward.15} parent=5 // pred_fallthru
      _
  $region6: #{model_forward.15} parent=0 // loop_footer
    %s17 = sadd.s32 1, %s13
  $region7: #{model_forward.15} parent=0 // loop_footer_branch
    %12 = sbr.rel target = $region3
  $region8: #{model_forward.15} parent=0 // loop_exit
    _

// kernel: reverse.3
$region0: #{reverse.3}
  %s0 = inlined_call_operand.vmem [shape: f32[2,4,2048], index: 0, kind: input, shape index: {}]
  %s1 = inlined_call_operand.vmem [shape: f32[2,4,2048], index: 1, kind: output, shape index: {}]
  %v2 = vlaneseq
  %v3 = vsub.s32 127, %v2
  %4 = vset.pattern.permute.xlu0 %v3
  $region1: #{reverse.3} parent=0
    #allocation0 [shape = 'u8[8192]{0}', space=vmem, size = 0x2000, scoped, tag = 'operand span for operand 0']
    #allocation1 [shape = 'u8[8192]{0}', space=vmem, size = 0x2000, scoped, tag = 'packed  for operand 0']
    #allocation2 [shape = 'u8[8192]{0}', space=vmem, size = 0x2000, scoped, tag = 'operand span for operand 1']
    #allocation3 [shape = 'u8[8192]{0}', space=vmem, size = 0x2000, scoped, tag = 'packed  for operand 1']
    loop: start=0, step=1, limit=18
    $region2: #{reverse.3} parent=1 // loop_pre_header
      _
    $region3: #{reverse.3} parent=1 // loop_header
      %s6 = sphi 0, %s10
      %p7 = scmp.ge.s32.totalorder %s6, 18
      %s13 = sphi 0, %s32
      %s14 = sphi 0, %s28
      %s15 = sphi 0, %s24
      %s16 = sphi 0, %s13
      %s17 = sphi 0, %s14
      %s18 = sphi 0, %s15
      %s19 = sphi 0, %s16
      %s20 = sphi 0, %s17
      %s21 = sphi 0, %s18
    $region4: #{reverse.3} parent=1 // loop_header_branch
      %9 = sbr.rel (%p7) target = $region8
    $region5: #{reverse.3} parent=1 // loop_body
      %s11 = ssub.s32 %s6, 1
      %s12 = ssub.s32 %s6, 2
      %s22 = sadd.s32 1, %s15
      %p23 = scmp.ge.s32.totalorder %s22, 16
      %s24 = scalar_select %p23, 0, %s22
      %s25 = sadd.s32 1, %s14
      %s26 = scalar_select %p23, %s25, %s14
      %p27 = scmp.ge.s32.totalorder %s26, 1
      %s28 = scalar_select %p27, 0, %s26
      %s29 = sadd.s32 1, %s13
      %s30 = scalar_select %p27, %s29, %s13
      %p31 = scmp.ge.s32.totalorder %s30, 1
      %s32 = scalar_select %p31, 0, %s30
      %p33 = scmp.le.s32.totalorder 1, %s6
      %p34 = scmp.lt.s32.totalorder %s6, 17
      %p35 = pnand %p33, %p34
      %p36 = pneg %p35
      // Predicated region
      $region9: #{reverse.3} parent=5 // pred_check
        _
      $region10: #{reverse.3} parent=5 // pred_check_branch
        %38 = sbr.rel (%p35) target = $region12
      $region11: #{reverse.3} parent=5 // pred_region
        %s39 = ssub.s32 %s6, 1
      $region12: #{reverse.3} parent=5 // pred_fallthru
        _
      %p40 = scmp.lt.s32.totalorder %s6, 16
      // Predicated region
      $region13: #{reverse.3} parent=5 // pred_check
        %p41 = pneg %p40
      $region14: #{reverse.3} parent=5 // pred_check_branch
        %43 = sbr.rel (%p41) target = $region16
      $region15: #{reverse.3} parent=5 // pred_region
        %s44 = sand.u32 %s6, 1
        %s45 = sand.u32 %s6, 1
        %s46 = smul.addr %s45, 8
        %s47 = scalar_lea.vmem [#allocation1], %s46
        %s48 = ssub.s32 15, %s15
        %s49 = smul.u32 2, %s13
        %s50 = smul.addr %s14, 16
        %s51 = sadd.s32 %s48, %s50
        %s52 = smul.addr %s49, 16
        %s53 = sadd.s32 %s51, %s52
        %s54 = smul.addr %s53, 4
        %s55 = scalar_lea.vmem %s0, %s54
        // Predicated region
        $region17: #{reverse.3} parent=15 // pred_check
          _
        $region18: #{reverse.3} parent=15 // pred_check_branch
          %57 = sbr.rel (0) target = $region20
        $region19: #{reverse.3} parent=15 // pred_region
          // Predicated region
          $region21: #{reverse.3} parent=19 // pred_check
            _
          $region22: #{reverse.3} parent=19 // pred_check_branch
            %59 = sbr.rel target = $region24
          $region23: #{reverse.3} parent=19 // pred_region
            // Predicated region
            $region36: #{reverse.3} parent=23 // pred_check
              _
            $region37: #{reverse.3} parent=23 // pred_check_branch
              %76 = sbr.rel (0) target = $region39
            $region38: #{reverse.3} parent=23 // pred_region
              loop: start=0, step=1, limit=1
              $region40: #{reverse.3} parent=38 // loop_pre_header
                _
              $region41: #{reverse.3} parent=38 // loop_header
                %s78 = sphi 0, %s82
                %p79 = scmp.ge.s32.totalorder %s78, 1
                %s83 = sphi %s55, %s55
                %s84 = sphi %s47, %s47
              $region42: #{reverse.3} parent=38 // loop_header_branch
                %81 = sbr.rel (%p79) target = $region46
              $region43: #{reverse.3} parent=38 // loop_body
                _
              $region44: #{reverse.3} parent=38 // loop_footer
                %s82 = sadd.s32 1, %s78
              $region45: #{reverse.3} parent=38 // loop_footer_branch
                %77 = sbr.rel target = $region41
              $region46: #{reverse.3} parent=38 // loop_exit
                _
              loop: start=0, step=1, limit=1
              $region47: #{reverse.3} parent=38 // loop_pre_header
                _
              $region48: #{reverse.3} parent=38 // loop_header
                %s87 = sphi 0, %s91
                %p88 = scmp.ge.s32.totalorder %s87, 1
                %s92 = sphi %s55, %s55
                %s93 = sphi %s47, %s47
              $region49: #{reverse.3} parent=38 // loop_header_branch
                %90 = sbr.rel (%p88) target = $region53
              $region50: #{reverse.3} parent=38 // loop_body
                %v94 = vld [vmem:[%s92] sm:$0xf]
                %95 = vst [vmem:[%s93] sm:$0xf] %v94
                %v96 = vld [vmem:[%s92 + $0x40] sm:$0xf]
                %97 = vst [vmem:[%s93 + $0x4] sm:$0xf] %v96
              $region51: #{reverse.3} parent=38 // loop_footer
                %s91 = sadd.s32 1, %s87
              $region52: #{reverse.3} parent=38 // loop_footer_branch
                %86 = sbr.rel target = $region48
              $region53: #{reverse.3} parent=38 // loop_exit
                _
            $region39: #{reverse.3} parent=23 // pred_fallthru
              _
          $region24: #{reverse.3} parent=19 // pred_fallthru
            _
          // Predicated region
          $region25: #{reverse.3} parent=19 // pred_check
            _
          $region26: #{reverse.3} parent=19 // pred_check_branch
            %61 = sbr.rel (0) target = $region28
          $region27: #{reverse.3} parent=19 // pred_region
            loop: start=0, step=1, limit=1
            $region29: #{reverse.3} parent=27 // loop_pre_header
              _
            $region30: #{reverse.3} parent=27 // loop_header
              %s64 = sphi 0, %s68
              %p65 = scmp.ge.s32.totalorder %s64, 1
              %s69 = sphi %s55, %s55
              %s70 = sphi %s47, %s47
            $region31: #{reverse.3} parent=27 // loop_header_branch
              %67 = sbr.rel (%p65) target = $region35
            $region32: #{reverse.3} parent=27 // loop_body
              %v71 = vld [vmem:[%s69] sm:$0xf]
              %72 = vst [vmem:[%s70] sm:$0xf] %v71
              %v73 = vld [vmem:[%s69 + $0x40] sm:$0xf]
              %74 = vst [vmem:[%s70 + $0x4] sm:$0xf] %v73
            $region33: #{reverse.3} parent=27 // loop_footer
              %s68 = sadd.s32 1, %s64
            $region34: #{reverse.3} parent=27 // loop_footer_branch
              %63 = sbr.rel target = $region30
            $region35: #{reverse.3} parent=27 // loop_exit
              _
          $region28: #{reverse.3} parent=19 // pred_fallthru
            _
        $region20: #{reverse.3} parent=15 // pred_fallthru
          _
        %98 = vnop
      $region16: #{reverse.3} parent=5 // pred_fallthru
        _
      %p99 = scmp.le.s32.totalorder 1, %s6
      %p100 = scmp.lt.s32.totalorder %s6, 17
      %p101 = pnand %p99, %p100
      %p102 = pneg %p101
      // Predicated region
      $region54: #{reverse.3} parent=5 // pred_check
        _
      $region55: #{reverse.3} parent=5 // pred_check_branch
        %104 = sbr.rel (%p101) target = $region57
      $region56: #{reverse.3} parent=5 // pred_region
        %s105 = ssub.s32 %s6, 1
        %s106 = sand.u32 %s11, 1
        %s107 = sand.u32 %s11, 1
        %s108 = smul.addr %s107, 8
        %s109 = scalar_lea.vmem [#allocation1], %s108
        %s110 = sand.u32 %s11, 1
        %s111 = sand.u32 %s11, 1
        %s112 = smul.addr %s111, 8
        %s113 = scalar_lea.vmem [#allocation1], %s112
        %s114 = sand.u32 %s11, 1
        %s115 = sand.u32 %s11, 1
        %s116 = smul.addr %s115, 8
        %s117 = scalar_lea.vmem [#allocation3], %s116
        %s119 = sshllo.u32 0, 4
        %s120 = scalar_lea.vmem %s113, 4 [#allocation1]
        %v121 = vld [vmem:[%s120] sm:%s119]
        %s122 = scalar_lea.vmem [#allocation0], 8
        %123 = vst [vmem:[%s122] sm:%s119] %v121
        %v124 = vld [vmem:[%s113] sm:%s119]
        %125 = vst [vmem:[#allocation0] sm:%s119] %v124
        %s126 = ssub.s32 15, %s18
        %s127 = smul.u32 2, %s16
        %s128 = smul.u32 2, %s16
        %v129 = vld [vmem:[#allocation0] sm:$0xff]
        %130 = vperm.xlu0 %4, %v129
        %v131 = vpop.permute.xlu0 %130
        %132 = vst [vmem:[#allocation2] sm:$0xff] %v131
        %s133 = scalar_lea.vmem [#allocation2], 8
        %s134 = scalar_lea.vmem [#allocation0], 8
        %v135 = vld [vmem:[%s134] sm:$0xff]
        %136 = vperm.xlu0 %4, %v135
        %v137 = vpop.permute.xlu0 %136
        %138 = vst [vmem:[%s133] sm:$0xff] %v137
        %s140 = sshllo.u32 0, 4
        %v142 = vld [vmem:[#allocation2] sm:%s140]
        %s143 = sshllo.u32 0, 4
        %144 = vst [vmem:[%s117] sm:%s143] %v142
        %s145 = scalar_lea.vmem [#allocation2], 8
        %v146 = vld [vmem:[%s145] sm:%s140]
        %s147 = sshllo.u32 0, 4
        %s148 = scalar_lea.vmem %s117, 4 [#allocation3]
        %149 = vst [vmem:[%s148] sm:%s147] %v146
        %s150 = sand.u32 %s11, 1
        %s151 = sand.u32 %s11, 1
        %s152 = smul.addr %s151, 8
        %s153 = scalar_lea.vmem [#allocation3], %s152
        %s154 = smul.u32 2, %s16
        %s155 = smul.addr %s17, 16
        %s156 = sadd.s32 %s18, %s155
        %s157 = smul.addr %s154, 16
        %s158 = sadd.s32 %s156, %s157
        %s159 = smul.addr %s158, 4
        %s160 = scalar_lea.vmem %s1, %s159
        // Predicated region
        $region58: #{reverse.3} parent=56 // pred_check
          _
        $region59: #{reverse.3} parent=56 // pred_check_branch
          %162 = sbr.rel (0) target = $region61
        $region60: #{reverse.3} parent=56 // pred_region
          // Predicated region
          $region62: #{reverse.3} parent=60 // pred_check
            _
          $region63: #{reverse.3} parent=60 // pred_check_branch
            %164 = sbr.rel target = $region65
          $region64: #{reverse.3} parent=60 // pred_region
            // Predicated region
            $region77: #{reverse.3} parent=64 // pred_check
              _
            $region78: #{reverse.3} parent=64 // pred_check_branch
              %181 = sbr.rel (0) target = $region80
            $region79: #{reverse.3} parent=64 // pred_region
              loop: start=0, step=1, limit=1
              $region81: #{reverse.3} parent=79 // loop_pre_header
                _
              $region82: #{reverse.3} parent=79 // loop_header
                %s183 = sphi 0, %s187
                %p184 = scmp.ge.s32.totalorder %s183, 1
                %s188 = sphi %s153, %s153
                %s189 = sphi %s160, %s160
              $region83: #{reverse.3} parent=79 // loop_header_branch
                %186 = sbr.rel (%p184) target = $region87
              $region84: #{reverse.3} parent=79 // loop_body
                _
              $region85: #{reverse.3} parent=79 // loop_footer
                %s187 = sadd.s32 1, %s183
              $region86: #{reverse.3} parent=79 // loop_footer_branch
                %182 = sbr.rel target = $region82
              $region87: #{reverse.3} parent=79 // loop_exit
                _
              loop: start=0, step=1, limit=1
              $region88: #{reverse.3} parent=79 // loop_pre_header
                _
              $region89: #{reverse.3} parent=79 // loop_header
                %s192 = sphi 0, %s196
                %p193 = scmp.ge.s32.totalorder %s192, 1
                %s197 = sphi %s153, %s153
                %s198 = sphi %s160, %s160
              $region90: #{reverse.3} parent=79 // loop_header_branch
                %195 = sbr.rel (%p193) target = $region94
              $region91: #{reverse.3} parent=79 // loop_body
                %v199 = vld [vmem:[%s197] sm:$0xf]
                %200 = vst [vmem:[%s198] sm:$0xf] %v199
                %v201 = vld [vmem:[%s197 + $0x4] sm:$0xf]
                %202 = vst [vmem:[%s198 + $0x40] sm:$0xf] %v201
              $region92: #{reverse.3} parent=79 // loop_footer
                %s196 = sadd.s32 1, %s192
              $region93: #{reverse.3} parent=79 // loop_footer_branch
                %191 = sbr.rel target = $region89
              $region94: #{reverse.3} parent=79 // loop_exit
                _
            $region80: #{reverse.3} parent=64 // pred_fallthru
              _
          $region65: #{reverse.3} parent=60 // pred_fallthru
            _
          // Predicated region
          $region66: #{reverse.3} parent=60 // pred_check
            _
          $region67: #{reverse.3} parent=60 // pred_check_branch
            %166 = sbr.rel (0) target = $region69
          $region68: #{reverse.3} parent=60 // pred_region
            loop: start=0, step=1, limit=1
            $region70: #{reverse.3} parent=68 // loop_pre_header
              _
            $region71: #{reverse.3} parent=68 // loop_header
              %s169 = sphi 0, %s173
              %p170 = scmp.ge.s32.totalorder %s169, 1
              %s174 = sphi %s153, %s153
              %s175 = sphi %s160, %s160
            $region72: #{reverse.3} parent=68 // loop_header_branch
              %172 = sbr.rel (%p170) target = $region76
            $region73: #{reverse.3} parent=68 // loop_body
              %v176 = vld [vmem:[%s174] sm:$0xf]
              %177 = vst [vmem:[%s175] sm:$0xf] %v176
              %v178 = vld [vmem:[%s174 + $0x4] sm:$0xf]
              %179 = vst [vmem:[%s175 + $0x40] sm:$0xf] %v178
            $region74: #{reverse.3} parent=68 // loop_footer
              %s173 = sadd.s32 1, %s169
            $region75: #{reverse.3} parent=68 // loop_footer_branch
              %168 = sbr.rel target = $region71
            $region76: #{reverse.3} parent=68 // loop_exit
              _
          $region69: #{reverse.3} parent=60 // pred_fallthru
            _
        $region61: #{reverse.3} parent=56 // pred_fallthru
          _
        %203 = vnop
      $region57: #{reverse.3} parent=5 // pred_fallthru
        _
      %p204 = scmp.le.s32.totalorder 2, %s6
      // Predicated region
      $region95: #{reverse.3} parent=5 // pred_check
        %p205 = pneg %p204
      $region96: #{reverse.3} parent=5 // pred_check_branch
        %207 = sbr.rel (%p205) target = $region98
      $region97: #{reverse.3} parent=5 // pred_region
        %s208 = ssub.s32 %s6, 2
        %s209 = sand.u32 %s12, 1
        %s210 = sand.u32 %s12, 1
        %s211 = smul.addr %s210, 8
        %s212 = scalar_lea.vmem [#allocation3], %s211
      $region98: #{reverse.3} parent=5 // pred_fallthru
        _
    $region6: #{reverse.3} parent=1 // loop_footer
      %s10 = sadd.s32 1, %s6
    $region7: #{reverse.3} parent=1 // loop_footer_branch
      %5 = sbr.rel target = $region3
    $region8: #{reverse.3} parent=1 // loop_exit
      _

</llo_original>
